<compile_context>
chip_gen: v5e
topology: v5e:2x2
jax: 0.10.0
libtpu: 0.0.40
codegen_flags: <defaults>
</compile_context>

<pallas_src>
import functools

import jax
import jax.numpy as jnp
from jax.experimental import pallas as pl
from jax.experimental.pallas import tpu as pltpu

EPS = 1e-5
VMEM_LIMIT = 32 * 1024 * 1024  # safe on v5e/v6e (128 MiB phys) and v7x (64 MiB phys)


# ---------------------------------------------------------------------------
# Pallas kernels
# ---------------------------------------------------------------------------

def conv_bn_relu_kernel(p_ref, w_ref, b_ref, g_ref, beta_ref, o_ref):
    # Transposed, lane-dense conv GEMM:
    #   p_ref: (K, M) im2col patches,  w_ref: (Cout_block, K)
    #   o_ref: (Cout_block, M)  -- M on the lane axis, per-channel BN over axis=-1
    y = jnp.dot(w_ref[...], p_ref[...], preferred_element_type=jnp.float32)
    y = y + b_ref[...]                                   # (Cb, 1) broadcast
    mean = jnp.mean(y, axis=-1, keepdims=True)           # batch stats (train mode)
    var = jnp.mean(jnp.square(y - mean), axis=-1, keepdims=True)
    yn = (y - mean) * jax.lax.rsqrt(var + EPS)
    o_ref[...] = jnp.maximum(yn * g_ref[...] + beta_ref[...], 0.0)


def tail_kernel(x_ref, w1_ref, b1_ref, gf_ref, bf_ref, w2_ref, b2_ref,
                wih_ref, bih_ref, whh_ref, bhh_ref,
                gp_ref, bp_ref, wp_ref, bpm_ref,
                out_ref, ctx_ref):
    # Fused: Linear(1024,256) -> BN(batch stats) -> ReLU -> Linear(256,256)
    #        -> GRU(256,256)  -> BN(batch stats) -> Linear(256,6)
    # x_ref rows are TIME-MAJOR: row = t * B + b.
    bn_rows = x_ref.shape[0]
    bsz = ctx_ref.shape[0]
    n_steps = bn_rows // bsz
    hdim = ctx_ref.shape[1]

    # --- MLP head of genc ---
    h = jnp.dot(x_ref[...], w1_ref[...], preferred_element_type=jnp.float32) + b1_ref[...]
    mean = jnp.mean(h, axis=0, keepdims=True)
    var = jnp.mean(jnp.square(h - mean), axis=0, keepdims=True)
    h = jnp.maximum((h - mean) * jax.lax.rsqrt(var + EPS) * gf_ref[...] + bf_ref[...], 0.0)
    feat = jnp.dot(h, w2_ref[...], preferred_element_type=jnp.float32) + b2_ref[...]

    # --- GRU input projection hoisted out of the recurrence (computed once) ---
    gi = jnp.dot(feat, wih_ref[...], preferred_element_type=jnp.float32) + bih_ref[...]

    # --- GRU recurrence (statically unrolled; only h @ W_hh stays serial) ---
    hstate = jnp.zeros((bsz, hdim), jnp.float32)
    for t in range(n_steps):
        gi_t = gi[t * bsz:(t + 1) * bsz, :]              # contiguous row block (B, 3H)
        gh = jnp.dot(hstate, whh_ref[...], preferred_element_type=jnp.float32) + bhh_ref[...]
        r = jax.nn.sigmoid(gi_t[:, :hdim] + gh[:, :hdim])
        z = jax.nn.sigmoid(gi_t[:, hdim:2 * hdim] + gh[:, hdim:2 * hdim])
        ng = jnp.tanh(gi_t[:, 2 * hdim:] + r * gh[:, 2 * hdim:])
        hstate = (1.0 - z) * ng + z * hstate

    ctx_ref[...] = hstate

    # --- predmotion: BatchNorm1d(256) (batch stats) + Linear(256, 6) ---
    mean = jnp.mean(hstate, axis=0, keepdims=True)
    var = jnp.mean(jnp.square(hstate - mean), axis=0, keepdims=True)
    cn = (hstate - mean) * jax.lax.rsqrt(var + EPS) * gp_ref[...] + bp_ref[...]
    out_ref[...] = jnp.dot(cn, wp_ref[...], preferred_element_type=jnp.float32) + bpm_ref[...]


# ---------------------------------------------------------------------------
# Glue (im2col, layout, parameter setup) in plain JAX
# ---------------------------------------------------------------------------

def im2col_cfirst(x, k=3, stride=2, pad=1):
    # x: (C, M, H, W) channel-first activations -> patches (C*k*k, M*Ho*Wo)
    # K ordering is (c, ki, kj), matching torch weight.reshape(Cout, -1).
    c, m, h, w = x.shape
    ho = (h + 2 * pad - k) // stride + 1
    wo = (w + 2 * pad - k) // stride + 1
    xp = jnp.pad(x, ((0, 0), (0, 0), (pad, pad), (pad, pad)))
    cols = []
    for i in range(k):
        for j in range(k):
            cols.append(xp[:, :, i:i + stride * ho:stride, j:j + stride * wo:stride])
    patches = jnp.stack(cols, axis=1)                    # (C, k*k, M, Ho, Wo)
    return patches.reshape(c * k * k, m * ho * wo), ho, wo


def conv_bn_relu(x_cmhw, w, b, gamma, beta):
    # x_cmhw: (Cin, M, H, W)  ->  (Cout, M, Ho, Wo)   (stays channel-first)
    cout = w.shape[0]
    m = x_cmhw.shape[1]
    patches, ho, wo = im2col_cfirst(x_cmhw)
    k, mt = patches.shape
    wmat = w.reshape(cout, k)                            # (Cout, K)
    half = cout // 2                                     # 2-way channel split
    y = pl.pallas_call(
        conv_bn_relu_kernel,
        out_shape=jax.ShapeDtypeStruct((cout, mt), jnp.float32),
        grid=(2,),
        in_specs=[
            pl.BlockSpec((k, mt), lambda i: (0, 0)),     # patches: shared, stays resident
            pl.BlockSpec((half, k), lambda i: (i, 0)),
            pl.BlockSpec((half, 1), lambda i: (i, 0)),
            pl.BlockSpec((half, 1), lambda i: (i, 0)),
            pl.BlockSpec((half, 1), lambda i: (i, 0)),
        ],
        out_specs=pl.BlockSpec((half, mt), lambda i: (i, 0)),
        compiler_params=pltpu.CompilerParams(
            dimension_semantics=("parallel",),           # both TCs on v7x
            vmem_limit_bytes=VMEM_LIMIT),
    )(patches, wmat, b.reshape(-1, 1), gamma.reshape(-1, 1), beta.reshape(-1, 1))
    return y.reshape(cout, m, ho, wo)


def init_params(key):
    keys = jax.random.split(key, 12)

    def normal(k, shape, scale=0.05):
        return scale * jax.random.normal(k, shape, jnp.float32)

    def ortho(k, shape):
        a = jax.random.normal(k, shape, jnp.float32)
        tall = shape[0] >= shape[1]
        q, r = jnp.linalg.qr(a if tall else a.T)
        q = q * jnp.sign(jnp.diag(r))
        return q if tall else q.T

    p = {"convs": []}
    for idx, (co, ci) in enumerate([(16, 3), (32, 16), (64, 32), (64, 64)]):
        p["convs"].append(dict(
            w=normal(keys[idx], (co, ci, 3, 3)),
            b=jnp.zeros((co,), jnp.float32),
            gamma=jnp.ones((co,), jnp.float32),
            beta=jnp.zeros((co,), jnp.float32)))
    p["fc1_w"] = normal(keys[4], (256, 64 * 4 * 4), 0.02)
    p["fc1_b"] = jnp.zeros((256,), jnp.float32)
    p["bn_fc_g"] = jnp.ones((256,), jnp.float32)
    p["bn_fc_b"] = jnp.zeros((256,), jnp.float32)
    p["fc2_w"] = normal(keys[5], (256, 256), 0.02)
    p["fc2_b"] = jnp.zeros((256,), jnp.float32)
    # GRU: orthogonal weights, zero biases (matches _initialize_weights)
    p["gru_wih"] = ortho(keys[6], (3 * 256, 256))
    p["gru_whh"] = ortho(keys[7], (3 * 256, 256))
    p["gru_bih"] = jnp.zeros((3 * 256,), jnp.float32)
    p["gru_bhh"] = jnp.zeros((3 * 256,), jnp.float32)
    # predmotion: BatchNorm1d(256) + Linear(256, 6)
    p["pm_bn_g"] = jnp.ones((256,), jnp.float32)
    p["pm_bn_b"] = jnp.zeros((256,), jnp.float32)
    p["pm_w"] = normal(keys[8], (6, 256), 0.05)
    p["pm_b"] = jnp.zeros((6,), jnp.float32)
    # self.pred is unused in forward -> not materialized
    return p


def forward(block, p):
    B, N, C, H, W = block.shape

    # Channel-first activation layout (C, B*N, H, W); sample index m = b*N + n.
    x = block.transpose(2, 0, 1, 3, 4).reshape(C, B * N, H, W)

    # genc conv stack (4x conv+BN+ReLU), all lane-dense transposed GEMMs.
    for cp in p["convs"]:
        x = conv_bn_relu(x, cp["w"], cp["b"], cp["gamma"], cp["beta"])

    # x: (64, B*N, 4, 4).  Flatten to torch (C,H,W) order per sample and
    # reorder rows to time-major (row = t*B + b) for the fused GRU kernel.
    cfin, _, ho, wo = x.shape
    xfc = (x.reshape(cfin, B, N, ho * wo)     # (64, B, N, 16)
             .transpose(2, 1, 0, 3)           # (N, B, 64, 16)
             .reshape(N * B, cfin * ho * wo)) # (N*B, 1024), col = c*16 + h*4 + w

    # Fused: fc1 -> BN -> ReLU -> fc2 -> GRU (hoisted input proj) -> BN -> fc(6)
    out, ctx = pl.pallas_call(
        tail_kernel,
        out_shape=(jax.ShapeDtypeStruct((B, 6), jnp.float32),
                   jax.ShapeDtypeStruct((B, 256), jnp.float32)),
        compiler_params=pltpu.CompilerParams(vmem_limit_bytes=VMEM_LIMIT),
    )(xfc,
      p["fc1_w"].T, p["fc1_b"].reshape(1, -1),
      p["bn_fc_g"].reshape(1, -1), p["bn_fc_b"].reshape(1, -1),
      p["fc2_w"].T, p["fc2_b"].reshape(1, -1),
      p["gru_wih"].T, p["gru_bih"].reshape(1, -1),
      p["gru_whh"].T, p["gru_bhh"].reshape(1, -1),
      p["pm_bn_g"].reshape(1, -1), p["pm_bn_b"].reshape(1, -1),
      p["pm_w"].T, p["pm_b"].reshape(1, -1))

    return [out, ctx]


if __name__ == "__main__":
    # Spatial size is forced to 64x64 by Linear(64*4*4, 256); keep B, N small.
    B, N, C, H, W = 2, 4, 3, 64, 64
    block = jax.random.normal(jax.random.PRNGKey(0), (B, N, C, H, W), jnp.float32)
    params = init_params(jax.random.PRNGKey(233))

    fwd = jax.jit(functools.partial(forward, p=params))
    output, context = fwd(block)
    jax.block_until_ready((output, context))

    assert output.shape == (B, 6), output.shape
    assert context.shape == (B, 256), context.shape
    assert bool(jnp.all(jnp.isfinite(output))) and bool(jnp.all(jnp.isfinite(context)))
    print("KERNEL_OK")
</pallas_src>

<mosaic_0001>
module attributes {stable_mosaic.version = 11 : i64} {
  func.func @conv_bn_relu_kernel(%arg0: i32, %arg1: memref<27x8192xf32, #tpu.memory_space<vmem>>, %arg2: memref<8x27xf32, #tpu.memory_space<vmem>>, %arg3: memref<8x1xf32, #tpu.memory_space<vmem>>, %arg4: memref<8x1xf32, #tpu.memory_space<vmem>>, %arg5: memref<8x1xf32, #tpu.memory_space<vmem>>, %arg6: memref<8x8192xf32, #tpu.memory_space<vmem>>) attributes {dimension_semantics = [#tpu.dimension_semantics<parallel>], iteration_bounds = array<i64: 2>, scalar_prefetch = 0 : i64, scratch_operands = 0 : i64, tpu.core_type = #tpu.core_type<tc>, window_params = [{pipeline_mode = #tpu.pipeline_mode<synchronous>, transform_indices = @transform_0, window_bounds = array<i64: 27, 8192>}, {transform_indices = @transform_1, window_bounds = array<i64: 8, 27>}, {transform_indices = @transform_2, window_bounds = array<i64: 8, 1>}, {transform_indices = @transform_3, window_bounds = array<i64: 8, 1>}, {transform_indices = @transform_4, window_bounds = array<i64: 8, 1>}, {transform_indices = @transform_5, window_bounds = array<i64: 8, 8192>}]} {
    %c0 = arith.constant 0 : index
    %c0_0 = arith.constant 0 : index
    %0 = vector.load %arg2[%c0, %c0_0] : memref<8x27xf32, #tpu.memory_space<vmem>>, vector<8x27xf32>
    %c0_1 = arith.constant 0 : index
    %c0_2 = arith.constant 0 : index
    %1 = vector.load %arg1[%c0_1, %c0_2] : memref<27x8192xf32, #tpu.memory_space<vmem>>, vector<27x8192xf32>
    %cst = arith.constant dense<0.000000e+00> : vector<8x8192xf32>
    %2 = tpu.matmul %0, %1, %cst {dimension_numbers = #tpu.dot_dimension_numbers<[1], [0], [0], [1], [0, 0, 1, 1], [], []>} : vector<8x27xf32>, vector<27x8192xf32>, vector<8x8192xf32> -> vector<8x8192xf32>
    %c0_3 = arith.constant 0 : index
    %c0_4 = arith.constant 0 : index
    %3 = vector.load %arg3[%c0_3, %c0_4] : memref<8x1xf32, #tpu.memory_space<vmem>>, vector<8x1xf32>
    %4 = vector.broadcast %3 : vector<8x1xf32> to vector<8x8192xf32>
    %5 = arith.addf %2, %4 : vector<8x8192xf32>
    %cst_5 = arith.constant dense<0.000000e+00> : vector<8xf32>
    %6 = vector.multi_reduction <add>, %5, %cst_5 [1] : vector<8x8192xf32> to vector<8xf32>
    %7 = vector.shape_cast %6 : vector<8xf32> to vector<8x1xf32>
    %cst_6 = arith.constant 8.192000e+03 : f32
    %8 = vector.broadcast %cst_6 : f32 to vector<8x1xf32>
    %9 = arith.divf %7, %8 : vector<8x1xf32>
    %10 = vector.broadcast %9 : vector<8x1xf32> to vector<8x8192xf32>
    %11 = arith.subf %5, %10 : vector<8x8192xf32>
    %12 = arith.mulf %11, %11 : vector<8x8192xf32>
    %cst_7 = arith.constant dense<0.000000e+00> : vector<8xf32>
    %13 = vector.multi_reduction <add>, %12, %cst_7 [1] : vector<8x8192xf32> to vector<8xf32>
    %14 = vector.shape_cast %13 : vector<8xf32> to vector<8x1xf32>
    %cst_8 = arith.constant 8.192000e+03 : f32
    %15 = vector.broadcast %cst_8 : f32 to vector<8x1xf32>
    %16 = arith.divf %14, %15 : vector<8x1xf32>
    %17 = vector.broadcast %9 : vector<8x1xf32> to vector<8x8192xf32>
    %18 = arith.subf %5, %17 : vector<8x8192xf32>
    %cst_9 = arith.constant 9.99999974E-6 : f32
    %19 = vector.broadcast %cst_9 : f32 to vector<8x1xf32>
    %20 = arith.addf %16, %19 : vector<8x1xf32>
    %21 = math.rsqrt %20 : vector<8x1xf32>
    %22 = vector.broadcast %21 : vector<8x1xf32> to vector<8x8192xf32>
    %23 = arith.mulf %18, %22 : vector<8x8192xf32>
    %c0_10 = arith.constant 0 : index
    %c0_11 = arith.constant 0 : index
    %24 = vector.load %arg4[%c0_10, %c0_11] : memref<8x1xf32, #tpu.memory_space<vmem>>, vector<8x1xf32>
    %25 = vector.broadcast %24 : vector<8x1xf32> to vector<8x8192xf32>
    %26 = arith.mulf %23, %25 : vector<8x8192xf32>
    %c0_12 = arith.constant 0 : index
    %c0_13 = arith.constant 0 : index
    %27 = vector.load %arg5[%c0_12, %c0_13] : memref<8x1xf32, #tpu.memory_space<vmem>>, vector<8x1xf32>
    %28 = vector.broadcast %27 : vector<8x1xf32> to vector<8x8192xf32>
    %29 = arith.addf %26, %28 : vector<8x8192xf32>
    %cst_14 = arith.constant 0.000000e+00 : f32
    %30 = vector.broadcast %cst_14 : f32 to vector<8x8192xf32>
    %31 = arith.maximumf %29, %30 : vector<8x8192xf32>
    %c0_15 = arith.constant 0 : index
    %c0_16 = arith.constant 0 : index
    %32 = vector.load %arg6[%c0_15, %c0_16] : memref<8x8192xf32, #tpu.memory_space<vmem>>, vector<8x8192xf32>
    tpu.vector_store %arg6[%c0_15, %c0_16], %31 {strides = array<i32>} : memref<8x8192xf32, #tpu.memory_space<vmem>>, vector<8x8192xf32>,
    return
  }
  func.func @transform_0(%arg0: i32) -> (i32, i32) {
    %c0_i32 = arith.constant 0 : i32
    %c0_i32_0 = arith.constant 0 : i32
    %c0_i32_1 = arith.constant 0 : i32
    return %c0_i32, %c0_i32_0 : i32, i32
  }
  func.func @transform_1(%arg0: i32) -> (i32, i32) {
    %c0_i32 = arith.constant 0 : i32
    %c0_i32_0 = arith.constant 0 : i32
    return %arg0, %c0_i32 : i32, i32
  }
  func.func @transform_2(%arg0: i32) -> (i32, i32) {
    %c0_i32 = arith.constant 0 : i32
    %c0_i32_0 = arith.constant 0 : i32
    return %arg0, %c0_i32 : i32, i32
  }
  func.func @transform_3(%arg0: i32) -> (i32, i32) {
    %c0_i32 = arith.constant 0 : i32
    %c0_i32_0 = arith.constant 0 : i32
    return %arg0, %c0_i32 : i32, i32
  }
  func.func @transform_4(%arg0: i32) -> (i32, i32) {
    %c0_i32 = arith.constant 0 : i32
    %c0_i32_0 = arith.constant 0 : i32
    return %arg0, %c0_i32 : i32, i32
  }
  func.func @transform_5(%arg0: i32) -> (i32, i32) {
    %c0_i32 = arith.constant 0 : i32
    %c0_i32_0 = arith.constant 0 : i32
    return %arg0, %c0_i32 : i32, i32
  }
}

module attributes {stable_mosaic.version = 11 : i64} {
  func.func @conv_bn_relu_kernel(%arg0: i32, %arg1: memref<144x2048xf32, #tpu.memory_space<vmem>>, %arg2: memref<16x144xf32, #tpu.memory_space<vmem>>, %arg3: memref<16x1xf32, #tpu.memory_space<vmem>>, %arg4: memref<16x1xf32, #tpu.memory_space<vmem>>, %arg5: memref<16x1xf32, #tpu.memory_space<vmem>>, %arg6: memref<16x2048xf32, #tpu.memory_space<vmem>>) attributes {dimension_semantics = [#tpu.dimension_semantics<parallel>], iteration_bounds = array<i64: 2>, scalar_prefetch = 0 : i64, scratch_operands = 0 : i64, tpu.core_type = #tpu.core_type<tc>, window_params = [{pipeline_mode = #tpu.pipeline_mode<synchronous>, transform_indices = @transform_0, window_bounds = array<i64: 144, 2048>}, {transform_indices = @transform_1, window_bounds = array<i64: 16, 144>}, {transform_indices = @transform_2, window_bounds = array<i64: 16, 1>}, {transform_indices = @transform_3, window_bounds = array<i64: 16, 1>}, {transform_indices = @transform_4, window_bounds = array<i64: 16, 1>}, {transform_indices = @transform_5, window_bounds = array<i64: 16, 2048>}]} {
    %c0 = arith.constant 0 : index
    %c0_0 = arith.constant 0 : index
    %0 = vector.load %arg2[%c0, %c0_0] : memref<16x144xf32, #tpu.memory_space<vmem>>, vector<16x144xf32>
    %c0_1 = arith.constant 0 : index
    %c0_2 = arith.constant 0 : index
    %1 = vector.load %arg1[%c0_1, %c0_2] : memref<144x2048xf32, #tpu.memory_space<vmem>>, vector<144x2048xf32>
    %cst = arith.constant dense<0.000000e+00> : vector<16x2048xf32>
    %2 = tpu.matmul %0, %1, %cst {dimension_numbers = #tpu.dot_dimension_numbers<[1], [0], [0], [1], [0, 0, 1, 1], [], []>} : vector<16x144xf32>, vector<144x2048xf32>, vector<16x2048xf32> -> vector<16x2048xf32>
    %c0_3 = arith.constant 0 : index
    %c0_4 = arith.constant 0 : index
    %3 = vector.load %arg3[%c0_3, %c0_4] : memref<16x1xf32, #tpu.memory_space<vmem>>, vector<16x1xf32>
    %4 = vector.broadcast %3 : vector<16x1xf32> to vector<16x2048xf32>
    %5 = arith.addf %2, %4 : vector<16x2048xf32>
    %cst_5 = arith.constant dense<0.000000e+00> : vector<16xf32>
    %6 = vector.multi_reduction <add>, %5, %cst_5 [1] : vector<16x2048xf32> to vector<16xf32>
    %7 = vector.shape_cast %6 : vector<16xf32> to vector<16x1xf32>
    %cst_6 = arith.constant 2.048000e+03 : f32
    %8 = vector.broadcast %cst_6 : f32 to vector<16x1xf32>
    %9 = arith.divf %7, %8 : vector<16x1xf32>
    %10 = vector.broadcast %9 : vector<16x1xf32> to vector<16x2048xf32>
    %11 = arith.subf %5, %10 : vector<16x2048xf32>
    %12 = arith.mulf %11, %11 : vector<16x2048xf32>
    %cst_7 = arith.constant dense<0.000000e+00> : vector<16xf32>
    %13 = vector.multi_reduction <add>, %12, %cst_7 [1] : vector<16x2048xf32> to vector<16xf32>
    %14 = vector.shape_cast %13 : vector<16xf32> to vector<16x1xf32>
    %cst_8 = arith.constant 2.048000e+03 : f32
    %15 = vector.broadcast %cst_8 : f32 to vector<16x1xf32>
    %16 = arith.divf %14, %15 : vector<16x1xf32>
    %17 = vector.broadcast %9 : vector<16x1xf32> to vector<16x2048xf32>
    %18 = arith.subf %5, %17 : vector<16x2048xf32>
    %cst_9 = arith.constant 9.99999974E-6 : f32
    %19 = vector.broadcast %cst_9 : f32 to vector<16x1xf32>
    %20 = arith.addf %16, %19 : vector<16x1xf32>
    %21 = math.rsqrt %20 : vector<16x1xf32>
    %22 = vector.broadcast %21 : vector<16x1xf32> to vector<16x2048xf32>
    %23 = arith.mulf %18, %22 : vector<16x2048xf32>
    %c0_10 = arith.constant 0 : index
    %c0_11 = arith.constant 0 : index
    %24 = vector.load %arg4[%c0_10, %c0_11] : memref<16x1xf32, #tpu.memory_space<vmem>>, vector<16x1xf32>
    %25 = vector.broadcast %24 : vector<16x1xf32> to vector<16x2048xf32>
    %26 = arith.mulf %23, %25 : vector<16x2048xf32>
    %c0_12 = arith.constant 0 : index
    %c0_13 = arith.constant 0 : index
    %27 = vector.load %arg5[%c0_12, %c0_13] : memref<16x1xf32, #tpu.memory_space<vmem>>, vector<16x1xf32>
    %28 = vector.broadcast %27 : vector<16x1xf32> to vector<16x2048xf32>
    %29 = arith.addf %26, %28 : vector<16x2048xf32>
    %cst_14 = arith.constant 0.000000e+00 : f32
    %30 = vector.broadcast %cst_14 : f32 to vector<16x2048xf32>
    %31 = arith.maximumf %29, %30 : vector<16x2048xf32>
    %c0_15 = arith.constant 0 : index
    %c0_16 = arith.constant 0 : index
    %32 = vector.load %arg6[%c0_15, %c0_16] : memref<16x2048xf32, #tpu.memory_space<vmem>>, vector<16x2048xf32>
    tpu.vector_store %arg6[%c0_15, %c0_16], %31 {strides = array<i32>} : memref<16x2048xf32, #tpu.memory_space<vmem>>, vector<16x2048xf32>,
    return
  }
  func.func @transform_0(%arg0: i32) -> (i32, i32) {
    %c0_i32 = arith.constant 0 : i32
    %c0_i32_0 = arith.constant 0 : i32
    %c0_i32_1 = arith.constant 0 : i32
    return %c0_i32, %c0_i32_0 : i32, i32
  }
  func.func @transform_1(%arg0: i32) -> (i32, i32) {
    %c0_i32 = arith.constant 0 : i32
    %c0_i32_0 = arith.constant 0 : i32
    return %arg0, %c0_i32 : i32, i32
  }
  func.func @transform_2(%arg0: i32) -> (i32, i32) {
    %c0_i32 = arith.constant 0 : i32
    %c0_i32_0 = arith.constant 0 : i32
    return %arg0, %c0_i32 : i32, i32
  }
  func.func @transform_3(%arg0: i32) -> (i32, i32) {
    %c0_i32 = arith.constant 0 : i32
    %c0_i32_0 = arith.constant 0 : i32
    return %arg0, %c0_i32 : i32, i32
  }
  func.func @transform_4(%arg0: i32) -> (i32, i32) {
    %c0_i32 = arith.constant 0 : i32
    %c0_i32_0 = arith.constant 0 : i32
    return %arg0, %c0_i32 : i32, i32
  }
  func.func @transform_5(%arg0: i32) -> (i32, i32) {
    %c0_i32 = arith.constant 0 : i32
    %c0_i32_0 = arith.constant 0 : i32
    return %arg0, %c0_i32 : i32, i32
  }
}

module attributes {stable_mosaic.version = 11 : i64} {
  func.func @conv_bn_relu_kernel(%arg0: i32, %arg1: memref<288x512xf32, #tpu.memory_space<vmem>>, %arg2: memref<32x288xf32, #tpu.memory_space<vmem>>, %arg3: memref<32x1xf32, #tpu.memory_space<vmem>>, %arg4: memref<32x1xf32, #tpu.memory_space<vmem>>, %arg5: memref<32x1xf32, #tpu.memory_space<vmem>>, %arg6: memref<32x512xf32, #tpu.memory_space<vmem>>) attributes {dimension_semantics = [#tpu.dimension_semantics<parallel>], iteration_bounds = array<i64: 2>, scalar_prefetch = 0 : i64, scratch_operands = 0 : i64, tpu.core_type = #tpu.core_type<tc>, window_params = [{pipeline_mode = #tpu.pipeline_mode<synchronous>, transform_indices = @transform_0, window_bounds = array<i64: 288, 512>}, {transform_indices = @transform_1, window_bounds = array<i64: 32, 288>}, {transform_indices = @transform_2, window_bounds = array<i64: 32, 1>}, {transform_indices = @transform_3, window_bounds = array<i64: 32, 1>}, {transform_indices = @transform_4, window_bounds = array<i64: 32, 1>}, {transform_indices = @transform_5, window_bounds = array<i64: 32, 512>}]} {
    %c0 = arith.constant 0 : index
    %c0_0 = arith.constant 0 : index
    %0 = vector.load %arg2[%c0, %c0_0] : memref<32x288xf32, #tpu.memory_space<vmem>>, vector<32x288xf32>
    %c0_1 = arith.constant 0 : index
    %c0_2 = arith.constant 0 : index
    %1 = vector.load %arg1[%c0_1, %c0_2] : memref<288x512xf32, #tpu.memory_space<vmem>>, vector<288x512xf32>
    %cst = arith.constant dense<0.000000e+00> : vector<32x512xf32>
    %2 = tpu.matmul %0, %1, %cst {dimension_numbers = #tpu.dot_dimension_numbers<[1], [0], [0], [1], [0, 0, 1, 1], [], []>} : vector<32x288xf32>, vector<288x512xf32>, vector<32x512xf32> -> vector<32x512xf32>
    %c0_3 = arith.constant 0 : index
    %c0_4 = arith.constant 0 : index
    %3 = vector.load %arg3[%c0_3, %c0_4] : memref<32x1xf32, #tpu.memory_space<vmem>>, vector<32x1xf32>
    %4 = vector.broadcast %3 : vector<32x1xf32> to vector<32x512xf32>
    %5 = arith.addf %2, %4 : vector<32x512xf32>
    %cst_5 = arith.constant dense<0.000000e+00> : vector<32xf32>
    %6 = vector.multi_reduction <add>, %5, %cst_5 [1] : vector<32x512xf32> to vector<32xf32>
    %7 = vector.shape_cast %6 : vector<32xf32> to vector<32x1xf32>
    %cst_6 = arith.constant 5.120000e+02 : f32
    %8 = vector.broadcast %cst_6 : f32 to vector<32x1xf32>
    %9 = arith.divf %7, %8 : vector<32x1xf32>
    %10 = vector.broadcast %9 : vector<32x1xf32> to vector<32x512xf32>
    %11 = arith.subf %5, %10 : vector<32x512xf32>
    %12 = arith.mulf %11, %11 : vector<32x512xf32>
    %cst_7 = arith.constant dense<0.000000e+00> : vector<32xf32>
    %13 = vector.multi_reduction <add>, %12, %cst_7 [1] : vector<32x512xf32> to vector<32xf32>
    %14 = vector.shape_cast %13 : vector<32xf32> to vector<32x1xf32>
    %cst_8 = arith.constant 5.120000e+02 : f32
    %15 = vector.broadcast %cst_8 : f32 to vector<32x1xf32>
    %16 = arith.divf %14, %15 : vector<32x1xf32>
    %17 = vector.broadcast %9 : vector<32x1xf32> to vector<32x512xf32>
    %18 = arith.subf %5, %17 : vector<32x512xf32>
    %cst_9 = arith.constant 9.99999974E-6 : f32
    %19 = vector.broadcast %cst_9 : f32 to vector<32x1xf32>
    %20 = arith.addf %16, %19 : vector<32x1xf32>
    %21 = math.rsqrt %20 : vector<32x1xf32>
    %22 = vector.broadcast %21 : vector<32x1xf32> to vector<32x512xf32>
    %23 = arith.mulf %18, %22 : vector<32x512xf32>
    %c0_10 = arith.constant 0 : index
    %c0_11 = arith.constant 0 : index
    %24 = vector.load %arg4[%c0_10, %c0_11] : memref<32x1xf32, #tpu.memory_space<vmem>>, vector<32x1xf32>
    %25 = vector.broadcast %24 : vector<32x1xf32> to vector<32x512xf32>
    %26 = arith.mulf %23, %25 : vector<32x512xf32>
    %c0_12 = arith.constant 0 : index
    %c0_13 = arith.constant 0 : index
    %27 = vector.load %arg5[%c0_12, %c0_13] : memref<32x1xf32, #tpu.memory_space<vmem>>, vector<32x1xf32>
    %28 = vector.broadcast %27 : vector<32x1xf32> to vector<32x512xf32>
    %29 = arith.addf %26, %28 : vector<32x512xf32>
    %cst_14 = arith.constant 0.000000e+00 : f32
    %30 = vector.broadcast %cst_14 : f32 to vector<32x512xf32>
    %31 = arith.maximumf %29, %30 : vector<32x512xf32>
    %c0_15 = arith.constant 0 : index
    %c0_16 = arith.constant 0 : index
    %32 = vector.load %arg6[%c0_15, %c0_16] : memref<32x512xf32, #tpu.memory_space<vmem>>, vector<32x512xf32>
    tpu.vector_store %arg6[%c0_15, %c0_16], %31 {strides = array<i32>} : memref<32x512xf32, #tpu.memory_space<vmem>>, vector<32x512xf32>,
    return
  }
  func.func @transform_0(%arg0: i32) -> (i32, i32) {
    %c0_i32 = arith.constant 0 : i32
    %c0_i32_0 = arith.constant 0 : i32
    %c0_i32_1 = arith.constant 0 : i32
    return %c0_i32, %c0_i32_0 : i32, i32
  }
  func.func @transform_1(%arg0: i32) -> (i32, i32) {
    %c0_i32 = arith.constant 0 : i32
    %c0_i32_0 = arith.constant 0 : i32
    return %arg0, %c0_i32 : i32, i32
  }
  func.func @transform_2(%arg0: i32) -> (i32, i32) {
    %c0_i32 = arith.constant 0 : i32
    %c0_i32_0 = arith.constant 0 : i32
    return %arg0, %c0_i32 : i32, i32
  }
  func.func @transform_3(%arg0: i32) -> (i32, i32) {
    %c0_i32 = arith.constant 0 : i32
    %c0_i32_0 = arith.constant 0 : i32
    return %arg0, %c0_i32 : i32, i32
  }
  func.func @transform_4(%arg0: i32) -> (i32, i32) {
    %c0_i32 = arith.constant 0 : i32
    %c0_i32_0 = arith.constant 0 : i32
    return %arg0, %c0_i32 : i32, i32
  }
  func.func @transform_5(%arg0: i32) -> (i32, i32) {
    %c0_i32 = arith.constant 0 : i32
    %c0_i32_0 = arith.constant 0 : i32
    return %arg0, %c0_i32 : i32, i32
  }
}

module attributes {stable_mosaic.version = 11 : i64} {
  func.func @conv_bn_relu_kernel(%arg0: i32, %arg1: memref<576x128xf32, #tpu.memory_space<vmem>>, %arg2: memref<32x576xf32, #tpu.memory_space<vmem>>, %arg3: memref<32x1xf32, #tpu.memory_space<vmem>>, %arg4: memref<32x1xf32, #tpu.memory_space<vmem>>, %arg5: memref<32x1xf32, #tpu.memory_space<vmem>>, %arg6: memref<32x128xf32, #tpu.memory_space<vmem>>) attributes {dimension_semantics = [#tpu.dimension_semantics<parallel>], iteration_bounds = array<i64: 2>, scalar_prefetch = 0 : i64, scratch_operands = 0 : i64, tpu.core_type = #tpu.core_type<tc>, window_params = [{pipeline_mode = #tpu.pipeline_mode<synchronous>, transform_indices = @transform_0, window_bounds = array<i64: 576, 128>}, {transform_indices = @transform_1, window_bounds = array<i64: 32, 576>}, {transform_indices = @transform_2, window_bounds = array<i64: 32, 1>}, {transform_indices = @transform_3, window_bounds = array<i64: 32, 1>}, {transform_indices = @transform_4, window_bounds = array<i64: 32, 1>}, {transform_indices = @transform_5, window_bounds = array<i64: 32, 128>}]} {
    %c0 = arith.constant 0 : index
    %c0_0 = arith.constant 0 : index
    %0 = vector.load %arg2[%c0, %c0_0] : memref<32x576xf32, #tpu.memory_space<vmem>>, vector<32x576xf32>
    %c0_1 = arith.constant 0 : index
    %c0_2 = arith.constant 0 : index
    %1 = vector.load %arg1[%c0_1, %c0_2] : memref<576x128xf32, #tpu.memory_space<vmem>>, vector<576x128xf32>
    %cst = arith.constant dense<0.000000e+00> : vector<32x128xf32>
    %2 = tpu.matmul %0, %1, %cst {dimension_numbers = #tpu.dot_dimension_numbers<[1], [0], [0], [1], [0, 0, 1, 1], [], []>} : vector<32x576xf32>, vector<576x128xf32>, vector<32x128xf32> -> vector<32x128xf32>
    %c0_3 = arith.constant 0 : index
    %c0_4 = arith.constant 0 : index
    %3 = vector.load %arg3[%c0_3, %c0_4] : memref<32x1xf32, #tpu.memory_space<vmem>>, vector<32x1xf32>
    %4 = vector.broadcast %3 : vector<32x1xf32> to vector<32x128xf32>
    %5 = arith.addf %2, %4 : vector<32x128xf32>
    %cst_5 = arith.constant dense<0.000000e+00> : vector<32xf32>
    %6 = vector.multi_reduction <add>, %5, %cst_5 [1] : vector<32x128xf32> to vector<32xf32>
    %7 = vector.shape_cast %6 : vector<32xf32> to vector<32x1xf32>
    %cst_6 = arith.constant 1.280000e+02 : f32
    %8 = vector.broadcast %cst_6 : f32 to vector<32x1xf32>
    %9 = arith.divf %7, %8 : vector<32x1xf32>
    %10 = vector.broadcast %9 : vector<32x1xf32> to vector<32x128xf32>
    %11 = arith.subf %5, %10 : vector<32x128xf32>
    %12 = arith.mulf %11, %11 : vector<32x128xf32>
    %cst_7 = arith.constant dense<0.000000e+00> : vector<32xf32>
    %13 = vector.multi_reduction <add>, %12, %cst_7 [1] : vector<32x128xf32> to vector<32xf32>
    %14 = vector.shape_cast %13 : vector<32xf32> to vector<32x1xf32>
    %cst_8 = arith.constant 1.280000e+02 : f32
    %15 = vector.broadcast %cst_8 : f32 to vector<32x1xf32>
    %16 = arith.divf %14, %15 : vector<32x1xf32>
    %17 = vector.broadcast %9 : vector<32x1xf32> to vector<32x128xf32>
    %18 = arith.subf %5, %17 : vector<32x128xf32>
    %cst_9 = arith.constant 9.99999974E-6 : f32
    %19 = vector.broadcast %cst_9 : f32 to vector<32x1xf32>
    %20 = arith.addf %16, %19 : vector<32x1xf32>
    %21 = math.rsqrt %20 : vector<32x1xf32>
    %22 = vector.broadcast %21 : vector<32x1xf32> to vector<32x128xf32>
    %23 = arith.mulf %18, %22 : vector<32x128xf32>
    %c0_10 = arith.constant 0 : index
    %c0_11 = arith.constant 0 : index
    %24 = vector.load %arg4[%c0_10, %c0_11] : memref<32x1xf32, #tpu.memory_space<vmem>>, vector<32x1xf32>
    %25 = vector.broadcast %24 : vector<32x1xf32> to vector<32x128xf32>
    %26 = arith.mulf %23, %25 : vector<32x128xf32>
    %c0_12 = arith.constant 0 : index
    %c0_13 = arith.constant 0 : index
    %27 = vector.load %arg5[%c0_12, %c0_13] : memref<32x1xf32, #tpu.memory_space<vmem>>, vector<32x1xf32>
    %28 = vector.broadcast %27 : vector<32x1xf32> to vector<32x128xf32>
    %29 = arith.addf %26, %28 : vector<32x128xf32>
    %cst_14 = arith.constant 0.000000e+00 : f32
    %30 = vector.broadcast %cst_14 : f32 to vector<32x128xf32>
    %31 = arith.maximumf %29, %30 : vector<32x128xf32>
    %c0_15 = arith.constant 0 : index
    %c0_16 = arith.constant 0 : index
    %32 = vector.load %arg6[%c0_15, %c0_16] : memref<32x128xf32, #tpu.memory_space<vmem>>, vector<32x128xf32>
    tpu.vector_store %arg6[%c0_15, %c0_16], %31 {strides = array<i32>} : memref<32x128xf32, #tpu.memory_space<vmem>>, vector<32x128xf32>,
    return
  }
  func.func @transform_0(%arg0: i32) -> (i32, i32) {
    %c0_i32 = arith.constant 0 : i32
    %c0_i32_0 = arith.constant 0 : i32
    %c0_i32_1 = arith.constant 0 : i32
    return %c0_i32, %c0_i32_0 : i32, i32
  }
  func.func @transform_1(%arg0: i32) -> (i32, i32) {
    %c0_i32 = arith.constant 0 : i32
    %c0_i32_0 = arith.constant 0 : i32
    return %arg0, %c0_i32 : i32, i32
  }
  func.func @transform_2(%arg0: i32) -> (i32, i32) {
    %c0_i32 = arith.constant 0 : i32
    %c0_i32_0 = arith.constant 0 : i32
    return %arg0, %c0_i32 : i32, i32
  }
  func.func @transform_3(%arg0: i32) -> (i32, i32) {
    %c0_i32 = arith.constant 0 : i32
    %c0_i32_0 = arith.constant 0 : i32
    return %arg0, %c0_i32 : i32, i32
  }
  func.func @transform_4(%arg0: i32) -> (i32, i32) {
    %c0_i32 = arith.constant 0 : i32
    %c0_i32_0 = arith.constant 0 : i32
    return %arg0, %c0_i32 : i32, i32
  }
  func.func @transform_5(%arg0: i32) -> (i32, i32) {
    %c0_i32 = arith.constant 0 : i32
    %c0_i32_0 = arith.constant 0 : i32
    return %arg0, %c0_i32 : i32, i32
  }
}

module attributes {stable_mosaic.version = 11 : i64} {
  func.func @tail_kernel(%arg0: memref<8x1024xf32, #tpu.memory_space<vmem>>, %arg1: memref<1024x256xf32, #tpu.memory_space<vmem>>, %arg2: memref<1x256xf32, #tpu.memory_space<vmem>>, %arg3: memref<1x256xf32, #tpu.memory_space<vmem>>, %arg4: memref<1x256xf32, #tpu.memory_space<vmem>>, %arg5: memref<256x256xf32, #tpu.memory_space<vmem>>, %arg6: memref<1x256xf32, #tpu.memory_space<vmem>>, %arg7: memref<256x768xf32, #tpu.memory_space<vmem>>, %arg8: memref<1x768xf32, #tpu.memory_space<vmem>>, %arg9: memref<256x768xf32, #tpu.memory_space<vmem>>, %arg10: memref<1x768xf32, #tpu.memory_space<vmem>>, %arg11: memref<1x256xf32, #tpu.memory_space<vmem>>, %arg12: memref<1x256xf32, #tpu.memory_space<vmem>>, %arg13: memref<256x6xf32, #tpu.memory_space<vmem>>, %arg14: memref<1x6xf32, #tpu.memory_space<vmem>>, %arg15: memref<2x6xf32, #tpu.memory_space<vmem>>, %arg16: memref<2x256xf32, #tpu.memory_space<vmem>>) attributes {dimension_semantics = [], scalar_prefetch = 0 : i64, scratch_operands = 0 : i64, tpu.core_type = #tpu.core_type<tc>} {
    %c0 = arith.constant 0 : index
    %c0_0 = arith.constant 0 : index
    %0 = vector.load %arg0[%c0, %c0_0] : memref<8x1024xf32, #tpu.memory_space<vmem>>, vector<8x1024xf32>
    %c0_1 = arith.constant 0 : index
    %c0_2 = arith.constant 0 : index
    %1 = vector.load %arg1[%c0_1, %c0_2] : memref<1024x256xf32, #tpu.memory_space<vmem>>, vector<1024x256xf32>
    %cst = arith.constant dense<0.000000e+00> : vector<8x256xf32>
    %2 = tpu.matmul %0, %1, %cst {dimension_numbers = #tpu.dot_dimension_numbers<[1], [0], [0], [1], [0, 0, 1, 1], [], []>} : vector<8x1024xf32>, vector<1024x256xf32>, vector<8x256xf32> -> vector<8x256xf32>
    %c0_3 = arith.constant 0 : index
    %c0_4 = arith.constant 0 : index
    %3 = vector.load %arg2[%c0_3, %c0_4] : memref<1x256xf32, #tpu.memory_space<vmem>>, vector<1x256xf32>
    %4 = vector.broadcast %3 : vector<1x256xf32> to vector<8x256xf32>
    %5 = arith.addf %2, %4 : vector<8x256xf32>
    %cst_5 = arith.constant dense<0.000000e+00> : vector<256xf32>
    %6 = vector.multi_reduction <add>, %5, %cst_5 [0] : vector<8x256xf32> to vector<256xf32>
    %7 = vector.shape_cast %6 : vector<256xf32> to vector<1x256xf32>
    %cst_6 = arith.constant 8.000000e+00 : f32
    %8 = vector.broadcast %cst_6 : f32 to vector<1x256xf32>
    %9 = arith.divf %7, %8 : vector<1x256xf32>
    %10 = vector.broadcast %9 : vector<1x256xf32> to vector<8x256xf32>
    %11 = arith.subf %5, %10 : vector<8x256xf32>
    %12 = arith.mulf %11, %11 : vector<8x256xf32>
    %cst_7 = arith.constant dense<0.000000e+00> : vector<256xf32>
    %13 = vector.multi_reduction <add>, %12, %cst_7 [0] : vector<8x256xf32> to vector<256xf32>
    %14 = vector.shape_cast %13 : vector<256xf32> to vector<1x256xf32>
    %cst_8 = arith.constant 8.000000e+00 : f32
    %15 = vector.broadcast %cst_8 : f32 to vector<1x256xf32>
    %16 = arith.divf %14, %15 : vector<1x256xf32>
    %17 = vector.broadcast %9 : vector<1x256xf32> to vector<8x256xf32>
    %18 = arith.subf %5, %17 : vector<8x256xf32>
    %cst_9 = arith.constant 9.99999974E-6 : f32
    %19 = vector.broadcast %cst_9 : f32 to vector<1x256xf32>
    %20 = arith.addf %16, %19 : vector<1x256xf32>
    %21 = math.rsqrt %20 : vector<1x256xf32>
    %22 = vector.broadcast %21 : vector<1x256xf32> to vector<8x256xf32>
    %23 = arith.mulf %18, %22 : vector<8x256xf32>
    %c0_10 = arith.constant 0 : index
    %c0_11 = arith.constant 0 : index
    %24 = vector.load %arg3[%c0_10, %c0_11] : memref<1x256xf32, #tpu.memory_space<vmem>>, vector<1x256xf32>
    %25 = vector.broadcast %24 : vector<1x256xf32> to vector<8x256xf32>
    %26 = arith.mulf %23, %25 : vector<8x256xf32>
    %c0_12 = arith.constant 0 : index
    %c0_13 = arith.constant 0 : index
    %27 = vector.load %arg4[%c0_12, %c0_13] : memref<1x256xf32, #tpu.memory_space<vmem>>, vector<1x256xf32>
    %28 = vector.broadcast %27 : vector<1x256xf32> to vector<8x256xf32>
    %29 = arith.addf %26, %28 : vector<8x256xf32>
    %cst_14 = arith.constant 0.000000e+00 : f32
    %30 = vector.broadcast %cst_14 : f32 to vector<8x256xf32>
    %31 = arith.maximumf %29, %30 : vector<8x256xf32>
    %c0_15 = arith.constant 0 : index
    %c0_16 = arith.constant 0 : index
    %32 = vector.load %arg5[%c0_15, %c0_16] : memref<256x256xf32, #tpu.memory_space<vmem>>, vector<256x256xf32>
    %cst_17 = arith.constant dense<0.000000e+00> : vector<8x256xf32>
    %33 = tpu.matmul %31, %32, %cst_17 {dimension_numbers = #tpu.dot_dimension_numbers<[1], [0], [0], [1], [0, 0, 1, 1], [], []>} : vector<8x256xf32>, vector<256x256xf32>, vector<8x256xf32> -> vector<8x256xf32>
    %c0_18 = arith.constant 0 : index
    %c0_19 = arith.constant 0 : index
    %34 = vector.load %arg6[%c0_18, %c0_19] : memref<1x256xf32, #tpu.memory_space<vmem>>, vector<1x256xf32>
    %35 = vector.broadcast %34 : vector<1x256xf32> to vector<8x256xf32>
    %36 = arith.addf %33, %35 : vector<8x256xf32>
    %c0_20 = arith.constant 0 : index
    %c0_21 = arith.constant 0 : index
    %37 = vector.load %arg7[%c0_20, %c0_21] : memref<256x768xf32, #tpu.memory_space<vmem>>, vector<256x768xf32>
    %cst_22 = arith.constant dense<0.000000e+00> : vector<8x768xf32>
    %38 = tpu.matmul %36, %37, %cst_22 {dimension_numbers = #tpu.dot_dimension_numbers<[1], [0], [0], [1], [0, 0, 1, 1], [], []>} : vector<8x256xf32>, vector<256x768xf32>, vector<8x768xf32> -> vector<8x768xf32>
    %c0_23 = arith.constant 0 : index
    %c0_24 = arith.constant 0 : index
    %39 = vector.load %arg8[%c0_23, %c0_24] : memref<1x768xf32, #tpu.memory_space<vmem>>, vector<1x768xf32>
    %40 = vector.broadcast %39 : vector<1x768xf32> to vector<8x768xf32>
    %41 = arith.addf %38, %40 : vector<8x768xf32>
    %cst_25 = arith.constant 0.000000e+00 : f32
    %42 = vector.broadcast %cst_25 : f32 to vector<2x256xf32>
    %43 = vector.extract_strided_slice %41 {offsets = [0, 0], sizes = [2, 768], strides = [1, 1]} : vector<8x768xf32> to vector<2x768xf32>
    %c0_26 = arith.constant 0 : index
    %c0_27 = arith.constant 0 : index
    %44 = vector.load %arg9[%c0_26, %c0_27] : memref<256x768xf32, #tpu.memory_space<vmem>>, vector<256x768xf32>
    %cst_28 = arith.constant dense<0.000000e+00> : vector<2x768xf32>
    %45 = tpu.matmul %42, %44, %cst_28 {dimension_numbers = #tpu.dot_dimension_numbers<[1], [0], [0], [1], [0, 0, 1, 1], [], []>} : vector<2x256xf32>, vector<256x768xf32>, vector<2x768xf32> -> vector<2x768xf32>
    %c0_29 = arith.constant 0 : index
    %c0_30 = arith.constant 0 : index
    %46 = vector.load %arg10[%c0_29, %c0_30] : memref<1x768xf32, #tpu.memory_space<vmem>>, vector<1x768xf32>
    %47 = vector.broadcast %46 : vector<1x768xf32> to vector<2x768xf32>
    %48 = arith.addf %45, %47 : vector<2x768xf32>
    %49 = vector.extract_strided_slice %43 {offsets = [0, 0], sizes = [2, 256], strides = [1, 1]} : vector<2x768xf32> to vector<2x256xf32>
    %50 = vector.extract_strided_slice %48 {offsets = [0, 0], sizes = [2, 256], strides = [1, 1]} : vector<2x768xf32> to vector<2x256xf32>
    %51 = arith.addf %49, %50 : vector<2x256xf32>
    %52 = arith.negf %51 : vector<2x256xf32>
    %53 = math.exp %52 : vector<2x256xf32>
    %cst_31 = arith.constant 1.000000e+00 : f32
    %54 = vector.broadcast %cst_31 : f32 to vector<2x256xf32>
    %55 = arith.addf %54, %53 : vector<2x256xf32>
    %56 = arith.divf %54, %55 : vector<2x256xf32>
    %57 = vector.extract_strided_slice %43 {offsets = [0, 256], sizes = [2, 256], strides = [1, 1]} : vector<2x768xf32> to vector<2x256xf32>
    %58 = vector.extract_strided_slice %48 {offsets = [0, 256], sizes = [2, 256], strides = [1, 1]} : vector<2x768xf32> to vector<2x256xf32>
    %59 = arith.addf %57, %58 : vector<2x256xf32>
    %60 = arith.negf %59 : vector<2x256xf32>
    %61 = math.exp %60 : vector<2x256xf32>
    %cst_32 = arith.constant 1.000000e+00 : f32
    %62 = vector.broadcast %cst_32 : f32 to vector<2x256xf32>
    %63 = arith.addf %62, %61 : vector<2x256xf32>
    %64 = arith.divf %62, %63 : vector<2x256xf32>
    %65 = vector.extract_strided_slice %43 {offsets = [0, 512], sizes = [2, 256], strides = [1, 1]} : vector<2x768xf32> to vector<2x256xf32>
    %66 = vector.extract_strided_slice %48 {offsets = [0, 512], sizes = [2, 256], strides = [1, 1]} : vector<2x768xf32> to vector<2x256xf32>
    %67 = arith.mulf %56, %66 : vector<2x256xf32>
    %68 = arith.addf %65, %67 : vector<2x256xf32>
    %69 = math.tanh %68 : vector<2x256xf32>
    %cst_33 = arith.constant 1.000000e+00 : f32
    %70 = vector.broadcast %cst_33 : f32 to vector<2x256xf32>
    %71 = arith.subf %70, %64 : vector<2x256xf32>
    %72 = arith.mulf %71, %69 : vector<2x256xf32>
    %73 = arith.mulf %64, %42 : vector<2x256xf32>
    %74 = arith.addf %72, %73 : vector<2x256xf32>
    %75 = vector.extract_strided_slice %41 {offsets = [2, 0], sizes = [2, 768], strides = [1, 1]} : vector<8x768xf32> to vector<2x768xf32>
    %c0_34 = arith.constant 0 : index
    %c0_35 = arith.constant 0 : index
    %76 = vector.load %arg9[%c0_34, %c0_35] : memref<256x768xf32, #tpu.memory_space<vmem>>, vector<256x768xf32>
    %cst_36 = arith.constant dense<0.000000e+00> : vector<2x768xf32>
    %77 = tpu.matmul %74, %76, %cst_36 {dimension_numbers = #tpu.dot_dimension_numbers<[1], [0], [0], [1], [0, 0, 1, 1], [], []>} : vector<2x256xf32>, vector<256x768xf32>, vector<2x768xf32> -> vector<2x768xf32>
    %c0_37 = arith.constant 0 : index
    %c0_38 = arith.constant 0 : index
    %78 = vector.load %arg10[%c0_37, %c0_38] : memref<1x768xf32, #tpu.memory_space<vmem>>, vector<1x768xf32>
    %79 = vector.broadcast %78 : vector<1x768xf32> to vector<2x768xf32>
    %80 = arith.addf %77, %79 : vector<2x768xf32>
    %81 = vector.extract_strided_slice %75 {offsets = [0, 0], sizes = [2, 256], strides = [1, 1]} : vector<2x768xf32> to vector<2x256xf32>
    %82 = vector.extract_strided_slice %80 {offsets = [0, 0], sizes = [2, 256], strides = [1, 1]} : vector<2x768xf32> to vector<2x256xf32>
    %83 = arith.addf %81, %82 : vector<2x256xf32>
    %84 = arith.negf %83 : vector<2x256xf32>
    %85 = math.exp %84 : vector<2x256xf32>
    %cst_39 = arith.constant 1.000000e+00 : f32
    %86 = vector.broadcast %cst_39 : f32 to vector<2x256xf32>
    %87 = arith.addf %86, %85 : vector<2x256xf32>
    %88 = arith.divf %86, %87 : vector<2x256xf32>
    %89 = vector.extract_strided_slice %75 {offsets = [0, 256], sizes = [2, 256], strides = [1, 1]} : vector<2x768xf32> to vector<2x256xf32>
    %90 = vector.extract_strided_slice %80 {offsets = [0, 256], sizes = [2, 256], strides = [1, 1]} : vector<2x768xf32> to vector<2x256xf32>
    %91 = arith.addf %89, %90 : vector<2x256xf32>
    %92 = arith.negf %91 : vector<2x256xf32>
    %93 = math.exp %92 : vector<2x256xf32>
    %cst_40 = arith.constant 1.000000e+00 : f32
    %94 = vector.broadcast %cst_40 : f32 to vector<2x256xf32>
    %95 = arith.addf %94, %93 : vector<2x256xf32>
    %96 = arith.divf %94, %95 : vector<2x256xf32>
    %97 = vector.extract_strided_slice %75 {offsets = [0, 512], sizes = [2, 256], strides = [1, 1]} : vector<2x768xf32> to vector<2x256xf32>
    %98 = vector.extract_strided_slice %80 {offsets = [0, 512], sizes = [2, 256], strides = [1, 1]} : vector<2x768xf32> to vector<2x256xf32>
    %99 = arith.mulf %88, %98 : vector<2x256xf32>
    %100 = arith.addf %97, %99 : vector<2x256xf32>
    %101 = math.tanh %100 : vector<2x256xf32>
    %cst_41 = arith.constant 1.000000e+00 : f32
    %102 = vector.broadcast %cst_41 : f32 to vector<2x256xf32>
    %103 = arith.subf %102, %96 : vector<2x256xf32>
    %104 = arith.mulf %103, %101 : vector<2x256xf32>
    %105 = arith.mulf %96, %74 : vector<2x256xf32>
    %106 = arith.addf %104, %105 : vector<2x256xf32>
    %107 = vector.extract_strided_slice %41 {offsets = [4, 0], sizes = [2, 768], strides = [1, 1]} : vector<8x768xf32> to vector<2x768xf32>
    %c0_42 = arith.constant 0 : index
    %c0_43 = arith.constant 0 : index
    %108 = vector.load %arg9[%c0_42, %c0_43] : memref<256x768xf32, #tpu.memory_space<vmem>>, vector<256x768xf32>
    %cst_44 = arith.constant dense<0.000000e+00> : vector<2x768xf32>
    %109 = tpu.matmul %106, %108, %cst_44 {dimension_numbers = #tpu.dot_dimension_numbers<[1], [0], [0], [1], [0, 0, 1, 1], [], []>} : vector<2x256xf32>, vector<256x768xf32>, vector<2x768xf32> -> vector<2x768xf32>
    %c0_45 = arith.constant 0 : index
    %c0_46 = arith.constant 0 : index
    %110 = vector.load %arg10[%c0_45, %c0_46] : memref<1x768xf32, #tpu.memory_space<vmem>>, vector<1x768xf32>
    %111 = vector.broadcast %110 : vector<1x768xf32> to vector<2x768xf32>
    %112 = arith.addf %109, %111 : vector<2x768xf32>
    %113 = vector.extract_strided_slice %107 {offsets = [0, 0], sizes = [2, 256], strides = [1, 1]} : vector<2x768xf32> to vector<2x256xf32>
    %114 = vector.extract_strided_slice %112 {offsets = [0, 0], sizes = [2, 256], strides = [1, 1]} : vector<2x768xf32> to vector<2x256xf32>
    %115 = arith.addf %113, %114 : vector<2x256xf32>
    %116 = arith.negf %115 : vector<2x256xf32>
    %117 = math.exp %116 : vector<2x256xf32>
    %cst_47 = arith.constant 1.000000e+00 : f32
    %118 = vector.broadcast %cst_47 : f32 to vector<2x256xf32>
    %119 = arith.addf %118, %117 : vector<2x256xf32>
    %120 = arith.divf %118, %119 : vector<2x256xf32>
    %121 = vector.extract_strided_slice %107 {offsets = [0, 256], sizes = [2, 256], strides = [1, 1]} : vector<2x768xf32> to vector<2x256xf32>
    %122 = vector.extract_strided_slice %112 {offsets = [0, 256], sizes = [2, 256], strides = [1, 1]} : vector<2x768xf32> to vector<2x256xf32>
    %123 = arith.addf %121, %122 : vector<2x256xf32>
    %124 = arith.negf %123 : vector<2x256xf32>
    %125 = math.exp %124 : vector<2x256xf32>
    %cst_48 = arith.constant 1.000000e+00 : f32
    %126 = vector.broadcast %cst_48 : f32 to vector<2x256xf32>
    %127 = arith.addf %126, %125 : vector<2x256xf32>
    %128 = arith.divf %126, %127 : vector<2x256xf32>
    %129 = vector.extract_strided_slice %107 {offsets = [0, 512], sizes = [2, 256], strides = [1, 1]} : vector<2x768xf32> to vector<2x256xf32>
    %130 = vector.extract_strided_slice %112 {offsets = [0, 512], sizes = [2, 256], strides = [1, 1]} : vector<2x768xf32> to vector<2x256xf32>
    %131 = arith.mulf %120, %130 : vector<2x256xf32>
    %132 = arith.addf %129, %131 : vector<2x256xf32>
    %133 = math.tanh %132 : vector<2x256xf32>
    %cst_49 = arith.constant 1.000000e+00 : f32
    %134 = vector.broadcast %cst_49 : f32 to vector<2x256xf32>
    %135 = arith.subf %134, %128 : vector<2x256xf32>
    %136 = arith.mulf %135, %133 : vector<2x256xf32>
    %137 = arith.mulf %128, %106 : vector<2x256xf32>
    %138 = arith.addf %136, %137 : vector<2x256xf32>
    %139 = vector.extract_strided_slice %41 {offsets = [6, 0], sizes = [2, 768], strides = [1, 1]} : vector<8x768xf32> to vector<2x768xf32>
    %c0_50 = arith.constant 0 : index
    %c0_51 = arith.constant 0 : index
    %140 = vector.load %arg9[%c0_50, %c0_51] : memref<256x768xf32, #tpu.memory_space<vmem>>, vector<256x768xf32>
    %cst_52 = arith.constant dense<0.000000e+00> : vector<2x768xf32>
    %141 = tpu.matmul %138, %140, %cst_52 {dimension_numbers = #tpu.dot_dimension_numbers<[1], [0], [0], [1], [0, 0, 1, 1], [], []>} : vector<2x256xf32>, vector<256x768xf32>, vector<2x768xf32> -> vector<2x768xf32>
    %c0_53 = arith.constant 0 : index
    %c0_54 = arith.constant 0 : index
    %142 = vector.load %arg10[%c0_53, %c0_54] : memref<1x768xf32, #tpu.memory_space<vmem>>, vector<1x768xf32>
    %143 = vector.broadcast %142 : vector<1x768xf32> to vector<2x768xf32>
    %144 = arith.addf %141, %143 : vector<2x768xf32>
    %145 = vector.extract_strided_slice %139 {offsets = [0, 0], sizes = [2, 256], strides = [1, 1]} : vector<2x768xf32> to vector<2x256xf32>
    %146 = vector.extract_strided_slice %144 {offsets = [0, 0], sizes = [2, 256], strides = [1, 1]} : vector<2x768xf32> to vector<2x256xf32>
    %147 = arith.addf %145, %146 : vector<2x256xf32>
    %148 = arith.negf %147 : vector<2x256xf32>
    %149 = math.exp %148 : vector<2x256xf32>
    %cst_55 = arith.constant 1.000000e+00 : f32
    %150 = vector.broadcast %cst_55 : f32 to vector<2x256xf32>
    %151 = arith.addf %150, %149 : vector<2x256xf32>
    %152 = arith.divf %150, %151 : vector<2x256xf32>
    %153 = vector.extract_strided_slice %139 {offsets = [0, 256], sizes = [2, 256], strides = [1, 1]} : vector<2x768xf32> to vector<2x256xf32>
    %154 = vector.extract_strided_slice %144 {offsets = [0, 256], sizes = [2, 256], strides = [1, 1]} : vector<2x768xf32> to vector<2x256xf32>
    %155 = arith.addf %153, %154 : vector<2x256xf32>
    %156 = arith.negf %155 : vector<2x256xf32>
    %157 = math.exp %156 : vector<2x256xf32>
    %cst_56 = arith.constant 1.000000e+00 : f32
    %158 = vector.broadcast %cst_56 : f32 to vector<2x256xf32>
    %159 = arith.addf %158, %157 : vector<2x256xf32>
    %160 = arith.divf %158, %159 : vector<2x256xf32>
    %161 = vector.extract_strided_slice %139 {offsets = [0, 512], sizes = [2, 256], strides = [1, 1]} : vector<2x768xf32> to vector<2x256xf32>
    %162 = vector.extract_strided_slice %144 {offsets = [0, 512], sizes = [2, 256], strides = [1, 1]} : vector<2x768xf32> to vector<2x256xf32>
    %163 = arith.mulf %152, %162 : vector<2x256xf32>
    %164 = arith.addf %161, %163 : vector<2x256xf32>
    %165 = math.tanh %164 : vector<2x256xf32>
    %cst_57 = arith.constant 1.000000e+00 : f32
    %166 = vector.broadcast %cst_57 : f32 to vector<2x256xf32>
    %167 = arith.subf %166, %160 : vector<2x256xf32>
    %168 = arith.mulf %167, %165 : vector<2x256xf32>
    %169 = arith.mulf %160, %138 : vector<2x256xf32>
    %170 = arith.addf %168, %169 : vector<2x256xf32>
    %c0_58 = arith.constant 0 : index
    %c0_59 = arith.constant 0 : index
    %171 = vector.load %arg16[%c0_58, %c0_59] : memref<2x256xf32, #tpu.memory_space<vmem>>, vector<2x256xf32>
    tpu.vector_store %arg16[%c0_58, %c0_59], %170 {strides = array<i32>} : memref<2x256xf32, #tpu.memory_space<vmem>>, vector<2x256xf32>,
    %cst_60 = arith.constant dense<0.000000e+00> : vector<256xf32>
    %172 = vector.multi_reduction <add>, %170, %cst_60 [0] : vector<2x256xf32> to vector<256xf32>
    %173 = vector.shape_cast %172 : vector<256xf32> to vector<1x256xf32>
    %cst_61 = arith.constant 2.000000e+00 : f32
    %174 = vector.broadcast %cst_61 : f32 to vector<1x256xf32>
    %175 = arith.divf %173, %174 : vector<1x256xf32>
    %176 = vector.broadcast %175 : vector<1x256xf32> to vector<2x256xf32>
    %177 = arith.subf %170, %176 : vector<2x256xf32>
    %178 = arith.mulf %177, %177 : vector<2x256xf32>
    %cst_62 = arith.constant dense<0.000000e+00> : vector<256xf32>
    %179 = vector.multi_reduction <add>, %178, %cst_62 [0] : vector<2x256xf32> to vector<256xf32>
    %180 = vector.shape_cast %179 : vector<256xf32> to vector<1x256xf32>
    %cst_63 = arith.constant 2.000000e+00 : f32
    %181 = vector.broadcast %cst_63 : f32 to vector<1x256xf32>
    %182 = arith.divf %180, %181 : vector<1x256xf32>
    %183 = vector.broadcast %175 : vector<1x256xf32> to vector<2x256xf32>
    %184 = arith.subf %170, %183 : vector<2x256xf32>
    %cst_64 = arith.constant 9.99999974E-6 : f32
    %185 = vector.broadcast %cst_64 : f32 to vector<1x256xf32>
    %186 = arith.addf %182, %185 : vector<1x256xf32>
    %187 = math.rsqrt %186 : vector<1x256xf32>
    %188 = vector.broadcast %187 : vector<1x256xf32> to vector<2x256xf32>
    %189 = arith.mulf %184, %188 : vector<2x256xf32>
    %c0_65 = arith.constant 0 : index
    %c0_66 = arith.constant 0 : index
    %190 = vector.load %arg11[%c0_65, %c0_66] : memref<1x256xf32, #tpu.memory_space<vmem>>, vector<1x256xf32>
    %191 = vector.broadcast %190 : vector<1x256xf32> to vector<2x256xf32>
    %192 = arith.mulf %189, %191 : vector<2x256xf32>
    %c0_67 = arith.constant 0 : index
    %c0_68 = arith.constant 0 : index
    %193 = vector.load %arg12[%c0_67, %c0_68] : memref<1x256xf32, #tpu.memory_space<vmem>>, vector<1x256xf32>
    %194 = vector.broadcast %193 : vector<1x256xf32> to vector<2x256xf32>
    %195 = arith.addf %192, %194 : vector<2x256xf32>
    %c0_69 = arith.constant 0 : index
    %c0_70 = arith.constant 0 : index
    %196 = vector.load %arg13[%c0_69, %c0_70] : memref<256x6xf32, #tpu.memory_space<vmem>>, vector<256x6xf32>
    %cst_71 = arith.constant dense<0.000000e+00> : vector<2x6xf32>
    %197 = tpu.matmul %195, %196, %cst_71 {dimension_numbers = #tpu.dot_dimension_numbers<[1], [0], [0], [1], [0, 0, 1, 1], [], []>} : vector<2x256xf32>, vector<256x6xf32>, vector<2x6xf32> -> vector<2x6xf32>
    %c0_72 = arith.constant 0 : index
    %c0_73 = arith.constant 0 : index
    %198 = vector.load %arg14[%c0_72, %c0_73] : memref<1x6xf32, #tpu.memory_space<vmem>>, vector<1x6xf32>
    %199 = vector.broadcast %198 : vector<1x6xf32> to vector<2x6xf32>
    %200 = arith.addf %197, %199 : vector<2x6xf32>
    %c0_74 = arith.constant 0 : index
    %c0_75 = arith.constant 0 : index
    %201 = vector.load %arg15[%c0_74, %c0_75] : memref<2x6xf32, #tpu.memory_space<vmem>>, vector<2x6xf32>
    tpu.vector_store %arg15[%c0_74, %c0_75], %200 {strides = array<i32>} : memref<2x6xf32, #tpu.memory_space<vmem>>, vector<2x6xf32>,
    return
  }
}

</mosaic_0001>

<llo_original>
// kernel: forward.5
$region0: #{forward.5}
  #allocation0 [shape = 'u32[]', space=smem, size = 0x4, offset = 0x4, fixed_abs, tag = 'smem constant byte address 0x4 - core index']
  #allocation1 [shape = 'u32[72,128]{1,0:T(1,128)}', space=vmem, size = 0x9000, scoped, tag = 'internal scratch']
  %s0 = inlined_call_operand.vmem [shape: f32[27,8192], index: 0, kind: input, shape index: {}]
  %s1 = inlined_call_operand.vmem [shape: f32[16,27], index: 1, kind: input, shape index: {}]
  %s2 = inlined_call_operand.vmem [shape: f32[16,1], index: 2, kind: input, shape index: {}, may-alias: {2,4}]
  %s3 = inlined_call_operand.vmem [shape: f32[16,1], index: 3, kind: input, shape index: {}]
  %s4 = inlined_call_operand.vmem [shape: f32[16,1], index: 4, kind: input, shape index: {}, may-alias: {2,4}]
  %s5 = inlined_call_operand.vmem [shape: f32[16,8192], index: 5, kind: output, shape index: {}]
  %s6 = sld [smem:[#allocation0]]
  $region53: #{forward.5} parent=0
    _
  %s8 = ssub.s32 1, %s6
  %s9 = scalar_select 0, %s8, %s6
  loop: start=0, step=1, limit=4
  $region2: #{forward.5} parent=0 // loop_pre_header
    _
  $region3: #{forward.5} parent=0 // loop_header
    %s11 = sphi 0, %s15
    %p12 = scmp.ge.s32.totalorder %s11, 4
    %s19 = sphi 0, %s19
    %s21 = sphi 0, %s19
    %s22 = sphi 0, %s21
    %s36 = sphi 0, %s22
    %s42 = sphi 0, %s44
    %s45 = sphi 0, %s42
    %s46 = sphi 0, %s45
    %s62 = sphi 0, %s46
    %s68 = sphi 0, %s70
    %s71 = sphi 0, %s68
    %s72 = sphi 0, %s71
    %s88 = sphi 0, %s72
    %s94 = sphi 0, %s96
    %s97 = sphi 0, %s94
    %s98 = sphi 0, %s97
    %s114 = sphi 0, %s98
    %s120 = sphi 0, %s122
    %s123 = sphi 0, %s120
    %s124 = sphi 0, %s123
    %s140 = sphi 0, %s124
    %s146 = sphi 0, %s148
    %s149 = sphi 0, %s146
    %s150 = sphi 0, %s149
    %s166 = sphi 0, %s150
  $region4: #{forward.5} parent=0 // loop_header_branch
    %14 = sbr.rel (%p12) target = $region8
  $region5: #{forward.5} parent=0 // loop_body
    %s16 = ssub.s32 %s11, 1
    %s17 = ssub.s32 %s11, 2
    %s18 = sadd.s32 %s11, 1
    %s20 = sadd.s32 %s19, 1
    %p23 = scmp.eq.s32.totalorder %s11, 1
    %p24 = scmp.ne.s32.totalorder %s19, %s21
    %p25 = scmp.eq.s32.totalorder %s11, 0
    %p26 = por %p24, %p25
    %p27 = scmp.ne.s32.totalorder %s19, %s21
    %p28 = scmp.eq.s32.totalorder %s16, 1
    %p29 = por %p27, %p28
    %p30 = scmp.ne.s32.totalorder %s21, %s22
    %p31 = scmp.eq.s32.totalorder %s16, 0
    %p32 = por %p30, %p31
    %p33 = scmp.ne.s32.totalorder %s21, %s22
    %p34 = scmp.eq.s32.totalorder %s17, 1
    %p35 = por %p33, %p34
    %p37 = scmp.ne.s32.totalorder %s22, %s36
    %p38 = scmp.eq.s32.totalorder %s17, 0
    %p39 = por %p37, %p38
    %s40 = ssub.s32 %s11, %s18
    %p41 = scmp.eq.s32.totalorder %s40, 0
    %s43 = sadd.s32 %s42, 1
    %s44 = scalar_select %p41, %s42, %s43
    %p47 = pneg %p41
    %p48 = scmp.eq.s32.totalorder %s11, 1
    %p49 = por %p47, %p48
    %p50 = scmp.ne.s32.totalorder %s42, %s45
    %p51 = scmp.eq.s32.totalorder %s11, 0
    %p52 = por %p50, %p51
    %p53 = scmp.ne.s32.totalorder %s42, %s45
    %p54 = scmp.eq.s32.totalorder %s16, 1
    %p55 = por %p53, %p54
    %p56 = scmp.ne.s32.totalorder %s45, %s46
    %p57 = scmp.eq.s32.totalorder %s16, 0
    %p58 = por %p56, %p57
    %p59 = scmp.ne.s32.totalorder %s45, %s46
    %p60 = scmp.eq.s32.totalorder %s17, 1
    %p61 = por %p59, %p60
    %p63 = scmp.ne.s32.totalorder %s46, %s62
    %p64 = scmp.eq.s32.totalorder %s17, 0
    %p65 = por %p63, %p64
    %s66 = ssub.s32 %s11, %s18
    %p67 = scmp.eq.s32.totalorder %s66, 0
    %s69 = sadd.s32 %s68, 1
    %s70 = scalar_select %p67, %s68, %s69
    %p73 = pneg %p67
    %p74 = scmp.eq.s32.totalorder %s11, 1
    %p75 = por %p73, %p74
    %p76 = scmp.ne.s32.totalorder %s68, %s71
    %p77 = scmp.eq.s32.totalorder %s11, 0
    %p78 = por %p76, %p77
    %p79 = scmp.ne.s32.totalorder %s68, %s71
    %p80 = scmp.eq.s32.totalorder %s16, 1
    %p81 = por %p79, %p80
    %p82 = scmp.ne.s32.totalorder %s71, %s72
    %p83 = scmp.eq.s32.totalorder %s16, 0
    %p84 = por %p82, %p83
    %p85 = scmp.ne.s32.totalorder %s71, %s72
    %p86 = scmp.eq.s32.totalorder %s17, 1
    %p87 = por %p85, %p86
    %p89 = scmp.ne.s32.totalorder %s72, %s88
    %p90 = scmp.eq.s32.totalorder %s17, 0
    %p91 = por %p89, %p90
    %s92 = ssub.s32 %s11, %s18
    %p93 = scmp.eq.s32.totalorder %s92, 0
    %s95 = sadd.s32 %s94, 1
    %s96 = scalar_select %p93, %s94, %s95
    %p99 = pneg %p93
    %p100 = scmp.eq.s32.totalorder %s11, 1
    %p101 = por %p99, %p100
    %p102 = scmp.ne.s32.totalorder %s94, %s97
    %p103 = scmp.eq.s32.totalorder %s11, 0
    %p104 = por %p102, %p103
    %p105 = scmp.ne.s32.totalorder %s94, %s97
    %p106 = scmp.eq.s32.totalorder %s16, 1
    %p107 = por %p105, %p106
    %p108 = scmp.ne.s32.totalorder %s97, %s98
    %p109 = scmp.eq.s32.totalorder %s16, 0
    %p110 = por %p108, %p109
    %p111 = scmp.ne.s32.totalorder %s97, %s98
    %p112 = scmp.eq.s32.totalorder %s17, 1
    %p113 = por %p111, %p112
    %p115 = scmp.ne.s32.totalorder %s98, %s114
    %p116 = scmp.eq.s32.totalorder %s17, 0
    %p117 = por %p115, %p116
    %s118 = ssub.s32 %s11, %s18
    %p119 = scmp.eq.s32.totalorder %s118, 0
    %s121 = sadd.s32 %s120, 1
    %s122 = scalar_select %p119, %s120, %s121
    %p125 = pneg %p119
    %p126 = scmp.eq.s32.totalorder %s11, 1
    %p127 = por %p125, %p126
    %p128 = scmp.ne.s32.totalorder %s120, %s123
    %p129 = scmp.eq.s32.totalorder %s11, 0
    %p130 = por %p128, %p129
    %p131 = scmp.ne.s32.totalorder %s120, %s123
    %p132 = scmp.eq.s32.totalorder %s16, 1
    %p133 = por %p131, %p132
    %p134 = scmp.ne.s32.totalorder %s123, %s124
    %p135 = scmp.eq.s32.totalorder %s16, 0
    %p136 = por %p134, %p135
    %p137 = scmp.ne.s32.totalorder %s123, %s124
    %p138 = scmp.eq.s32.totalorder %s17, 1
    %p139 = por %p137, %p138
    %p141 = scmp.ne.s32.totalorder %s124, %s140
    %p142 = scmp.eq.s32.totalorder %s17, 0
    %p143 = por %p141, %p142
    %s144 = ssub.s32 %s11, %s18
    %p145 = scmp.eq.s32.totalorder %s144, 0
    %s147 = sadd.s32 %s146, 1
    %s148 = scalar_select %p145, %s146, %s147
    %p151 = pneg %p145
    %p152 = scmp.eq.s32.totalorder %s11, 1
    %p153 = por %p151, %p152
    %p154 = scmp.ne.s32.totalorder %s146, %s149
    %p155 = scmp.eq.s32.totalorder %s11, 0
    %p156 = por %p154, %p155
    %p157 = scmp.ne.s32.totalorder %s146, %s149
    %p158 = scmp.eq.s32.totalorder %s16, 1
    %p159 = por %p157, %p158
    %p160 = scmp.ne.s32.totalorder %s149, %s150
    %p161 = scmp.eq.s32.totalorder %s16, 0
    %p162 = por %p160, %p161
    %p163 = scmp.ne.s32.totalorder %s149, %s150
    %p164 = scmp.eq.s32.totalorder %s17, 1
    %p165 = por %p163, %p164
    %p167 = scmp.ne.s32.totalorder %s150, %s166
    %p168 = scmp.eq.s32.totalorder %s17, 0
    %p169 = por %p167, %p168
    %p170 = scmp.le.s32.totalorder 1, %s11
    %p171 = scmp.lt.s32.totalorder %s11, 3
    %p172 = pnand %p170, %p171
    %p173 = pneg %p172
    // Predicated region
    $region9: #{forward.5} parent=5 // pred_check
      _
    $region10: #{forward.5} parent=5 // pred_check_branch
      %175 = sbr.rel (%p172) target = $region12
    $region11: #{forward.5} parent=5 // pred_region
      %s176 = ssub.s32 %s11, 1
      // Predicated region
      $region13: #{forward.5} parent=11 // pred_check
        %p177 = pneg %p32
      $region14: #{forward.5} parent=11 // pred_check_branch
        %179 = sbr.rel (%p177) target = $region16
      $region15: #{forward.5} parent=11 // pred_region
        _
      $region16: #{forward.5} parent=11 // pred_fallthru
        _
    $region12: #{forward.5} parent=5 // pred_fallthru
      _
    %p180 = scmp.lt.s32.totalorder %s11, 2
    // Predicated region
    $region17: #{forward.5} parent=5 // pred_check
      %p181 = pneg %p180
    $region18: #{forward.5} parent=5 // pred_check_branch
      %183 = sbr.rel (%p181) target = $region20
    $region19: #{forward.5} parent=5 // pred_region
      // Predicated region
      $region21: #{forward.5} parent=19 // pred_check
        %p184 = pneg %p52
      $region22: #{forward.5} parent=19 // pred_check_branch
        %186 = sbr.rel (%p184) target = $region24
      $region23: #{forward.5} parent=19 // pred_region
        %p187 = scmp.lt.s32.totalorder %s11, 1
        %s188 = scalar_select %p187, %s11, 1
        %s189 = smul.addr %s188, 8
        %s190 = scalar_lea.vmem %s1, %s189
      $region24: #{forward.5} parent=19 // pred_fallthru
        _
      // Predicated region
      $region25: #{forward.5} parent=19 // pred_check
        %p191 = pneg %p78
      $region26: #{forward.5} parent=19 // pred_check_branch
        %193 = sbr.rel (%p191) target = $region28
      $region27: #{forward.5} parent=19 // pred_region
        %p194 = scmp.lt.s32.totalorder %s11, 1
        %s195 = scalar_select %p194, %s11, 1
        %s196 = smul.addr %s195, 8
        %s197 = scalar_lea.vmem %s2, %s196
      $region28: #{forward.5} parent=19 // pred_fallthru
        _
      // Predicated region
      $region29: #{forward.5} parent=19 // pred_check
        %p198 = pneg %p104
      $region30: #{forward.5} parent=19 // pred_check_branch
        %200 = sbr.rel (%p198) target = $region32
      $region31: #{forward.5} parent=19 // pred_region
        %p201 = scmp.lt.s32.totalorder %s11, 1
        %s202 = scalar_select %p201, %s11, 1
        %s203 = smul.addr %s202, 8
        %s204 = scalar_lea.vmem %s3, %s203
      $region32: #{forward.5} parent=19 // pred_fallthru
        _
      // Predicated region
      $region33: #{forward.5} parent=19 // pred_check
        %p205 = pneg %p130
      $region34: #{forward.5} parent=19 // pred_check_branch
        %207 = sbr.rel (%p205) target = $region36
      $region35: #{forward.5} parent=19 // pred_region
        %p208 = scmp.lt.s32.totalorder %s11, 1
        %s209 = scalar_select %p208, %s11, 1
        %s210 = smul.addr %s209, 8
        %s211 = scalar_lea.vmem %s4, %s210
      $region36: #{forward.5} parent=19 // pred_fallthru
        _
    $region20: #{forward.5} parent=5 // pred_fallthru
      _
    %p212 = scmp.le.s32.totalorder 1, %s11
    %p213 = scmp.lt.s32.totalorder %s11, 3
    %p214 = pnand %p212, %p213
    %p215 = pneg %p214
    // Predicated region
    $region37: #{forward.5} parent=5 // pred_check
      _
    $region38: #{forward.5} parent=5 // pred_check_branch
      %217 = sbr.rel (%p214) target = $region40
    $region39: #{forward.5} parent=5 // pred_region
      %s218 = ssub.s32 %s11, 1
      %p219 = pneg %p32
      %p220 = pneg %p29
      %p221 = scmp.lt.s32.totalorder %s16, 1
      %s222 = scalar_select %p221, %s16, 1
      %s223 = smul.addr %s222, 8
      %s224 = scalar_lea.vmem %s1, %s223
      %p225 = pneg %p58
      %p226 = pneg %p55
      %p227 = scmp.lt.s32.totalorder %s16, 1
      %s228 = scalar_select %p227, %s16, 1
      %s229 = smul.addr %s228, 8
      %s230 = scalar_lea.vmem %s2, %s229
      %p231 = pneg %p84
      %p232 = pneg %p81
      %p233 = scmp.lt.s32.totalorder %s16, 1
      %s234 = scalar_select %p233, %s16, 1
      %s235 = smul.addr %s234, 8
      %s236 = scalar_lea.vmem %s3, %s235
      %p237 = pneg %p110
      %p238 = pneg %p107
      %p239 = scmp.lt.s32.totalorder %s16, 1
      %s240 = scalar_select %p239, %s16, 1
      %s241 = smul.addr %s240, 8
      %s242 = scalar_lea.vmem %s4, %s241
      %p243 = pneg %p136
      %p244 = pneg %p133
      %p245 = pneg %p162
      %p246 = pneg %p159
      %p247 = scmp.lt.s32.totalorder %s16, 1
      %s248 = scalar_select %p247, %s16, 1
      %s249 = smul.addr %s248, 64
      %s250 = smul.addr %s249, 8
      %s251 = scalar_lea.vmem %s5, %s250
      %p252 = scmp.lt.s32.totalorder %s16, 1
      %s253 = scalar_select %p252, %s16, 1
      %s254 = smul.addr %s253, 8
      %s255 = scalar_lea.vmem %s1, %s254
      %p256 = scmp.lt.s32.totalorder %s16, 1
      %s257 = scalar_select %p256, %s16, 1
      %s258 = smul.addr %s257, 8
      %s259 = scalar_lea.vmem %s2, %s258
      %p260 = scmp.lt.s32.totalorder %s16, 1
      %s261 = scalar_select %p260, %s16, 1
      %s262 = smul.addr %s261, 8
      %s263 = scalar_lea.vmem %s3, %s262
      %p264 = scmp.lt.s32.totalorder %s16, 1
      %s265 = scalar_select %p264, %s16, 1
      %s266 = smul.addr %s265, 8
      %s267 = scalar_lea.vmem %s4, %s266
      %p268 = scmp.lt.s32.totalorder %s16, 1
      %s269 = scalar_select %p268, %s16, 1
      %s270 = smul.addr %s269, 64
      %s271 = smul.addr %s270, 8
      %s272 = scalar_lea.vmem %s5, %s271
      %v273 = vld [vmem:[%s255] sm:$0xff]
      %v274 = vld [vmem:[%s0] sm:$0xff]
      %v275 = vld [vmem:[%s0 + $0x8] sm:$0xff]
      %v276 = vld [vmem:[%s0 + $0x10] sm:$0xff]
      %v277 = vld [vmem:[%s0 + $0x18] sm:$0xff]
      %v278 = vld [vmem:[%s0 + $0x20] sm:$0xff]
      %v279 = vld [vmem:[%s0 + $0x28] sm:$0xff]
      %v280 = vld [vmem:[%s0 + $0x30] sm:$0xff]
      %v281 = vld [vmem:[%s0 + $0x38] sm:$0xff]
      %v282 = vld [vmem:[%s0 + $0x40] sm:$0xff]
      %v283 = vld [vmem:[%s0 + $0x48] sm:$0xff]
      %v284 = vld [vmem:[%s0 + $0x50] sm:$0xff]
      %v285 = vld [vmem:[%s0 + $0x58] sm:$0xff]
      %v286 = vld [vmem:[%s0 + $0x60] sm:$0xff]
      %v287 = vld [vmem:[%s0 + $0x68] sm:$0xff]
      %v288 = vld [vmem:[%s0 + $0x70] sm:$0xff]
      %v289 = vld [vmem:[%s0 + $0x78] sm:$0xff]
      %v290 = vld [vmem:[%s0 + $0x80] sm:$0xff]
      %v291 = vld [vmem:[%s0 + $0x88] sm:$0xff]
      %v292 = vld [vmem:[%s0 + $0x90] sm:$0xff]
      %v293 = vld [vmem:[%s0 + $0x98] sm:$0xff]
      %v294 = vld [vmem:[%s0 + $0xa0] sm:$0xff]
      %v295 = vld [vmem:[%s0 + $0xa8] sm:$0xff]
      %v296 = vld [vmem:[%s0 + $0xb0] sm:$0xff]
      %v297 = vld [vmem:[%s0 + $0xb8] sm:$0xff]
      %v298 = vld [vmem:[%s0 + $0xc0] sm:$0xff]
      %v299 = vld [vmem:[%s0 + $0xc8] sm:$0xff]
      %v300 = vld [vmem:[%s0 + $0xd0] sm:$0xff]
      %v301 = vld [vmem:[%s0 + $0xd8] sm:$0xff]
      %v302 = vld [vmem:[%s0 + $0xe0] sm:$0xff]
      %v303 = vld [vmem:[%s0 + $0xe8] sm:$0xff]
      %v304 = vld [vmem:[%s0 + $0xf0] sm:$0xff]
      %v305 = vld [vmem:[%s0 + $0xf8] sm:$0xff]
      %v306 = vld [vmem:[%s0 + $0x100] sm:$0xff]
      %v307 = vld [vmem:[%s0 + $0x108] sm:$0xff]
      %v308 = vld [vmem:[%s0 + $0x110] sm:$0xff]
      %v309 = vld [vmem:[%s0 + $0x118] sm:$0xff]
      %v310 = vld [vmem:[%s0 + $0x120] sm:$0xff]
      %v311 = vld [vmem:[%s0 + $0x128] sm:$0xff]
      %v312 = vld [vmem:[%s0 + $0x130] sm:$0xff]
      %v313 = vld [vmem:[%s0 + $0x138] sm:$0xff]
      %v314 = vld [vmem:[%s0 + $0x140] sm:$0xff]
      %v315 = vld [vmem:[%s0 + $0x148] sm:$0xff]
      %v316 = vld [vmem:[%s0 + $0x150] sm:$0xff]
      %v317 = vld [vmem:[%s0 + $0x158] sm:$0xff]
      %v318 = vld [vmem:[%s0 + $0x160] sm:$0xff]
      %v319 = vld [vmem:[%s0 + $0x168] sm:$0xff]
      %v320 = vld [vmem:[%s0 + $0x170] sm:$0xff]
      %v321 = vld [vmem:[%s0 + $0x178] sm:$0xff]
      %v322 = vld [vmem:[%s0 + $0x180] sm:$0xff]
      %v323 = vld [vmem:[%s0 + $0x188] sm:$0xff]
      %v324 = vld [vmem:[%s0 + $0x190] sm:$0xff]
      %v325 = vld [vmem:[%s0 + $0x198] sm:$0xff]
      %v326 = vld [vmem:[%s0 + $0x1a0] sm:$0xff]
      %v327 = vld [vmem:[%s0 + $0x1a8] sm:$0xff]
      %v328 = vld [vmem:[%s0 + $0x1b0] sm:$0xff]
      %v329 = vld [vmem:[%s0 + $0x1b8] sm:$0xff]
      %v330 = vld [vmem:[%s0 + $0x1c0] sm:$0xff]
      %v331 = vld [vmem:[%s0 + $0x1c8] sm:$0xff]
      %v332 = vld [vmem:[%s0 + $0x1d0] sm:$0xff]
      %v333 = vld [vmem:[%s0 + $0x1d8] sm:$0xff]
      %v334 = vld [vmem:[%s0 + $0x1e0] sm:$0xff]
      %v335 = vld [vmem:[%s0 + $0x1e8] sm:$0xff]
      %v336 = vld [vmem:[%s0 + $0x1f0] sm:$0xff]
      %v337 = vld [vmem:[%s0 + $0x1f8] sm:$0xff]
      %v338 = vld [vmem:[%s0 + $0x200] sm:$0xff]
      %v339 = vld [vmem:[%s0 + $0x208] sm:$0xff]
      %v340 = vld [vmem:[%s0 + $0x210] sm:$0xff]
      %v341 = vld [vmem:[%s0 + $0x218] sm:$0xff]
      %v342 = vld [vmem:[%s0 + $0x220] sm:$0xff]
      %v343 = vld [vmem:[%s0 + $0x228] sm:$0xff]
      %v344 = vld [vmem:[%s0 + $0x230] sm:$0xff]
      %v345 = vld [vmem:[%s0 + $0x238] sm:$0xff]
      %v346 = vld [vmem:[%s0 + $0x240] sm:$0xff]
      %v347 = vld [vmem:[%s0 + $0x248] sm:$0xff]
      %v348 = vld [vmem:[%s0 + $0x250] sm:$0xff]
      %v349 = vld [vmem:[%s0 + $0x258] sm:$0xff]
      %v350 = vld [vmem:[%s0 + $0x260] sm:$0xff]
      %v351 = vld [vmem:[%s0 + $0x268] sm:$0xff]
      %v352 = vld [vmem:[%s0 + $0x270] sm:$0xff]
      %v353 = vld [vmem:[%s0 + $0x278] sm:$0xff]
      %v354 = vld [vmem:[%s0 + $0x280] sm:$0xff]
      %v355 = vld [vmem:[%s0 + $0x288] sm:$0xff]
      %v356 = vld [vmem:[%s0 + $0x290] sm:$0xff]
      %v357 = vld [vmem:[%s0 + $0x298] sm:$0xff]
      %v358 = vld [vmem:[%s0 + $0x2a0] sm:$0xff]
      %v359 = vld [vmem:[%s0 + $0x2a8] sm:$0xff]
      %v360 = vld [vmem:[%s0 + $0x2b0] sm:$0xff]
      %v361 = vld [vmem:[%s0 + $0x2b8] sm:$0xff]
      %v362 = vld [vmem:[%s0 + $0x2c0] sm:$0xff]
      %v363 = vld [vmem:[%s0 + $0x2c8] sm:$0xff]
      %v364 = vld [vmem:[%s0 + $0x2d0] sm:$0xff]
      %v365 = vld [vmem:[%s0 + $0x2d8] sm:$0xff]
      %v366 = vld [vmem:[%s0 + $0x2e0] sm:$0xff]
      %v367 = vld [vmem:[%s0 + $0x2e8] sm:$0xff]
      %v368 = vld [vmem:[%s0 + $0x2f0] sm:$0xff]
      %v369 = vld [vmem:[%s0 + $0x2f8] sm:$0xff]
      %v370 = vld [vmem:[%s0 + $0x300] sm:$0xff]
      %v371 = vld [vmem:[%s0 + $0x308] sm:$0xff]
      %v372 = vld [vmem:[%s0 + $0x310] sm:$0xff]
      %v373 = vld [vmem:[%s0 + $0x318] sm:$0xff]
      %v374 = vld [vmem:[%s0 + $0x320] sm:$0xff]
      %v375 = vld [vmem:[%s0 + $0x328] sm:$0xff]
      %v376 = vld [vmem:[%s0 + $0x330] sm:$0xff]
      %v377 = vld [vmem:[%s0 + $0x338] sm:$0xff]
      %v378 = vld [vmem:[%s0 + $0x340] sm:$0xff]
      %v379 = vld [vmem:[%s0 + $0x348] sm:$0xff]
      %v380 = vld [vmem:[%s0 + $0x350] sm:$0xff]
      %v381 = vld [vmem:[%s0 + $0x358] sm:$0xff]
      %v382 = vld [vmem:[%s0 + $0x360] sm:$0xff]
      %v383 = vld [vmem:[%s0 + $0x368] sm:$0xff]
      %v384 = vld [vmem:[%s0 + $0x370] sm:$0xff]
      %v385 = vld [vmem:[%s0 + $0x378] sm:$0xff]
      %v386 = vld [vmem:[%s0 + $0x380] sm:$0xff]
      %v387 = vld [vmem:[%s0 + $0x388] sm:$0xff]
      %v388 = vld [vmem:[%s0 + $0x390] sm:$0xff]
      %v389 = vld [vmem:[%s0 + $0x398] sm:$0xff]
      %v390 = vld [vmem:[%s0 + $0x3a0] sm:$0xff]
      %v391 = vld [vmem:[%s0 + $0x3a8] sm:$0xff]
      %v392 = vld [vmem:[%s0 + $0x3b0] sm:$0xff]
      %v393 = vld [vmem:[%s0 + $0x3b8] sm:$0xff]
      %v394 = vld [vmem:[%s0 + $0x3c0] sm:$0xff]
      %v395 = vld [vmem:[%s0 + $0x3c8] sm:$0xff]
      %v396 = vld [vmem:[%s0 + $0x3d0] sm:$0xff]
      %v397 = vld [vmem:[%s0 + $0x3d8] sm:$0xff]
      %v398 = vld [vmem:[%s0 + $0x3e0] sm:$0xff]
      %v399 = vld [vmem:[%s0 + $0x3e8] sm:$0xff]
      %v400 = vld [vmem:[%s0 + $0x3f0] sm:$0xff]
      %v401 = vld [vmem:[%s0 + $0x3f8] sm:$0xff]
      %v402 = vld [vmem:[%s0 + $0x400] sm:$0xff]
      %v403 = vld [vmem:[%s0 + $0x408] sm:$0xff]
      %v404 = vld [vmem:[%s0 + $0x410] sm:$0xff]
      %v405 = vld [vmem:[%s0 + $0x418] sm:$0xff]
      %v406 = vld [vmem:[%s0 + $0x420] sm:$0xff]
      %v407 = vld [vmem:[%s0 + $0x428] sm:$0xff]
      %v408 = vld [vmem:[%s0 + $0x430] sm:$0xff]
      %v409 = vld [vmem:[%s0 + $0x438] sm:$0xff]
      %v410 = vld [vmem:[%s0 + $0x440] sm:$0xff]
      %v411 = vld [vmem:[%s0 + $0x448] sm:$0xff]
      %v412 = vld [vmem:[%s0 + $0x450] sm:$0xff]
      %v413 = vld [vmem:[%s0 + $0x458] sm:$0xff]
      %v414 = vld [vmem:[%s0 + $0x460] sm:$0xff]
      %v415 = vld [vmem:[%s0 + $0x468] sm:$0xff]
      %v416 = vld [vmem:[%s0 + $0x470] sm:$0xff]
      %v417 = vld [vmem:[%s0 + $0x478] sm:$0xff]
      %v418 = vld [vmem:[%s0 + $0x480] sm:$0xff]
      %v419 = vld [vmem:[%s0 + $0x488] sm:$0xff]
      %v420 = vld [vmem:[%s0 + $0x490] sm:$0xff]
      %v421 = vld [vmem:[%s0 + $0x498] sm:$0xff]
      %v422 = vld [vmem:[%s0 + $0x4a0] sm:$0xff]
      %v423 = vld [vmem:[%s0 + $0x4a8] sm:$0xff]
      %v424 = vld [vmem:[%s0 + $0x4b0] sm:$0xff]
      %v425 = vld [vmem:[%s0 + $0x4b8] sm:$0xff]
      %v426 = vld [vmem:[%s0 + $0x4c0] sm:$0xff]
      %v427 = vld [vmem:[%s0 + $0x4c8] sm:$0xff]
      %v428 = vld [vmem:[%s0 + $0x4d0] sm:$0xff]
      %v429 = vld [vmem:[%s0 + $0x4d8] sm:$0xff]
      %v430 = vld [vmem:[%s0 + $0x4e0] sm:$0xff]
      %v431 = vld [vmem:[%s0 + $0x4e8] sm:$0xff]
      %v432 = vld [vmem:[%s0 + $0x4f0] sm:$0xff]
      %v433 = vld [vmem:[%s0 + $0x4f8] sm:$0xff]
      %v434 = vld [vmem:[%s0 + $0x500] sm:$0xff]
      %v435 = vld [vmem:[%s0 + $0x508] sm:$0xff]
      %v436 = vld [vmem:[%s0 + $0x510] sm:$0xff]
      %v437 = vld [vmem:[%s0 + $0x518] sm:$0xff]
      %v438 = vld [vmem:[%s0 + $0x520] sm:$0xff]
      %v439 = vld [vmem:[%s0 + $0x528] sm:$0xff]
      %v440 = vld [vmem:[%s0 + $0x530] sm:$0xff]
      %v441 = vld [vmem:[%s0 + $0x538] sm:$0xff]
      %v442 = vld [vmem:[%s0 + $0x540] sm:$0xff]
      %v443 = vld [vmem:[%s0 + $0x548] sm:$0xff]
      %v444 = vld [vmem:[%s0 + $0x550] sm:$0xff]
      %v445 = vld [vmem:[%s0 + $0x558] sm:$0xff]
      %v446 = vld [vmem:[%s0 + $0x560] sm:$0xff]
      %v447 = vld [vmem:[%s0 + $0x568] sm:$0xff]
      %v448 = vld [vmem:[%s0 + $0x570] sm:$0xff]
      %v449 = vld [vmem:[%s0 + $0x578] sm:$0xff]
      %v450 = vld [vmem:[%s0 + $0x580] sm:$0xff]
      %v451 = vld [vmem:[%s0 + $0x588] sm:$0xff]
      %v452 = vld [vmem:[%s0 + $0x590] sm:$0xff]
      %v453 = vld [vmem:[%s0 + $0x598] sm:$0xff]
      %v454 = vld [vmem:[%s0 + $0x5a0] sm:$0xff]
      %v455 = vld [vmem:[%s0 + $0x5a8] sm:$0xff]
      %v456 = vld [vmem:[%s0 + $0x5b0] sm:$0xff]
      %v457 = vld [vmem:[%s0 + $0x5b8] sm:$0xff]
      %v458 = vld [vmem:[%s0 + $0x5c0] sm:$0xff]
      %v459 = vld [vmem:[%s0 + $0x5c8] sm:$0xff]
      %v460 = vld [vmem:[%s0 + $0x5d0] sm:$0xff]
      %v461 = vld [vmem:[%s0 + $0x5d8] sm:$0xff]
      %v462 = vld [vmem:[%s0 + $0x5e0] sm:$0xff]
      %v463 = vld [vmem:[%s0 + $0x5e8] sm:$0xff]
      %v464 = vld [vmem:[%s0 + $0x5f0] sm:$0xff]
      %v465 = vld [vmem:[%s0 + $0x5f8] sm:$0xff]
      %v466 = vld [vmem:[%s0 + $0x600] sm:$0x7]
      %v467 = vld [vmem:[%s0 + $0x608] sm:$0x7]
      %v468 = vld [vmem:[%s0 + $0x610] sm:$0x7]
      %v469 = vld [vmem:[%s0 + $0x618] sm:$0x7]
      %v470 = vld [vmem:[%s0 + $0x620] sm:$0x7]
      %v471 = vld [vmem:[%s0 + $0x628] sm:$0x7]
      %v472 = vld [vmem:[%s0 + $0x630] sm:$0x7]
      %v473 = vld [vmem:[%s0 + $0x638] sm:$0x7]
      %v474 = vld [vmem:[%s0 + $0x640] sm:$0x7]
      %v475 = vld [vmem:[%s0 + $0x648] sm:$0x7]
      %v476 = vld [vmem:[%s0 + $0x650] sm:$0x7]
      %v477 = vld [vmem:[%s0 + $0x658] sm:$0x7]
      %v478 = vld [vmem:[%s0 + $0x660] sm:$0x7]
      %v479 = vld [vmem:[%s0 + $0x668] sm:$0x7]
      %v480 = vld [vmem:[%s0 + $0x670] sm:$0x7]
      %v481 = vld [vmem:[%s0 + $0x678] sm:$0x7]
      %v482 = vld [vmem:[%s0 + $0x680] sm:$0x7]
      %v483 = vld [vmem:[%s0 + $0x688] sm:$0x7]
      %v484 = vld [vmem:[%s0 + $0x690] sm:$0x7]
      %v485 = vld [vmem:[%s0 + $0x698] sm:$0x7]
      %v486 = vld [vmem:[%s0 + $0x6a0] sm:$0x7]
      %v487 = vld [vmem:[%s0 + $0x6a8] sm:$0x7]
      %v488 = vld [vmem:[%s0 + $0x6b0] sm:$0x7]
      %v489 = vld [vmem:[%s0 + $0x6b8] sm:$0x7]
      %v490 = vld [vmem:[%s0 + $0x6c0] sm:$0x7]
      %v491 = vld [vmem:[%s0 + $0x6c8] sm:$0x7]
      %v492 = vld [vmem:[%s0 + $0x6d0] sm:$0x7]
      %v493 = vld [vmem:[%s0 + $0x6d8] sm:$0x7]
      %v494 = vld [vmem:[%s0 + $0x6e0] sm:$0x7]
      %v495 = vld [vmem:[%s0 + $0x6e8] sm:$0x7]
      %v496 = vld [vmem:[%s0 + $0x6f0] sm:$0x7]
      %v497 = vld [vmem:[%s0 + $0x6f8] sm:$0x7]
      %v498 = vld [vmem:[%s0 + $0x700] sm:$0x7]
      %v499 = vld [vmem:[%s0 + $0x708] sm:$0x7]
      %v500 = vld [vmem:[%s0 + $0x710] sm:$0x7]
      %v501 = vld [vmem:[%s0 + $0x718] sm:$0x7]
      %v502 = vld [vmem:[%s0 + $0x720] sm:$0x7]
      %v503 = vld [vmem:[%s0 + $0x728] sm:$0x7]
      %v504 = vld [vmem:[%s0 + $0x730] sm:$0x7]
      %v505 = vld [vmem:[%s0 + $0x738] sm:$0x7]
      %v506 = vld [vmem:[%s0 + $0x740] sm:$0x7]
      %v507 = vld [vmem:[%s0 + $0x748] sm:$0x7]
      %v508 = vld [vmem:[%s0 + $0x750] sm:$0x7]
      %v509 = vld [vmem:[%s0 + $0x758] sm:$0x7]
      %v510 = vld [vmem:[%s0 + $0x760] sm:$0x7]
      %v511 = vld [vmem:[%s0 + $0x768] sm:$0x7]
      %v512 = vld [vmem:[%s0 + $0x770] sm:$0x7]
      %v513 = vld [vmem:[%s0 + $0x778] sm:$0x7]
      %v514 = vld [vmem:[%s0 + $0x780] sm:$0x7]
      %v515 = vld [vmem:[%s0 + $0x788] sm:$0x7]
      %v516 = vld [vmem:[%s0 + $0x790] sm:$0x7]
      %v517 = vld [vmem:[%s0 + $0x798] sm:$0x7]
      %v518 = vld [vmem:[%s0 + $0x7a0] sm:$0x7]
      %v519 = vld [vmem:[%s0 + $0x7a8] sm:$0x7]
      %v520 = vld [vmem:[%s0 + $0x7b0] sm:$0x7]
      %v521 = vld [vmem:[%s0 + $0x7b8] sm:$0x7]
      %v522 = vld [vmem:[%s0 + $0x7c0] sm:$0x7]
      %v523 = vld [vmem:[%s0 + $0x7c8] sm:$0x7]
      %v524 = vld [vmem:[%s0 + $0x7d0] sm:$0x7]
      %v525 = vld [vmem:[%s0 + $0x7d8] sm:$0x7]
      %v526 = vld [vmem:[%s0 + $0x7e0] sm:$0x7]
      %v527 = vld [vmem:[%s0 + $0x7e8] sm:$0x7]
      %v528 = vld [vmem:[%s0 + $0x7f0] sm:$0x7]
      %v529 = vld [vmem:[%s0 + $0x7f8] sm:$0x7]
      %v530 = vld [vmem:[%s259] sm:$0xff]
      %532 = vset.pattern.permute.xlu0 0
      %533 = vperm.xlu0 %532, %v530
      %v534 = vpop.permute.xlu0 %533
      %vm536 = vcmask 220160
      %v538 = vsel %vm536, %v273, 0
      %vm540 = vcmask 1042432
      %v542 = vsel %vm540, %v466, 0
      %v545 = vsel %vm540, %v467, 0
      %v548 = vsel %vm540, %v468, 0
      %v551 = vsel %vm540, %v469, 0
      %v554 = vsel %vm540, %v470, 0
      %v557 = vsel %vm540, %v471, 0
      %v560 = vsel %vm540, %v472, 0
      %v563 = vsel %vm540, %v473, 0
      %v566 = vsel %vm540, %v474, 0
      %v569 = vsel %vm540, %v475, 0
      %v572 = vsel %vm540, %v476, 0
      %v575 = vsel %vm540, %v477, 0
      %v578 = vsel %vm540, %v478, 0
      %v581 = vsel %vm540, %v479, 0
      %v584 = vsel %vm540, %v480, 0
      %v587 = vsel %vm540, %v481, 0
      %v590 = vsel %vm540, %v482, 0
      %v593 = vsel %vm540, %v483, 0
      %v596 = vsel %vm540, %v484, 0
      %v599 = vsel %vm540, %v485, 0
      %v602 = vsel %vm540, %v486, 0
      %v605 = vsel %vm540, %v487, 0
      %v608 = vsel %vm540, %v488, 0
      %v611 = vsel %vm540, %v489, 0
      %v614 = vsel %vm540, %v490, 0
      %v617 = vsel %vm540, %v491, 0
      %v620 = vsel %vm540, %v492, 0
      %v623 = vsel %vm540, %v493, 0
      %v626 = vsel %vm540, %v494, 0
      %v629 = vsel %vm540, %v495, 0
      %v632 = vsel %vm540, %v496, 0
      %v635 = vsel %vm540, %v497, 0
      %v638 = vsel %vm540, %v498, 0
      %v641 = vsel %vm540, %v499, 0
      %v644 = vsel %vm540, %v500, 0
      %v647 = vsel %vm540, %v501, 0
      %v650 = vsel %vm540, %v502, 0
      %v653 = vsel %vm540, %v503, 0
      %v656 = vsel %vm540, %v504, 0
      %v659 = vsel %vm540, %v505, 0
      %v662 = vsel %vm540, %v506, 0
      %v665 = vsel %vm540, %v507, 0
      %v668 = vsel %vm540, %v508, 0
      %v671 = vsel %vm540, %v509, 0
      %v674 = vsel %vm540, %v510, 0
      %v677 = vsel %vm540, %v511, 0
      %v680 = vsel %vm540, %v512, 0
      %v683 = vsel %vm540, %v513, 0
      %v686 = vsel %vm540, %v514, 0
      %v689 = vsel %vm540, %v515, 0
      %v692 = vsel %vm540, %v516, 0
      %v695 = vsel %vm540, %v517, 0
      %v698 = vsel %vm540, %v518, 0
      %v701 = vsel %vm540, %v519, 0
      %v704 = vsel %vm540, %v520, 0
      %v707 = vsel %vm540, %v521, 0
      %v710 = vsel %vm540, %v522, 0
      %v713 = vsel %vm540, %v523, 0
      %v716 = vsel %vm540, %v524, 0
      %v719 = vsel %vm540, %v525, 0
      %v722 = vsel %vm540, %v526, 0
      %v725 = vsel %vm540, %v527, 0
      %v728 = vsel %vm540, %v528, 0
      %v731 = vsel %vm540, %v529, 0
      %733 = vmatpush.msra.mxu0 0.0
      %734 = vmatpush.msra.mxu0 0.0
      %735 = vmatpush.msra.mxu0 0.0
      %736 = vmatpush.msra.mxu0 0.0
      %737 = vmatpush.msra.mxu0 0.0
      %738 = vmatpush.msra.mxu0 0.0
      %739 = vmatpush.msra.mxu0 0.0
      %740 = vmatpush.msra.mxu0 0.0
      %741 = vmatpush.msra.mxu0 0.0
      %742 = vmatpush.msra.mxu0 0.0
      %743 = vmatpush.msra.mxu0 0.0
      %744 = vmatpush.msra.mxu0 0.0
      %745 = vmatpush.msra.mxu0 %v542
      %746 = vmatpush.msra.mxu0 %v402
      %747 = vmatpush.msra.mxu0 %v338
      %748 = vmatpush.msra.mxu0 %v274
      %749 = vmatmul.f32.gmra.mxu0 %v538
      %v750 = vpop.f32.mrf.mxu0
      %v751 = vadd.f32 %v534, %v750
      %752 = vdwg.mxu0
      %753 = vmatpush.msra.mxu0 0.0
      %754 = vmatpush.msra.mxu0 0.0
      %755 = vmatpush.msra.mxu0 0.0
      %756 = vmatpush.msra.mxu0 0.0
      %757 = vmatpush.msra.mxu0 0.0
      %758 = vmatpush.msra.mxu0 0.0
      %759 = vmatpush.msra.mxu0 0.0
      %760 = vmatpush.msra.mxu0 0.0
      %761 = vmatpush.msra.mxu0 0.0
      %762 = vmatpush.msra.mxu0 0.0
      %763 = vmatpush.msra.mxu0 0.0
      %764 = vmatpush.msra.mxu0 0.0
      %765 = vmatpush.msra.mxu0 %v545
      %766 = vmatpush.msra.mxu0 %v403
      %767 = vmatpush.msra.mxu0 %v339
      %768 = vmatpush.msra.mxu0 %v275
      %769 = vmatmul.f32.gmra.mxu0 %v538
      %v770 = vpop.f32.mrf.mxu0
      %v771 = vadd.f32 %v534, %v770
      %772 = vdwg.mxu0
      %773 = vmatpush.msra.mxu0 0.0
      %774 = vmatpush.msra.mxu0 0.0
      %775 = vmatpush.msra.mxu0 0.0
      %776 = vmatpush.msra.mxu0 0.0
      %777 = vmatpush.msra.mxu0 0.0
      %778 = vmatpush.msra.mxu0 0.0
      %779 = vmatpush.msra.mxu0 0.0
      %780 = vmatpush.msra.mxu0 0.0
      %781 = vmatpush.msra.mxu0 0.0
      %782 = vmatpush.msra.mxu0 0.0
      %783 = vmatpush.msra.mxu0 0.0
      %784 = vmatpush.msra.mxu0 0.0
      %785 = vmatpush.msra.mxu0 %v548
      %786 = vmatpush.msra.mxu0 %v404
      %787 = vmatpush.msra.mxu0 %v340
      %788 = vmatpush.msra.mxu0 %v276
      %789 = vmatmul.f32.gmra.mxu0 %v538
      %v790 = vpop.f32.mrf.mxu0
      %v791 = vadd.f32 %v534, %v790
      %792 = vdwg.mxu0
      %793 = vmatpush.msra.mxu0 0.0
      %794 = vmatpush.msra.mxu0 0.0
      %795 = vmatpush.msra.mxu0 0.0
      %796 = vmatpush.msra.mxu0 0.0
      %797 = vmatpush.msra.mxu0 0.0
      %798 = vmatpush.msra.mxu0 0.0
      %799 = vmatpush.msra.mxu0 0.0
      %800 = vmatpush.msra.mxu0 0.0
      %801 = vmatpush.msra.mxu0 0.0
      %802 = vmatpush.msra.mxu0 0.0
      %803 = vmatpush.msra.mxu0 0.0
      %804 = vmatpush.msra.mxu0 0.0
      %805 = vmatpush.msra.mxu0 %v551
      %806 = vmatpush.msra.mxu0 %v405
      %807 = vmatpush.msra.mxu0 %v341
      %808 = vmatpush.msra.mxu0 %v277
      %809 = vmatmul.f32.gmra.mxu0 %v538
      %v810 = vpop.f32.mrf.mxu0
      %v811 = vadd.f32 %v534, %v810
      %812 = vdwg.mxu0
      %813 = vmatpush.msra.mxu0 0.0
      %814 = vmatpush.msra.mxu0 0.0
      %815 = vmatpush.msra.mxu0 0.0
      %816 = vmatpush.msra.mxu0 0.0
      %817 = vmatpush.msra.mxu0 0.0
      %818 = vmatpush.msra.mxu0 0.0
      %819 = vmatpush.msra.mxu0 0.0
      %820 = vmatpush.msra.mxu0 0.0
      %821 = vmatpush.msra.mxu0 0.0
      %822 = vmatpush.msra.mxu0 0.0
      %823 = vmatpush.msra.mxu0 0.0
      %824 = vmatpush.msra.mxu0 0.0
      %825 = vmatpush.msra.mxu0 %v554
      %826 = vmatpush.msra.mxu0 %v406
      %827 = vmatpush.msra.mxu0 %v342
      %828 = vmatpush.msra.mxu0 %v278
      %829 = vmatmul.f32.gmra.mxu0 %v538
      %v830 = vpop.f32.mrf.mxu0
      %v831 = vadd.f32 %v534, %v830
      %832 = vdwg.mxu0
      %833 = vmatpush.msra.mxu0 0.0
      %834 = vmatpush.msra.mxu0 0.0
      %835 = vmatpush.msra.mxu0 0.0
      %836 = vmatpush.msra.mxu0 0.0
      %837 = vmatpush.msra.mxu0 0.0
      %838 = vmatpush.msra.mxu0 0.0
      %839 = vmatpush.msra.mxu0 0.0
      %840 = vmatpush.msra.mxu0 0.0
      %841 = vmatpush.msra.mxu0 0.0
      %842 = vmatpush.msra.mxu0 0.0
      %843 = vmatpush.msra.mxu0 0.0
      %844 = vmatpush.msra.mxu0 0.0
      %845 = vmatpush.msra.mxu0 %v557
      %846 = vmatpush.msra.mxu0 %v407
      %847 = vmatpush.msra.mxu0 %v343
      %848 = vmatpush.msra.mxu0 %v279
      %849 = vmatmul.f32.gmra.mxu0 %v538
      %v850 = vpop.f32.mrf.mxu0
      %v851 = vadd.f32 %v534, %v850
      %852 = vdwg.mxu0
      %853 = vmatpush.msra.mxu0 0.0
      %854 = vmatpush.msra.mxu0 0.0
      %855 = vmatpush.msra.mxu0 0.0
      %856 = vmatpush.msra.mxu0 0.0
      %857 = vmatpush.msra.mxu0 0.0
      %858 = vmatpush.msra.mxu0 0.0
      %859 = vmatpush.msra.mxu0 0.0
      %860 = vmatpush.msra.mxu0 0.0
      %861 = vmatpush.msra.mxu0 0.0
      %862 = vmatpush.msra.mxu0 0.0
      %863 = vmatpush.msra.mxu0 0.0
      %864 = vmatpush.msra.mxu0 0.0
      %865 = vmatpush.msra.mxu0 %v560
      %866 = vmatpush.msra.mxu0 %v408
      %867 = vmatpush.msra.mxu0 %v344
      %868 = vmatpush.msra.mxu0 %v280
      %869 = vmatmul.f32.gmra.mxu0 %v538
      %v870 = vpop.f32.mrf.mxu0
      %v871 = vadd.f32 %v534, %v870
      %872 = vdwg.mxu0
      %873 = vmatpush.msra.mxu0 0.0
      %874 = vmatpush.msra.mxu0 0.0
      %875 = vmatpush.msra.mxu0 0.0
      %876 = vmatpush.msra.mxu0 0.0
      %877 = vmatpush.msra.mxu0 0.0
      %878 = vmatpush.msra.mxu0 0.0
      %879 = vmatpush.msra.mxu0 0.0
      %880 = vmatpush.msra.mxu0 0.0
      %881 = vmatpush.msra.mxu0 0.0
      %882 = vmatpush.msra.mxu0 0.0
      %883 = vmatpush.msra.mxu0 0.0
      %884 = vmatpush.msra.mxu0 0.0
      %885 = vmatpush.msra.mxu0 %v563
      %886 = vmatpush.msra.mxu0 %v409
      %887 = vmatpush.msra.mxu0 %v345
      %888 = vmatpush.msra.mxu0 %v281
      %889 = vmatmul.f32.gmra.mxu0 %v538
      %v890 = vpop.f32.mrf.mxu0
      %v891 = vadd.f32 %v534, %v890
      %892 = vdwg.mxu0
      %893 = vmatpush.msra.mxu0 0.0
      %894 = vmatpush.msra.mxu0 0.0
      %895 = vmatpush.msra.mxu0 0.0
      %896 = vmatpush.msra.mxu0 0.0
      %897 = vmatpush.msra.mxu0 0.0
      %898 = vmatpush.msra.mxu0 0.0
      %899 = vmatpush.msra.mxu0 0.0
      %900 = vmatpush.msra.mxu0 0.0
      %901 = vmatpush.msra.mxu0 0.0
      %902 = vmatpush.msra.mxu0 0.0
      %903 = vmatpush.msra.mxu0 0.0
      %904 = vmatpush.msra.mxu0 0.0
      %905 = vmatpush.msra.mxu0 %v566
      %906 = vmatpush.msra.mxu0 %v410
      %907 = vmatpush.msra.mxu0 %v346
      %908 = vmatpush.msra.mxu0 %v282
      %909 = vmatmul.f32.gmra.mxu0 %v538
      %v910 = vpop.f32.mrf.mxu0
      %v911 = vadd.f32 %v534, %v910
      %912 = vdwg.mxu0
      %913 = vmatpush.msra.mxu0 0.0
      %914 = vmatpush.msra.mxu0 0.0
      %915 = vmatpush.msra.mxu0 0.0
      %916 = vmatpush.msra.mxu0 0.0
      %917 = vmatpush.msra.mxu0 0.0
      %918 = vmatpush.msra.mxu0 0.0
      %919 = vmatpush.msra.mxu0 0.0
      %920 = vmatpush.msra.mxu0 0.0
      %921 = vmatpush.msra.mxu0 0.0
      %922 = vmatpush.msra.mxu0 0.0
      %923 = vmatpush.msra.mxu0 0.0
      %924 = vmatpush.msra.mxu0 0.0
      %925 = vmatpush.msra.mxu0 %v569
      %926 = vmatpush.msra.mxu0 %v411
      %927 = vmatpush.msra.mxu0 %v347
      %928 = vmatpush.msra.mxu0 %v283
      %929 = vmatmul.f32.gmra.mxu0 %v538
      %v930 = vpop.f32.mrf.mxu0
      %v931 = vadd.f32 %v534, %v930
      %932 = vdwg.mxu0
      %933 = vmatpush.msra.mxu0 0.0
      %934 = vmatpush.msra.mxu0 0.0
      %935 = vmatpush.msra.mxu0 0.0
      %936 = vmatpush.msra.mxu0 0.0
      %937 = vmatpush.msra.mxu0 0.0
      %938 = vmatpush.msra.mxu0 0.0
      %939 = vmatpush.msra.mxu0 0.0
      %940 = vmatpush.msra.mxu0 0.0
      %941 = vmatpush.msra.mxu0 0.0
      %942 = vmatpush.msra.mxu0 0.0
      %943 = vmatpush.msra.mxu0 0.0
      %944 = vmatpush.msra.mxu0 0.0
      %945 = vmatpush.msra.mxu0 %v572
      %946 = vmatpush.msra.mxu0 %v412
      %947 = vmatpush.msra.mxu0 %v348
      %948 = vmatpush.msra.mxu0 %v284
      %949 = vmatmul.f32.gmra.mxu0 %v538
      %v950 = vpop.f32.mrf.mxu0
      %v951 = vadd.f32 %v534, %v950
      %952 = vdwg.mxu0
      %953 = vmatpush.msra.mxu0 0.0
      %954 = vmatpush.msra.mxu0 0.0
      %955 = vmatpush.msra.mxu0 0.0
      %956 = vmatpush.msra.mxu0 0.0
      %957 = vmatpush.msra.mxu0 0.0
      %958 = vmatpush.msra.mxu0 0.0
      %959 = vmatpush.msra.mxu0 0.0
      %960 = vmatpush.msra.mxu0 0.0
      %961 = vmatpush.msra.mxu0 0.0
      %962 = vmatpush.msra.mxu0 0.0
      %963 = vmatpush.msra.mxu0 0.0
      %964 = vmatpush.msra.mxu0 0.0
      %965 = vmatpush.msra.mxu0 %v575
      %966 = vmatpush.msra.mxu0 %v413
      %967 = vmatpush.msra.mxu0 %v349
      %968 = vmatpush.msra.mxu0 %v285
      %969 = vmatmul.f32.gmra.mxu0 %v538
      %v970 = vpop.f32.mrf.mxu0
      %v971 = vadd.f32 %v534, %v970
      %972 = vdwg.mxu0
      %973 = vmatpush.msra.mxu0 0.0
      %974 = vmatpush.msra.mxu0 0.0
      %975 = vmatpush.msra.mxu0 0.0
      %976 = vmatpush.msra.mxu0 0.0
      %977 = vmatpush.msra.mxu0 0.0
      %978 = vmatpush.msra.mxu0 0.0
      %979 = vmatpush.msra.mxu0 0.0
      %980 = vmatpush.msra.mxu0 0.0
      %981 = vmatpush.msra.mxu0 0.0
      %982 = vmatpush.msra.mxu0 0.0
      %983 = vmatpush.msra.mxu0 0.0
      %984 = vmatpush.msra.mxu0 0.0
      %985 = vmatpush.msra.mxu0 %v578
      %986 = vmatpush.msra.mxu0 %v414
      %987 = vmatpush.msra.mxu0 %v350
      %988 = vmatpush.msra.mxu0 %v286
      %989 = vmatmul.f32.gmra.mxu0 %v538
      %v990 = vpop.f32.mrf.mxu0
      %v991 = vadd.f32 %v534, %v990
      %992 = vdwg.mxu0
      %993 = vmatpush.msra.mxu0 0.0
      %994 = vmatpush.msra.mxu0 0.0
      %995 = vmatpush.msra.mxu0 0.0
      %996 = vmatpush.msra.mxu0 0.0
      %997 = vmatpush.msra.mxu0 0.0
      %998 = vmatpush.msra.mxu0 0.0
      %999 = vmatpush.msra.mxu0 0.0
      %1000 = vmatpush.msra.mxu0 0.0
      %1001 = vmatpush.msra.mxu0 0.0
      %1002 = vmatpush.msra.mxu0 0.0
      %1003 = vmatpush.msra.mxu0 0.0
      %1004 = vmatpush.msra.mxu0 0.0
      %1005 = vmatpush.msra.mxu0 %v581
      %1006 = vmatpush.msra.mxu0 %v415
      %1007 = vmatpush.msra.mxu0 %v351
      %1008 = vmatpush.msra.mxu0 %v287
      %1009 = vmatmul.f32.gmra.mxu0 %v538
      %v1010 = vpop.f32.mrf.mxu0
      %v1011 = vadd.f32 %v534, %v1010
      %1012 = vdwg.mxu0
      %1013 = vmatpush.msra.mxu0 0.0
      %1014 = vmatpush.msra.mxu0 0.0
      %1015 = vmatpush.msra.mxu0 0.0
      %1016 = vmatpush.msra.mxu0 0.0
      %1017 = vmatpush.msra.mxu0 0.0
      %1018 = vmatpush.msra.mxu0 0.0
      %1019 = vmatpush.msra.mxu0 0.0
      %1020 = vmatpush.msra.mxu0 0.0
      %1021 = vmatpush.msra.mxu0 0.0
      %1022 = vmatpush.msra.mxu0 0.0
      %1023 = vmatpush.msra.mxu0 0.0
      %1024 = vmatpush.msra.mxu0 0.0
      %1025 = vmatpush.msra.mxu0 %v584
      %1026 = vmatpush.msra.mxu0 %v416
      %1027 = vmatpush.msra.mxu0 %v352
      %1028 = vmatpush.msra.mxu0 %v288
      %1029 = vmatmul.f32.gmra.mxu0 %v538
      %v1030 = vpop.f32.mrf.mxu0
      %v1031 = vadd.f32 %v534, %v1030
      %1032 = vdwg.mxu0
      %1033 = vmatpush.msra.mxu0 0.0
      %1034 = vmatpush.msra.mxu0 0.0
      %1035 = vmatpush.msra.mxu0 0.0
      %1036 = vmatpush.msra.mxu0 0.0
      %1037 = vmatpush.msra.mxu0 0.0
      %1038 = vmatpush.msra.mxu0 0.0
      %1039 = vmatpush.msra.mxu0 0.0
      %1040 = vmatpush.msra.mxu0 0.0
      %1041 = vmatpush.msra.mxu0 0.0
      %1042 = vmatpush.msra.mxu0 0.0
      %1043 = vmatpush.msra.mxu0 0.0
      %1044 = vmatpush.msra.mxu0 0.0
      %1045 = vmatpush.msra.mxu0 %v587
      %1046 = vmatpush.msra.mxu0 %v417
      %1047 = vmatpush.msra.mxu0 %v353
      %1048 = vmatpush.msra.mxu0 %v289
      %1049 = vmatmul.f32.gmra.mxu0 %v538
      %v1050 = vpop.f32.mrf.mxu0
      %v1051 = vadd.f32 %v534, %v1050
      %1052 = vdwg.mxu0
      %1053 = vmatpush.msra.mxu0 0.0
      %1054 = vmatpush.msra.mxu0 0.0
      %1055 = vmatpush.msra.mxu0 0.0
      %1056 = vmatpush.msra.mxu0 0.0
      %1057 = vmatpush.msra.mxu0 0.0
      %1058 = vmatpush.msra.mxu0 0.0
      %1059 = vmatpush.msra.mxu0 0.0
      %1060 = vmatpush.msra.mxu0 0.0
      %1061 = vmatpush.msra.mxu0 0.0
      %1062 = vmatpush.msra.mxu0 0.0
      %1063 = vmatpush.msra.mxu0 0.0
      %1064 = vmatpush.msra.mxu0 0.0
      %1065 = vmatpush.msra.mxu0 %v590
      %1066 = vmatpush.msra.mxu0 %v418
      %1067 = vmatpush.msra.mxu0 %v354
      %1068 = vmatpush.msra.mxu0 %v290
      %1069 = vmatmul.f32.gmra.mxu0 %v538
      %v1070 = vpop.f32.mrf.mxu0
      %v1071 = vadd.f32 %v534, %v1070
      %1072 = vdwg.mxu0
      %1073 = vmatpush.msra.mxu0 0.0
      %1074 = vmatpush.msra.mxu0 0.0
      %1075 = vmatpush.msra.mxu0 0.0
      %1076 = vmatpush.msra.mxu0 0.0
      %1077 = vmatpush.msra.mxu0 0.0
      %1078 = vmatpush.msra.mxu0 0.0
      %1079 = vmatpush.msra.mxu0 0.0
      %1080 = vmatpush.msra.mxu0 0.0
      %1081 = vmatpush.msra.mxu0 0.0
      %1082 = vmatpush.msra.mxu0 0.0
      %1083 = vmatpush.msra.mxu0 0.0
      %1084 = vmatpush.msra.mxu0 0.0
      %1085 = vmatpush.msra.mxu0 %v593
      %1086 = vmatpush.msra.mxu0 %v419
      %1087 = vmatpush.msra.mxu0 %v355
      %1088 = vmatpush.msra.mxu0 %v291
      %1089 = vmatmul.f32.gmra.mxu0 %v538
      %v1090 = vpop.f32.mrf.mxu0
      %v1091 = vadd.f32 %v534, %v1090
      %1092 = vdwg.mxu0
      %1093 = vmatpush.msra.mxu0 0.0
      %1094 = vmatpush.msra.mxu0 0.0
      %1095 = vmatpush.msra.mxu0 0.0
      %1096 = vmatpush.msra.mxu0 0.0
      %1097 = vmatpush.msra.mxu0 0.0
      %1098 = vmatpush.msra.mxu0 0.0
      %1099 = vmatpush.msra.mxu0 0.0
      %1100 = vmatpush.msra.mxu0 0.0
      %1101 = vmatpush.msra.mxu0 0.0
      %1102 = vmatpush.msra.mxu0 0.0
      %1103 = vmatpush.msra.mxu0 0.0
      %1104 = vmatpush.msra.mxu0 0.0
      %1105 = vmatpush.msra.mxu0 %v596
      %1106 = vmatpush.msra.mxu0 %v420
      %1107 = vmatpush.msra.mxu0 %v356
      %1108 = vmatpush.msra.mxu0 %v292
      %1109 = vmatmul.f32.gmra.mxu0 %v538
      %v1110 = vpop.f32.mrf.mxu0
      %v1111 = vadd.f32 %v534, %v1110
      %1112 = vdwg.mxu0
      %1113 = vmatpush.msra.mxu0 0.0
      %1114 = vmatpush.msra.mxu0 0.0
      %1115 = vmatpush.msra.mxu0 0.0
      %1116 = vmatpush.msra.mxu0 0.0
      %1117 = vmatpush.msra.mxu0 0.0
      %1118 = vmatpush.msra.mxu0 0.0
      %1119 = vmatpush.msra.mxu0 0.0
      %1120 = vmatpush.msra.mxu0 0.0
      %1121 = vmatpush.msra.mxu0 0.0
      %1122 = vmatpush.msra.mxu0 0.0
      %1123 = vmatpush.msra.mxu0 0.0
      %1124 = vmatpush.msra.mxu0 0.0
      %1125 = vmatpush.msra.mxu0 %v599
      %1126 = vmatpush.msra.mxu0 %v421
      %1127 = vmatpush.msra.mxu0 %v357
      %1128 = vmatpush.msra.mxu0 %v293
      %1129 = vmatmul.f32.gmra.mxu0 %v538
      %v1130 = vpop.f32.mrf.mxu0
      %v1131 = vadd.f32 %v534, %v1130
      %1132 = vdwg.mxu0
      %1133 = vmatpush.msra.mxu0 0.0
      %1134 = vmatpush.msra.mxu0 0.0
      %1135 = vmatpush.msra.mxu0 0.0
      %1136 = vmatpush.msra.mxu0 0.0
      %1137 = vmatpush.msra.mxu0 0.0
      %1138 = vmatpush.msra.mxu0 0.0
      %1139 = vmatpush.msra.mxu0 0.0
      %1140 = vmatpush.msra.mxu0 0.0
      %1141 = vmatpush.msra.mxu0 0.0
      %1142 = vmatpush.msra.mxu0 0.0
      %1143 = vmatpush.msra.mxu0 0.0
      %1144 = vmatpush.msra.mxu0 0.0
      %1145 = vmatpush.msra.mxu0 %v602
      %1146 = vmatpush.msra.mxu0 %v422
      %1147 = vmatpush.msra.mxu0 %v358
      %1148 = vmatpush.msra.mxu0 %v294
      %1149 = vmatmul.f32.gmra.mxu0 %v538
      %v1150 = vpop.f32.mrf.mxu0
      %v1151 = vadd.f32 %v534, %v1150
      %1152 = vdwg.mxu0
      %1153 = vmatpush.msra.mxu0 0.0
      %1154 = vmatpush.msra.mxu0 0.0
      %1155 = vmatpush.msra.mxu0 0.0
      %1156 = vmatpush.msra.mxu0 0.0
      %1157 = vmatpush.msra.mxu0 0.0
      %1158 = vmatpush.msra.mxu0 0.0
      %1159 = vmatpush.msra.mxu0 0.0
      %1160 = vmatpush.msra.mxu0 0.0
      %1161 = vmatpush.msra.mxu0 0.0
      %1162 = vmatpush.msra.mxu0 0.0
      %1163 = vmatpush.msra.mxu0 0.0
      %1164 = vmatpush.msra.mxu0 0.0
      %1165 = vmatpush.msra.mxu0 %v605
      %1166 = vmatpush.msra.mxu0 %v423
      %1167 = vmatpush.msra.mxu0 %v359
      %1168 = vmatpush.msra.mxu0 %v295
      %1169 = vmatmul.f32.gmra.mxu0 %v538
      %v1170 = vpop.f32.mrf.mxu0
      %v1171 = vadd.f32 %v534, %v1170
      %1172 = vdwg.mxu0
      %1173 = vmatpush.msra.mxu0 0.0
      %1174 = vmatpush.msra.mxu0 0.0
      %1175 = vmatpush.msra.mxu0 0.0
      %1176 = vmatpush.msra.mxu0 0.0
      %1177 = vmatpush.msra.mxu0 0.0
      %1178 = vmatpush.msra.mxu0 0.0
      %1179 = vmatpush.msra.mxu0 0.0
      %1180 = vmatpush.msra.mxu0 0.0
      %1181 = vmatpush.msra.mxu0 0.0
      %1182 = vmatpush.msra.mxu0 0.0
      %1183 = vmatpush.msra.mxu0 0.0
      %1184 = vmatpush.msra.mxu0 0.0
      %1185 = vmatpush.msra.mxu0 %v608
      %1186 = vmatpush.msra.mxu0 %v424
      %1187 = vmatpush.msra.mxu0 %v360
      %1188 = vmatpush.msra.mxu0 %v296
      %1189 = vmatmul.f32.gmra.mxu0 %v538
      %v1190 = vpop.f32.mrf.mxu0
      %v1191 = vadd.f32 %v534, %v1190
      %1192 = vdwg.mxu0
      %1193 = vmatpush.msra.mxu0 0.0
      %1194 = vmatpush.msra.mxu0 0.0
      %1195 = vmatpush.msra.mxu0 0.0
      %1196 = vmatpush.msra.mxu0 0.0
      %1197 = vmatpush.msra.mxu0 0.0
      %1198 = vmatpush.msra.mxu0 0.0
      %1199 = vmatpush.msra.mxu0 0.0
      %1200 = vmatpush.msra.mxu0 0.0
      %1201 = vmatpush.msra.mxu0 0.0
      %1202 = vmatpush.msra.mxu0 0.0
      %1203 = vmatpush.msra.mxu0 0.0
      %1204 = vmatpush.msra.mxu0 0.0
      %1205 = vmatpush.msra.mxu0 %v611
      %1206 = vmatpush.msra.mxu0 %v425
      %1207 = vmatpush.msra.mxu0 %v361
      %1208 = vmatpush.msra.mxu0 %v297
      %1209 = vmatmul.f32.gmra.mxu0 %v538
      %v1210 = vpop.f32.mrf.mxu0
      %v1211 = vadd.f32 %v534, %v1210
      %1212 = vdwg.mxu0
      %1213 = vmatpush.msra.mxu0 0.0
      %1214 = vmatpush.msra.mxu0 0.0
      %1215 = vmatpush.msra.mxu0 0.0
      %1216 = vmatpush.msra.mxu0 0.0
      %1217 = vmatpush.msra.mxu0 0.0
      %1218 = vmatpush.msra.mxu0 0.0
      %1219 = vmatpush.msra.mxu0 0.0
      %1220 = vmatpush.msra.mxu0 0.0
      %1221 = vmatpush.msra.mxu0 0.0
      %1222 = vmatpush.msra.mxu0 0.0
      %1223 = vmatpush.msra.mxu0 0.0
      %1224 = vmatpush.msra.mxu0 0.0
      %1225 = vmatpush.msra.mxu0 %v614
      %1226 = vmatpush.msra.mxu0 %v426
      %1227 = vmatpush.msra.mxu0 %v362
      %1228 = vmatpush.msra.mxu0 %v298
      %1229 = vmatmul.f32.gmra.mxu0 %v538
      %v1230 = vpop.f32.mrf.mxu0
      %v1231 = vadd.f32 %v534, %v1230
      %1232 = vdwg.mxu0
      %1233 = vmatpush.msra.mxu0 0.0
      %1234 = vmatpush.msra.mxu0 0.0
      %1235 = vmatpush.msra.mxu0 0.0
      %1236 = vmatpush.msra.mxu0 0.0
      %1237 = vmatpush.msra.mxu0 0.0
      %1238 = vmatpush.msra.mxu0 0.0
      %1239 = vmatpush.msra.mxu0 0.0
      %1240 = vmatpush.msra.mxu0 0.0
      %1241 = vmatpush.msra.mxu0 0.0
      %1242 = vmatpush.msra.mxu0 0.0
      %1243 = vmatpush.msra.mxu0 0.0
      %1244 = vmatpush.msra.mxu0 0.0
      %1245 = vmatpush.msra.mxu0 %v617
      %1246 = vmatpush.msra.mxu0 %v427
      %1247 = vmatpush.msra.mxu0 %v363
      %1248 = vmatpush.msra.mxu0 %v299
      %1249 = vmatmul.f32.gmra.mxu0 %v538
      %v1250 = vpop.f32.mrf.mxu0
      %v1251 = vadd.f32 %v534, %v1250
      %1252 = vdwg.mxu0
      %1253 = vmatpush.msra.mxu0 0.0
      %1254 = vmatpush.msra.mxu0 0.0
      %1255 = vmatpush.msra.mxu0 0.0
      %1256 = vmatpush.msra.mxu0 0.0
      %1257 = vmatpush.msra.mxu0 0.0
      %1258 = vmatpush.msra.mxu0 0.0
      %1259 = vmatpush.msra.mxu0 0.0
      %1260 = vmatpush.msra.mxu0 0.0
      %1261 = vmatpush.msra.mxu0 0.0
      %1262 = vmatpush.msra.mxu0 0.0
      %1263 = vmatpush.msra.mxu0 0.0
      %1264 = vmatpush.msra.mxu0 0.0
      %1265 = vmatpush.msra.mxu0 %v620
      %1266 = vmatpush.msra.mxu0 %v428
      %1267 = vmatpush.msra.mxu0 %v364
      %1268 = vmatpush.msra.mxu0 %v300
      %1269 = vmatmul.f32.gmra.mxu0 %v538
      %v1270 = vpop.f32.mrf.mxu0
      %v1271 = vadd.f32 %v534, %v1270
      %1272 = vdwg.mxu0
      %1273 = vmatpush.msra.mxu0 0.0
      %1274 = vmatpush.msra.mxu0 0.0
      %1275 = vmatpush.msra.mxu0 0.0
      %1276 = vmatpush.msra.mxu0 0.0
      %1277 = vmatpush.msra.mxu0 0.0
      %1278 = vmatpush.msra.mxu0 0.0
      %1279 = vmatpush.msra.mxu0 0.0
      %1280 = vmatpush.msra.mxu0 0.0
      %1281 = vmatpush.msra.mxu0 0.0
      %1282 = vmatpush.msra.mxu0 0.0
      %1283 = vmatpush.msra.mxu0 0.0
      %1284 = vmatpush.msra.mxu0 0.0
      %1285 = vmatpush.msra.mxu0 %v623
      %1286 = vmatpush.msra.mxu0 %v429
      %1287 = vmatpush.msra.mxu0 %v365
      %1288 = vmatpush.msra.mxu0 %v301
      %1289 = vmatmul.f32.gmra.mxu0 %v538
      %v1290 = vpop.f32.mrf.mxu0
      %v1291 = vadd.f32 %v534, %v1290
      %1292 = vdwg.mxu0
      %1293 = vmatpush.msra.mxu0 0.0
      %1294 = vmatpush.msra.mxu0 0.0
      %1295 = vmatpush.msra.mxu0 0.0
      %1296 = vmatpush.msra.mxu0 0.0
      %1297 = vmatpush.msra.mxu0 0.0
      %1298 = vmatpush.msra.mxu0 0.0
      %1299 = vmatpush.msra.mxu0 0.0
      %1300 = vmatpush.msra.mxu0 0.0
      %1301 = vmatpush.msra.mxu0 0.0
      %1302 = vmatpush.msra.mxu0 0.0
      %1303 = vmatpush.msra.mxu0 0.0
      %1304 = vmatpush.msra.mxu0 0.0
      %1305 = vmatpush.msra.mxu0 %v626
      %1306 = vmatpush.msra.mxu0 %v430
      %1307 = vmatpush.msra.mxu0 %v366
      %1308 = vmatpush.msra.mxu0 %v302
      %1309 = vmatmul.f32.gmra.mxu0 %v538
      %v1310 = vpop.f32.mrf.mxu0
      %v1311 = vadd.f32 %v534, %v1310
      %1312 = vdwg.mxu0
      %1313 = vmatpush.msra.mxu0 0.0
      %1314 = vmatpush.msra.mxu0 0.0
      %1315 = vmatpush.msra.mxu0 0.0
      %1316 = vmatpush.msra.mxu0 0.0
      %1317 = vmatpush.msra.mxu0 0.0
      %1318 = vmatpush.msra.mxu0 0.0
      %1319 = vmatpush.msra.mxu0 0.0
      %1320 = vmatpush.msra.mxu0 0.0
      %1321 = vmatpush.msra.mxu0 0.0
      %1322 = vmatpush.msra.mxu0 0.0
      %1323 = vmatpush.msra.mxu0 0.0
      %1324 = vmatpush.msra.mxu0 0.0
      %1325 = vmatpush.msra.mxu0 %v629
      %1326 = vmatpush.msra.mxu0 %v431
      %1327 = vmatpush.msra.mxu0 %v367
      %1328 = vmatpush.msra.mxu0 %v303
      %1329 = vmatmul.f32.gmra.mxu0 %v538
      %v1330 = vpop.f32.mrf.mxu0
      %v1331 = vadd.f32 %v534, %v1330
      %1332 = vdwg.mxu0
      %1333 = vmatpush.msra.mxu0 0.0
      %1334 = vmatpush.msra.mxu0 0.0
      %1335 = vmatpush.msra.mxu0 0.0
      %1336 = vmatpush.msra.mxu0 0.0
      %1337 = vmatpush.msra.mxu0 0.0
      %1338 = vmatpush.msra.mxu0 0.0
      %1339 = vmatpush.msra.mxu0 0.0
      %1340 = vmatpush.msra.mxu0 0.0
      %1341 = vmatpush.msra.mxu0 0.0
      %1342 = vmatpush.msra.mxu0 0.0
      %1343 = vmatpush.msra.mxu0 0.0
      %1344 = vmatpush.msra.mxu0 0.0
      %1345 = vmatpush.msra.mxu0 %v632
      %1346 = vmatpush.msra.mxu0 %v432
      %1347 = vmatpush.msra.mxu0 %v368
      %1348 = vmatpush.msra.mxu0 %v304
      %1349 = vmatmul.f32.gmra.mxu0 %v538
      %v1350 = vpop.f32.mrf.mxu0
      %v1351 = vadd.f32 %v534, %v1350
      %1352 = vdwg.mxu0
      %1353 = vmatpush.msra.mxu0 0.0
      %1354 = vmatpush.msra.mxu0 0.0
      %1355 = vmatpush.msra.mxu0 0.0
      %1356 = vmatpush.msra.mxu0 0.0
      %1357 = vmatpush.msra.mxu0 0.0
      %1358 = vmatpush.msra.mxu0 0.0
      %1359 = vmatpush.msra.mxu0 0.0
      %1360 = vmatpush.msra.mxu0 0.0
      %1361 = vmatpush.msra.mxu0 0.0
      %1362 = vmatpush.msra.mxu0 0.0
      %1363 = vmatpush.msra.mxu0 0.0
      %1364 = vmatpush.msra.mxu0 0.0
      %1365 = vmatpush.msra.mxu0 %v635
      %1366 = vmatpush.msra.mxu0 %v433
      %1367 = vmatpush.msra.mxu0 %v369
      %1368 = vmatpush.msra.mxu0 %v305
      %1369 = vmatmul.f32.gmra.mxu0 %v538
      %v1370 = vpop.f32.mrf.mxu0
      %v1371 = vadd.f32 %v534, %v1370
      %1372 = vdwg.mxu0
      %1373 = vmatpush.msra.mxu0 0.0
      %1374 = vmatpush.msra.mxu0 0.0
      %1375 = vmatpush.msra.mxu0 0.0
      %1376 = vmatpush.msra.mxu0 0.0
      %1377 = vmatpush.msra.mxu0 0.0
      %1378 = vmatpush.msra.mxu0 0.0
      %1379 = vmatpush.msra.mxu0 0.0
      %1380 = vmatpush.msra.mxu0 0.0
      %1381 = vmatpush.msra.mxu0 0.0
      %1382 = vmatpush.msra.mxu0 0.0
      %1383 = vmatpush.msra.mxu0 0.0
      %1384 = vmatpush.msra.mxu0 0.0
      %1385 = vmatpush.msra.mxu0 %v638
      %1386 = vmatpush.msra.mxu0 %v434
      %1387 = vmatpush.msra.mxu0 %v370
      %1388 = vmatpush.msra.mxu0 %v306
      %1389 = vmatmul.f32.gmra.mxu0 %v538
      %v1390 = vpop.f32.mrf.mxu0
      %v1391 = vadd.f32 %v534, %v1390
      %1392 = vdwg.mxu0
      %1393 = vmatpush.msra.mxu0 0.0
      %1394 = vmatpush.msra.mxu0 0.0
      %1395 = vmatpush.msra.mxu0 0.0
      %1396 = vmatpush.msra.mxu0 0.0
      %1397 = vmatpush.msra.mxu0 0.0
      %1398 = vmatpush.msra.mxu0 0.0
      %1399 = vmatpush.msra.mxu0 0.0
      %1400 = vmatpush.msra.mxu0 0.0
      %1401 = vmatpush.msra.mxu0 0.0
      %1402 = vmatpush.msra.mxu0 0.0
      %1403 = vmatpush.msra.mxu0 0.0
      %1404 = vmatpush.msra.mxu0 0.0
      %1405 = vmatpush.msra.mxu0 %v641
      %1406 = vmatpush.msra.mxu0 %v435
      %1407 = vmatpush.msra.mxu0 %v371
      %1408 = vmatpush.msra.mxu0 %v307
      %1409 = vmatmul.f32.gmra.mxu0 %v538
      %v1410 = vpop.f32.mrf.mxu0
      %v1411 = vadd.f32 %v534, %v1410
      %1412 = vdwg.mxu0
      %1413 = vmatpush.msra.mxu0 0.0
      %1414 = vmatpush.msra.mxu0 0.0
      %1415 = vmatpush.msra.mxu0 0.0
      %1416 = vmatpush.msra.mxu0 0.0
      %1417 = vmatpush.msra.mxu0 0.0
      %1418 = vmatpush.msra.mxu0 0.0
      %1419 = vmatpush.msra.mxu0 0.0
      %1420 = vmatpush.msra.mxu0 0.0
      %1421 = vmatpush.msra.mxu0 0.0
      %1422 = vmatpush.msra.mxu0 0.0
      %1423 = vmatpush.msra.mxu0 0.0
      %1424 = vmatpush.msra.mxu0 0.0
      %1425 = vmatpush.msra.mxu0 %v644
      %1426 = vmatpush.msra.mxu0 %v436
      %1427 = vmatpush.msra.mxu0 %v372
      %1428 = vmatpush.msra.mxu0 %v308
      %1429 = vmatmul.f32.gmra.mxu0 %v538
      %v1430 = vpop.f32.mrf.mxu0
      %v1431 = vadd.f32 %v534, %v1430
      %1432 = vdwg.mxu0
      %1433 = vmatpush.msra.mxu0 0.0
      %1434 = vmatpush.msra.mxu0 0.0
      %1435 = vmatpush.msra.mxu0 0.0
      %1436 = vmatpush.msra.mxu0 0.0
      %1437 = vmatpush.msra.mxu0 0.0
      %1438 = vmatpush.msra.mxu0 0.0
      %1439 = vmatpush.msra.mxu0 0.0
      %1440 = vmatpush.msra.mxu0 0.0
      %1441 = vmatpush.msra.mxu0 0.0
      %1442 = vmatpush.msra.mxu0 0.0
      %1443 = vmatpush.msra.mxu0 0.0
      %1444 = vmatpush.msra.mxu0 0.0
      %1445 = vmatpush.msra.mxu0 %v647
      %1446 = vmatpush.msra.mxu0 %v437
      %1447 = vmatpush.msra.mxu0 %v373
      %1448 = vmatpush.msra.mxu0 %v309
      %1449 = vmatmul.f32.gmra.mxu0 %v538
      %v1450 = vpop.f32.mrf.mxu0
      %v1451 = vadd.f32 %v534, %v1450
      %1452 = vdwg.mxu0
      %1453 = vmatpush.msra.mxu0 0.0
      %1454 = vmatpush.msra.mxu0 0.0
      %1455 = vmatpush.msra.mxu0 0.0
      %1456 = vmatpush.msra.mxu0 0.0
      %1457 = vmatpush.msra.mxu0 0.0
      %1458 = vmatpush.msra.mxu0 0.0
      %1459 = vmatpush.msra.mxu0 0.0
      %1460 = vmatpush.msra.mxu0 0.0
      %1461 = vmatpush.msra.mxu0 0.0
      %1462 = vmatpush.msra.mxu0 0.0
      %1463 = vmatpush.msra.mxu0 0.0
      %1464 = vmatpush.msra.mxu0 0.0
      %1465 = vmatpush.msra.mxu0 %v650
      %1466 = vmatpush.msra.mxu0 %v438
      %1467 = vmatpush.msra.mxu0 %v374
      %1468 = vmatpush.msra.mxu0 %v310
      %1469 = vmatmul.f32.gmra.mxu0 %v538
      %v1470 = vpop.f32.mrf.mxu0
      %v1471 = vadd.f32 %v534, %v1470
      %1472 = vdwg.mxu0
      %1473 = vmatpush.msra.mxu0 0.0
      %1474 = vmatpush.msra.mxu0 0.0
      %1475 = vmatpush.msra.mxu0 0.0
      %1476 = vmatpush.msra.mxu0 0.0
      %1477 = vmatpush.msra.mxu0 0.0
      %1478 = vmatpush.msra.mxu0 0.0
      %1479 = vmatpush.msra.mxu0 0.0
      %1480 = vmatpush.msra.mxu0 0.0
      %1481 = vmatpush.msra.mxu0 0.0
      %1482 = vmatpush.msra.mxu0 0.0
      %1483 = vmatpush.msra.mxu0 0.0
      %1484 = vmatpush.msra.mxu0 0.0
      %1485 = vmatpush.msra.mxu0 %v653
      %1486 = vmatpush.msra.mxu0 %v439
      %1487 = vmatpush.msra.mxu0 %v375
      %1488 = vmatpush.msra.mxu0 %v311
      %1489 = vmatmul.f32.gmra.mxu0 %v538
      %v1490 = vpop.f32.mrf.mxu0
      %v1491 = vadd.f32 %v534, %v1490
      %1492 = vdwg.mxu0
      %1493 = vmatpush.msra.mxu0 0.0
      %1494 = vmatpush.msra.mxu0 0.0
      %1495 = vmatpush.msra.mxu0 0.0
      %1496 = vmatpush.msra.mxu0 0.0
      %1497 = vmatpush.msra.mxu0 0.0
      %1498 = vmatpush.msra.mxu0 0.0
      %1499 = vmatpush.msra.mxu0 0.0
      %1500 = vmatpush.msra.mxu0 0.0
      %1501 = vmatpush.msra.mxu0 0.0
      %1502 = vmatpush.msra.mxu0 0.0
      %1503 = vmatpush.msra.mxu0 0.0
      %1504 = vmatpush.msra.mxu0 0.0
      %1505 = vmatpush.msra.mxu0 %v656
      %1506 = vmatpush.msra.mxu0 %v440
      %1507 = vmatpush.msra.mxu0 %v376
      %1508 = vmatpush.msra.mxu0 %v312
      %1509 = vmatmul.f32.gmra.mxu0 %v538
      %v1510 = vpop.f32.mrf.mxu0
      %v1511 = vadd.f32 %v534, %v1510
      %1512 = vdwg.mxu0
      %1513 = vmatpush.msra.mxu0 0.0
      %1514 = vmatpush.msra.mxu0 0.0
      %1515 = vmatpush.msra.mxu0 0.0
      %1516 = vmatpush.msra.mxu0 0.0
      %1517 = vmatpush.msra.mxu0 0.0
      %1518 = vmatpush.msra.mxu0 0.0
      %1519 = vmatpush.msra.mxu0 0.0
      %1520 = vmatpush.msra.mxu0 0.0
      %1521 = vmatpush.msra.mxu0 0.0
      %1522 = vmatpush.msra.mxu0 0.0
      %1523 = vmatpush.msra.mxu0 0.0
      %1524 = vmatpush.msra.mxu0 0.0
      %1525 = vmatpush.msra.mxu0 %v659
      %1526 = vmatpush.msra.mxu0 %v441
      %1527 = vmatpush.msra.mxu0 %v377
      %1528 = vmatpush.msra.mxu0 %v313
      %1529 = vmatmul.f32.gmra.mxu0 %v538
      %v1530 = vpop.f32.mrf.mxu0
      %v1531 = vadd.f32 %v534, %v1530
      %1532 = vdwg.mxu0
      %1533 = vmatpush.msra.mxu0 0.0
      %1534 = vmatpush.msra.mxu0 0.0
      %1535 = vmatpush.msra.mxu0 0.0
      %1536 = vmatpush.msra.mxu0 0.0
      %1537 = vmatpush.msra.mxu0 0.0
      %1538 = vmatpush.msra.mxu0 0.0
      %1539 = vmatpush.msra.mxu0 0.0
      %1540 = vmatpush.msra.mxu0 0.0
      %1541 = vmatpush.msra.mxu0 0.0
      %1542 = vmatpush.msra.mxu0 0.0
      %1543 = vmatpush.msra.mxu0 0.0
      %1544 = vmatpush.msra.mxu0 0.0
      %1545 = vmatpush.msra.mxu0 %v662
      %1546 = vmatpush.msra.mxu0 %v442
      %1547 = vmatpush.msra.mxu0 %v378
      %1548 = vmatpush.msra.mxu0 %v314
      %1549 = vmatmul.f32.gmra.mxu0 %v538
      %v1550 = vpop.f32.mrf.mxu0
      %v1551 = vadd.f32 %v534, %v1550
      %1552 = vdwg.mxu0
      %1553 = vmatpush.msra.mxu0 0.0
      %1554 = vmatpush.msra.mxu0 0.0
      %1555 = vmatpush.msra.mxu0 0.0
      %1556 = vmatpush.msra.mxu0 0.0
      %1557 = vmatpush.msra.mxu0 0.0
      %1558 = vmatpush.msra.mxu0 0.0
      %1559 = vmatpush.msra.mxu0 0.0
      %1560 = vmatpush.msra.mxu0 0.0
      %1561 = vmatpush.msra.mxu0 0.0
      %1562 = vmatpush.msra.mxu0 0.0
      %1563 = vmatpush.msra.mxu0 0.0
      %1564 = vmatpush.msra.mxu0 0.0
      %1565 = vmatpush.msra.mxu0 %v665
      %1566 = vmatpush.msra.mxu0 %v443
      %1567 = vmatpush.msra.mxu0 %v379
      %1568 = vmatpush.msra.mxu0 %v315
      %1569 = vmatmul.f32.gmra.mxu0 %v538
      %v1570 = vpop.f32.mrf.mxu0
      %v1571 = vadd.f32 %v534, %v1570
      %1572 = vdwg.mxu0
      %1573 = vmatpush.msra.mxu0 0.0
      %1574 = vmatpush.msra.mxu0 0.0
      %1575 = vmatpush.msra.mxu0 0.0
      %1576 = vmatpush.msra.mxu0 0.0
      %1577 = vmatpush.msra.mxu0 0.0
      %1578 = vmatpush.msra.mxu0 0.0
      %1579 = vmatpush.msra.mxu0 0.0
      %1580 = vmatpush.msra.mxu0 0.0
      %1581 = vmatpush.msra.mxu0 0.0
      %1582 = vmatpush.msra.mxu0 0.0
      %1583 = vmatpush.msra.mxu0 0.0
      %1584 = vmatpush.msra.mxu0 0.0
      %1585 = vmatpush.msra.mxu0 %v668
      %1586 = vmatpush.msra.mxu0 %v444
      %1587 = vmatpush.msra.mxu0 %v380
      %1588 = vmatpush.msra.mxu0 %v316
      %1589 = vmatmul.f32.gmra.mxu0 %v538
      %v1590 = vpop.f32.mrf.mxu0
      %v1591 = vadd.f32 %v534, %v1590
      %1592 = vdwg.mxu0
      %1593 = vmatpush.msra.mxu0 0.0
      %1594 = vmatpush.msra.mxu0 0.0
      %1595 = vmatpush.msra.mxu0 0.0
      %1596 = vmatpush.msra.mxu0 0.0
      %1597 = vmatpush.msra.mxu0 0.0
      %1598 = vmatpush.msra.mxu0 0.0
      %1599 = vmatpush.msra.mxu0 0.0
      %1600 = vmatpush.msra.mxu0 0.0
      %1601 = vmatpush.msra.mxu0 0.0
      %1602 = vmatpush.msra.mxu0 0.0
      %1603 = vmatpush.msra.mxu0 0.0
      %1604 = vmatpush.msra.mxu0 0.0
      %1605 = vmatpush.msra.mxu0 %v671
      %1606 = vmatpush.msra.mxu0 %v445
      %1607 = vmatpush.msra.mxu0 %v381
      %1608 = vmatpush.msra.mxu0 %v317
      %1609 = vmatmul.f32.gmra.mxu0 %v538
      %v1610 = vpop.f32.mrf.mxu0
      %v1611 = vadd.f32 %v534, %v1610
      %1612 = vdwg.mxu0
      %1613 = vmatpush.msra.mxu0 0.0
      %1614 = vmatpush.msra.mxu0 0.0
      %1615 = vmatpush.msra.mxu0 0.0
      %1616 = vmatpush.msra.mxu0 0.0
      %1617 = vmatpush.msra.mxu0 0.0
      %1618 = vmatpush.msra.mxu0 0.0
      %1619 = vmatpush.msra.mxu0 0.0
      %1620 = vmatpush.msra.mxu0 0.0
      %1621 = vmatpush.msra.mxu0 0.0
      %1622 = vmatpush.msra.mxu0 0.0
      %1623 = vmatpush.msra.mxu0 0.0
      %1624 = vmatpush.msra.mxu0 0.0
      %1625 = vmatpush.msra.mxu0 %v674
      %1626 = vmatpush.msra.mxu0 %v446
      %1627 = vmatpush.msra.mxu0 %v382
      %1628 = vmatpush.msra.mxu0 %v318
      %1629 = vmatmul.f32.gmra.mxu0 %v538
      %v1630 = vpop.f32.mrf.mxu0
      %v1631 = vadd.f32 %v534, %v1630
      %1632 = vdwg.mxu0
      %1633 = vmatpush.msra.mxu0 0.0
      %1634 = vmatpush.msra.mxu0 0.0
      %1635 = vmatpush.msra.mxu0 0.0
      %1636 = vmatpush.msra.mxu0 0.0
      %1637 = vmatpush.msra.mxu0 0.0
      %1638 = vmatpush.msra.mxu0 0.0
      %1639 = vmatpush.msra.mxu0 0.0
      %1640 = vmatpush.msra.mxu0 0.0
      %1641 = vmatpush.msra.mxu0 0.0
      %1642 = vmatpush.msra.mxu0 0.0
      %1643 = vmatpush.msra.mxu0 0.0
      %1644 = vmatpush.msra.mxu0 0.0
      %1645 = vmatpush.msra.mxu0 %v677
      %1646 = vmatpush.msra.mxu0 %v447
      %1647 = vmatpush.msra.mxu0 %v383
      %1648 = vmatpush.msra.mxu0 %v319
      %1649 = vmatmul.f32.gmra.mxu0 %v538
      %v1650 = vpop.f32.mrf.mxu0
      %v1651 = vadd.f32 %v534, %v1650
      %1652 = vdwg.mxu0
      %1653 = vmatpush.msra.mxu0 0.0
      %1654 = vmatpush.msra.mxu0 0.0
      %1655 = vmatpush.msra.mxu0 0.0
      %1656 = vmatpush.msra.mxu0 0.0
      %1657 = vmatpush.msra.mxu0 0.0
      %1658 = vmatpush.msra.mxu0 0.0
      %1659 = vmatpush.msra.mxu0 0.0
      %1660 = vmatpush.msra.mxu0 0.0
      %1661 = vmatpush.msra.mxu0 0.0
      %1662 = vmatpush.msra.mxu0 0.0
      %1663 = vmatpush.msra.mxu0 0.0
      %1664 = vmatpush.msra.mxu0 0.0
      %1665 = vmatpush.msra.mxu0 %v680
      %1666 = vmatpush.msra.mxu0 %v448
      %1667 = vmatpush.msra.mxu0 %v384
      %1668 = vmatpush.msra.mxu0 %v320
      %1669 = vmatmul.f32.gmra.mxu0 %v538
      %v1670 = vpop.f32.mrf.mxu0
      %v1671 = vadd.f32 %v534, %v1670
      %1672 = vdwg.mxu0
      %1673 = vmatpush.msra.mxu0 0.0
      %1674 = vmatpush.msra.mxu0 0.0
      %1675 = vmatpush.msra.mxu0 0.0
      %1676 = vmatpush.msra.mxu0 0.0
      %1677 = vmatpush.msra.mxu0 0.0
      %1678 = vmatpush.msra.mxu0 0.0
      %1679 = vmatpush.msra.mxu0 0.0
      %1680 = vmatpush.msra.mxu0 0.0
      %1681 = vmatpush.msra.mxu0 0.0
      %1682 = vmatpush.msra.mxu0 0.0
      %1683 = vmatpush.msra.mxu0 0.0
      %1684 = vmatpush.msra.mxu0 0.0
      %1685 = vmatpush.msra.mxu0 %v683
      %1686 = vmatpush.msra.mxu0 %v449
      %1687 = vmatpush.msra.mxu0 %v385
      %1688 = vmatpush.msra.mxu0 %v321
      %1689 = vmatmul.f32.gmra.mxu0 %v538
      %v1690 = vpop.f32.mrf.mxu0
      %v1691 = vadd.f32 %v534, %v1690
      %1692 = vdwg.mxu0
      %1693 = vmatpush.msra.mxu0 0.0
      %1694 = vmatpush.msra.mxu0 0.0
      %1695 = vmatpush.msra.mxu0 0.0
      %1696 = vmatpush.msra.mxu0 0.0
      %1697 = vmatpush.msra.mxu0 0.0
      %1698 = vmatpush.msra.mxu0 0.0
      %1699 = vmatpush.msra.mxu0 0.0
      %1700 = vmatpush.msra.mxu0 0.0
      %1701 = vmatpush.msra.mxu0 0.0
      %1702 = vmatpush.msra.mxu0 0.0
      %1703 = vmatpush.msra.mxu0 0.0
      %1704 = vmatpush.msra.mxu0 0.0
      %1705 = vmatpush.msra.mxu0 %v686
      %1706 = vmatpush.msra.mxu0 %v450
      %1707 = vmatpush.msra.mxu0 %v386
      %1708 = vmatpush.msra.mxu0 %v322
      %1709 = vmatmul.f32.gmra.mxu0 %v538
      %v1710 = vpop.f32.mrf.mxu0
      %v1711 = vadd.f32 %v534, %v1710
      %1712 = vdwg.mxu0
      %1713 = vmatpush.msra.mxu0 0.0
      %1714 = vmatpush.msra.mxu0 0.0
      %1715 = vmatpush.msra.mxu0 0.0
      %1716 = vmatpush.msra.mxu0 0.0
      %1717 = vmatpush.msra.mxu0 0.0
      %1718 = vmatpush.msra.mxu0 0.0
      %1719 = vmatpush.msra.mxu0 0.0
      %1720 = vmatpush.msra.mxu0 0.0
      %1721 = vmatpush.msra.mxu0 0.0
      %1722 = vmatpush.msra.mxu0 0.0
      %1723 = vmatpush.msra.mxu0 0.0
      %1724 = vmatpush.msra.mxu0 0.0
      %1725 = vmatpush.msra.mxu0 %v689
      %1726 = vmatpush.msra.mxu0 %v451
      %1727 = vmatpush.msra.mxu0 %v387
      %1728 = vmatpush.msra.mxu0 %v323
      %1729 = vmatmul.f32.gmra.mxu0 %v538
      %v1730 = vpop.f32.mrf.mxu0
      %v1731 = vadd.f32 %v534, %v1730
      %1732 = vdwg.mxu0
      %1733 = vmatpush.msra.mxu0 0.0
      %1734 = vmatpush.msra.mxu0 0.0
      %1735 = vmatpush.msra.mxu0 0.0
      %1736 = vmatpush.msra.mxu0 0.0
      %1737 = vmatpush.msra.mxu0 0.0
      %1738 = vmatpush.msra.mxu0 0.0
      %1739 = vmatpush.msra.mxu0 0.0
      %1740 = vmatpush.msra.mxu0 0.0
      %1741 = vmatpush.msra.mxu0 0.0
      %1742 = vmatpush.msra.mxu0 0.0
      %1743 = vmatpush.msra.mxu0 0.0
      %1744 = vmatpush.msra.mxu0 0.0
      %1745 = vmatpush.msra.mxu0 %v692
      %1746 = vmatpush.msra.mxu0 %v452
      %1747 = vmatpush.msra.mxu0 %v388
      %1748 = vmatpush.msra.mxu0 %v324
      %1749 = vmatmul.f32.gmra.mxu0 %v538
      %v1750 = vpop.f32.mrf.mxu0
      %v1751 = vadd.f32 %v534, %v1750
      %1752 = vdwg.mxu0
      %1753 = vmatpush.msra.mxu0 0.0
      %1754 = vmatpush.msra.mxu0 0.0
      %1755 = vmatpush.msra.mxu0 0.0
      %1756 = vmatpush.msra.mxu0 0.0
      %1757 = vmatpush.msra.mxu0 0.0
      %1758 = vmatpush.msra.mxu0 0.0
      %1759 = vmatpush.msra.mxu0 0.0
      %1760 = vmatpush.msra.mxu0 0.0
      %1761 = vmatpush.msra.mxu0 0.0
      %1762 = vmatpush.msra.mxu0 0.0
      %1763 = vmatpush.msra.mxu0 0.0
      %1764 = vmatpush.msra.mxu0 0.0
      %1765 = vmatpush.msra.mxu0 %v695
      %1766 = vmatpush.msra.mxu0 %v453
      %1767 = vmatpush.msra.mxu0 %v389
      %1768 = vmatpush.msra.mxu0 %v325
      %1769 = vmatmul.f32.gmra.mxu0 %v538
      %v1770 = vpop.f32.mrf.mxu0
      %v1771 = vadd.f32 %v534, %v1770
      %1772 = vdwg.mxu0
      %1773 = vmatpush.msra.mxu0 0.0
      %1774 = vmatpush.msra.mxu0 0.0
      %1775 = vmatpush.msra.mxu0 0.0
      %1776 = vmatpush.msra.mxu0 0.0
      %1777 = vmatpush.msra.mxu0 0.0
      %1778 = vmatpush.msra.mxu0 0.0
      %1779 = vmatpush.msra.mxu0 0.0
      %1780 = vmatpush.msra.mxu0 0.0
      %1781 = vmatpush.msra.mxu0 0.0
      %1782 = vmatpush.msra.mxu0 0.0
      %1783 = vmatpush.msra.mxu0 0.0
      %1784 = vmatpush.msra.mxu0 0.0
      %1785 = vmatpush.msra.mxu0 %v698
      %1786 = vmatpush.msra.mxu0 %v454
      %1787 = vmatpush.msra.mxu0 %v390
      %1788 = vmatpush.msra.mxu0 %v326
      %1789 = vmatmul.f32.gmra.mxu0 %v538
      %v1790 = vpop.f32.mrf.mxu0
      %v1791 = vadd.f32 %v534, %v1790
      %1792 = vdwg.mxu0
      %1793 = vmatpush.msra.mxu0 0.0
      %1794 = vmatpush.msra.mxu0 0.0
      %1795 = vmatpush.msra.mxu0 0.0
      %1796 = vmatpush.msra.mxu0 0.0
      %1797 = vmatpush.msra.mxu0 0.0
      %1798 = vmatpush.msra.mxu0 0.0
      %1799 = vmatpush.msra.mxu0 0.0
      %1800 = vmatpush.msra.mxu0 0.0
      %1801 = vmatpush.msra.mxu0 0.0
      %1802 = vmatpush.msra.mxu0 0.0
      %1803 = vmatpush.msra.mxu0 0.0
      %1804 = vmatpush.msra.mxu0 0.0
      %1805 = vmatpush.msra.mxu0 %v701
      %1806 = vmatpush.msra.mxu0 %v455
      %1807 = vmatpush.msra.mxu0 %v391
      %1808 = vmatpush.msra.mxu0 %v327
      %1809 = vmatmul.f32.gmra.mxu0 %v538
      %v1810 = vpop.f32.mrf.mxu0
      %v1811 = vadd.f32 %v534, %v1810
      %1812 = vdwg.mxu0
      %1813 = vmatpush.msra.mxu0 0.0
      %1814 = vmatpush.msra.mxu0 0.0
      %1815 = vmatpush.msra.mxu0 0.0
      %1816 = vmatpush.msra.mxu0 0.0
      %1817 = vmatpush.msra.mxu0 0.0
      %1818 = vmatpush.msra.mxu0 0.0
      %1819 = vmatpush.msra.mxu0 0.0
      %1820 = vmatpush.msra.mxu0 0.0
      %1821 = vmatpush.msra.mxu0 0.0
      %1822 = vmatpush.msra.mxu0 0.0
      %1823 = vmatpush.msra.mxu0 0.0
      %1824 = vmatpush.msra.mxu0 0.0
      %1825 = vmatpush.msra.mxu0 %v704
      %1826 = vmatpush.msra.mxu0 %v456
      %1827 = vmatpush.msra.mxu0 %v392
      %1828 = vmatpush.msra.mxu0 %v328
      %1829 = vmatmul.f32.gmra.mxu0 %v538
      %v1830 = vpop.f32.mrf.mxu0
      %v1831 = vadd.f32 %v534, %v1830
      %1832 = vdwg.mxu0
      %1833 = vmatpush.msra.mxu0 0.0
      %1834 = vmatpush.msra.mxu0 0.0
      %1835 = vmatpush.msra.mxu0 0.0
      %1836 = vmatpush.msra.mxu0 0.0
      %1837 = vmatpush.msra.mxu0 0.0
      %1838 = vmatpush.msra.mxu0 0.0
      %1839 = vmatpush.msra.mxu0 0.0
      %1840 = vmatpush.msra.mxu0 0.0
      %1841 = vmatpush.msra.mxu0 0.0
      %1842 = vmatpush.msra.mxu0 0.0
      %1843 = vmatpush.msra.mxu0 0.0
      %1844 = vmatpush.msra.mxu0 0.0
      %1845 = vmatpush.msra.mxu0 %v707
      %1846 = vmatpush.msra.mxu0 %v457
      %1847 = vmatpush.msra.mxu0 %v393
      %1848 = vmatpush.msra.mxu0 %v329
      %1849 = vmatmul.f32.gmra.mxu0 %v538
      %v1850 = vpop.f32.mrf.mxu0
      %v1851 = vadd.f32 %v534, %v1850
      %1852 = vdwg.mxu0
      %1853 = vmatpush.msra.mxu0 0.0
      %1854 = vmatpush.msra.mxu0 0.0
      %1855 = vmatpush.msra.mxu0 0.0
      %1856 = vmatpush.msra.mxu0 0.0
      %1857 = vmatpush.msra.mxu0 0.0
      %1858 = vmatpush.msra.mxu0 0.0
      %1859 = vmatpush.msra.mxu0 0.0
      %1860 = vmatpush.msra.mxu0 0.0
      %1861 = vmatpush.msra.mxu0 0.0
      %1862 = vmatpush.msra.mxu0 0.0
      %1863 = vmatpush.msra.mxu0 0.0
      %1864 = vmatpush.msra.mxu0 0.0
      %1865 = vmatpush.msra.mxu0 %v710
      %1866 = vmatpush.msra.mxu0 %v458
      %1867 = vmatpush.msra.mxu0 %v394
      %1868 = vmatpush.msra.mxu0 %v330
      %1869 = vmatmul.f32.gmra.mxu0 %v538
      %v1870 = vpop.f32.mrf.mxu0
      %v1871 = vadd.f32 %v534, %v1870
      %1872 = vdwg.mxu0
      %1873 = vmatpush.msra.mxu0 0.0
      %1874 = vmatpush.msra.mxu0 0.0
      %1875 = vmatpush.msra.mxu0 0.0
      %1876 = vmatpush.msra.mxu0 0.0
      %1877 = vmatpush.msra.mxu0 0.0
      %1878 = vmatpush.msra.mxu0 0.0
      %1879 = vmatpush.msra.mxu0 0.0
      %1880 = vmatpush.msra.mxu0 0.0
      %1881 = vmatpush.msra.mxu0 0.0
      %1882 = vmatpush.msra.mxu0 0.0
      %1883 = vmatpush.msra.mxu0 0.0
      %1884 = vmatpush.msra.mxu0 0.0
      %1885 = vmatpush.msra.mxu0 %v713
      %1886 = vmatpush.msra.mxu0 %v459
      %1887 = vmatpush.msra.mxu0 %v395
      %1888 = vmatpush.msra.mxu0 %v331
      %1889 = vmatmul.f32.gmra.mxu0 %v538
      %v1890 = vpop.f32.mrf.mxu0
      %v1891 = vadd.f32 %v534, %v1890
      %1892 = vdwg.mxu0
      %1893 = vmatpush.msra.mxu0 0.0
      %1894 = vmatpush.msra.mxu0 0.0
      %1895 = vmatpush.msra.mxu0 0.0
      %1896 = vmatpush.msra.mxu0 0.0
      %1897 = vmatpush.msra.mxu0 0.0
      %1898 = vmatpush.msra.mxu0 0.0
      %1899 = vmatpush.msra.mxu0 0.0
      %1900 = vmatpush.msra.mxu0 0.0
      %1901 = vmatpush.msra.mxu0 0.0
      %1902 = vmatpush.msra.mxu0 0.0
      %1903 = vmatpush.msra.mxu0 0.0
      %1904 = vmatpush.msra.mxu0 0.0
      %1905 = vmatpush.msra.mxu0 %v716
      %1906 = vmatpush.msra.mxu0 %v460
      %1907 = vmatpush.msra.mxu0 %v396
      %1908 = vmatpush.msra.mxu0 %v332
      %1909 = vmatmul.f32.gmra.mxu0 %v538
      %v1910 = vpop.f32.mrf.mxu0
      %v1911 = vadd.f32 %v534, %v1910
      %1912 = vdwg.mxu0
      %1913 = vmatpush.msra.mxu0 0.0
      %1914 = vmatpush.msra.mxu0 0.0
      %1915 = vmatpush.msra.mxu0 0.0
      %1916 = vmatpush.msra.mxu0 0.0
      %1917 = vmatpush.msra.mxu0 0.0
      %1918 = vmatpush.msra.mxu0 0.0
      %1919 = vmatpush.msra.mxu0 0.0
      %1920 = vmatpush.msra.mxu0 0.0
      %1921 = vmatpush.msra.mxu0 0.0
      %1922 = vmatpush.msra.mxu0 0.0
      %1923 = vmatpush.msra.mxu0 0.0
      %1924 = vmatpush.msra.mxu0 0.0
      %1925 = vmatpush.msra.mxu0 %v719
      %1926 = vmatpush.msra.mxu0 %v461
      %1927 = vmatpush.msra.mxu0 %v397
      %1928 = vmatpush.msra.mxu0 %v333
      %1929 = vmatmul.f32.gmra.mxu0 %v538
      %v1930 = vpop.f32.mrf.mxu0
      %v1931 = vadd.f32 %v534, %v1930
      %1932 = vdwg.mxu0
      %1933 = vmatpush.msra.mxu0 0.0
      %1934 = vmatpush.msra.mxu0 0.0
      %1935 = vmatpush.msra.mxu0 0.0
      %1936 = vmatpush.msra.mxu0 0.0
      %1937 = vmatpush.msra.mxu0 0.0
      %1938 = vmatpush.msra.mxu0 0.0
      %1939 = vmatpush.msra.mxu0 0.0
      %1940 = vmatpush.msra.mxu0 0.0
      %1941 = vmatpush.msra.mxu0 0.0
      %1942 = vmatpush.msra.mxu0 0.0
      %1943 = vmatpush.msra.mxu0 0.0
      %1944 = vmatpush.msra.mxu0 0.0
      %1945 = vmatpush.msra.mxu0 %v722
      %1946 = vmatpush.msra.mxu0 %v462
      %1947 = vmatpush.msra.mxu0 %v398
      %1948 = vmatpush.msra.mxu0 %v334
      %1949 = vmatmul.f32.gmra.mxu0 %v538
      %v1950 = vpop.f32.mrf.mxu0
      %v1951 = vadd.f32 %v534, %v1950
      %1952 = vdwg.mxu0
      %1953 = vmatpush.msra.mxu0 0.0
      %1954 = vmatpush.msra.mxu0 0.0
      %1955 = vmatpush.msra.mxu0 0.0
      %1956 = vmatpush.msra.mxu0 0.0
      %1957 = vmatpush.msra.mxu0 0.0
      %1958 = vmatpush.msra.mxu0 0.0
      %1959 = vmatpush.msra.mxu0 0.0
      %1960 = vmatpush.msra.mxu0 0.0
      %1961 = vmatpush.msra.mxu0 0.0
      %1962 = vmatpush.msra.mxu0 0.0
      %1963 = vmatpush.msra.mxu0 0.0
      %1964 = vmatpush.msra.mxu0 0.0
      %1965 = vmatpush.msra.mxu0 %v725
      %1966 = vmatpush.msra.mxu0 %v463
      %1967 = vmatpush.msra.mxu0 %v399
      %1968 = vmatpush.msra.mxu0 %v335
      %1969 = vmatmul.f32.gmra.mxu0 %v538
      %v1970 = vpop.f32.mrf.mxu0
      %v1971 = vadd.f32 %v534, %v1970
      %1972 = vdwg.mxu0
      %1973 = vmatpush.msra.mxu0 0.0
      %1974 = vmatpush.msra.mxu0 0.0
      %1975 = vmatpush.msra.mxu0 0.0
      %1976 = vmatpush.msra.mxu0 0.0
      %1977 = vmatpush.msra.mxu0 0.0
      %1978 = vmatpush.msra.mxu0 0.0
      %1979 = vmatpush.msra.mxu0 0.0
      %1980 = vmatpush.msra.mxu0 0.0
      %1981 = vmatpush.msra.mxu0 0.0
      %1982 = vmatpush.msra.mxu0 0.0
      %1983 = vmatpush.msra.mxu0 0.0
      %1984 = vmatpush.msra.mxu0 0.0
      %1985 = vmatpush.msra.mxu0 %v728
      %1986 = vmatpush.msra.mxu0 %v464
      %1987 = vmatpush.msra.mxu0 %v400
      %1988 = vmatpush.msra.mxu0 %v336
      %1989 = vmatmul.f32.gmra.mxu0 %v538
      %v1990 = vpop.f32.mrf.mxu0
      %v1991 = vadd.f32 %v534, %v1990
      %1992 = vdwg.mxu0
      %1993 = vmatpush.msra.mxu0 0.0
      %1994 = vmatpush.msra.mxu0 0.0
      %1995 = vmatpush.msra.mxu0 0.0
      %1996 = vmatpush.msra.mxu0 0.0
      %1997 = vmatpush.msra.mxu0 0.0
      %1998 = vmatpush.msra.mxu0 0.0
      %1999 = vmatpush.msra.mxu0 0.0
      %2000 = vmatpush.msra.mxu0 0.0
      %2001 = vmatpush.msra.mxu0 0.0
      %2002 = vmatpush.msra.mxu0 0.0
      %2003 = vmatpush.msra.mxu0 0.0
      %2004 = vmatpush.msra.mxu0 0.0
      %2005 = vmatpush.msra.mxu0 %v731
      %2006 = vmatpush.msra.mxu0 %v465
      %2007 = vmatpush.msra.mxu0 %v401
      %2008 = vmatpush.msra.mxu0 %v337
      %2009 = vmatmul.f32.gmra.mxu0 %v538
      %v2010 = vpop.f32.mrf.mxu0
      %v2011 = vadd.f32 %v534, %v2010
      %2012 = vdwg.mxu0
      %v2013 = vadd.f32 %v751, %v771
      %v2014 = vadd.f32 %v2013, %v791
      %v2015 = vadd.f32 %v2014, %v811
      %v2016 = vadd.f32 %v2015, %v831
      %v2017 = vadd.f32 %v2016, %v851
      %v2018 = vadd.f32 %v2017, %v871
      %v2019 = vadd.f32 %v2018, %v891
      %v2020 = vadd.f32 %v2019, %v911
      %v2021 = vadd.f32 %v2020, %v931
      %v2022 = vadd.f32 %v2021, %v951
      %v2023 = vadd.f32 %v2022, %v971
      %v2024 = vadd.f32 %v2023, %v991
      %v2025 = vadd.f32 %v2024, %v1011
      %v2026 = vadd.f32 %v2025, %v1031
      %v2027 = vadd.f32 %v2026, %v1051
      %v2028 = vadd.f32 %v2027, %v1071
      %v2029 = vadd.f32 %v2028, %v1091
      %v2030 = vadd.f32 %v2029, %v1111
      %v2031 = vadd.f32 %v2030, %v1131
      %v2032 = vadd.f32 %v2031, %v1151
      %v2033 = vadd.f32 %v2032, %v1171
      %v2034 = vadd.f32 %v2033, %v1191
      %v2035 = vadd.f32 %v2034, %v1211
      %v2036 = vadd.f32 %v2035, %v1231
      %v2037 = vadd.f32 %v2036, %v1251
      %v2038 = vadd.f32 %v2037, %v1271
      %v2039 = vadd.f32 %v2038, %v1291
      %v2040 = vadd.f32 %v2039, %v1311
      %v2041 = vadd.f32 %v2040, %v1331
      %v2042 = vadd.f32 %v2041, %v1351
      %v2043 = vadd.f32 %v2042, %v1371
      %v2044 = vadd.f32 %v2043, %v1391
      %v2045 = vadd.f32 %v2044, %v1411
      %v2046 = vadd.f32 %v2045, %v1431
      %v2047 = vadd.f32 %v2046, %v1451
      %v2048 = vadd.f32 %v2047, %v1471
      %v2049 = vadd.f32 %v2048, %v1491
      %v2050 = vadd.f32 %v2049, %v1511
      %v2051 = vadd.f32 %v2050, %v1531
      %v2052 = vadd.f32 %v2051, %v1551
      %v2053 = vadd.f32 %v2052, %v1571
      %v2054 = vadd.f32 %v2053, %v1591
      %v2055 = vadd.f32 %v2054, %v1611
      %v2056 = vadd.f32 %v2055, %v1631
      %v2057 = vadd.f32 %v2056, %v1651
      %v2058 = vadd.f32 %v2057, %v1671
      %v2059 = vadd.f32 %v2058, %v1691
      %v2060 = vadd.f32 %v2059, %v1711
      %v2061 = vadd.f32 %v2060, %v1731
      %v2062 = vadd.f32 %v2061, %v1751
      %v2063 = vadd.f32 %v2062, %v1771
      %v2064 = vadd.f32 %v2063, %v1791
      %v2065 = vadd.f32 %v2064, %v1811
      %v2066 = vadd.f32 %v2065, %v1831
      %v2067 = vadd.f32 %v2066, %v1851
      %v2068 = vadd.f32 %v2067, %v1871
      %v2069 = vadd.f32 %v2068, %v1891
      %v2070 = vadd.f32 %v2069, %v1911
      %v2071 = vadd.f32 %v2070, %v1931
      %v2072 = vadd.f32 %v2071, %v1951
      %v2073 = vadd.f32 %v2072, %v1971
      %v2074 = vadd.f32 %v2073, %v1991
      %v2075 = vadd.f32 %v2074, %v2011
      %2076 = vadd.xlane.f32.xlu0 %v2075
      %v2077 = vpop.xlane.xlu0 %2076
      %v2078 = vrcp.pop 8192.0
      %v2079 = vmul.f32 8192.0, %v2078
      %v2080 = vsub.f32 1.0, %v2079
      %v2081 = vmul.f32 %v2078, %v2080
      %v2082 = vadd.f32 %v2078, %v2081
      %vm2083 = vweird.f32 %v2078
      %v2084 = vsel %vm2083, %v2078, %v2082
      %v2085 = vmul.f32 %v2077, %v2084
      %v2086 = vsub.f32 %v751, %v2085
      %v2087 = vsub.f32 %v771, %v2085
      %v2088 = vsub.f32 %v791, %v2085
      %v2089 = vsub.f32 %v811, %v2085
      %v2090 = vsub.f32 %v831, %v2085
      %v2091 = vsub.f32 %v851, %v2085
      %v2092 = vsub.f32 %v871, %v2085
      %v2093 = vsub.f32 %v891, %v2085
      %v2094 = vsub.f32 %v911, %v2085
      %v2095 = vsub.f32 %v931, %v2085
      %v2096 = vsub.f32 %v951, %v2085
      %v2097 = vsub.f32 %v971, %v2085
      %v2098 = vsub.f32 %v991, %v2085
      %v2099 = vsub.f32 %v1011, %v2085
      %v2100 = vsub.f32 %v1031, %v2085
      %v2101 = vsub.f32 %v1051, %v2085
      %v2102 = vsub.f32 %v1071, %v2085
      %v2103 = vsub.f32 %v1091, %v2085
      %v2104 = vsub.f32 %v1111, %v2085
      %v2105 = vsub.f32 %v1131, %v2085
      %v2106 = vsub.f32 %v1151, %v2085
      %v2107 = vsub.f32 %v1171, %v2085
      %v2108 = vsub.f32 %v1191, %v2085
      %v2109 = vsub.f32 %v1211, %v2085
      %v2110 = vsub.f32 %v1231, %v2085
      %v2111 = vsub.f32 %v1251, %v2085
      %v2112 = vsub.f32 %v1271, %v2085
      %v2113 = vsub.f32 %v1291, %v2085
      %v2114 = vsub.f32 %v1311, %v2085
      %v2115 = vsub.f32 %v1331, %v2085
      %v2116 = vsub.f32 %v1351, %v2085
      %v2117 = vsub.f32 %v1371, %v2085
      %v2118 = vsub.f32 %v1391, %v2085
      %v2119 = vsub.f32 %v1411, %v2085
      %v2120 = vsub.f32 %v1431, %v2085
      %v2121 = vsub.f32 %v1451, %v2085
      %v2122 = vsub.f32 %v1471, %v2085
      %v2123 = vsub.f32 %v1491, %v2085
      %v2124 = vsub.f32 %v1511, %v2085
      %v2125 = vsub.f32 %v1531, %v2085
      %v2126 = vsub.f32 %v1551, %v2085
      %v2127 = vsub.f32 %v1571, %v2085
      %v2128 = vsub.f32 %v1591, %v2085
      %v2129 = vsub.f32 %v1611, %v2085
      %v2130 = vsub.f32 %v1631, %v2085
      %v2131 = vsub.f32 %v1651, %v2085
      %v2132 = vsub.f32 %v1671, %v2085
      %v2133 = vsub.f32 %v1691, %v2085
      %v2134 = vsub.f32 %v1711, %v2085
      %v2135 = vsub.f32 %v1731, %v2085
      %v2136 = vsub.f32 %v1751, %v2085
      %v2137 = vsub.f32 %v1771, %v2085
      %v2138 = vsub.f32 %v1791, %v2085
      %v2139 = vsub.f32 %v1811, %v2085
      %v2140 = vsub.f32 %v1831, %v2085
      %v2141 = vsub.f32 %v1851, %v2085
      %v2142 = vsub.f32 %v1871, %v2085
      %v2143 = vsub.f32 %v1891, %v2085
      %v2144 = vsub.f32 %v1911, %v2085
      %v2145 = vsub.f32 %v1931, %v2085
      %v2146 = vsub.f32 %v1951, %v2085
      %v2147 = vsub.f32 %v1971, %v2085
      %v2148 = vsub.f32 %v1991, %v2085
      %v2149 = vsub.f32 %v2011, %v2085
      %v2150 = vmul.f32 %v2086, %v2086
      %v2151 = vmul.f32 %v2087, %v2087
      %v2152 = vmul.f32 %v2088, %v2088
      %v2153 = vmul.f32 %v2089, %v2089
      %v2154 = vmul.f32 %v2090, %v2090
      %v2155 = vmul.f32 %v2091, %v2091
      %v2156 = vmul.f32 %v2092, %v2092
      %v2157 = vmul.f32 %v2093, %v2093
      %v2158 = vmul.f32 %v2094, %v2094
      %v2159 = vmul.f32 %v2095, %v2095
      %v2160 = vmul.f32 %v2096, %v2096
      %v2161 = vmul.f32 %v2097, %v2097
      %v2162 = vmul.f32 %v2098, %v2098
      %v2163 = vmul.f32 %v2099, %v2099
      %v2164 = vmul.f32 %v2100, %v2100
      %v2165 = vmul.f32 %v2101, %v2101
      %v2166 = vmul.f32 %v2102, %v2102
      %v2167 = vmul.f32 %v2103, %v2103
      %v2168 = vmul.f32 %v2104, %v2104
      %v2169 = vmul.f32 %v2105, %v2105
      %v2170 = vmul.f32 %v2106, %v2106
      %v2171 = vmul.f32 %v2107, %v2107
      %v2172 = vmul.f32 %v2108, %v2108
      %v2173 = vmul.f32 %v2109, %v2109
      %v2174 = vmul.f32 %v2110, %v2110
      %v2175 = vmul.f32 %v2111, %v2111
      %v2176 = vmul.f32 %v2112, %v2112
      %v2177 = vmul.f32 %v2113, %v2113
      %v2178 = vmul.f32 %v2114, %v2114
      %v2179 = vmul.f32 %v2115, %v2115
      %v2180 = vmul.f32 %v2116, %v2116
      %v2181 = vmul.f32 %v2117, %v2117
      %v2182 = vmul.f32 %v2118, %v2118
      %v2183 = vmul.f32 %v2119, %v2119
      %v2184 = vmul.f32 %v2120, %v2120
      %v2185 = vmul.f32 %v2121, %v2121
      %v2186 = vmul.f32 %v2122, %v2122
      %v2187 = vmul.f32 %v2123, %v2123
      %v2188 = vmul.f32 %v2124, %v2124
      %v2189 = vmul.f32 %v2125, %v2125
      %v2190 = vmul.f32 %v2126, %v2126
      %v2191 = vmul.f32 %v2127, %v2127
      %v2192 = vmul.f32 %v2128, %v2128
      %v2193 = vmul.f32 %v2129, %v2129
      %v2194 = vmul.f32 %v2130, %v2130
      %v2195 = vmul.f32 %v2131, %v2131
      %v2196 = vmul.f32 %v2132, %v2132
      %v2197 = vmul.f32 %v2133, %v2133
      %v2198 = vmul.f32 %v2134, %v2134
      %v2199 = vmul.f32 %v2135, %v2135
      %v2200 = vmul.f32 %v2136, %v2136
      %v2201 = vmul.f32 %v2137, %v2137
      %v2202 = vmul.f32 %v2138, %v2138
      %v2203 = vmul.f32 %v2139, %v2139
      %v2204 = vmul.f32 %v2140, %v2140
      %v2205 = vmul.f32 %v2141, %v2141
      %v2206 = vmul.f32 %v2142, %v2142
      %v2207 = vmul.f32 %v2143, %v2143
      %v2208 = vmul.f32 %v2144, %v2144
      %v2209 = vmul.f32 %v2145, %v2145
      %v2210 = vmul.f32 %v2146, %v2146
      %v2211 = vmul.f32 %v2147, %v2147
      %v2212 = vmul.f32 %v2148, %v2148
      %v2213 = vmul.f32 %v2149, %v2149
      %v2214 = vadd.f32 %v2150, %v2151
      %v2215 = vadd.f32 %v2214, %v2152
      %v2216 = vadd.f32 %v2215, %v2153
      %v2217 = vadd.f32 %v2216, %v2154
      %v2218 = vadd.f32 %v2217, %v2155
      %v2219 = vadd.f32 %v2218, %v2156
      %v2220 = vadd.f32 %v2219, %v2157
      %v2221 = vadd.f32 %v2220, %v2158
      %v2222 = vadd.f32 %v2221, %v2159
      %v2223 = vadd.f32 %v2222, %v2160
      %v2224 = vadd.f32 %v2223, %v2161
      %v2225 = vadd.f32 %v2224, %v2162
      %v2226 = vadd.f32 %v2225, %v2163
      %v2227 = vadd.f32 %v2226, %v2164
      %v2228 = vadd.f32 %v2227, %v2165
      %v2229 = vadd.f32 %v2228, %v2166
      %v2230 = vadd.f32 %v2229, %v2167
      %v2231 = vadd.f32 %v2230, %v2168
      %v2232 = vadd.f32 %v2231, %v2169
      %v2233 = vadd.f32 %v2232, %v2170
      %v2234 = vadd.f32 %v2233, %v2171
      %v2235 = vadd.f32 %v2234, %v2172
      %v2236 = vadd.f32 %v2235, %v2173
      %v2237 = vadd.f32 %v2236, %v2174
      %v2238 = vadd.f32 %v2237, %v2175
      %v2239 = vadd.f32 %v2238, %v2176
      %v2240 = vadd.f32 %v2239, %v2177
      %v2241 = vadd.f32 %v2240, %v2178
      %v2242 = vadd.f32 %v2241, %v2179
      %v2243 = vadd.f32 %v2242, %v2180
      %v2244 = vadd.f32 %v2243, %v2181
      %v2245 = vadd.f32 %v2244, %v2182
      %v2246 = vadd.f32 %v2245, %v2183
      %v2247 = vadd.f32 %v2246, %v2184
      %v2248 = vadd.f32 %v2247, %v2185
      %v2249 = vadd.f32 %v2248, %v2186
      %v2250 = vadd.f32 %v2249, %v2187
      %v2251 = vadd.f32 %v2250, %v2188
      %v2252 = vadd.f32 %v2251, %v2189
      %v2253 = vadd.f32 %v2252, %v2190
      %v2254 = vadd.f32 %v2253, %v2191
      %v2255 = vadd.f32 %v2254, %v2192
      %v2256 = vadd.f32 %v2255, %v2193
      %v2257 = vadd.f32 %v2256, %v2194
      %v2258 = vadd.f32 %v2257, %v2195
      %v2259 = vadd.f32 %v2258, %v2196
      %v2260 = vadd.f32 %v2259, %v2197
      %v2261 = vadd.f32 %v2260, %v2198
      %v2262 = vadd.f32 %v2261, %v2199
      %v2263 = vadd.f32 %v2262, %v2200
      %v2264 = vadd.f32 %v2263, %v2201
      %v2265 = vadd.f32 %v2264, %v2202
      %v2266 = vadd.f32 %v2265, %v2203
      %v2267 = vadd.f32 %v2266, %v2204
      %v2268 = vadd.f32 %v2267, %v2205
      %v2269 = vadd.f32 %v2268, %v2206
      %v2270 = vadd.f32 %v2269, %v2207
      %v2271 = vadd.f32 %v2270, %v2208
      %v2272 = vadd.f32 %v2271, %v2209
      %v2273 = vadd.f32 %v2272, %v2210
      %v2274 = vadd.f32 %v2273, %v2211
      %v2275 = vadd.f32 %v2274, %v2212
      %v2276 = vadd.f32 %v2275, %v2213
      %2277 = vadd.xlane.f32.xlu0 %v2276
      %v2278 = vpop.xlane.xlu0 %2277
      %v2279 = vmul.f32 %v2278, %v2084
      %v2280 = vadd.f32 %v2279, 1e-05
      %v2281 = vrsqrt.pop %v2280
      %v2282 = vmul.f32 %v2281, %v2280
      %v2283 = vmul.f32 %v2282, %v2281
      %v2284 = vmul.f32 0.5, %v2283
      %v2285 = vsub.f32 1.5, %v2284
      %v2286 = vmul.f32 %v2281, %v2285
      %vm2287 = vweird.f32 %v2280
      %vm2288 = vweird.f32 %v2281
      %vm2289 = vmor %vm2287, %vm2288
      %v2290 = vsel %vm2289, %v2281, %v2286
      %v2291 = vmul.f32 %v2086, %v2290
      %v2292 = vmul.f32 %v2087, %v2290
      %v2293 = vmul.f32 %v2088, %v2290
      %v2294 = vmul.f32 %v2089, %v2290
      %v2295 = vmul.f32 %v2090, %v2290
      %v2296 = vmul.f32 %v2091, %v2290
      %v2297 = vmul.f32 %v2092, %v2290
      %v2298 = vmul.f32 %v2093, %v2290
      %v2299 = vmul.f32 %v2094, %v2290
      %v2300 = vmul.f32 %v2095, %v2290
      %v2301 = vmul.f32 %v2096, %v2290
      %v2302 = vmul.f32 %v2097, %v2290
      %v2303 = vmul.f32 %v2098, %v2290
      %v2304 = vmul.f32 %v2099, %v2290
      %v2305 = vmul.f32 %v2100, %v2290
      %v2306 = vmul.f32 %v2101, %v2290
      %v2307 = vmul.f32 %v2102, %v2290
      %v2308 = vmul.f32 %v2103, %v2290
      %v2309 = vmul.f32 %v2104, %v2290
      %v2310 = vmul.f32 %v2105, %v2290
      %v2311 = vmul.f32 %v2106, %v2290
      %v2312 = vmul.f32 %v2107, %v2290
      %v2313 = vmul.f32 %v2108, %v2290
      %v2314 = vmul.f32 %v2109, %v2290
      %v2315 = vmul.f32 %v2110, %v2290
      %v2316 = vmul.f32 %v2111, %v2290
      %v2317 = vmul.f32 %v2112, %v2290
      %v2318 = vmul.f32 %v2113, %v2290
      %v2319 = vmul.f32 %v2114, %v2290
      %v2320 = vmul.f32 %v2115, %v2290
      %v2321 = vmul.f32 %v2116, %v2290
      %v2322 = vmul.f32 %v2117, %v2290
      %v2323 = vmul.f32 %v2118, %v2290
      %v2324 = vmul.f32 %v2119, %v2290
      %v2325 = vmul.f32 %v2120, %v2290
      %v2326 = vmul.f32 %v2121, %v2290
      %v2327 = vmul.f32 %v2122, %v2290
      %v2328 = vmul.f32 %v2123, %v2290
      %v2329 = vmul.f32 %v2124, %v2290
      %v2330 = vmul.f32 %v2125, %v2290
      %v2331 = vmul.f32 %v2126, %v2290
      %v2332 = vmul.f32 %v2127, %v2290
      %v2333 = vmul.f32 %v2128, %v2290
      %v2334 = vmul.f32 %v2129, %v2290
      %v2335 = vmul.f32 %v2130, %v2290
      %v2336 = vmul.f32 %v2131, %v2290
      %v2337 = vmul.f32 %v2132, %v2290
      %v2338 = vmul.f32 %v2133, %v2290
      %v2339 = vmul.f32 %v2134, %v2290
      %v2340 = vmul.f32 %v2135, %v2290
      %v2341 = vmul.f32 %v2136, %v2290
      %v2342 = vmul.f32 %v2137, %v2290
      %v2343 = vmul.f32 %v2138, %v2290
      %v2344 = vmul.f32 %v2139, %v2290
      %v2345 = vmul.f32 %v2140, %v2290
      %v2346 = vmul.f32 %v2141, %v2290
      %v2347 = vmul.f32 %v2142, %v2290
      %v2348 = vmul.f32 %v2143, %v2290
      %v2349 = vmul.f32 %v2144, %v2290
      %v2350 = vmul.f32 %v2145, %v2290
      %v2351 = vmul.f32 %v2146, %v2290
      %v2352 = vmul.f32 %v2147, %v2290
      %v2353 = vmul.f32 %v2148, %v2290
      %v2354 = vmul.f32 %v2149, %v2290
      %v2355 = vld [vmem:[%s263] sm:$0xff]
      %2357 = vset.pattern.permute.xlu0 0
      %2358 = vperm.xlu0 %2357, %v2355
      %v2359 = vpop.permute.xlu0 %2358
      %v2361 = vmul.f32 %v2291, %v2359
      %v2362 = vmul.f32 %v2292, %v2359
      %v2363 = vmul.f32 %v2293, %v2359
      %v2364 = vmul.f32 %v2294, %v2359
      %v2365 = vmul.f32 %v2295, %v2359
      %v2366 = vmul.f32 %v2296, %v2359
      %v2367 = vmul.f32 %v2297, %v2359
      %v2368 = vmul.f32 %v2298, %v2359
      %v2369 = vmul.f32 %v2299, %v2359
      %v2370 = vmul.f32 %v2300, %v2359
      %v2371 = vmul.f32 %v2301, %v2359
      %v2372 = vmul.f32 %v2302, %v2359
      %v2373 = vmul.f32 %v2303, %v2359
      %v2374 = vmul.f32 %v2304, %v2359
      %v2375 = vmul.f32 %v2305, %v2359
      %v2376 = vmul.f32 %v2306, %v2359
      %v2377 = vmul.f32 %v2307, %v2359
      %v2378 = vmul.f32 %v2308, %v2359
      %v2379 = vmul.f32 %v2309, %v2359
      %v2380 = vmul.f32 %v2310, %v2359
      %v2381 = vmul.f32 %v2311, %v2359
      %v2382 = vmul.f32 %v2312, %v2359
      %v2383 = vmul.f32 %v2313, %v2359
      %v2384 = vmul.f32 %v2314, %v2359
      %v2385 = vmul.f32 %v2315, %v2359
      %v2386 = vmul.f32 %v2316, %v2359
      %v2387 = vmul.f32 %v2317, %v2359
      %v2388 = vmul.f32 %v2318, %v2359
      %v2389 = vmul.f32 %v2319, %v2359
      %v2390 = vmul.f32 %v2320, %v2359
      %v2391 = vmul.f32 %v2321, %v2359
      %v2392 = vmul.f32 %v2322, %v2359
      %v2393 = vmul.f32 %v2323, %v2359
      %v2394 = vmul.f32 %v2324, %v2359
      %v2395 = vmul.f32 %v2325, %v2359
      %v2396 = vmul.f32 %v2326, %v2359
      %v2397 = vmul.f32 %v2327, %v2359
      %v2398 = vmul.f32 %v2328, %v2359
      %v2399 = vmul.f32 %v2329, %v2359
      %v2400 = vmul.f32 %v2330, %v2359
      %v2401 = vmul.f32 %v2331, %v2359
      %v2402 = vmul.f32 %v2332, %v2359
      %v2403 = vmul.f32 %v2333, %v2359
      %v2404 = vmul.f32 %v2334, %v2359
      %v2405 = vmul.f32 %v2335, %v2359
      %v2406 = vmul.f32 %v2336, %v2359
      %v2407 = vmul.f32 %v2337, %v2359
      %v2408 = vmul.f32 %v2338, %v2359
      %v2409 = vmul.f32 %v2339, %v2359
      %v2410 = vmul.f32 %v2340, %v2359
      %v2411 = vmul.f32 %v2341, %v2359
      %v2412 = vmul.f32 %v2342, %v2359
      %v2413 = vmul.f32 %v2343, %v2359
      %v2414 = vmul.f32 %v2344, %v2359
      %v2415 = vmul.f32 %v2345, %v2359
      %v2416 = vmul.f32 %v2346, %v2359
      %v2417 = vmul.f32 %v2347, %v2359
      %v2418 = vmul.f32 %v2348, %v2359
      %v2419 = vmul.f32 %v2349, %v2359
      %v2420 = vmul.f32 %v2350, %v2359
      %v2421 = vmul.f32 %v2351, %v2359
      %v2422 = vmul.f32 %v2352, %v2359
      %v2423 = vmul.f32 %v2353, %v2359
      %v2424 = vmul.f32 %v2354, %v2359
      %v2425 = vld [vmem:[%s267] sm:$0xff]
      %2427 = vset.pattern.permute.xlu0 0
      %2428 = vperm.xlu0 %2427, %v2425
      %v2429 = vpop.permute.xlu0 %2428
      %v2431 = vadd.f32 %v2361, %v2429
      %v2432 = vadd.f32 %v2362, %v2429
      %v2433 = vadd.f32 %v2363, %v2429
      %v2434 = vadd.f32 %v2364, %v2429
      %v2435 = vadd.f32 %v2365, %v2429
      %v2436 = vadd.f32 %v2366, %v2429
      %v2437 = vadd.f32 %v2367, %v2429
      %v2438 = vadd.f32 %v2368, %v2429
      %v2439 = vadd.f32 %v2369, %v2429
      %v2440 = vadd.f32 %v2370, %v2429
      %v2441 = vadd.f32 %v2371, %v2429
      %v2442 = vadd.f32 %v2372, %v2429
      %v2443 = vadd.f32 %v2373, %v2429
      %v2444 = vadd.f32 %v2374, %v2429
      %v2445 = vadd.f32 %v2375, %v2429
      %v2446 = vadd.f32 %v2376, %v2429
      %v2447 = vadd.f32 %v2377, %v2429
      %v2448 = vadd.f32 %v2378, %v2429
      %v2449 = vadd.f32 %v2379, %v2429
      %v2450 = vadd.f32 %v2380, %v2429
      %v2451 = vadd.f32 %v2381, %v2429
      %v2452 = vadd.f32 %v2382, %v2429
      %v2453 = vadd.f32 %v2383, %v2429
      %v2454 = vadd.f32 %v2384, %v2429
      %v2455 = vadd.f32 %v2385, %v2429
      %v2456 = vadd.f32 %v2386, %v2429
      %v2457 = vadd.f32 %v2387, %v2429
      %v2458 = vadd.f32 %v2388, %v2429
      %v2459 = vadd.f32 %v2389, %v2429
      %v2460 = vadd.f32 %v2390, %v2429
      %v2461 = vadd.f32 %v2391, %v2429
      %v2462 = vadd.f32 %v2392, %v2429
      %v2463 = vadd.f32 %v2393, %v2429
      %v2464 = vadd.f32 %v2394, %v2429
      %v2465 = vadd.f32 %v2395, %v2429
      %v2466 = vadd.f32 %v2396, %v2429
      %v2467 = vadd.f32 %v2397, %v2429
      %v2468 = vadd.f32 %v2398, %v2429
      %v2469 = vadd.f32 %v2399, %v2429
      %v2470 = vadd.f32 %v2400, %v2429
      %v2471 = vadd.f32 %v2401, %v2429
      %v2472 = vadd.f32 %v2402, %v2429
      %v2473 = vadd.f32 %v2403, %v2429
      %v2474 = vadd.f32 %v2404, %v2429
      %v2475 = vadd.f32 %v2405, %v2429
      %v2476 = vadd.f32 %v2406, %v2429
      %v2477 = vadd.f32 %v2407, %v2429
      %v2478 = vadd.f32 %v2408, %v2429
      %v2479 = vadd.f32 %v2409, %v2429
      %v2480 = vadd.f32 %v2410, %v2429
      %v2481 = vadd.f32 %v2411, %v2429
      %v2482 = vadd.f32 %v2412, %v2429
      %v2483 = vadd.f32 %v2413, %v2429
      %v2484 = vadd.f32 %v2414, %v2429
      %v2485 = vadd.f32 %v2415, %v2429
      %v2486 = vadd.f32 %v2416, %v2429
      %v2487 = vadd.f32 %v2417, %v2429
      %v2488 = vadd.f32 %v2418, %v2429
      %v2489 = vadd.f32 %v2419, %v2429
      %v2490 = vadd.f32 %v2420, %v2429
      %v2491 = vadd.f32 %v2421, %v2429
      %v2492 = vadd.f32 %v2422, %v2429
      %v2493 = vadd.f32 %v2423, %v2429
      %v2494 = vadd.f32 %v2424, %v2429
      %v2495 = vmax.f32 %v2431, 0.0
      %v2496 = vmax.f32 %v2432, 0.0
      %v2497 = vmax.f32 %v2433, 0.0
      %v2498 = vmax.f32 %v2434, 0.0
      %v2499 = vmax.f32 %v2435, 0.0
      %v2500 = vmax.f32 %v2436, 0.0
      %v2501 = vmax.f32 %v2437, 0.0
      %v2502 = vmax.f32 %v2438, 0.0
      %v2503 = vmax.f32 %v2439, 0.0
      %v2504 = vmax.f32 %v2440, 0.0
      %v2505 = vmax.f32 %v2441, 0.0
      %v2506 = vmax.f32 %v2442, 0.0
      %v2507 = vmax.f32 %v2443, 0.0
      %v2508 = vmax.f32 %v2444, 0.0
      %v2509 = vmax.f32 %v2445, 0.0
      %v2510 = vmax.f32 %v2446, 0.0
      %v2511 = vmax.f32 %v2447, 0.0
      %v2512 = vmax.f32 %v2448, 0.0
      %v2513 = vmax.f32 %v2449, 0.0
      %v2514 = vmax.f32 %v2450, 0.0
      %v2515 = vmax.f32 %v2451, 0.0
      %v2516 = vmax.f32 %v2452, 0.0
      %v2517 = vmax.f32 %v2453, 0.0
      %v2518 = vmax.f32 %v2454, 0.0
      %v2519 = vmax.f32 %v2455, 0.0
      %v2520 = vmax.f32 %v2456, 0.0
      %v2521 = vmax.f32 %v2457, 0.0
      %v2522 = vmax.f32 %v2458, 0.0
      %v2523 = vmax.f32 %v2459, 0.0
      %v2524 = vmax.f32 %v2460, 0.0
      %v2525 = vmax.f32 %v2461, 0.0
      %v2526 = vmax.f32 %v2462, 0.0
      %v2527 = vmax.f32 %v2463, 0.0
      %v2528 = vmax.f32 %v2464, 0.0
      %v2529 = vmax.f32 %v2465, 0.0
      %v2530 = vmax.f32 %v2466, 0.0
      %v2531 = vmax.f32 %v2467, 0.0
      %v2532 = vmax.f32 %v2468, 0.0
      %v2533 = vmax.f32 %v2469, 0.0
      %v2534 = vmax.f32 %v2470, 0.0
      %v2535 = vmax.f32 %v2471, 0.0
      %v2536 = vmax.f32 %v2472, 0.0
      %v2537 = vmax.f32 %v2473, 0.0
      %v2538 = vmax.f32 %v2474, 0.0
      %v2539 = vmax.f32 %v2475, 0.0
      %v2540 = vmax.f32 %v2476, 0.0
      %v2541 = vmax.f32 %v2477, 0.0
      %v2542 = vmax.f32 %v2478, 0.0
      %v2543 = vmax.f32 %v2479, 0.0
      %v2544 = vmax.f32 %v2480, 0.0
      %v2545 = vmax.f32 %v2481, 0.0
      %v2546 = vmax.f32 %v2482, 0.0
      %v2547 = vmax.f32 %v2483, 0.0
      %v2548 = vmax.f32 %v2484, 0.0
      %v2549 = vmax.f32 %v2485, 0.0
      %v2550 = vmax.f32 %v2486, 0.0
      %v2551 = vmax.f32 %v2487, 0.0
      %v2552 = vmax.f32 %v2488, 0.0
      %v2553 = vmax.f32 %v2489, 0.0
      %v2554 = vmax.f32 %v2490, 0.0
      %v2555 = vmax.f32 %v2491, 0.0
      %v2556 = vmax.f32 %v2492, 0.0
      %v2557 = vmax.f32 %v2493, 0.0
      %v2558 = vmax.f32 %v2494, 0.0
      %2559 = vst [vmem:[%s272] sm:$0xff] %v2495
      %2560 = vst [vmem:[%s272 + $0x8] sm:$0xff] %v2496
      %2561 = vst [vmem:[%s272 + $0x10] sm:$0xff] %v2497
      %2562 = vst [vmem:[%s272 + $0x18] sm:$0xff] %v2498
      %2563 = vst [vmem:[%s272 + $0x20] sm:$0xff] %v2499
      %2564 = vst [vmem:[%s272 + $0x28] sm:$0xff] %v2500
      %2565 = vst [vmem:[%s272 + $0x30] sm:$0xff] %v2501
      %2566 = vst [vmem:[%s272 + $0x38] sm:$0xff] %v2502
      %2567 = vst [vmem:[%s272 + $0x40] sm:$0xff] %v2503
      %2568 = vst [vmem:[%s272 + $0x48] sm:$0xff] %v2504
      %2569 = vst [vmem:[%s272 + $0x50] sm:$0xff] %v2505
      %2570 = vst [vmem:[%s272 + $0x58] sm:$0xff] %v2506
      %2571 = vst [vmem:[%s272 + $0x60] sm:$0xff] %v2507
      %2572 = vst [vmem:[%s272 + $0x68] sm:$0xff] %v2508
      %2573 = vst [vmem:[%s272 + $0x70] sm:$0xff] %v2509
      %2574 = vst [vmem:[%s272 + $0x78] sm:$0xff] %v2510
      %2575 = vst [vmem:[%s272 + $0x80] sm:$0xff] %v2511
      %2576 = vst [vmem:[%s272 + $0x88] sm:$0xff] %v2512
      %2577 = vst [vmem:[%s272 + $0x90] sm:$0xff] %v2513
      %2578 = vst [vmem:[%s272 + $0x98] sm:$0xff] %v2514
      %2579 = vst [vmem:[%s272 + $0xa0] sm:$0xff] %v2515
      %2580 = vst [vmem:[%s272 + $0xa8] sm:$0xff] %v2516
      %2581 = vst [vmem:[%s272 + $0xb0] sm:$0xff] %v2517
      %2582 = vst [vmem:[%s272 + $0xb8] sm:$0xff] %v2518
      %2583 = vst [vmem:[%s272 + $0xc0] sm:$0xff] %v2519
      %2584 = vst [vmem:[%s272 + $0xc8] sm:$0xff] %v2520
      %2585 = vst [vmem:[%s272 + $0xd0] sm:$0xff] %v2521
      %2586 = vst [vmem:[%s272 + $0xd8] sm:$0xff] %v2522
      %2587 = vst [vmem:[%s272 + $0xe0] sm:$0xff] %v2523
      %2588 = vst [vmem:[%s272 + $0xe8] sm:$0xff] %v2524
      %2589 = vst [vmem:[%s272 + $0xf0] sm:$0xff] %v2525
      %2590 = vst [vmem:[%s272 + $0xf8] sm:$0xff] %v2526
      %2591 = vst [vmem:[%s272 + $0x100] sm:$0xff] %v2527
      %2592 = vst [vmem:[%s272 + $0x108] sm:$0xff] %v2528
      %2593 = vst [vmem:[%s272 + $0x110] sm:$0xff] %v2529
      %2594 = vst [vmem:[%s272 + $0x118] sm:$0xff] %v2530
      %2595 = vst [vmem:[%s272 + $0x120] sm:$0xff] %v2531
      %2596 = vst [vmem:[%s272 + $0x128] sm:$0xff] %v2532
      %2597 = vst [vmem:[%s272 + $0x130] sm:$0xff] %v2533
      %2598 = vst [vmem:[%s272 + $0x138] sm:$0xff] %v2534
      %2599 = vst [vmem:[%s272 + $0x140] sm:$0xff] %v2535
      %2600 = vst [vmem:[%s272 + $0x148] sm:$0xff] %v2536
      %2601 = vst [vmem:[%s272 + $0x150] sm:$0xff] %v2537
      %2602 = vst [vmem:[%s272 + $0x158] sm:$0xff] %v2538
      %2603 = vst [vmem:[%s272 + $0x160] sm:$0xff] %v2539
      %2604 = vst [vmem:[%s272 + $0x168] sm:$0xff] %v2540
      %2605 = vst [vmem:[%s272 + $0x170] sm:$0xff] %v2541
      %2606 = vst [vmem:[%s272 + $0x178] sm:$0xff] %v2542
      %2607 = vst [vmem:[%s272 + $0x180] sm:$0xff] %v2543
      %2608 = vst [vmem:[%s272 + $0x188] sm:$0xff] %v2544
      %2609 = vst [vmem:[%s272 + $0x190] sm:$0xff] %v2545
      %2610 = vst [vmem:[%s272 + $0x198] sm:$0xff] %v2546
      %2611 = vst [vmem:[%s272 + $0x1a0] sm:$0xff] %v2547
      %2612 = vst [vmem:[%s272 + $0x1a8] sm:$0xff] %v2548
      %2613 = vst [vmem:[%s272 + $0x1b0] sm:$0xff] %v2549
      %2614 = vst [vmem:[%s272 + $0x1b8] sm:$0xff] %v2550
      %2615 = vst [vmem:[%s272 + $0x1c0] sm:$0xff] %v2551
      %2616 = vst [vmem:[%s272 + $0x1c8] sm:$0xff] %v2552
      %2617 = vst [vmem:[%s272 + $0x1d0] sm:$0xff] %v2553
      %2618 = vst [vmem:[%s272 + $0x1d8] sm:$0xff] %v2554
      %2619 = vst [vmem:[%s272 + $0x1e0] sm:$0xff] %v2555
      %2620 = vst [vmem:[%s272 + $0x1e8] sm:$0xff] %v2556
      %2621 = vst [vmem:[%s272 + $0x1f0] sm:$0xff] %v2557
      %2622 = vst [vmem:[%s272 + $0x1f8] sm:$0xff] %v2558
      %p2623 = scmp.lt.s32.totalorder %s16, 1
      %s2624 = scalar_select %p2623, %s16, 1
      %s2625 = smul.addr %s2624, 64
      %s2626 = smul.addr %s2625, 8
      %s2627 = scalar_lea.vmem %s5, %s2626
      // Predicated region
      $region41: #{forward.5} parent=39 // pred_check
        %p2628 = pneg %p159
      $region42: #{forward.5} parent=39 // pred_check_branch
        %2630 = sbr.rel (%p2628) target = $region44
      $region43: #{forward.5} parent=39 // pred_region
        _
      $region44: #{forward.5} parent=39 // pred_fallthru
        _
    $region40: #{forward.5} parent=5 // pred_fallthru
      _
    %p2631 = scmp.le.s32.totalorder 2, %s11
    // Predicated region
    $region45: #{forward.5} parent=5 // pred_check
      %p2632 = pneg %p2631
    $region46: #{forward.5} parent=5 // pred_check_branch
      %2634 = sbr.rel (%p2632) target = $region48
    $region47: #{forward.5} parent=5 // pred_region
      %s2635 = ssub.s32 %s11, 2
      // Predicated region
      $region49: #{forward.5} parent=47 // pred_check
        %p2636 = pneg %p165
      $region50: #{forward.5} parent=47 // pred_check_branch
        %2638 = sbr.rel (%p2636) target = $region52
      $region51: #{forward.5} parent=47 // pred_region
        %p2639 = scmp.lt.s32.totalorder %s17, 1
        %s2640 = scalar_select %p2639, %s17, 1
        %s2641 = smul.addr %s2640, 64
        %s2642 = smul.addr %s2641, 8
        %s2643 = scalar_lea.vmem %s5, %s2642
      $region52: #{forward.5} parent=47 // pred_fallthru
        _
    $region48: #{forward.5} parent=5 // pred_fallthru
      _
  $region6: #{forward.5} parent=0 // loop_footer
    %s15 = sadd.s32 1, %s11
  $region7: #{forward.5} parent=0 // loop_footer_branch
    %10 = sbr.rel target = $region3
  $region8: #{forward.5} parent=0 // loop_exit
    _

// kernel: forward.6
$region0: #{forward.6}
  #allocation0 [shape = 'u32[]', space=smem, size = 0x4, offset = 0x4, fixed_abs, tag = 'smem constant byte address 0x4 - core index']
  #allocation1 [shape = 'u32[72,128]{1,0:T(1,128)}', space=vmem, size = 0x9000, scoped, tag = 'internal scratch']
  %s0 = inlined_call_operand.vmem [shape: f32[144,2048], index: 0, kind: input, shape index: {}]
  %s1 = inlined_call_operand.vmem [shape: f32[32,144], index: 1, kind: input, shape index: {}]
  %s2 = inlined_call_operand.vmem [shape: f32[32,1], index: 2, kind: input, shape index: {}, may-alias: {2,4}]
  %s3 = inlined_call_operand.vmem [shape: f32[32,1], index: 3, kind: input, shape index: {}]
  %s4 = inlined_call_operand.vmem [shape: f32[32,1], index: 4, kind: input, shape index: {}, may-alias: {2,4}]
  %s5 = inlined_call_operand.vmem [shape: f32[32,2048], index: 5, kind: output, shape index: {}]
  %s6 = sld [smem:[#allocation0]]
  $region53: #{forward.6} parent=0
    _
  %s8 = ssub.s32 1, %s6
  %s9 = scalar_select 0, %s8, %s6
  loop: start=0, step=1, limit=4
  $region2: #{forward.6} parent=0 // loop_pre_header
    _
  $region3: #{forward.6} parent=0 // loop_header
    %s11 = sphi 0, %s15
    %p12 = scmp.ge.s32.totalorder %s11, 4
    %s19 = sphi 0, %s19
    %s21 = sphi 0, %s19
    %s22 = sphi 0, %s21
    %s36 = sphi 0, %s22
    %s42 = sphi 0, %s44
    %s45 = sphi 0, %s42
    %s46 = sphi 0, %s45
    %s62 = sphi 0, %s46
    %s68 = sphi 0, %s70
    %s71 = sphi 0, %s68
    %s72 = sphi 0, %s71
    %s88 = sphi 0, %s72
    %s94 = sphi 0, %s96
    %s97 = sphi 0, %s94
    %s98 = sphi 0, %s97
    %s114 = sphi 0, %s98
    %s120 = sphi 0, %s122
    %s123 = sphi 0, %s120
    %s124 = sphi 0, %s123
    %s140 = sphi 0, %s124
    %s146 = sphi 0, %s148
    %s149 = sphi 0, %s146
    %s150 = sphi 0, %s149
    %s166 = sphi 0, %s150
  $region4: #{forward.6} parent=0 // loop_header_branch
    %14 = sbr.rel (%p12) target = $region8
  $region5: #{forward.6} parent=0 // loop_body
    %s16 = ssub.s32 %s11, 1
    %s17 = ssub.s32 %s11, 2
    %s18 = sadd.s32 %s11, 1
    %s20 = sadd.s32 %s19, 1
    %p23 = scmp.eq.s32.totalorder %s11, 1
    %p24 = scmp.ne.s32.totalorder %s19, %s21
    %p25 = scmp.eq.s32.totalorder %s11, 0
    %p26 = por %p24, %p25
    %p27 = scmp.ne.s32.totalorder %s19, %s21
    %p28 = scmp.eq.s32.totalorder %s16, 1
    %p29 = por %p27, %p28
    %p30 = scmp.ne.s32.totalorder %s21, %s22
    %p31 = scmp.eq.s32.totalorder %s16, 0
    %p32 = por %p30, %p31
    %p33 = scmp.ne.s32.totalorder %s21, %s22
    %p34 = scmp.eq.s32.totalorder %s17, 1
    %p35 = por %p33, %p34
    %p37 = scmp.ne.s32.totalorder %s22, %s36
    %p38 = scmp.eq.s32.totalorder %s17, 0
    %p39 = por %p37, %p38
    %s40 = ssub.s32 %s11, %s18
    %p41 = scmp.eq.s32.totalorder %s40, 0
    %s43 = sadd.s32 %s42, 1
    %s44 = scalar_select %p41, %s42, %s43
    %p47 = pneg %p41
    %p48 = scmp.eq.s32.totalorder %s11, 1
    %p49 = por %p47, %p48
    %p50 = scmp.ne.s32.totalorder %s42, %s45
    %p51 = scmp.eq.s32.totalorder %s11, 0
    %p52 = por %p50, %p51
    %p53 = scmp.ne.s32.totalorder %s42, %s45
    %p54 = scmp.eq.s32.totalorder %s16, 1
    %p55 = por %p53, %p54
    %p56 = scmp.ne.s32.totalorder %s45, %s46
    %p57 = scmp.eq.s32.totalorder %s16, 0
    %p58 = por %p56, %p57
    %p59 = scmp.ne.s32.totalorder %s45, %s46
    %p60 = scmp.eq.s32.totalorder %s17, 1
    %p61 = por %p59, %p60
    %p63 = scmp.ne.s32.totalorder %s46, %s62
    %p64 = scmp.eq.s32.totalorder %s17, 0
    %p65 = por %p63, %p64
    %s66 = ssub.s32 %s11, %s18
    %p67 = scmp.eq.s32.totalorder %s66, 0
    %s69 = sadd.s32 %s68, 1
    %s70 = scalar_select %p67, %s68, %s69
    %p73 = pneg %p67
    %p74 = scmp.eq.s32.totalorder %s11, 1
    %p75 = por %p73, %p74
    %p76 = scmp.ne.s32.totalorder %s68, %s71
    %p77 = scmp.eq.s32.totalorder %s11, 0
    %p78 = por %p76, %p77
    %p79 = scmp.ne.s32.totalorder %s68, %s71
    %p80 = scmp.eq.s32.totalorder %s16, 1
    %p81 = por %p79, %p80
    %p82 = scmp.ne.s32.totalorder %s71, %s72
    %p83 = scmp.eq.s32.totalorder %s16, 0
    %p84 = por %p82, %p83
    %p85 = scmp.ne.s32.totalorder %s71, %s72
    %p86 = scmp.eq.s32.totalorder %s17, 1
    %p87 = por %p85, %p86
    %p89 = scmp.ne.s32.totalorder %s72, %s88
    %p90 = scmp.eq.s32.totalorder %s17, 0
    %p91 = por %p89, %p90
    %s92 = ssub.s32 %s11, %s18
    %p93 = scmp.eq.s32.totalorder %s92, 0
    %s95 = sadd.s32 %s94, 1
    %s96 = scalar_select %p93, %s94, %s95
    %p99 = pneg %p93
    %p100 = scmp.eq.s32.totalorder %s11, 1
    %p101 = por %p99, %p100
    %p102 = scmp.ne.s32.totalorder %s94, %s97
    %p103 = scmp.eq.s32.totalorder %s11, 0
    %p104 = por %p102, %p103
    %p105 = scmp.ne.s32.totalorder %s94, %s97
    %p106 = scmp.eq.s32.totalorder %s16, 1
    %p107 = por %p105, %p106
    %p108 = scmp.ne.s32.totalorder %s97, %s98
    %p109 = scmp.eq.s32.totalorder %s16, 0
    %p110 = por %p108, %p109
    %p111 = scmp.ne.s32.totalorder %s97, %s98
    %p112 = scmp.eq.s32.totalorder %s17, 1
    %p113 = por %p111, %p112
    %p115 = scmp.ne.s32.totalorder %s98, %s114
    %p116 = scmp.eq.s32.totalorder %s17, 0
    %p117 = por %p115, %p116
    %s118 = ssub.s32 %s11, %s18
    %p119 = scmp.eq.s32.totalorder %s118, 0
    %s121 = sadd.s32 %s120, 1
    %s122 = scalar_select %p119, %s120, %s121
    %p125 = pneg %p119
    %p126 = scmp.eq.s32.totalorder %s11, 1
    %p127 = por %p125, %p126
    %p128 = scmp.ne.s32.totalorder %s120, %s123
    %p129 = scmp.eq.s32.totalorder %s11, 0
    %p130 = por %p128, %p129
    %p131 = scmp.ne.s32.totalorder %s120, %s123
    %p132 = scmp.eq.s32.totalorder %s16, 1
    %p133 = por %p131, %p132
    %p134 = scmp.ne.s32.totalorder %s123, %s124
    %p135 = scmp.eq.s32.totalorder %s16, 0
    %p136 = por %p134, %p135
    %p137 = scmp.ne.s32.totalorder %s123, %s124
    %p138 = scmp.eq.s32.totalorder %s17, 1
    %p139 = por %p137, %p138
    %p141 = scmp.ne.s32.totalorder %s124, %s140
    %p142 = scmp.eq.s32.totalorder %s17, 0
    %p143 = por %p141, %p142
    %s144 = ssub.s32 %s11, %s18
    %p145 = scmp.eq.s32.totalorder %s144, 0
    %s147 = sadd.s32 %s146, 1
    %s148 = scalar_select %p145, %s146, %s147
    %p151 = pneg %p145
    %p152 = scmp.eq.s32.totalorder %s11, 1
    %p153 = por %p151, %p152
    %p154 = scmp.ne.s32.totalorder %s146, %s149
    %p155 = scmp.eq.s32.totalorder %s11, 0
    %p156 = por %p154, %p155
    %p157 = scmp.ne.s32.totalorder %s146, %s149
    %p158 = scmp.eq.s32.totalorder %s16, 1
    %p159 = por %p157, %p158
    %p160 = scmp.ne.s32.totalorder %s149, %s150
    %p161 = scmp.eq.s32.totalorder %s16, 0
    %p162 = por %p160, %p161
    %p163 = scmp.ne.s32.totalorder %s149, %s150
    %p164 = scmp.eq.s32.totalorder %s17, 1
    %p165 = por %p163, %p164
    %p167 = scmp.ne.s32.totalorder %s150, %s166
    %p168 = scmp.eq.s32.totalorder %s17, 0
    %p169 = por %p167, %p168
    %p170 = scmp.le.s32.totalorder 1, %s11
    %p171 = scmp.lt.s32.totalorder %s11, 3
    %p172 = pnand %p170, %p171
    %p173 = pneg %p172
    // Predicated region
    $region9: #{forward.6} parent=5 // pred_check
      _
    $region10: #{forward.6} parent=5 // pred_check_branch
      %175 = sbr.rel (%p172) target = $region12
    $region11: #{forward.6} parent=5 // pred_region
      %s176 = ssub.s32 %s11, 1
      // Predicated region
      $region13: #{forward.6} parent=11 // pred_check
        %p177 = pneg %p32
      $region14: #{forward.6} parent=11 // pred_check_branch
        %179 = sbr.rel (%p177) target = $region16
      $region15: #{forward.6} parent=11 // pred_region
        _
      $region16: #{forward.6} parent=11 // pred_fallthru
        _
    $region12: #{forward.6} parent=5 // pred_fallthru
      _
    %p180 = scmp.lt.s32.totalorder %s11, 2
    // Predicated region
    $region17: #{forward.6} parent=5 // pred_check
      %p181 = pneg %p180
    $region18: #{forward.6} parent=5 // pred_check_branch
      %183 = sbr.rel (%p181) target = $region20
    $region19: #{forward.6} parent=5 // pred_region
      // Predicated region
      $region21: #{forward.6} parent=19 // pred_check
        %p184 = pneg %p52
      $region22: #{forward.6} parent=19 // pred_check_branch
        %186 = sbr.rel (%p184) target = $region24
      $region23: #{forward.6} parent=19 // pred_region
        %s187 = smul.u32 2, %s11
        %p188 = scmp.lt.s32.totalorder %s187, 3
        %s189 = scalar_select %p188, %s187, 3
        %s190 = smul.addr %s189, 2
        %s191 = smul.addr %s190, 8
        %s192 = scalar_lea.vmem %s1, %s191
        %s193 = smul.u32 2, %s11
      $region24: #{forward.6} parent=19 // pred_fallthru
        _
      // Predicated region
      $region25: #{forward.6} parent=19 // pred_check
        %p194 = pneg %p78
      $region26: #{forward.6} parent=19 // pred_check_branch
        %196 = sbr.rel (%p194) target = $region28
      $region27: #{forward.6} parent=19 // pred_region
        %s197 = smul.u32 2, %s11
        %p198 = scmp.lt.s32.totalorder %s197, 3
        %s199 = scalar_select %p198, %s197, 3
        %s200 = smul.addr %s199, 8
        %s201 = scalar_lea.vmem %s2, %s200
        %s202 = smul.u32 2, %s11
      $region28: #{forward.6} parent=19 // pred_fallthru
        _
      // Predicated region
      $region29: #{forward.6} parent=19 // pred_check
        %p203 = pneg %p104
      $region30: #{forward.6} parent=19 // pred_check_branch
        %205 = sbr.rel (%p203) target = $region32
      $region31: #{forward.6} parent=19 // pred_region
        %s206 = smul.u32 2, %s11
        %p207 = scmp.lt.s32.totalorder %s206, 3
        %s208 = scalar_select %p207, %s206, 3
        %s209 = smul.addr %s208, 8
        %s210 = scalar_lea.vmem %s3, %s209
        %s211 = smul.u32 2, %s11
      $region32: #{forward.6} parent=19 // pred_fallthru
        _
      // Predicated region
      $region33: #{forward.6} parent=19 // pred_check
        %p212 = pneg %p130
      $region34: #{forward.6} parent=19 // pred_check_branch
        %214 = sbr.rel (%p212) target = $region36
      $region35: #{forward.6} parent=19 // pred_region
        %s215 = smul.u32 2, %s11
        %p216 = scmp.lt.s32.totalorder %s215, 3
        %s217 = scalar_select %p216, %s215, 3
        %s218 = smul.addr %s217, 8
        %s219 = scalar_lea.vmem %s4, %s218
        %s220 = smul.u32 2, %s11
      $region36: #{forward.6} parent=19 // pred_fallthru
        _
    $region20: #{forward.6} parent=5 // pred_fallthru
      _
    %p221 = scmp.le.s32.totalorder 1, %s11
    %p222 = scmp.lt.s32.totalorder %s11, 3
    %p223 = pnand %p221, %p222
    %p224 = pneg %p223
    // Predicated region
    $region37: #{forward.6} parent=5 // pred_check
      _
    $region38: #{forward.6} parent=5 // pred_check_branch
      %226 = sbr.rel (%p223) target = $region40
    $region39: #{forward.6} parent=5 // pred_region
      %s227 = ssub.s32 %s11, 1
      %p228 = pneg %p32
      %p229 = pneg %p29
      %s230 = smul.u32 2, %s16
      %p231 = scmp.lt.s32.totalorder %s230, 3
      %s232 = scalar_select %p231, %s230, 3
      %s233 = smul.addr %s232, 2
      %s234 = smul.addr %s233, 8
      %s235 = scalar_lea.vmem %s1, %s234
      %p236 = pneg %p58
      %p237 = pneg %p55
      %s238 = smul.u32 2, %s16
      %p239 = scmp.lt.s32.totalorder %s238, 3
      %s240 = scalar_select %p239, %s238, 3
      %s241 = smul.addr %s240, 8
      %s242 = scalar_lea.vmem %s2, %s241
      %p243 = pneg %p84
      %p244 = pneg %p81
      %s245 = smul.u32 2, %s16
      %p246 = scmp.lt.s32.totalorder %s245, 3
      %s247 = scalar_select %p246, %s245, 3
      %s248 = smul.addr %s247, 8
      %s249 = scalar_lea.vmem %s3, %s248
      %p250 = pneg %p110
      %p251 = pneg %p107
      %s252 = smul.u32 2, %s16
      %p253 = scmp.lt.s32.totalorder %s252, 3
      %s254 = scalar_select %p253, %s252, 3
      %s255 = smul.addr %s254, 8
      %s256 = scalar_lea.vmem %s4, %s255
      %p257 = pneg %p136
      %p258 = pneg %p133
      %p259 = pneg %p162
      %p260 = pneg %p159
      %s261 = smul.u32 2, %s16
      %p262 = scmp.lt.s32.totalorder %s261, 3
      %s263 = scalar_select %p262, %s261, 3
      %s264 = smul.addr %s263, 16
      %s265 = smul.addr %s264, 8
      %s266 = scalar_lea.vmem %s5, %s265
      %s267 = smul.u32 2, %s16
      %p268 = scmp.lt.s32.totalorder %s267, 3
      %s269 = scalar_select %p268, %s267, 3
      %s270 = smul.addr %s269, 2
      %s271 = smul.addr %s270, 8
      %s272 = scalar_lea.vmem %s1, %s271
      %s273 = smul.u32 2, %s16
      %s274 = smul.u32 2, %s16
      %p275 = scmp.lt.s32.totalorder %s274, 3
      %s276 = scalar_select %p275, %s274, 3
      %s277 = smul.addr %s276, 8
      %s278 = scalar_lea.vmem %s2, %s277
      %s279 = smul.u32 2, %s16
      %s280 = smul.u32 2, %s16
      %p281 = scmp.lt.s32.totalorder %s280, 3
      %s282 = scalar_select %p281, %s280, 3
      %s283 = smul.addr %s282, 8
      %s284 = scalar_lea.vmem %s3, %s283
      %s285 = smul.u32 2, %s16
      %s286 = smul.u32 2, %s16
      %p287 = scmp.lt.s32.totalorder %s286, 3
      %s288 = scalar_select %p287, %s286, 3
      %s289 = smul.addr %s288, 8
      %s290 = scalar_lea.vmem %s4, %s289
      %s291 = smul.u32 2, %s16
      %s292 = smul.u32 2, %s16
      %p293 = scmp.lt.s32.totalorder %s292, 3
      %s294 = scalar_select %p293, %s292, 3
      %s295 = smul.addr %s294, 16
      %s296 = smul.addr %s295, 8
      %s297 = scalar_lea.vmem %s5, %s296
      %s298 = smul.u32 2, %s16
      %v299 = vld [vmem:[%s272] sm:$0xff]
      %v300 = vld [vmem:[%s272 + $0x8] sm:$0xff]
      %v301 = vld [vmem:[%s272 + $0x10] sm:$0xff]
      %v302 = vld [vmem:[%s272 + $0x18] sm:$0xff]
      %v303 = vld [vmem:[%s0] sm:$0xff]
      %v304 = vld [vmem:[%s0 + $0x8] sm:$0xff]
      %v305 = vld [vmem:[%s0 + $0x10] sm:$0xff]
      %v306 = vld [vmem:[%s0 + $0x18] sm:$0xff]
      %v307 = vld [vmem:[%s0 + $0x20] sm:$0xff]
      %v308 = vld [vmem:[%s0 + $0x28] sm:$0xff]
      %v309 = vld [vmem:[%s0 + $0x30] sm:$0xff]
      %v310 = vld [vmem:[%s0 + $0x38] sm:$0xff]
      %v311 = vld [vmem:[%s0 + $0x40] sm:$0xff]
      %v312 = vld [vmem:[%s0 + $0x48] sm:$0xff]
      %v313 = vld [vmem:[%s0 + $0x50] sm:$0xff]
      %v314 = vld [vmem:[%s0 + $0x58] sm:$0xff]
      %v315 = vld [vmem:[%s0 + $0x60] sm:$0xff]
      %v316 = vld [vmem:[%s0 + $0x68] sm:$0xff]
      %v317 = vld [vmem:[%s0 + $0x70] sm:$0xff]
      %v318 = vld [vmem:[%s0 + $0x78] sm:$0xff]
      %v319 = vld [vmem:[%s0 + $0x80] sm:$0xff]
      %v320 = vld [vmem:[%s0 + $0x88] sm:$0xff]
      %v321 = vld [vmem:[%s0 + $0x90] sm:$0xff]
      %v322 = vld [vmem:[%s0 + $0x98] sm:$0xff]
      %v323 = vld [vmem:[%s0 + $0xa0] sm:$0xff]
      %v324 = vld [vmem:[%s0 + $0xa8] sm:$0xff]
      %v325 = vld [vmem:[%s0 + $0xb0] sm:$0xff]
      %v326 = vld [vmem:[%s0 + $0xb8] sm:$0xff]
      %v327 = vld [vmem:[%s0 + $0xc0] sm:$0xff]
      %v328 = vld [vmem:[%s0 + $0xc8] sm:$0xff]
      %v329 = vld [vmem:[%s0 + $0xd0] sm:$0xff]
      %v330 = vld [vmem:[%s0 + $0xd8] sm:$0xff]
      %v331 = vld [vmem:[%s0 + $0xe0] sm:$0xff]
      %v332 = vld [vmem:[%s0 + $0xe8] sm:$0xff]
      %v333 = vld [vmem:[%s0 + $0xf0] sm:$0xff]
      %v334 = vld [vmem:[%s0 + $0xf8] sm:$0xff]
      %v335 = vld [vmem:[%s0 + $0x100] sm:$0xff]
      %v336 = vld [vmem:[%s0 + $0x108] sm:$0xff]
      %v337 = vld [vmem:[%s0 + $0x110] sm:$0xff]
      %v338 = vld [vmem:[%s0 + $0x118] sm:$0xff]
      %v339 = vld [vmem:[%s0 + $0x120] sm:$0xff]
      %v340 = vld [vmem:[%s0 + $0x128] sm:$0xff]
      %v341 = vld [vmem:[%s0 + $0x130] sm:$0xff]
      %v342 = vld [vmem:[%s0 + $0x138] sm:$0xff]
      %v343 = vld [vmem:[%s0 + $0x140] sm:$0xff]
      %v344 = vld [vmem:[%s0 + $0x148] sm:$0xff]
      %v345 = vld [vmem:[%s0 + $0x150] sm:$0xff]
      %v346 = vld [vmem:[%s0 + $0x158] sm:$0xff]
      %v347 = vld [vmem:[%s0 + $0x160] sm:$0xff]
      %v348 = vld [vmem:[%s0 + $0x168] sm:$0xff]
      %v349 = vld [vmem:[%s0 + $0x170] sm:$0xff]
      %v350 = vld [vmem:[%s0 + $0x178] sm:$0xff]
      %v351 = vld [vmem:[%s0 + $0x180] sm:$0xff]
      %v352 = vld [vmem:[%s0 + $0x188] sm:$0xff]
      %v353 = vld [vmem:[%s0 + $0x190] sm:$0xff]
      %v354 = vld [vmem:[%s0 + $0x198] sm:$0xff]
      %v355 = vld [vmem:[%s0 + $0x1a0] sm:$0xff]
      %v356 = vld [vmem:[%s0 + $0x1a8] sm:$0xff]
      %v357 = vld [vmem:[%s0 + $0x1b0] sm:$0xff]
      %v358 = vld [vmem:[%s0 + $0x1b8] sm:$0xff]
      %v359 = vld [vmem:[%s0 + $0x1c0] sm:$0xff]
      %v360 = vld [vmem:[%s0 + $0x1c8] sm:$0xff]
      %v361 = vld [vmem:[%s0 + $0x1d0] sm:$0xff]
      %v362 = vld [vmem:[%s0 + $0x1d8] sm:$0xff]
      %v363 = vld [vmem:[%s0 + $0x1e0] sm:$0xff]
      %v364 = vld [vmem:[%s0 + $0x1e8] sm:$0xff]
      %v365 = vld [vmem:[%s0 + $0x1f0] sm:$0xff]
      %v366 = vld [vmem:[%s0 + $0x1f8] sm:$0xff]
      %v367 = vld [vmem:[%s0 + $0x200] sm:$0xff]
      %v368 = vld [vmem:[%s0 + $0x208] sm:$0xff]
      %v369 = vld [vmem:[%s0 + $0x210] sm:$0xff]
      %v370 = vld [vmem:[%s0 + $0x218] sm:$0xff]
      %v371 = vld [vmem:[%s0 + $0x220] sm:$0xff]
      %v372 = vld [vmem:[%s0 + $0x228] sm:$0xff]
      %v373 = vld [vmem:[%s0 + $0x230] sm:$0xff]
      %v374 = vld [vmem:[%s0 + $0x238] sm:$0xff]
      %v375 = vld [vmem:[%s0 + $0x240] sm:$0xff]
      %v376 = vld [vmem:[%s0 + $0x248] sm:$0xff]
      %v377 = vld [vmem:[%s0 + $0x250] sm:$0xff]
      %v378 = vld [vmem:[%s0 + $0x258] sm:$0xff]
      %v379 = vld [vmem:[%s0 + $0x260] sm:$0xff]
      %v380 = vld [vmem:[%s0 + $0x268] sm:$0xff]
      %v381 = vld [vmem:[%s0 + $0x270] sm:$0xff]
      %v382 = vld [vmem:[%s0 + $0x278] sm:$0xff]
      %v383 = vld [vmem:[%s0 + $0x280] sm:$0xff]
      %v384 = vld [vmem:[%s0 + $0x288] sm:$0xff]
      %v385 = vld [vmem:[%s0 + $0x290] sm:$0xff]
      %v386 = vld [vmem:[%s0 + $0x298] sm:$0xff]
      %v387 = vld [vmem:[%s0 + $0x2a0] sm:$0xff]
      %v388 = vld [vmem:[%s0 + $0x2a8] sm:$0xff]
      %v389 = vld [vmem:[%s0 + $0x2b0] sm:$0xff]
      %v390 = vld [vmem:[%s0 + $0x2b8] sm:$0xff]
      %v391 = vld [vmem:[%s0 + $0x2c0] sm:$0xff]
      %v392 = vld [vmem:[%s0 + $0x2c8] sm:$0xff]
      %v393 = vld [vmem:[%s0 + $0x2d0] sm:$0xff]
      %v394 = vld [vmem:[%s0 + $0x2d8] sm:$0xff]
      %v395 = vld [vmem:[%s0 + $0x2e0] sm:$0xff]
      %v396 = vld [vmem:[%s0 + $0x2e8] sm:$0xff]
      %v397 = vld [vmem:[%s0 + $0x2f0] sm:$0xff]
      %v398 = vld [vmem:[%s0 + $0x2f8] sm:$0xff]
      %v399 = vld [vmem:[%s0 + $0x300] sm:$0xff]
      %v400 = vld [vmem:[%s0 + $0x308] sm:$0xff]
      %v401 = vld [vmem:[%s0 + $0x310] sm:$0xff]
      %v402 = vld [vmem:[%s0 + $0x318] sm:$0xff]
      %v403 = vld [vmem:[%s0 + $0x320] sm:$0xff]
      %v404 = vld [vmem:[%s0 + $0x328] sm:$0xff]
      %v405 = vld [vmem:[%s0 + $0x330] sm:$0xff]
      %v406 = vld [vmem:[%s0 + $0x338] sm:$0xff]
      %v407 = vld [vmem:[%s0 + $0x340] sm:$0xff]
      %v408 = vld [vmem:[%s0 + $0x348] sm:$0xff]
      %v409 = vld [vmem:[%s0 + $0x350] sm:$0xff]
      %v410 = vld [vmem:[%s0 + $0x358] sm:$0xff]
      %v411 = vld [vmem:[%s0 + $0x360] sm:$0xff]
      %v412 = vld [vmem:[%s0 + $0x368] sm:$0xff]
      %v413 = vld [vmem:[%s0 + $0x370] sm:$0xff]
      %v414 = vld [vmem:[%s0 + $0x378] sm:$0xff]
      %v415 = vld [vmem:[%s0 + $0x380] sm:$0xff]
      %v416 = vld [vmem:[%s0 + $0x388] sm:$0xff]
      %v417 = vld [vmem:[%s0 + $0x390] sm:$0xff]
      %v418 = vld [vmem:[%s0 + $0x398] sm:$0xff]
      %v419 = vld [vmem:[%s0 + $0x3a0] sm:$0xff]
      %v420 = vld [vmem:[%s0 + $0x3a8] sm:$0xff]
      %v421 = vld [vmem:[%s0 + $0x3b0] sm:$0xff]
      %v422 = vld [vmem:[%s0 + $0x3b8] sm:$0xff]
      %v423 = vld [vmem:[%s0 + $0x3c0] sm:$0xff]
      %v424 = vld [vmem:[%s0 + $0x3c8] sm:$0xff]
      %v425 = vld [vmem:[%s0 + $0x3d0] sm:$0xff]
      %v426 = vld [vmem:[%s0 + $0x3d8] sm:$0xff]
      %v427 = vld [vmem:[%s0 + $0x3e0] sm:$0xff]
      %v428 = vld [vmem:[%s0 + $0x3e8] sm:$0xff]
      %v429 = vld [vmem:[%s0 + $0x3f0] sm:$0xff]
      %v430 = vld [vmem:[%s0 + $0x3f8] sm:$0xff]
      %v431 = vld [vmem:[%s0 + $0x400] sm:$0xff]
      %v432 = vld [vmem:[%s0 + $0x408] sm:$0xff]
      %v433 = vld [vmem:[%s0 + $0x410] sm:$0xff]
      %v434 = vld [vmem:[%s0 + $0x418] sm:$0xff]
      %v435 = vld [vmem:[%s0 + $0x420] sm:$0xff]
      %v436 = vld [vmem:[%s0 + $0x428] sm:$0xff]
      %v437 = vld [vmem:[%s0 + $0x430] sm:$0xff]
      %v438 = vld [vmem:[%s0 + $0x438] sm:$0xff]
      %v439 = vld [vmem:[%s0 + $0x440] sm:$0xff]
      %v440 = vld [vmem:[%s0 + $0x448] sm:$0xff]
      %v441 = vld [vmem:[%s0 + $0x450] sm:$0xff]
      %v442 = vld [vmem:[%s0 + $0x458] sm:$0xff]
      %v443 = vld [vmem:[%s0 + $0x460] sm:$0xff]
      %v444 = vld [vmem:[%s0 + $0x468] sm:$0xff]
      %v445 = vld [vmem:[%s0 + $0x470] sm:$0xff]
      %v446 = vld [vmem:[%s0 + $0x478] sm:$0xff]
      %v447 = vld [vmem:[%s0 + $0x480] sm:$0xff]
      %v448 = vld [vmem:[%s0 + $0x488] sm:$0xff]
      %v449 = vld [vmem:[%s0 + $0x490] sm:$0xff]
      %v450 = vld [vmem:[%s0 + $0x498] sm:$0xff]
      %v451 = vld [vmem:[%s0 + $0x4a0] sm:$0xff]
      %v452 = vld [vmem:[%s0 + $0x4a8] sm:$0xff]
      %v453 = vld [vmem:[%s0 + $0x4b0] sm:$0xff]
      %v454 = vld [vmem:[%s0 + $0x4b8] sm:$0xff]
      %v455 = vld [vmem:[%s0 + $0x4c0] sm:$0xff]
      %v456 = vld [vmem:[%s0 + $0x4c8] sm:$0xff]
      %v457 = vld [vmem:[%s0 + $0x4d0] sm:$0xff]
      %v458 = vld [vmem:[%s0 + $0x4d8] sm:$0xff]
      %v459 = vld [vmem:[%s0 + $0x4e0] sm:$0xff]
      %v460 = vld [vmem:[%s0 + $0x4e8] sm:$0xff]
      %v461 = vld [vmem:[%s0 + $0x4f0] sm:$0xff]
      %v462 = vld [vmem:[%s0 + $0x4f8] sm:$0xff]
      %v463 = vld [vmem:[%s0 + $0x500] sm:$0xff]
      %v464 = vld [vmem:[%s0 + $0x508] sm:$0xff]
      %v465 = vld [vmem:[%s0 + $0x510] sm:$0xff]
      %v466 = vld [vmem:[%s0 + $0x518] sm:$0xff]
      %v467 = vld [vmem:[%s0 + $0x520] sm:$0xff]
      %v468 = vld [vmem:[%s0 + $0x528] sm:$0xff]
      %v469 = vld [vmem:[%s0 + $0x530] sm:$0xff]
      %v470 = vld [vmem:[%s0 + $0x538] sm:$0xff]
      %v471 = vld [vmem:[%s0 + $0x540] sm:$0xff]
      %v472 = vld [vmem:[%s0 + $0x548] sm:$0xff]
      %v473 = vld [vmem:[%s0 + $0x550] sm:$0xff]
      %v474 = vld [vmem:[%s0 + $0x558] sm:$0xff]
      %v475 = vld [vmem:[%s0 + $0x560] sm:$0xff]
      %v476 = vld [vmem:[%s0 + $0x568] sm:$0xff]
      %v477 = vld [vmem:[%s0 + $0x570] sm:$0xff]
      %v478 = vld [vmem:[%s0 + $0x578] sm:$0xff]
      %v479 = vld [vmem:[%s0 + $0x580] sm:$0xff]
      %v480 = vld [vmem:[%s0 + $0x588] sm:$0xff]
      %v481 = vld [vmem:[%s0 + $0x590] sm:$0xff]
      %v482 = vld [vmem:[%s0 + $0x598] sm:$0xff]
      %v483 = vld [vmem:[%s0 + $0x5a0] sm:$0xff]
      %v484 = vld [vmem:[%s0 + $0x5a8] sm:$0xff]
      %v485 = vld [vmem:[%s0 + $0x5b0] sm:$0xff]
      %v486 = vld [vmem:[%s0 + $0x5b8] sm:$0xff]
      %v487 = vld [vmem:[%s0 + $0x5c0] sm:$0xff]
      %v488 = vld [vmem:[%s0 + $0x5c8] sm:$0xff]
      %v489 = vld [vmem:[%s0 + $0x5d0] sm:$0xff]
      %v490 = vld [vmem:[%s0 + $0x5d8] sm:$0xff]
      %v491 = vld [vmem:[%s0 + $0x5e0] sm:$0xff]
      %v492 = vld [vmem:[%s0 + $0x5e8] sm:$0xff]
      %v493 = vld [vmem:[%s0 + $0x5f0] sm:$0xff]
      %v494 = vld [vmem:[%s0 + $0x5f8] sm:$0xff]
      %v495 = vld [vmem:[%s0 + $0x600] sm:$0xff]
      %v496 = vld [vmem:[%s0 + $0x608] sm:$0xff]
      %v497 = vld [vmem:[%s0 + $0x610] sm:$0xff]
      %v498 = vld [vmem:[%s0 + $0x618] sm:$0xff]
      %v499 = vld [vmem:[%s0 + $0x620] sm:$0xff]
      %v500 = vld [vmem:[%s0 + $0x628] sm:$0xff]
      %v501 = vld [vmem:[%s0 + $0x630] sm:$0xff]
      %v502 = vld [vmem:[%s0 + $0x638] sm:$0xff]
      %v503 = vld [vmem:[%s0 + $0x640] sm:$0xff]
      %v504 = vld [vmem:[%s0 + $0x648] sm:$0xff]
      %v505 = vld [vmem:[%s0 + $0x650] sm:$0xff]
      %v506 = vld [vmem:[%s0 + $0x658] sm:$0xff]
      %v507 = vld [vmem:[%s0 + $0x660] sm:$0xff]
      %v508 = vld [vmem:[%s0 + $0x668] sm:$0xff]
      %v509 = vld [vmem:[%s0 + $0x670] sm:$0xff]
      %v510 = vld [vmem:[%s0 + $0x678] sm:$0xff]
      %v511 = vld [vmem:[%s0 + $0x680] sm:$0xff]
      %v512 = vld [vmem:[%s0 + $0x688] sm:$0xff]
      %v513 = vld [vmem:[%s0 + $0x690] sm:$0xff]
      %v514 = vld [vmem:[%s0 + $0x698] sm:$0xff]
      %v515 = vld [vmem:[%s0 + $0x6a0] sm:$0xff]
      %v516 = vld [vmem:[%s0 + $0x6a8] sm:$0xff]
      %v517 = vld [vmem:[%s0 + $0x6b0] sm:$0xff]
      %v518 = vld [vmem:[%s0 + $0x6b8] sm:$0xff]
      %v519 = vld [vmem:[%s0 + $0x6c0] sm:$0xff]
      %v520 = vld [vmem:[%s0 + $0x6c8] sm:$0xff]
      %v521 = vld [vmem:[%s0 + $0x6d0] sm:$0xff]
      %v522 = vld [vmem:[%s0 + $0x6d8] sm:$0xff]
      %v523 = vld [vmem:[%s0 + $0x6e0] sm:$0xff]
      %v524 = vld [vmem:[%s0 + $0x6e8] sm:$0xff]
      %v525 = vld [vmem:[%s0 + $0x6f0] sm:$0xff]
      %v526 = vld [vmem:[%s0 + $0x6f8] sm:$0xff]
      %v527 = vld [vmem:[%s0 + $0x700] sm:$0xff]
      %v528 = vld [vmem:[%s0 + $0x708] sm:$0xff]
      %v529 = vld [vmem:[%s0 + $0x710] sm:$0xff]
      %v530 = vld [vmem:[%s0 + $0x718] sm:$0xff]
      %v531 = vld [vmem:[%s0 + $0x720] sm:$0xff]
      %v532 = vld [vmem:[%s0 + $0x728] sm:$0xff]
      %v533 = vld [vmem:[%s0 + $0x730] sm:$0xff]
      %v534 = vld [vmem:[%s0 + $0x738] sm:$0xff]
      %v535 = vld [vmem:[%s0 + $0x740] sm:$0xff]
      %v536 = vld [vmem:[%s0 + $0x748] sm:$0xff]
      %v537 = vld [vmem:[%s0 + $0x750] sm:$0xff]
      %v538 = vld [vmem:[%s0 + $0x758] sm:$0xff]
      %v539 = vld [vmem:[%s0 + $0x760] sm:$0xff]
      %v540 = vld [vmem:[%s0 + $0x768] sm:$0xff]
      %v541 = vld [vmem:[%s0 + $0x770] sm:$0xff]
      %v542 = vld [vmem:[%s0 + $0x778] sm:$0xff]
      %v543 = vld [vmem:[%s0 + $0x780] sm:$0xff]
      %v544 = vld [vmem:[%s0 + $0x788] sm:$0xff]
      %v545 = vld [vmem:[%s0 + $0x790] sm:$0xff]
      %v546 = vld [vmem:[%s0 + $0x798] sm:$0xff]
      %v547 = vld [vmem:[%s0 + $0x7a0] sm:$0xff]
      %v548 = vld [vmem:[%s0 + $0x7a8] sm:$0xff]
      %v549 = vld [vmem:[%s0 + $0x7b0] sm:$0xff]
      %v550 = vld [vmem:[%s0 + $0x7b8] sm:$0xff]
      %v551 = vld [vmem:[%s0 + $0x7c0] sm:$0xff]
      %v552 = vld [vmem:[%s0 + $0x7c8] sm:$0xff]
      %v553 = vld [vmem:[%s0 + $0x7d0] sm:$0xff]
      %v554 = vld [vmem:[%s0 + $0x7d8] sm:$0xff]
      %v555 = vld [vmem:[%s0 + $0x7e0] sm:$0xff]
      %v556 = vld [vmem:[%s0 + $0x7e8] sm:$0xff]
      %v557 = vld [vmem:[%s0 + $0x7f0] sm:$0xff]
      %v558 = vld [vmem:[%s0 + $0x7f8] sm:$0xff]
      %v559 = vld [vmem:[%s0 + $0x800] sm:$0xff]
      %v560 = vld [vmem:[%s0 + $0x808] sm:$0xff]
      %v561 = vld [vmem:[%s0 + $0x810] sm:$0xff]
      %v562 = vld [vmem:[%s0 + $0x818] sm:$0xff]
      %v563 = vld [vmem:[%s0 + $0x820] sm:$0xff]
      %v564 = vld [vmem:[%s0 + $0x828] sm:$0xff]
      %v565 = vld [vmem:[%s0 + $0x830] sm:$0xff]
      %v566 = vld [vmem:[%s0 + $0x838] sm:$0xff]
      %v567 = vld [vmem:[%s0 + $0x840] sm:$0xff]
      %v568 = vld [vmem:[%s0 + $0x848] sm:$0xff]
      %v569 = vld [vmem:[%s0 + $0x850] sm:$0xff]
      %v570 = vld [vmem:[%s0 + $0x858] sm:$0xff]
      %v571 = vld [vmem:[%s0 + $0x860] sm:$0xff]
      %v572 = vld [vmem:[%s0 + $0x868] sm:$0xff]
      %v573 = vld [vmem:[%s0 + $0x870] sm:$0xff]
      %v574 = vld [vmem:[%s0 + $0x878] sm:$0xff]
      %v575 = vld [vmem:[%s0 + $0x880] sm:$0xff]
      %v576 = vld [vmem:[%s0 + $0x888] sm:$0xff]
      %v577 = vld [vmem:[%s0 + $0x890] sm:$0xff]
      %v578 = vld [vmem:[%s0 + $0x898] sm:$0xff]
      %v579 = vld [vmem:[%s0 + $0x8a0] sm:$0xff]
      %v580 = vld [vmem:[%s0 + $0x8a8] sm:$0xff]
      %v581 = vld [vmem:[%s0 + $0x8b0] sm:$0xff]
      %v582 = vld [vmem:[%s0 + $0x8b8] sm:$0xff]
      %v583 = vld [vmem:[%s0 + $0x8c0] sm:$0xff]
      %v584 = vld [vmem:[%s0 + $0x8c8] sm:$0xff]
      %v585 = vld [vmem:[%s0 + $0x8d0] sm:$0xff]
      %v586 = vld [vmem:[%s0 + $0x8d8] sm:$0xff]
      %v587 = vld [vmem:[%s0 + $0x8e0] sm:$0xff]
      %v588 = vld [vmem:[%s0 + $0x8e8] sm:$0xff]
      %v589 = vld [vmem:[%s0 + $0x8f0] sm:$0xff]
      %v590 = vld [vmem:[%s0 + $0x8f8] sm:$0xff]
      %v591 = vld [vmem:[%s278] sm:$0xff]
      %v592 = vld [vmem:[%s278 + $0x8] sm:$0xff]
      %594 = vset.pattern.permute.xlu0 0
      %595 = vperm.xlu0 %594, %v591
      %v596 = vpop.permute.xlu0 %595
      %599 = vset.pattern.permute.xlu0 0
      %600 = vperm.xlu0 %599, %v592
      %v601 = vpop.permute.xlu0 %600
      %vm603 = vcmask 130048
      %v605 = vsel %vm603, %v300, 0
      %v608 = vsel %vm603, %v302, 0
      %610 = vmatpush.msra.mxu0 %v543
      %611 = vmatpush.msra.mxu0 %v527
      %612 = vmatpush.msra.mxu0 %v511
      %613 = vmatpush.msra.mxu0 %v495
      %614 = vmatpush.msra.mxu0 %v479
      %615 = vmatpush.msra.mxu0 %v463
      %616 = vmatpush.msra.mxu0 %v447
      %617 = vmatpush.msra.mxu0 %v431
      %618 = vmatpush.msra.mxu0 %v415
      %619 = vmatpush.msra.mxu0 %v399
      %620 = vmatpush.msra.mxu0 %v383
      %621 = vmatpush.msra.mxu0 %v367
      %622 = vmatpush.msra.mxu0 %v351
      %623 = vmatpush.msra.mxu0 %v335
      %624 = vmatpush.msra.mxu0 %v319
      %625 = vmatpush.msra.mxu0 %v303
      %626 = vmatmul.f32.gmra.mxu0 %v299
      %v627 = vpop.f32.mrf.mxu0
      %v628 = vadd.f32 %v596, %v627
      %629 = vmatmul.f32.gmra.mxu0 %v301
      %v630 = vpop.f32.mrf.mxu0
      %v631 = vadd.f32 %v601, %v630
      %632 = vdwg.mxu0
      %633 = vmatpush.msra.mxu0 0.0
      %634 = vmatpush.msra.mxu0 0.0
      %635 = vmatpush.msra.mxu0 0.0
      %636 = vmatpush.msra.mxu0 0.0
      %637 = vmatpush.msra.mxu0 0.0
      %638 = vmatpush.msra.mxu0 0.0
      %639 = vmatpush.msra.mxu0 0.0
      %640 = vmatpush.msra.mxu0 0.0
      %641 = vmatpush.msra.mxu0 0.0
      %642 = vmatpush.msra.mxu0 0.0
      %643 = vmatpush.msra.mxu0 0.0
      %644 = vmatpush.msra.mxu0 0.0
      %645 = vmatpush.msra.mxu0 0.0
      %646 = vmatpush.msra.mxu0 0.0
      %647 = vmatpush.msra.mxu0 %v575
      %648 = vmatpush.msra.mxu0 %v559
      %649 = vmatmul.f32.gmra.mxu0 %v605
      %v650 = vpop.f32.mrf.mxu0
      %v651 = vadd.f32 %v628, %v650
      %652 = vmatmul.f32.gmra.mxu0 %v608
      %v653 = vpop.f32.mrf.mxu0
      %v654 = vadd.f32 %v631, %v653
      %655 = vdwg.mxu0
      %656 = vmatpush.msra.mxu0 %v544
      %657 = vmatpush.msra.mxu0 %v528
      %658 = vmatpush.msra.mxu0 %v512
      %659 = vmatpush.msra.mxu0 %v496
      %660 = vmatpush.msra.mxu0 %v480
      %661 = vmatpush.msra.mxu0 %v464
      %662 = vmatpush.msra.mxu0 %v448
      %663 = vmatpush.msra.mxu0 %v432
      %664 = vmatpush.msra.mxu0 %v416
      %665 = vmatpush.msra.mxu0 %v400
      %666 = vmatpush.msra.mxu0 %v384
      %667 = vmatpush.msra.mxu0 %v368
      %668 = vmatpush.msra.mxu0 %v352
      %669 = vmatpush.msra.mxu0 %v336
      %670 = vmatpush.msra.mxu0 %v320
      %671 = vmatpush.msra.mxu0 %v304
      %672 = vmatmul.f32.gmra.mxu0 %v299
      %v673 = vpop.f32.mrf.mxu0
      %v674 = vadd.f32 %v596, %v673
      %675 = vmatmul.f32.gmra.mxu0 %v301
      %v676 = vpop.f32.mrf.mxu0
      %v677 = vadd.f32 %v601, %v676
      %678 = vdwg.mxu0
      %679 = vmatpush.msra.mxu0 0.0
      %680 = vmatpush.msra.mxu0 0.0
      %681 = vmatpush.msra.mxu0 0.0
      %682 = vmatpush.msra.mxu0 0.0
      %683 = vmatpush.msra.mxu0 0.0
      %684 = vmatpush.msra.mxu0 0.0
      %685 = vmatpush.msra.mxu0 0.0
      %686 = vmatpush.msra.mxu0 0.0
      %687 = vmatpush.msra.mxu0 0.0
      %688 = vmatpush.msra.mxu0 0.0
      %689 = vmatpush.msra.mxu0 0.0
      %690 = vmatpush.msra.mxu0 0.0
      %691 = vmatpush.msra.mxu0 0.0
      %692 = vmatpush.msra.mxu0 0.0
      %693 = vmatpush.msra.mxu0 %v576
      %694 = vmatpush.msra.mxu0 %v560
      %695 = vmatmul.f32.gmra.mxu0 %v605
      %v696 = vpop.f32.mrf.mxu0
      %v697 = vadd.f32 %v674, %v696
      %698 = vmatmul.f32.gmra.mxu0 %v608
      %v699 = vpop.f32.mrf.mxu0
      %v700 = vadd.f32 %v677, %v699
      %701 = vdwg.mxu0
      %702 = vmatpush.msra.mxu0 %v545
      %703 = vmatpush.msra.mxu0 %v529
      %704 = vmatpush.msra.mxu0 %v513
      %705 = vmatpush.msra.mxu0 %v497
      %706 = vmatpush.msra.mxu0 %v481
      %707 = vmatpush.msra.mxu0 %v465
      %708 = vmatpush.msra.mxu0 %v449
      %709 = vmatpush.msra.mxu0 %v433
      %710 = vmatpush.msra.mxu0 %v417
      %711 = vmatpush.msra.mxu0 %v401
      %712 = vmatpush.msra.mxu0 %v385
      %713 = vmatpush.msra.mxu0 %v369
      %714 = vmatpush.msra.mxu0 %v353
      %715 = vmatpush.msra.mxu0 %v337
      %716 = vmatpush.msra.mxu0 %v321
      %717 = vmatpush.msra.mxu0 %v305
      %718 = vmatmul.f32.gmra.mxu0 %v299
      %v719 = vpop.f32.mrf.mxu0
      %v720 = vadd.f32 %v596, %v719
      %721 = vmatmul.f32.gmra.mxu0 %v301
      %v722 = vpop.f32.mrf.mxu0
      %v723 = vadd.f32 %v601, %v722
      %724 = vdwg.mxu0
      %725 = vmatpush.msra.mxu0 0.0
      %726 = vmatpush.msra.mxu0 0.0
      %727 = vmatpush.msra.mxu0 0.0
      %728 = vmatpush.msra.mxu0 0.0
      %729 = vmatpush.msra.mxu0 0.0
      %730 = vmatpush.msra.mxu0 0.0
      %731 = vmatpush.msra.mxu0 0.0
      %732 = vmatpush.msra.mxu0 0.0
      %733 = vmatpush.msra.mxu0 0.0
      %734 = vmatpush.msra.mxu0 0.0
      %735 = vmatpush.msra.mxu0 0.0
      %736 = vmatpush.msra.mxu0 0.0
      %737 = vmatpush.msra.mxu0 0.0
      %738 = vmatpush.msra.mxu0 0.0
      %739 = vmatpush.msra.mxu0 %v577
      %740 = vmatpush.msra.mxu0 %v561
      %741 = vmatmul.f32.gmra.mxu0 %v605
      %v742 = vpop.f32.mrf.mxu0
      %v743 = vadd.f32 %v720, %v742
      %744 = vmatmul.f32.gmra.mxu0 %v608
      %v745 = vpop.f32.mrf.mxu0
      %v746 = vadd.f32 %v723, %v745
      %747 = vdwg.mxu0
      %748 = vmatpush.msra.mxu0 %v546
      %749 = vmatpush.msra.mxu0 %v530
      %750 = vmatpush.msra.mxu0 %v514
      %751 = vmatpush.msra.mxu0 %v498
      %752 = vmatpush.msra.mxu0 %v482
      %753 = vmatpush.msra.mxu0 %v466
      %754 = vmatpush.msra.mxu0 %v450
      %755 = vmatpush.msra.mxu0 %v434
      %756 = vmatpush.msra.mxu0 %v418
      %757 = vmatpush.msra.mxu0 %v402
      %758 = vmatpush.msra.mxu0 %v386
      %759 = vmatpush.msra.mxu0 %v370
      %760 = vmatpush.msra.mxu0 %v354
      %761 = vmatpush.msra.mxu0 %v338
      %762 = vmatpush.msra.mxu0 %v322
      %763 = vmatpush.msra.mxu0 %v306
      %764 = vmatmul.f32.gmra.mxu0 %v299
      %v765 = vpop.f32.mrf.mxu0
      %v766 = vadd.f32 %v596, %v765
      %767 = vmatmul.f32.gmra.mxu0 %v301
      %v768 = vpop.f32.mrf.mxu0
      %v769 = vadd.f32 %v601, %v768
      %770 = vdwg.mxu0
      %771 = vmatpush.msra.mxu0 0.0
      %772 = vmatpush.msra.mxu0 0.0
      %773 = vmatpush.msra.mxu0 0.0
      %774 = vmatpush.msra.mxu0 0.0
      %775 = vmatpush.msra.mxu0 0.0
      %776 = vmatpush.msra.mxu0 0.0
      %777 = vmatpush.msra.mxu0 0.0
      %778 = vmatpush.msra.mxu0 0.0
      %779 = vmatpush.msra.mxu0 0.0
      %780 = vmatpush.msra.mxu0 0.0
      %781 = vmatpush.msra.mxu0 0.0
      %782 = vmatpush.msra.mxu0 0.0
      %783 = vmatpush.msra.mxu0 0.0
      %784 = vmatpush.msra.mxu0 0.0
      %785 = vmatpush.msra.mxu0 %v578
      %786 = vmatpush.msra.mxu0 %v562
      %787 = vmatmul.f32.gmra.mxu0 %v605
      %v788 = vpop.f32.mrf.mxu0
      %v789 = vadd.f32 %v766, %v788
      %790 = vmatmul.f32.gmra.mxu0 %v608
      %v791 = vpop.f32.mrf.mxu0
      %v792 = vadd.f32 %v769, %v791
      %793 = vdwg.mxu0
      %794 = vmatpush.msra.mxu0 %v547
      %795 = vmatpush.msra.mxu0 %v531
      %796 = vmatpush.msra.mxu0 %v515
      %797 = vmatpush.msra.mxu0 %v499
      %798 = vmatpush.msra.mxu0 %v483
      %799 = vmatpush.msra.mxu0 %v467
      %800 = vmatpush.msra.mxu0 %v451
      %801 = vmatpush.msra.mxu0 %v435
      %802 = vmatpush.msra.mxu0 %v419
      %803 = vmatpush.msra.mxu0 %v403
      %804 = vmatpush.msra.mxu0 %v387
      %805 = vmatpush.msra.mxu0 %v371
      %806 = vmatpush.msra.mxu0 %v355
      %807 = vmatpush.msra.mxu0 %v339
      %808 = vmatpush.msra.mxu0 %v323
      %809 = vmatpush.msra.mxu0 %v307
      %810 = vmatmul.f32.gmra.mxu0 %v299
      %v811 = vpop.f32.mrf.mxu0
      %v812 = vadd.f32 %v596, %v811
      %813 = vmatmul.f32.gmra.mxu0 %v301
      %v814 = vpop.f32.mrf.mxu0
      %v815 = vadd.f32 %v601, %v814
      %816 = vdwg.mxu0
      %817 = vmatpush.msra.mxu0 0.0
      %818 = vmatpush.msra.mxu0 0.0
      %819 = vmatpush.msra.mxu0 0.0
      %820 = vmatpush.msra.mxu0 0.0
      %821 = vmatpush.msra.mxu0 0.0
      %822 = vmatpush.msra.mxu0 0.0
      %823 = vmatpush.msra.mxu0 0.0
      %824 = vmatpush.msra.mxu0 0.0
      %825 = vmatpush.msra.mxu0 0.0
      %826 = vmatpush.msra.mxu0 0.0
      %827 = vmatpush.msra.mxu0 0.0
      %828 = vmatpush.msra.mxu0 0.0
      %829 = vmatpush.msra.mxu0 0.0
      %830 = vmatpush.msra.mxu0 0.0
      %831 = vmatpush.msra.mxu0 %v579
      %832 = vmatpush.msra.mxu0 %v563
      %833 = vmatmul.f32.gmra.mxu0 %v605
      %v834 = vpop.f32.mrf.mxu0
      %v835 = vadd.f32 %v812, %v834
      %836 = vmatmul.f32.gmra.mxu0 %v608
      %v837 = vpop.f32.mrf.mxu0
      %v838 = vadd.f32 %v815, %v837
      %839 = vdwg.mxu0
      %840 = vmatpush.msra.mxu0 %v548
      %841 = vmatpush.msra.mxu0 %v532
      %842 = vmatpush.msra.mxu0 %v516
      %843 = vmatpush.msra.mxu0 %v500
      %844 = vmatpush.msra.mxu0 %v484
      %845 = vmatpush.msra.mxu0 %v468
      %846 = vmatpush.msra.mxu0 %v452
      %847 = vmatpush.msra.mxu0 %v436
      %848 = vmatpush.msra.mxu0 %v420
      %849 = vmatpush.msra.mxu0 %v404
      %850 = vmatpush.msra.mxu0 %v388
      %851 = vmatpush.msra.mxu0 %v372
      %852 = vmatpush.msra.mxu0 %v356
      %853 = vmatpush.msra.mxu0 %v340
      %854 = vmatpush.msra.mxu0 %v324
      %855 = vmatpush.msra.mxu0 %v308
      %856 = vmatmul.f32.gmra.mxu0 %v299
      %v857 = vpop.f32.mrf.mxu0
      %v858 = vadd.f32 %v596, %v857
      %859 = vmatmul.f32.gmra.mxu0 %v301
      %v860 = vpop.f32.mrf.mxu0
      %v861 = vadd.f32 %v601, %v860
      %862 = vdwg.mxu0
      %863 = vmatpush.msra.mxu0 0.0
      %864 = vmatpush.msra.mxu0 0.0
      %865 = vmatpush.msra.mxu0 0.0
      %866 = vmatpush.msra.mxu0 0.0
      %867 = vmatpush.msra.mxu0 0.0
      %868 = vmatpush.msra.mxu0 0.0
      %869 = vmatpush.msra.mxu0 0.0
      %870 = vmatpush.msra.mxu0 0.0
      %871 = vmatpush.msra.mxu0 0.0
      %872 = vmatpush.msra.mxu0 0.0
      %873 = vmatpush.msra.mxu0 0.0
      %874 = vmatpush.msra.mxu0 0.0
      %875 = vmatpush.msra.mxu0 0.0
      %876 = vmatpush.msra.mxu0 0.0
      %877 = vmatpush.msra.mxu0 %v580
      %878 = vmatpush.msra.mxu0 %v564
      %879 = vmatmul.f32.gmra.mxu0 %v605
      %v880 = vpop.f32.mrf.mxu0
      %v881 = vadd.f32 %v858, %v880
      %882 = vmatmul.f32.gmra.mxu0 %v608
      %v883 = vpop.f32.mrf.mxu0
      %v884 = vadd.f32 %v861, %v883
      %885 = vdwg.mxu0
      %886 = vmatpush.msra.mxu0 %v549
      %887 = vmatpush.msra.mxu0 %v533
      %888 = vmatpush.msra.mxu0 %v517
      %889 = vmatpush.msra.mxu0 %v501
      %890 = vmatpush.msra.mxu0 %v485
      %891 = vmatpush.msra.mxu0 %v469
      %892 = vmatpush.msra.mxu0 %v453
      %893 = vmatpush.msra.mxu0 %v437
      %894 = vmatpush.msra.mxu0 %v421
      %895 = vmatpush.msra.mxu0 %v405
      %896 = vmatpush.msra.mxu0 %v389
      %897 = vmatpush.msra.mxu0 %v373
      %898 = vmatpush.msra.mxu0 %v357
      %899 = vmatpush.msra.mxu0 %v341
      %900 = vmatpush.msra.mxu0 %v325
      %901 = vmatpush.msra.mxu0 %v309
      %902 = vmatmul.f32.gmra.mxu0 %v299
      %v903 = vpop.f32.mrf.mxu0
      %v904 = vadd.f32 %v596, %v903
      %905 = vmatmul.f32.gmra.mxu0 %v301
      %v906 = vpop.f32.mrf.mxu0
      %v907 = vadd.f32 %v601, %v906
      %908 = vdwg.mxu0
      %909 = vmatpush.msra.mxu0 0.0
      %910 = vmatpush.msra.mxu0 0.0
      %911 = vmatpush.msra.mxu0 0.0
      %912 = vmatpush.msra.mxu0 0.0
      %913 = vmatpush.msra.mxu0 0.0
      %914 = vmatpush.msra.mxu0 0.0
      %915 = vmatpush.msra.mxu0 0.0
      %916 = vmatpush.msra.mxu0 0.0
      %917 = vmatpush.msra.mxu0 0.0
      %918 = vmatpush.msra.mxu0 0.0
      %919 = vmatpush.msra.mxu0 0.0
      %920 = vmatpush.msra.mxu0 0.0
      %921 = vmatpush.msra.mxu0 0.0
      %922 = vmatpush.msra.mxu0 0.0
      %923 = vmatpush.msra.mxu0 %v581
      %924 = vmatpush.msra.mxu0 %v565
      %925 = vmatmul.f32.gmra.mxu0 %v605
      %v926 = vpop.f32.mrf.mxu0
      %v927 = vadd.f32 %v904, %v926
      %928 = vmatmul.f32.gmra.mxu0 %v608
      %v929 = vpop.f32.mrf.mxu0
      %v930 = vadd.f32 %v907, %v929
      %931 = vdwg.mxu0
      %932 = vmatpush.msra.mxu0 %v550
      %933 = vmatpush.msra.mxu0 %v534
      %934 = vmatpush.msra.mxu0 %v518
      %935 = vmatpush.msra.mxu0 %v502
      %936 = vmatpush.msra.mxu0 %v486
      %937 = vmatpush.msra.mxu0 %v470
      %938 = vmatpush.msra.mxu0 %v454
      %939 = vmatpush.msra.mxu0 %v438
      %940 = vmatpush.msra.mxu0 %v422
      %941 = vmatpush.msra.mxu0 %v406
      %942 = vmatpush.msra.mxu0 %v390
      %943 = vmatpush.msra.mxu0 %v374
      %944 = vmatpush.msra.mxu0 %v358
      %945 = vmatpush.msra.mxu0 %v342
      %946 = vmatpush.msra.mxu0 %v326
      %947 = vmatpush.msra.mxu0 %v310
      %948 = vmatmul.f32.gmra.mxu0 %v299
      %v949 = vpop.f32.mrf.mxu0
      %v950 = vadd.f32 %v596, %v949
      %951 = vmatmul.f32.gmra.mxu0 %v301
      %v952 = vpop.f32.mrf.mxu0
      %v953 = vadd.f32 %v601, %v952
      %954 = vdwg.mxu0
      %955 = vmatpush.msra.mxu0 0.0
      %956 = vmatpush.msra.mxu0 0.0
      %957 = vmatpush.msra.mxu0 0.0
      %958 = vmatpush.msra.mxu0 0.0
      %959 = vmatpush.msra.mxu0 0.0
      %960 = vmatpush.msra.mxu0 0.0
      %961 = vmatpush.msra.mxu0 0.0
      %962 = vmatpush.msra.mxu0 0.0
      %963 = vmatpush.msra.mxu0 0.0
      %964 = vmatpush.msra.mxu0 0.0
      %965 = vmatpush.msra.mxu0 0.0
      %966 = vmatpush.msra.mxu0 0.0
      %967 = vmatpush.msra.mxu0 0.0
      %968 = vmatpush.msra.mxu0 0.0
      %969 = vmatpush.msra.mxu0 %v582
      %970 = vmatpush.msra.mxu0 %v566
      %971 = vmatmul.f32.gmra.mxu0 %v605
      %v972 = vpop.f32.mrf.mxu0
      %v973 = vadd.f32 %v950, %v972
      %974 = vmatmul.f32.gmra.mxu0 %v608
      %v975 = vpop.f32.mrf.mxu0
      %v976 = vadd.f32 %v953, %v975
      %977 = vdwg.mxu0
      %978 = vmatpush.msra.mxu0 %v551
      %979 = vmatpush.msra.mxu0 %v535
      %980 = vmatpush.msra.mxu0 %v519
      %981 = vmatpush.msra.mxu0 %v503
      %982 = vmatpush.msra.mxu0 %v487
      %983 = vmatpush.msra.mxu0 %v471
      %984 = vmatpush.msra.mxu0 %v455
      %985 = vmatpush.msra.mxu0 %v439
      %986 = vmatpush.msra.mxu0 %v423
      %987 = vmatpush.msra.mxu0 %v407
      %988 = vmatpush.msra.mxu0 %v391
      %989 = vmatpush.msra.mxu0 %v375
      %990 = vmatpush.msra.mxu0 %v359
      %991 = vmatpush.msra.mxu0 %v343
      %992 = vmatpush.msra.mxu0 %v327
      %993 = vmatpush.msra.mxu0 %v311
      %994 = vmatmul.f32.gmra.mxu0 %v299
      %v995 = vpop.f32.mrf.mxu0
      %v996 = vadd.f32 %v596, %v995
      %997 = vmatmul.f32.gmra.mxu0 %v301
      %v998 = vpop.f32.mrf.mxu0
      %v999 = vadd.f32 %v601, %v998
      %1000 = vdwg.mxu0
      %1001 = vmatpush.msra.mxu0 0.0
      %1002 = vmatpush.msra.mxu0 0.0
      %1003 = vmatpush.msra.mxu0 0.0
      %1004 = vmatpush.msra.mxu0 0.0
      %1005 = vmatpush.msra.mxu0 0.0
      %1006 = vmatpush.msra.mxu0 0.0
      %1007 = vmatpush.msra.mxu0 0.0
      %1008 = vmatpush.msra.mxu0 0.0
      %1009 = vmatpush.msra.mxu0 0.0
      %1010 = vmatpush.msra.mxu0 0.0
      %1011 = vmatpush.msra.mxu0 0.0
      %1012 = vmatpush.msra.mxu0 0.0
      %1013 = vmatpush.msra.mxu0 0.0
      %1014 = vmatpush.msra.mxu0 0.0
      %1015 = vmatpush.msra.mxu0 %v583
      %1016 = vmatpush.msra.mxu0 %v567
      %1017 = vmatmul.f32.gmra.mxu0 %v605
      %v1018 = vpop.f32.mrf.mxu0
      %v1019 = vadd.f32 %v996, %v1018
      %1020 = vmatmul.f32.gmra.mxu0 %v608
      %v1021 = vpop.f32.mrf.mxu0
      %v1022 = vadd.f32 %v999, %v1021
      %1023 = vdwg.mxu0
      %1024 = vmatpush.msra.mxu0 %v552
      %1025 = vmatpush.msra.mxu0 %v536
      %1026 = vmatpush.msra.mxu0 %v520
      %1027 = vmatpush.msra.mxu0 %v504
      %1028 = vmatpush.msra.mxu0 %v488
      %1029 = vmatpush.msra.mxu0 %v472
      %1030 = vmatpush.msra.mxu0 %v456
      %1031 = vmatpush.msra.mxu0 %v440
      %1032 = vmatpush.msra.mxu0 %v424
      %1033 = vmatpush.msra.mxu0 %v408
      %1034 = vmatpush.msra.mxu0 %v392
      %1035 = vmatpush.msra.mxu0 %v376
      %1036 = vmatpush.msra.mxu0 %v360
      %1037 = vmatpush.msra.mxu0 %v344
      %1038 = vmatpush.msra.mxu0 %v328
      %1039 = vmatpush.msra.mxu0 %v312
      %1040 = vmatmul.f32.gmra.mxu0 %v299
      %v1041 = vpop.f32.mrf.mxu0
      %v1042 = vadd.f32 %v596, %v1041
      %1043 = vmatmul.f32.gmra.mxu0 %v301
      %v1044 = vpop.f32.mrf.mxu0
      %v1045 = vadd.f32 %v601, %v1044
      %1046 = vdwg.mxu0
      %1047 = vmatpush.msra.mxu0 0.0
      %1048 = vmatpush.msra.mxu0 0.0
      %1049 = vmatpush.msra.mxu0 0.0
      %1050 = vmatpush.msra.mxu0 0.0
      %1051 = vmatpush.msra.mxu0 0.0
      %1052 = vmatpush.msra.mxu0 0.0
      %1053 = vmatpush.msra.mxu0 0.0
      %1054 = vmatpush.msra.mxu0 0.0
      %1055 = vmatpush.msra.mxu0 0.0
      %1056 = vmatpush.msra.mxu0 0.0
      %1057 = vmatpush.msra.mxu0 0.0
      %1058 = vmatpush.msra.mxu0 0.0
      %1059 = vmatpush.msra.mxu0 0.0
      %1060 = vmatpush.msra.mxu0 0.0
      %1061 = vmatpush.msra.mxu0 %v584
      %1062 = vmatpush.msra.mxu0 %v568
      %1063 = vmatmul.f32.gmra.mxu0 %v605
      %v1064 = vpop.f32.mrf.mxu0
      %v1065 = vadd.f32 %v1042, %v1064
      %1066 = vmatmul.f32.gmra.mxu0 %v608
      %v1067 = vpop.f32.mrf.mxu0
      %v1068 = vadd.f32 %v1045, %v1067
      %1069 = vdwg.mxu0
      %1070 = vmatpush.msra.mxu0 %v553
      %1071 = vmatpush.msra.mxu0 %v537
      %1072 = vmatpush.msra.mxu0 %v521
      %1073 = vmatpush.msra.mxu0 %v505
      %1074 = vmatpush.msra.mxu0 %v489
      %1075 = vmatpush.msra.mxu0 %v473
      %1076 = vmatpush.msra.mxu0 %v457
      %1077 = vmatpush.msra.mxu0 %v441
      %1078 = vmatpush.msra.mxu0 %v425
      %1079 = vmatpush.msra.mxu0 %v409
      %1080 = vmatpush.msra.mxu0 %v393
      %1081 = vmatpush.msra.mxu0 %v377
      %1082 = vmatpush.msra.mxu0 %v361
      %1083 = vmatpush.msra.mxu0 %v345
      %1084 = vmatpush.msra.mxu0 %v329
      %1085 = vmatpush.msra.mxu0 %v313
      %1086 = vmatmul.f32.gmra.mxu0 %v299
      %v1087 = vpop.f32.mrf.mxu0
      %v1088 = vadd.f32 %v596, %v1087
      %1089 = vmatmul.f32.gmra.mxu0 %v301
      %v1090 = vpop.f32.mrf.mxu0
      %v1091 = vadd.f32 %v601, %v1090
      %1092 = vdwg.mxu0
      %1093 = vmatpush.msra.mxu0 0.0
      %1094 = vmatpush.msra.mxu0 0.0
      %1095 = vmatpush.msra.mxu0 0.0
      %1096 = vmatpush.msra.mxu0 0.0
      %1097 = vmatpush.msra.mxu0 0.0
      %1098 = vmatpush.msra.mxu0 0.0
      %1099 = vmatpush.msra.mxu0 0.0
      %1100 = vmatpush.msra.mxu0 0.0
      %1101 = vmatpush.msra.mxu0 0.0
      %1102 = vmatpush.msra.mxu0 0.0
      %1103 = vmatpush.msra.mxu0 0.0
      %1104 = vmatpush.msra.mxu0 0.0
      %1105 = vmatpush.msra.mxu0 0.0
      %1106 = vmatpush.msra.mxu0 0.0
      %1107 = vmatpush.msra.mxu0 %v585
      %1108 = vmatpush.msra.mxu0 %v569
      %1109 = vmatmul.f32.gmra.mxu0 %v605
      %v1110 = vpop.f32.mrf.mxu0
      %v1111 = vadd.f32 %v1088, %v1110
      %1112 = vmatmul.f32.gmra.mxu0 %v608
      %v1113 = vpop.f32.mrf.mxu0
      %v1114 = vadd.f32 %v1091, %v1113
      %1115 = vdwg.mxu0
      %1116 = vmatpush.msra.mxu0 %v554
      %1117 = vmatpush.msra.mxu0 %v538
      %1118 = vmatpush.msra.mxu0 %v522
      %1119 = vmatpush.msra.mxu0 %v506
      %1120 = vmatpush.msra.mxu0 %v490
      %1121 = vmatpush.msra.mxu0 %v474
      %1122 = vmatpush.msra.mxu0 %v458
      %1123 = vmatpush.msra.mxu0 %v442
      %1124 = vmatpush.msra.mxu0 %v426
      %1125 = vmatpush.msra.mxu0 %v410
      %1126 = vmatpush.msra.mxu0 %v394
      %1127 = vmatpush.msra.mxu0 %v378
      %1128 = vmatpush.msra.mxu0 %v362
      %1129 = vmatpush.msra.mxu0 %v346
      %1130 = vmatpush.msra.mxu0 %v330
      %1131 = vmatpush.msra.mxu0 %v314
      %1132 = vmatmul.f32.gmra.mxu0 %v299
      %v1133 = vpop.f32.mrf.mxu0
      %v1134 = vadd.f32 %v596, %v1133
      %1135 = vmatmul.f32.gmra.mxu0 %v301
      %v1136 = vpop.f32.mrf.mxu0
      %v1137 = vadd.f32 %v601, %v1136
      %1138 = vdwg.mxu0
      %1139 = vmatpush.msra.mxu0 0.0
      %1140 = vmatpush.msra.mxu0 0.0
      %1141 = vmatpush.msra.mxu0 0.0
      %1142 = vmatpush.msra.mxu0 0.0
      %1143 = vmatpush.msra.mxu0 0.0
      %1144 = vmatpush.msra.mxu0 0.0
      %1145 = vmatpush.msra.mxu0 0.0
      %1146 = vmatpush.msra.mxu0 0.0
      %1147 = vmatpush.msra.mxu0 0.0
      %1148 = vmatpush.msra.mxu0 0.0
      %1149 = vmatpush.msra.mxu0 0.0
      %1150 = vmatpush.msra.mxu0 0.0
      %1151 = vmatpush.msra.mxu0 0.0
      %1152 = vmatpush.msra.mxu0 0.0
      %1153 = vmatpush.msra.mxu0 %v586
      %1154 = vmatpush.msra.mxu0 %v570
      %1155 = vmatmul.f32.gmra.mxu0 %v605
      %v1156 = vpop.f32.mrf.mxu0
      %v1157 = vadd.f32 %v1134, %v1156
      %1158 = vmatmul.f32.gmra.mxu0 %v608
      %v1159 = vpop.f32.mrf.mxu0
      %v1160 = vadd.f32 %v1137, %v1159
      %1161 = vdwg.mxu0
      %1162 = vmatpush.msra.mxu0 %v555
      %1163 = vmatpush.msra.mxu0 %v539
      %1164 = vmatpush.msra.mxu0 %v523
      %1165 = vmatpush.msra.mxu0 %v507
      %1166 = vmatpush.msra.mxu0 %v491
      %1167 = vmatpush.msra.mxu0 %v475
      %1168 = vmatpush.msra.mxu0 %v459
      %1169 = vmatpush.msra.mxu0 %v443
      %1170 = vmatpush.msra.mxu0 %v427
      %1171 = vmatpush.msra.mxu0 %v411
      %1172 = vmatpush.msra.mxu0 %v395
      %1173 = vmatpush.msra.mxu0 %v379
      %1174 = vmatpush.msra.mxu0 %v363
      %1175 = vmatpush.msra.mxu0 %v347
      %1176 = vmatpush.msra.mxu0 %v331
      %1177 = vmatpush.msra.mxu0 %v315
      %1178 = vmatmul.f32.gmra.mxu0 %v299
      %v1179 = vpop.f32.mrf.mxu0
      %v1180 = vadd.f32 %v596, %v1179
      %1181 = vmatmul.f32.gmra.mxu0 %v301
      %v1182 = vpop.f32.mrf.mxu0
      %v1183 = vadd.f32 %v601, %v1182
      %1184 = vdwg.mxu0
      %1185 = vmatpush.msra.mxu0 0.0
      %1186 = vmatpush.msra.mxu0 0.0
      %1187 = vmatpush.msra.mxu0 0.0
      %1188 = vmatpush.msra.mxu0 0.0
      %1189 = vmatpush.msra.mxu0 0.0
      %1190 = vmatpush.msra.mxu0 0.0
      %1191 = vmatpush.msra.mxu0 0.0
      %1192 = vmatpush.msra.mxu0 0.0
      %1193 = vmatpush.msra.mxu0 0.0
      %1194 = vmatpush.msra.mxu0 0.0
      %1195 = vmatpush.msra.mxu0 0.0
      %1196 = vmatpush.msra.mxu0 0.0
      %1197 = vmatpush.msra.mxu0 0.0
      %1198 = vmatpush.msra.mxu0 0.0
      %1199 = vmatpush.msra.mxu0 %v587
      %1200 = vmatpush.msra.mxu0 %v571
      %1201 = vmatmul.f32.gmra.mxu0 %v605
      %v1202 = vpop.f32.mrf.mxu0
      %v1203 = vadd.f32 %v1180, %v1202
      %1204 = vmatmul.f32.gmra.mxu0 %v608
      %v1205 = vpop.f32.mrf.mxu0
      %v1206 = vadd.f32 %v1183, %v1205
      %1207 = vdwg.mxu0
      %1208 = vmatpush.msra.mxu0 %v556
      %1209 = vmatpush.msra.mxu0 %v540
      %1210 = vmatpush.msra.mxu0 %v524
      %1211 = vmatpush.msra.mxu0 %v508
      %1212 = vmatpush.msra.mxu0 %v492
      %1213 = vmatpush.msra.mxu0 %v476
      %1214 = vmatpush.msra.mxu0 %v460
      %1215 = vmatpush.msra.mxu0 %v444
      %1216 = vmatpush.msra.mxu0 %v428
      %1217 = vmatpush.msra.mxu0 %v412
      %1218 = vmatpush.msra.mxu0 %v396
      %1219 = vmatpush.msra.mxu0 %v380
      %1220 = vmatpush.msra.mxu0 %v364
      %1221 = vmatpush.msra.mxu0 %v348
      %1222 = vmatpush.msra.mxu0 %v332
      %1223 = vmatpush.msra.mxu0 %v316
      %1224 = vmatmul.f32.gmra.mxu0 %v299
      %v1225 = vpop.f32.mrf.mxu0
      %v1226 = vadd.f32 %v596, %v1225
      %1227 = vmatmul.f32.gmra.mxu0 %v301
      %v1228 = vpop.f32.mrf.mxu0
      %v1229 = vadd.f32 %v601, %v1228
      %1230 = vdwg.mxu0
      %1231 = vmatpush.msra.mxu0 0.0
      %1232 = vmatpush.msra.mxu0 0.0
      %1233 = vmatpush.msra.mxu0 0.0
      %1234 = vmatpush.msra.mxu0 0.0
      %1235 = vmatpush.msra.mxu0 0.0
      %1236 = vmatpush.msra.mxu0 0.0
      %1237 = vmatpush.msra.mxu0 0.0
      %1238 = vmatpush.msra.mxu0 0.0
      %1239 = vmatpush.msra.mxu0 0.0
      %1240 = vmatpush.msra.mxu0 0.0
      %1241 = vmatpush.msra.mxu0 0.0
      %1242 = vmatpush.msra.mxu0 0.0
      %1243 = vmatpush.msra.mxu0 0.0
      %1244 = vmatpush.msra.mxu0 0.0
      %1245 = vmatpush.msra.mxu0 %v588
      %1246 = vmatpush.msra.mxu0 %v572
      %1247 = vmatmul.f32.gmra.mxu0 %v605
      %v1248 = vpop.f32.mrf.mxu0
      %v1249 = vadd.f32 %v1226, %v1248
      %1250 = vmatmul.f32.gmra.mxu0 %v608
      %v1251 = vpop.f32.mrf.mxu0
      %v1252 = vadd.f32 %v1229, %v1251
      %1253 = vdwg.mxu0
      %1254 = vmatpush.msra.mxu0 %v557
      %1255 = vmatpush.msra.mxu0 %v541
      %1256 = vmatpush.msra.mxu0 %v525
      %1257 = vmatpush.msra.mxu0 %v509
      %1258 = vmatpush.msra.mxu0 %v493
      %1259 = vmatpush.msra.mxu0 %v477
      %1260 = vmatpush.msra.mxu0 %v461
      %1261 = vmatpush.msra.mxu0 %v445
      %1262 = vmatpush.msra.mxu0 %v429
      %1263 = vmatpush.msra.mxu0 %v413
      %1264 = vmatpush.msra.mxu0 %v397
      %1265 = vmatpush.msra.mxu0 %v381
      %1266 = vmatpush.msra.mxu0 %v365
      %1267 = vmatpush.msra.mxu0 %v349
      %1268 = vmatpush.msra.mxu0 %v333
      %1269 = vmatpush.msra.mxu0 %v317
      %1270 = vmatmul.f32.gmra.mxu0 %v299
      %v1271 = vpop.f32.mrf.mxu0
      %v1272 = vadd.f32 %v596, %v1271
      %1273 = vmatmul.f32.gmra.mxu0 %v301
      %v1274 = vpop.f32.mrf.mxu0
      %v1275 = vadd.f32 %v601, %v1274
      %1276 = vdwg.mxu0
      %1277 = vmatpush.msra.mxu0 0.0
      %1278 = vmatpush.msra.mxu0 0.0
      %1279 = vmatpush.msra.mxu0 0.0
      %1280 = vmatpush.msra.mxu0 0.0
      %1281 = vmatpush.msra.mxu0 0.0
      %1282 = vmatpush.msra.mxu0 0.0
      %1283 = vmatpush.msra.mxu0 0.0
      %1284 = vmatpush.msra.mxu0 0.0
      %1285 = vmatpush.msra.mxu0 0.0
      %1286 = vmatpush.msra.mxu0 0.0
      %1287 = vmatpush.msra.mxu0 0.0
      %1288 = vmatpush.msra.mxu0 0.0
      %1289 = vmatpush.msra.mxu0 0.0
      %1290 = vmatpush.msra.mxu0 0.0
      %1291 = vmatpush.msra.mxu0 %v589
      %1292 = vmatpush.msra.mxu0 %v573
      %1293 = vmatmul.f32.gmra.mxu0 %v605
      %v1294 = vpop.f32.mrf.mxu0
      %v1295 = vadd.f32 %v1272, %v1294
      %1296 = vmatmul.f32.gmra.mxu0 %v608
      %v1297 = vpop.f32.mrf.mxu0
      %v1298 = vadd.f32 %v1275, %v1297
      %1299 = vdwg.mxu0
      %1300 = vmatpush.msra.mxu0 %v558
      %1301 = vmatpush.msra.mxu0 %v542
      %1302 = vmatpush.msra.mxu0 %v526
      %1303 = vmatpush.msra.mxu0 %v510
      %1304 = vmatpush.msra.mxu0 %v494
      %1305 = vmatpush.msra.mxu0 %v478
      %1306 = vmatpush.msra.mxu0 %v462
      %1307 = vmatpush.msra.mxu0 %v446
      %1308 = vmatpush.msra.mxu0 %v430
      %1309 = vmatpush.msra.mxu0 %v414
      %1310 = vmatpush.msra.mxu0 %v398
      %1311 = vmatpush.msra.mxu0 %v382
      %1312 = vmatpush.msra.mxu0 %v366
      %1313 = vmatpush.msra.mxu0 %v350
      %1314 = vmatpush.msra.mxu0 %v334
      %1315 = vmatpush.msra.mxu0 %v318
      %1316 = vmatmul.f32.gmra.mxu0 %v299
      %v1317 = vpop.f32.mrf.mxu0
      %v1318 = vadd.f32 %v596, %v1317
      %1319 = vmatmul.f32.gmra.mxu0 %v301
      %v1320 = vpop.f32.mrf.mxu0
      %v1321 = vadd.f32 %v601, %v1320
      %1322 = vdwg.mxu0
      %1323 = vmatpush.msra.mxu0 0.0
      %1324 = vmatpush.msra.mxu0 0.0
      %1325 = vmatpush.msra.mxu0 0.0
      %1326 = vmatpush.msra.mxu0 0.0
      %1327 = vmatpush.msra.mxu0 0.0
      %1328 = vmatpush.msra.mxu0 0.0
      %1329 = vmatpush.msra.mxu0 0.0
      %1330 = vmatpush.msra.mxu0 0.0
      %1331 = vmatpush.msra.mxu0 0.0
      %1332 = vmatpush.msra.mxu0 0.0
      %1333 = vmatpush.msra.mxu0 0.0
      %1334 = vmatpush.msra.mxu0 0.0
      %1335 = vmatpush.msra.mxu0 0.0
      %1336 = vmatpush.msra.mxu0 0.0
      %1337 = vmatpush.msra.mxu0 %v590
      %1338 = vmatpush.msra.mxu0 %v574
      %1339 = vmatmul.f32.gmra.mxu0 %v605
      %v1340 = vpop.f32.mrf.mxu0
      %v1341 = vadd.f32 %v1318, %v1340
      %1342 = vmatmul.f32.gmra.mxu0 %v608
      %v1343 = vpop.f32.mrf.mxu0
      %v1344 = vadd.f32 %v1321, %v1343
      %1345 = vdwg.mxu0
      %v1346 = vadd.f32 %v651, %v697
      %v1347 = vadd.f32 %v1346, %v743
      %v1348 = vadd.f32 %v1347, %v789
      %v1349 = vadd.f32 %v1348, %v835
      %v1350 = vadd.f32 %v1349, %v881
      %v1351 = vadd.f32 %v1350, %v927
      %v1352 = vadd.f32 %v1351, %v973
      %v1353 = vadd.f32 %v1352, %v1019
      %v1354 = vadd.f32 %v1353, %v1065
      %v1355 = vadd.f32 %v1354, %v1111
      %v1356 = vadd.f32 %v1355, %v1157
      %v1357 = vadd.f32 %v1356, %v1203
      %v1358 = vadd.f32 %v1357, %v1249
      %v1359 = vadd.f32 %v1358, %v1295
      %v1360 = vadd.f32 %v1359, %v1341
      %1361 = vadd.xlane.f32.xlu0 %v1360
      %v1362 = vpop.xlane.xlu0 %1361
      %v1363 = vadd.f32 %v654, %v700
      %v1364 = vadd.f32 %v1363, %v746
      %v1365 = vadd.f32 %v1364, %v792
      %v1366 = vadd.f32 %v1365, %v838
      %v1367 = vadd.f32 %v1366, %v884
      %v1368 = vadd.f32 %v1367, %v930
      %v1369 = vadd.f32 %v1368, %v976
      %v1370 = vadd.f32 %v1369, %v1022
      %v1371 = vadd.f32 %v1370, %v1068
      %v1372 = vadd.f32 %v1371, %v1114
      %v1373 = vadd.f32 %v1372, %v1160
      %v1374 = vadd.f32 %v1373, %v1206
      %v1375 = vadd.f32 %v1374, %v1252
      %v1376 = vadd.f32 %v1375, %v1298
      %v1377 = vadd.f32 %v1376, %v1344
      %1378 = vadd.xlane.f32.xlu0 %v1377
      %v1379 = vpop.xlane.xlu0 %1378
      %v1380 = vrcp.pop 2048.0
      %v1381 = vmul.f32 2048.0, %v1380
      %v1382 = vsub.f32 1.0, %v1381
      %v1383 = vmul.f32 %v1380, %v1382
      %v1384 = vadd.f32 %v1380, %v1383
      %vm1385 = vweird.f32 %v1380
      %v1386 = vsel %vm1385, %v1380, %v1384
      %v1387 = vmul.f32 %v1362, %v1386
      %v1388 = vmul.f32 %v1379, %v1386
      %v1389 = vsub.f32 %v651, %v1387
      %v1390 = vsub.f32 %v697, %v1387
      %v1391 = vsub.f32 %v743, %v1387
      %v1392 = vsub.f32 %v789, %v1387
      %v1393 = vsub.f32 %v835, %v1387
      %v1394 = vsub.f32 %v881, %v1387
      %v1395 = vsub.f32 %v927, %v1387
      %v1396 = vsub.f32 %v973, %v1387
      %v1397 = vsub.f32 %v1019, %v1387
      %v1398 = vsub.f32 %v1065, %v1387
      %v1399 = vsub.f32 %v1111, %v1387
      %v1400 = vsub.f32 %v1157, %v1387
      %v1401 = vsub.f32 %v1203, %v1387
      %v1402 = vsub.f32 %v1249, %v1387
      %v1403 = vsub.f32 %v1295, %v1387
      %v1404 = vsub.f32 %v1341, %v1387
      %v1405 = vsub.f32 %v654, %v1388
      %v1406 = vsub.f32 %v700, %v1388
      %v1407 = vsub.f32 %v746, %v1388
      %v1408 = vsub.f32 %v792, %v1388
      %v1409 = vsub.f32 %v838, %v1388
      %v1410 = vsub.f32 %v884, %v1388
      %v1411 = vsub.f32 %v930, %v1388
      %v1412 = vsub.f32 %v976, %v1388
      %v1413 = vsub.f32 %v1022, %v1388
      %v1414 = vsub.f32 %v1068, %v1388
      %v1415 = vsub.f32 %v1114, %v1388
      %v1416 = vsub.f32 %v1160, %v1388
      %v1417 = vsub.f32 %v1206, %v1388
      %v1418 = vsub.f32 %v1252, %v1388
      %v1419 = vsub.f32 %v1298, %v1388
      %v1420 = vsub.f32 %v1344, %v1388
      %v1421 = vmul.f32 %v1389, %v1389
      %v1422 = vmul.f32 %v1390, %v1390
      %v1423 = vmul.f32 %v1391, %v1391
      %v1424 = vmul.f32 %v1392, %v1392
      %v1425 = vmul.f32 %v1393, %v1393
      %v1426 = vmul.f32 %v1394, %v1394
      %v1427 = vmul.f32 %v1395, %v1395
      %v1428 = vmul.f32 %v1396, %v1396
      %v1429 = vmul.f32 %v1397, %v1397
      %v1430 = vmul.f32 %v1398, %v1398
      %v1431 = vmul.f32 %v1399, %v1399
      %v1432 = vmul.f32 %v1400, %v1400
      %v1433 = vmul.f32 %v1401, %v1401
      %v1434 = vmul.f32 %v1402, %v1402
      %v1435 = vmul.f32 %v1403, %v1403
      %v1436 = vmul.f32 %v1404, %v1404
      %v1437 = vmul.f32 %v1405, %v1405
      %v1438 = vmul.f32 %v1406, %v1406
      %v1439 = vmul.f32 %v1407, %v1407
      %v1440 = vmul.f32 %v1408, %v1408
      %v1441 = vmul.f32 %v1409, %v1409
      %v1442 = vmul.f32 %v1410, %v1410
      %v1443 = vmul.f32 %v1411, %v1411
      %v1444 = vmul.f32 %v1412, %v1412
      %v1445 = vmul.f32 %v1413, %v1413
      %v1446 = vmul.f32 %v1414, %v1414
      %v1447 = vmul.f32 %v1415, %v1415
      %v1448 = vmul.f32 %v1416, %v1416
      %v1449 = vmul.f32 %v1417, %v1417
      %v1450 = vmul.f32 %v1418, %v1418
      %v1451 = vmul.f32 %v1419, %v1419
      %v1452 = vmul.f32 %v1420, %v1420
      %v1453 = vadd.f32 %v1421, %v1422
      %v1454 = vadd.f32 %v1453, %v1423
      %v1455 = vadd.f32 %v1454, %v1424
      %v1456 = vadd.f32 %v1455, %v1425
      %v1457 = vadd.f32 %v1456, %v1426
      %v1458 = vadd.f32 %v1457, %v1427
      %v1459 = vadd.f32 %v1458, %v1428
      %v1460 = vadd.f32 %v1459, %v1429
      %v1461 = vadd.f32 %v1460, %v1430
      %v1462 = vadd.f32 %v1461, %v1431
      %v1463 = vadd.f32 %v1462, %v1432
      %v1464 = vadd.f32 %v1463, %v1433
      %v1465 = vadd.f32 %v1464, %v1434
      %v1466 = vadd.f32 %v1465, %v1435
      %v1467 = vadd.f32 %v1466, %v1436
      %1468 = vadd.xlane.f32.xlu0 %v1467
      %v1469 = vpop.xlane.xlu0 %1468
      %v1470 = vadd.f32 %v1437, %v1438
      %v1471 = vadd.f32 %v1470, %v1439
      %v1472 = vadd.f32 %v1471, %v1440
      %v1473 = vadd.f32 %v1472, %v1441
      %v1474 = vadd.f32 %v1473, %v1442
      %v1475 = vadd.f32 %v1474, %v1443
      %v1476 = vadd.f32 %v1475, %v1444
      %v1477 = vadd.f32 %v1476, %v1445
      %v1478 = vadd.f32 %v1477, %v1446
      %v1479 = vadd.f32 %v1478, %v1447
      %v1480 = vadd.f32 %v1479, %v1448
      %v1481 = vadd.f32 %v1480, %v1449
      %v1482 = vadd.f32 %v1481, %v1450
      %v1483 = vadd.f32 %v1482, %v1451
      %v1484 = vadd.f32 %v1483, %v1452
      %1485 = vadd.xlane.f32.xlu0 %v1484
      %v1486 = vpop.xlane.xlu0 %1485
      %v1487 = vmul.f32 %v1469, %v1386
      %v1488 = vmul.f32 %v1486, %v1386
      %v1489 = vadd.f32 %v1487, 1e-05
      %v1490 = vadd.f32 %v1488, 1e-05
      %v1491 = vrsqrt.pop %v1489
      %v1492 = vmul.f32 %v1491, %v1489
      %v1493 = vmul.f32 %v1492, %v1491
      %v1494 = vmul.f32 0.5, %v1493
      %v1495 = vsub.f32 1.5, %v1494
      %v1496 = vmul.f32 %v1491, %v1495
      %vm1497 = vweird.f32 %v1489
      %vm1498 = vweird.f32 %v1491
      %vm1499 = vmor %vm1497, %vm1498
      %v1500 = vsel %vm1499, %v1491, %v1496
      %v1501 = vrsqrt.pop %v1490
      %v1502 = vmul.f32 %v1501, %v1490
      %v1503 = vmul.f32 %v1502, %v1501
      %v1504 = vmul.f32 0.5, %v1503
      %v1505 = vsub.f32 1.5, %v1504
      %v1506 = vmul.f32 %v1501, %v1505
      %vm1507 = vweird.f32 %v1490
      %vm1508 = vweird.f32 %v1501
      %vm1509 = vmor %vm1507, %vm1508
      %v1510 = vsel %vm1509, %v1501, %v1506
      %v1511 = vmul.f32 %v1389, %v1500
      %v1512 = vmul.f32 %v1390, %v1500
      %v1513 = vmul.f32 %v1391, %v1500
      %v1514 = vmul.f32 %v1392, %v1500
      %v1515 = vmul.f32 %v1393, %v1500
      %v1516 = vmul.f32 %v1394, %v1500
      %v1517 = vmul.f32 %v1395, %v1500
      %v1518 = vmul.f32 %v1396, %v1500
      %v1519 = vmul.f32 %v1397, %v1500
      %v1520 = vmul.f32 %v1398, %v1500
      %v1521 = vmul.f32 %v1399, %v1500
      %v1522 = vmul.f32 %v1400, %v1500
      %v1523 = vmul.f32 %v1401, %v1500
      %v1524 = vmul.f32 %v1402, %v1500
      %v1525 = vmul.f32 %v1403, %v1500
      %v1526 = vmul.f32 %v1404, %v1500
      %v1527 = vmul.f32 %v1405, %v1510
      %v1528 = vmul.f32 %v1406, %v1510
      %v1529 = vmul.f32 %v1407, %v1510
      %v1530 = vmul.f32 %v1408, %v1510
      %v1531 = vmul.f32 %v1409, %v1510
      %v1532 = vmul.f32 %v1410, %v1510
      %v1533 = vmul.f32 %v1411, %v1510
      %v1534 = vmul.f32 %v1412, %v1510
      %v1535 = vmul.f32 %v1413, %v1510
      %v1536 = vmul.f32 %v1414, %v1510
      %v1537 = vmul.f32 %v1415, %v1510
      %v1538 = vmul.f32 %v1416, %v1510
      %v1539 = vmul.f32 %v1417, %v1510
      %v1540 = vmul.f32 %v1418, %v1510
      %v1541 = vmul.f32 %v1419, %v1510
      %v1542 = vmul.f32 %v1420, %v1510
      %v1543 = vld [vmem:[%s284] sm:$0xff]
      %v1544 = vld [vmem:[%s284 + $0x8] sm:$0xff]
      %1546 = vset.pattern.permute.xlu0 0
      %1547 = vperm.xlu0 %1546, %v1543
      %v1548 = vpop.permute.xlu0 %1547
      %1551 = vset.pattern.permute.xlu0 0
      %1552 = vperm.xlu0 %1551, %v1544
      %v1553 = vpop.permute.xlu0 %1552
      %v1555 = vmul.f32 %v1511, %v1548
      %v1556 = vmul.f32 %v1512, %v1548
      %v1557 = vmul.f32 %v1513, %v1548
      %v1558 = vmul.f32 %v1514, %v1548
      %v1559 = vmul.f32 %v1515, %v1548
      %v1560 = vmul.f32 %v1516, %v1548
      %v1561 = vmul.f32 %v1517, %v1548
      %v1562 = vmul.f32 %v1518, %v1548
      %v1563 = vmul.f32 %v1519, %v1548
      %v1564 = vmul.f32 %v1520, %v1548
      %v1565 = vmul.f32 %v1521, %v1548
      %v1566 = vmul.f32 %v1522, %v1548
      %v1567 = vmul.f32 %v1523, %v1548
      %v1568 = vmul.f32 %v1524, %v1548
      %v1569 = vmul.f32 %v1525, %v1548
      %v1570 = vmul.f32 %v1526, %v1548
      %v1571 = vmul.f32 %v1527, %v1553
      %v1572 = vmul.f32 %v1528, %v1553
      %v1573 = vmul.f32 %v1529, %v1553
      %v1574 = vmul.f32 %v1530, %v1553
      %v1575 = vmul.f32 %v1531, %v1553
      %v1576 = vmul.f32 %v1532, %v1553
      %v1577 = vmul.f32 %v1533, %v1553
      %v1578 = vmul.f32 %v1534, %v1553
      %v1579 = vmul.f32 %v1535, %v1553
      %v1580 = vmul.f32 %v1536, %v1553
      %v1581 = vmul.f32 %v1537, %v1553
      %v1582 = vmul.f32 %v1538, %v1553
      %v1583 = vmul.f32 %v1539, %v1553
      %v1584 = vmul.f32 %v1540, %v1553
      %v1585 = vmul.f32 %v1541, %v1553
      %v1586 = vmul.f32 %v1542, %v1553
      %v1587 = vld [vmem:[%s290] sm:$0xff]
      %v1588 = vld [vmem:[%s290 + $0x8] sm:$0xff]
      %1590 = vset.pattern.permute.xlu0 0
      %1591 = vperm.xlu0 %1590, %v1587
      %v1592 = vpop.permute.xlu0 %1591
      %1595 = vset.pattern.permute.xlu0 0
      %1596 = vperm.xlu0 %1595, %v1588
      %v1597 = vpop.permute.xlu0 %1596
      %v1599 = vadd.f32 %v1555, %v1592
      %v1600 = vadd.f32 %v1556, %v1592
      %v1601 = vadd.f32 %v1557, %v1592
      %v1602 = vadd.f32 %v1558, %v1592
      %v1603 = vadd.f32 %v1559, %v1592
      %v1604 = vadd.f32 %v1560, %v1592
      %v1605 = vadd.f32 %v1561, %v1592
      %v1606 = vadd.f32 %v1562, %v1592
      %v1607 = vadd.f32 %v1563, %v1592
      %v1608 = vadd.f32 %v1564, %v1592
      %v1609 = vadd.f32 %v1565, %v1592
      %v1610 = vadd.f32 %v1566, %v1592
      %v1611 = vadd.f32 %v1567, %v1592
      %v1612 = vadd.f32 %v1568, %v1592
      %v1613 = vadd.f32 %v1569, %v1592
      %v1614 = vadd.f32 %v1570, %v1592
      %v1615 = vadd.f32 %v1571, %v1597
      %v1616 = vadd.f32 %v1572, %v1597
      %v1617 = vadd.f32 %v1573, %v1597
      %v1618 = vadd.f32 %v1574, %v1597
      %v1619 = vadd.f32 %v1575, %v1597
      %v1620 = vadd.f32 %v1576, %v1597
      %v1621 = vadd.f32 %v1577, %v1597
      %v1622 = vadd.f32 %v1578, %v1597
      %v1623 = vadd.f32 %v1579, %v1597
      %v1624 = vadd.f32 %v1580, %v1597
      %v1625 = vadd.f32 %v1581, %v1597
      %v1626 = vadd.f32 %v1582, %v1597
      %v1627 = vadd.f32 %v1583, %v1597
      %v1628 = vadd.f32 %v1584, %v1597
      %v1629 = vadd.f32 %v1585, %v1597
      %v1630 = vadd.f32 %v1586, %v1597
      %v1631 = vmax.f32 %v1599, 0.0
      %v1632 = vmax.f32 %v1600, 0.0
      %v1633 = vmax.f32 %v1601, 0.0
      %v1634 = vmax.f32 %v1602, 0.0
      %v1635 = vmax.f32 %v1603, 0.0
      %v1636 = vmax.f32 %v1604, 0.0
      %v1637 = vmax.f32 %v1605, 0.0
      %v1638 = vmax.f32 %v1606, 0.0
      %v1639 = vmax.f32 %v1607, 0.0
      %v1640 = vmax.f32 %v1608, 0.0
      %v1641 = vmax.f32 %v1609, 0.0
      %v1642 = vmax.f32 %v1610, 0.0
      %v1643 = vmax.f32 %v1611, 0.0
      %v1644 = vmax.f32 %v1612, 0.0
      %v1645 = vmax.f32 %v1613, 0.0
      %v1646 = vmax.f32 %v1614, 0.0
      %v1647 = vmax.f32 %v1615, 0.0
      %v1648 = vmax.f32 %v1616, 0.0
      %v1649 = vmax.f32 %v1617, 0.0
      %v1650 = vmax.f32 %v1618, 0.0
      %v1651 = vmax.f32 %v1619, 0.0
      %v1652 = vmax.f32 %v1620, 0.0
      %v1653 = vmax.f32 %v1621, 0.0
      %v1654 = vmax.f32 %v1622, 0.0
      %v1655 = vmax.f32 %v1623, 0.0
      %v1656 = vmax.f32 %v1624, 0.0
      %v1657 = vmax.f32 %v1625, 0.0
      %v1658 = vmax.f32 %v1626, 0.0
      %v1659 = vmax.f32 %v1627, 0.0
      %v1660 = vmax.f32 %v1628, 0.0
      %v1661 = vmax.f32 %v1629, 0.0
      %v1662 = vmax.f32 %v1630, 0.0
      %1663 = vst [vmem:[%s297] sm:$0xff] %v1631
      %1664 = vst [vmem:[%s297 + $0x8] sm:$0xff] %v1632
      %1665 = vst [vmem:[%s297 + $0x10] sm:$0xff] %v1633
      %1666 = vst [vmem:[%s297 + $0x18] sm:$0xff] %v1634
      %1667 = vst [vmem:[%s297 + $0x20] sm:$0xff] %v1635
      %1668 = vst [vmem:[%s297 + $0x28] sm:$0xff] %v1636
      %1669 = vst [vmem:[%s297 + $0x30] sm:$0xff] %v1637
      %1670 = vst [vmem:[%s297 + $0x38] sm:$0xff] %v1638
      %1671 = vst [vmem:[%s297 + $0x40] sm:$0xff] %v1639
      %1672 = vst [vmem:[%s297 + $0x48] sm:$0xff] %v1640
      %1673 = vst [vmem:[%s297 + $0x50] sm:$0xff] %v1641
      %1674 = vst [vmem:[%s297 + $0x58] sm:$0xff] %v1642
      %1675 = vst [vmem:[%s297 + $0x60] sm:$0xff] %v1643
      %1676 = vst [vmem:[%s297 + $0x68] sm:$0xff] %v1644
      %1677 = vst [vmem:[%s297 + $0x70] sm:$0xff] %v1645
      %1678 = vst [vmem:[%s297 + $0x78] sm:$0xff] %v1646
      %1679 = vst [vmem:[%s297 + $0x80] sm:$0xff] %v1647
      %1680 = vst [vmem:[%s297 + $0x88] sm:$0xff] %v1648
      %1681 = vst [vmem:[%s297 + $0x90] sm:$0xff] %v1649
      %1682 = vst [vmem:[%s297 + $0x98] sm:$0xff] %v1650
      %1683 = vst [vmem:[%s297 + $0xa0] sm:$0xff] %v1651
      %1684 = vst [vmem:[%s297 + $0xa8] sm:$0xff] %v1652
      %1685 = vst [vmem:[%s297 + $0xb0] sm:$0xff] %v1653
      %1686 = vst [vmem:[%s297 + $0xb8] sm:$0xff] %v1654
      %1687 = vst [vmem:[%s297 + $0xc0] sm:$0xff] %v1655
      %1688 = vst [vmem:[%s297 + $0xc8] sm:$0xff] %v1656
      %1689 = vst [vmem:[%s297 + $0xd0] sm:$0xff] %v1657
      %1690 = vst [vmem:[%s297 + $0xd8] sm:$0xff] %v1658
      %1691 = vst [vmem:[%s297 + $0xe0] sm:$0xff] %v1659
      %1692 = vst [vmem:[%s297 + $0xe8] sm:$0xff] %v1660
      %1693 = vst [vmem:[%s297 + $0xf0] sm:$0xff] %v1661
      %1694 = vst [vmem:[%s297 + $0xf8] sm:$0xff] %v1662
      %s1695 = smul.u32 2, %s16
      %p1696 = scmp.lt.s32.totalorder %s1695, 3
      %s1697 = scalar_select %p1696, %s1695, 3
      %s1698 = smul.addr %s1697, 16
      %s1699 = smul.addr %s1698, 8
      %s1700 = scalar_lea.vmem %s5, %s1699
      // Predicated region
      $region41: #{forward.6} parent=39 // pred_check
        %p1701 = pneg %p159
      $region42: #{forward.6} parent=39 // pred_check_branch
        %1703 = sbr.rel (%p1701) target = $region44
      $region43: #{forward.6} parent=39 // pred_region
        %s1704 = smul.u32 2, %s16
      $region44: #{forward.6} parent=39 // pred_fallthru
        _
    $region40: #{forward.6} parent=5 // pred_fallthru
      _
    %p1705 = scmp.le.s32.totalorder 2, %s11
    // Predicated region
    $region45: #{forward.6} parent=5 // pred_check
      %p1706 = pneg %p1705
    $region46: #{forward.6} parent=5 // pred_check_branch
      %1708 = sbr.rel (%p1706) target = $region48
    $region47: #{forward.6} parent=5 // pred_region
      %s1709 = ssub.s32 %s11, 2
      // Predicated region
      $region49: #{forward.6} parent=47 // pred_check
        %p1710 = pneg %p165
      $region50: #{forward.6} parent=47 // pred_check_branch
        %1712 = sbr.rel (%p1710) target = $region52
      $region51: #{forward.6} parent=47 // pred_region
        %s1713 = smul.u32 2, %s17
        %p1714 = scmp.lt.s32.totalorder %s1713, 3
        %s1715 = scalar_select %p1714, %s1713, 3
        %s1716 = smul.addr %s1715, 16
        %s1717 = smul.addr %s1716, 8
        %s1718 = scalar_lea.vmem %s5, %s1717
      $region52: #{forward.6} parent=47 // pred_fallthru
        _
    $region48: #{forward.6} parent=5 // pred_fallthru
      _
  $region6: #{forward.6} parent=0 // loop_footer
    %s15 = sadd.s32 1, %s11
  $region7: #{forward.6} parent=0 // loop_footer_branch
    %10 = sbr.rel target = $region3
  $region8: #{forward.6} parent=0 // loop_exit
    _

// kernel: forward.7
$region0: #{forward.7}
  #allocation0 [shape = 'u32[]', space=smem, size = 0x4, offset = 0x4, fixed_abs, tag = 'smem constant byte address 0x4 - core index']
  #allocation1 [shape = 'u32[72,128]{1,0:T(1,128)}', space=vmem, size = 0x9000, scoped, tag = 'internal scratch']
  %s0 = inlined_call_operand.vmem [shape: f32[288,512], index: 0, kind: input, shape index: {}]
  %s1 = inlined_call_operand.vmem [shape: f32[64,288], index: 1, kind: input, shape index: {}]
  %s2 = inlined_call_operand.vmem [shape: f32[64,1], index: 2, kind: input, shape index: {}, may-alias: {2,4}]
  %s3 = inlined_call_operand.vmem [shape: f32[64,1], index: 3, kind: input, shape index: {}]
  %s4 = inlined_call_operand.vmem [shape: f32[64,1], index: 4, kind: input, shape index: {}, may-alias: {2,4}]
  %s5 = inlined_call_operand.vmem [shape: f32[64,512], index: 5, kind: output, shape index: {}]
  %s6 = sld [smem:[#allocation0]]
  $region53: #{forward.7} parent=0
    _
  %s8 = ssub.s32 1, %s6
  %s9 = scalar_select 0, %s8, %s6
  loop: start=0, step=1, limit=4
  $region2: #{forward.7} parent=0 // loop_pre_header
    _
  $region3: #{forward.7} parent=0 // loop_header
    %s11 = sphi 0, %s15
    %p12 = scmp.ge.s32.totalorder %s11, 4
    %s19 = sphi 0, %s19
    %s21 = sphi 0, %s19
    %s22 = sphi 0, %s21
    %s36 = sphi 0, %s22
    %s42 = sphi 0, %s44
    %s45 = sphi 0, %s42
    %s46 = sphi 0, %s45
    %s62 = sphi 0, %s46
    %s68 = sphi 0, %s70
    %s71 = sphi 0, %s68
    %s72 = sphi 0, %s71
    %s88 = sphi 0, %s72
    %s94 = sphi 0, %s96
    %s97 = sphi 0, %s94
    %s98 = sphi 0, %s97
    %s114 = sphi 0, %s98
    %s120 = sphi 0, %s122
    %s123 = sphi 0, %s120
    %s124 = sphi 0, %s123
    %s140 = sphi 0, %s124
    %s146 = sphi 0, %s148
    %s149 = sphi 0, %s146
    %s150 = sphi 0, %s149
    %s166 = sphi 0, %s150
  $region4: #{forward.7} parent=0 // loop_header_branch
    %14 = sbr.rel (%p12) target = $region8
  $region5: #{forward.7} parent=0 // loop_body
    %s16 = ssub.s32 %s11, 1
    %s17 = ssub.s32 %s11, 2
    %s18 = sadd.s32 %s11, 1
    %s20 = sadd.s32 %s19, 1
    %p23 = scmp.eq.s32.totalorder %s11, 1
    %p24 = scmp.ne.s32.totalorder %s19, %s21
    %p25 = scmp.eq.s32.totalorder %s11, 0
    %p26 = por %p24, %p25
    %p27 = scmp.ne.s32.totalorder %s19, %s21
    %p28 = scmp.eq.s32.totalorder %s16, 1
    %p29 = por %p27, %p28
    %p30 = scmp.ne.s32.totalorder %s21, %s22
    %p31 = scmp.eq.s32.totalorder %s16, 0
    %p32 = por %p30, %p31
    %p33 = scmp.ne.s32.totalorder %s21, %s22
    %p34 = scmp.eq.s32.totalorder %s17, 1
    %p35 = por %p33, %p34
    %p37 = scmp.ne.s32.totalorder %s22, %s36
    %p38 = scmp.eq.s32.totalorder %s17, 0
    %p39 = por %p37, %p38
    %s40 = ssub.s32 %s11, %s18
    %p41 = scmp.eq.s32.totalorder %s40, 0
    %s43 = sadd.s32 %s42, 1
    %s44 = scalar_select %p41, %s42, %s43
    %p47 = pneg %p41
    %p48 = scmp.eq.s32.totalorder %s11, 1
    %p49 = por %p47, %p48
    %p50 = scmp.ne.s32.totalorder %s42, %s45
    %p51 = scmp.eq.s32.totalorder %s11, 0
    %p52 = por %p50, %p51
    %p53 = scmp.ne.s32.totalorder %s42, %s45
    %p54 = scmp.eq.s32.totalorder %s16, 1
    %p55 = por %p53, %p54
    %p56 = scmp.ne.s32.totalorder %s45, %s46
    %p57 = scmp.eq.s32.totalorder %s16, 0
    %p58 = por %p56, %p57
    %p59 = scmp.ne.s32.totalorder %s45, %s46
    %p60 = scmp.eq.s32.totalorder %s17, 1
    %p61 = por %p59, %p60
    %p63 = scmp.ne.s32.totalorder %s46, %s62
    %p64 = scmp.eq.s32.totalorder %s17, 0
    %p65 = por %p63, %p64
    %s66 = ssub.s32 %s11, %s18
    %p67 = scmp.eq.s32.totalorder %s66, 0
    %s69 = sadd.s32 %s68, 1
    %s70 = scalar_select %p67, %s68, %s69
    %p73 = pneg %p67
    %p74 = scmp.eq.s32.totalorder %s11, 1
    %p75 = por %p73, %p74
    %p76 = scmp.ne.s32.totalorder %s68, %s71
    %p77 = scmp.eq.s32.totalorder %s11, 0
    %p78 = por %p76, %p77
    %p79 = scmp.ne.s32.totalorder %s68, %s71
    %p80 = scmp.eq.s32.totalorder %s16, 1
    %p81 = por %p79, %p80
    %p82 = scmp.ne.s32.totalorder %s71, %s72
    %p83 = scmp.eq.s32.totalorder %s16, 0
    %p84 = por %p82, %p83
    %p85 = scmp.ne.s32.totalorder %s71, %s72
    %p86 = scmp.eq.s32.totalorder %s17, 1
    %p87 = por %p85, %p86
    %p89 = scmp.ne.s32.totalorder %s72, %s88
    %p90 = scmp.eq.s32.totalorder %s17, 0
    %p91 = por %p89, %p90
    %s92 = ssub.s32 %s11, %s18
    %p93 = scmp.eq.s32.totalorder %s92, 0
    %s95 = sadd.s32 %s94, 1
    %s96 = scalar_select %p93, %s94, %s95
    %p99 = pneg %p93
    %p100 = scmp.eq.s32.totalorder %s11, 1
    %p101 = por %p99, %p100
    %p102 = scmp.ne.s32.totalorder %s94, %s97
    %p103 = scmp.eq.s32.totalorder %s11, 0
    %p104 = por %p102, %p103
    %p105 = scmp.ne.s32.totalorder %s94, %s97
    %p106 = scmp.eq.s32.totalorder %s16, 1
    %p107 = por %p105, %p106
    %p108 = scmp.ne.s32.totalorder %s97, %s98
    %p109 = scmp.eq.s32.totalorder %s16, 0
    %p110 = por %p108, %p109
    %p111 = scmp.ne.s32.totalorder %s97, %s98
    %p112 = scmp.eq.s32.totalorder %s17, 1
    %p113 = por %p111, %p112
    %p115 = scmp.ne.s32.totalorder %s98, %s114
    %p116 = scmp.eq.s32.totalorder %s17, 0
    %p117 = por %p115, %p116
    %s118 = ssub.s32 %s11, %s18
    %p119 = scmp.eq.s32.totalorder %s118, 0
    %s121 = sadd.s32 %s120, 1
    %s122 = scalar_select %p119, %s120, %s121
    %p125 = pneg %p119
    %p126 = scmp.eq.s32.totalorder %s11, 1
    %p127 = por %p125, %p126
    %p128 = scmp.ne.s32.totalorder %s120, %s123
    %p129 = scmp.eq.s32.totalorder %s11, 0
    %p130 = por %p128, %p129
    %p131 = scmp.ne.s32.totalorder %s120, %s123
    %p132 = scmp.eq.s32.totalorder %s16, 1
    %p133 = por %p131, %p132
    %p134 = scmp.ne.s32.totalorder %s123, %s124
    %p135 = scmp.eq.s32.totalorder %s16, 0
    %p136 = por %p134, %p135
    %p137 = scmp.ne.s32.totalorder %s123, %s124
    %p138 = scmp.eq.s32.totalorder %s17, 1
    %p139 = por %p137, %p138
    %p141 = scmp.ne.s32.totalorder %s124, %s140
    %p142 = scmp.eq.s32.totalorder %s17, 0
    %p143 = por %p141, %p142
    %s144 = ssub.s32 %s11, %s18
    %p145 = scmp.eq.s32.totalorder %s144, 0
    %s147 = sadd.s32 %s146, 1
    %s148 = scalar_select %p145, %s146, %s147
    %p151 = pneg %p145
    %p152 = scmp.eq.s32.totalorder %s11, 1
    %p153 = por %p151, %p152
    %p154 = scmp.ne.s32.totalorder %s146, %s149
    %p155 = scmp.eq.s32.totalorder %s11, 0
    %p156 = por %p154, %p155
    %p157 = scmp.ne.s32.totalorder %s146, %s149
    %p158 = scmp.eq.s32.totalorder %s16, 1
    %p159 = por %p157, %p158
    %p160 = scmp.ne.s32.totalorder %s149, %s150
    %p161 = scmp.eq.s32.totalorder %s16, 0
    %p162 = por %p160, %p161
    %p163 = scmp.ne.s32.totalorder %s149, %s150
    %p164 = scmp.eq.s32.totalorder %s17, 1
    %p165 = por %p163, %p164
    %p167 = scmp.ne.s32.totalorder %s150, %s166
    %p168 = scmp.eq.s32.totalorder %s17, 0
    %p169 = por %p167, %p168
    %p170 = scmp.le.s32.totalorder 1, %s11
    %p171 = scmp.lt.s32.totalorder %s11, 3
    %p172 = pnand %p170, %p171
    %p173 = pneg %p172
    // Predicated region
    $region9: #{forward.7} parent=5 // pred_check
      _
    $region10: #{forward.7} parent=5 // pred_check_branch
      %175 = sbr.rel (%p172) target = $region12
    $region11: #{forward.7} parent=5 // pred_region
      %s176 = ssub.s32 %s11, 1
      // Predicated region
      $region13: #{forward.7} parent=11 // pred_check
        %p177 = pneg %p32
      $region14: #{forward.7} parent=11 // pred_check_branch
        %179 = sbr.rel (%p177) target = $region16
      $region15: #{forward.7} parent=11 // pred_region
        _
      $region16: #{forward.7} parent=11 // pred_fallthru
        _
    $region12: #{forward.7} parent=5 // pred_fallthru
      _
    %p180 = scmp.lt.s32.totalorder %s11, 2
    // Predicated region
    $region17: #{forward.7} parent=5 // pred_check
      %p181 = pneg %p180
    $region18: #{forward.7} parent=5 // pred_check_branch
      %183 = sbr.rel (%p181) target = $region20
    $region19: #{forward.7} parent=5 // pred_region
      // Predicated region
      $region21: #{forward.7} parent=19 // pred_check
        %p184 = pneg %p52
      $region22: #{forward.7} parent=19 // pred_check_branch
        %186 = sbr.rel (%p184) target = $region24
      $region23: #{forward.7} parent=19 // pred_region
        %s187 = smul.u32 4, %s11
        %p188 = scmp.lt.s32.totalorder %s187, 7
        %s189 = scalar_select %p188, %s187, 7
        %s190 = smul.addr %s189, 3
        %s191 = smul.addr %s190, 8
        %s192 = scalar_lea.vmem %s1, %s191
        %s193 = smul.u32 4, %s11
      $region24: #{forward.7} parent=19 // pred_fallthru
        _
      // Predicated region
      $region25: #{forward.7} parent=19 // pred_check
        %p194 = pneg %p78
      $region26: #{forward.7} parent=19 // pred_check_branch
        %196 = sbr.rel (%p194) target = $region28
      $region27: #{forward.7} parent=19 // pred_region
        %s197 = smul.u32 4, %s11
        %p198 = scmp.lt.s32.totalorder %s197, 7
        %s199 = scalar_select %p198, %s197, 7
        %s200 = smul.addr %s199, 8
        %s201 = scalar_lea.vmem %s2, %s200
        %s202 = smul.u32 4, %s11
      $region28: #{forward.7} parent=19 // pred_fallthru
        _
      // Predicated region
      $region29: #{forward.7} parent=19 // pred_check
        %p203 = pneg %p104
      $region30: #{forward.7} parent=19 // pred_check_branch
        %205 = sbr.rel (%p203) target = $region32
      $region31: #{forward.7} parent=19 // pred_region
        %s206 = smul.u32 4, %s11
        %p207 = scmp.lt.s32.totalorder %s206, 7
        %s208 = scalar_select %p207, %s206, 7
        %s209 = smul.addr %s208, 8
        %s210 = scalar_lea.vmem %s3, %s209
        %s211 = smul.u32 4, %s11
      $region32: #{forward.7} parent=19 // pred_fallthru
        _
      // Predicated region
      $region33: #{forward.7} parent=19 // pred_check
        %p212 = pneg %p130
      $region34: #{forward.7} parent=19 // pred_check_branch
        %214 = sbr.rel (%p212) target = $region36
      $region35: #{forward.7} parent=19 // pred_region
        %s215 = smul.u32 4, %s11
        %p216 = scmp.lt.s32.totalorder %s215, 7
        %s217 = scalar_select %p216, %s215, 7
        %s218 = smul.addr %s217, 8
        %s219 = scalar_lea.vmem %s4, %s218
        %s220 = smul.u32 4, %s11
      $region36: #{forward.7} parent=19 // pred_fallthru
        _
    $region20: #{forward.7} parent=5 // pred_fallthru
      _
    %p221 = scmp.le.s32.totalorder 1, %s11
    %p222 = scmp.lt.s32.totalorder %s11, 3
    %p223 = pnand %p221, %p222
    %p224 = pneg %p223
    // Predicated region
    $region37: #{forward.7} parent=5 // pred_check
      _
    $region38: #{forward.7} parent=5 // pred_check_branch
      %226 = sbr.rel (%p223) target = $region40
    $region39: #{forward.7} parent=5 // pred_region
      %s227 = ssub.s32 %s11, 1
      %p228 = pneg %p32
      %p229 = pneg %p29
      %s230 = smul.u32 4, %s16
      %p231 = scmp.lt.s32.totalorder %s230, 7
      %s232 = scalar_select %p231, %s230, 7
      %s233 = smul.addr %s232, 3
      %s234 = smul.addr %s233, 8
      %s235 = scalar_lea.vmem %s1, %s234
      %p236 = pneg %p58
      %p237 = pneg %p55
      %s238 = smul.u32 4, %s16
      %p239 = scmp.lt.s32.totalorder %s238, 7
      %s240 = scalar_select %p239, %s238, 7
      %s241 = smul.addr %s240, 8
      %s242 = scalar_lea.vmem %s2, %s241
      %p243 = pneg %p84
      %p244 = pneg %p81
      %s245 = smul.u32 4, %s16
      %p246 = scmp.lt.s32.totalorder %s245, 7
      %s247 = scalar_select %p246, %s245, 7
      %s248 = smul.addr %s247, 8
      %s249 = scalar_lea.vmem %s3, %s248
      %p250 = pneg %p110
      %p251 = pneg %p107
      %s252 = smul.u32 4, %s16
      %p253 = scmp.lt.s32.totalorder %s252, 7
      %s254 = scalar_select %p253, %s252, 7
      %s255 = smul.addr %s254, 8
      %s256 = scalar_lea.vmem %s4, %s255
      %p257 = pneg %p136
      %p258 = pneg %p133
      %p259 = pneg %p162
      %p260 = pneg %p159
      %s261 = smul.u32 4, %s16
      %p262 = scmp.lt.s32.totalorder %s261, 7
      %s263 = scalar_select %p262, %s261, 7
      %s264 = smul.addr %s263, 4
      %s265 = smul.addr %s264, 8
      %s266 = scalar_lea.vmem %s5, %s265
      %s267 = smul.u32 4, %s16
      %p268 = scmp.lt.s32.totalorder %s267, 7
      %s269 = scalar_select %p268, %s267, 7
      %s270 = smul.addr %s269, 3
      %s271 = smul.addr %s270, 8
      %s272 = scalar_lea.vmem %s1, %s271
      %s273 = smul.u32 4, %s16
      %s274 = smul.u32 4, %s16
      %p275 = scmp.lt.s32.totalorder %s274, 7
      %s276 = scalar_select %p275, %s274, 7
      %s277 = smul.addr %s276, 8
      %s278 = scalar_lea.vmem %s2, %s277
      %s279 = smul.u32 4, %s16
      %s280 = smul.u32 4, %s16
      %p281 = scmp.lt.s32.totalorder %s280, 7
      %s282 = scalar_select %p281, %s280, 7
      %s283 = smul.addr %s282, 8
      %s284 = scalar_lea.vmem %s3, %s283
      %s285 = smul.u32 4, %s16
      %s286 = smul.u32 4, %s16
      %p287 = scmp.lt.s32.totalorder %s286, 7
      %s288 = scalar_select %p287, %s286, 7
      %s289 = smul.addr %s288, 8
      %s290 = scalar_lea.vmem %s4, %s289
      %s291 = smul.u32 4, %s16
      %s292 = smul.u32 4, %s16
      %p293 = scmp.lt.s32.totalorder %s292, 7
      %s294 = scalar_select %p293, %s292, 7
      %s295 = smul.addr %s294, 4
      %s296 = smul.addr %s295, 8
      %s297 = scalar_lea.vmem %s5, %s296
      %s298 = smul.u32 4, %s16
      %v299 = vld [vmem:[%s272] sm:$0xff]
      %v300 = vld [vmem:[%s272 + $0x8] sm:$0xff]
      %v301 = vld [vmem:[%s272 + $0x10] sm:$0xff]
      %v302 = vld [vmem:[%s272 + $0x18] sm:$0xff]
      %v303 = vld [vmem:[%s272 + $0x20] sm:$0xff]
      %v304 = vld [vmem:[%s272 + $0x28] sm:$0xff]
      %v305 = vld [vmem:[%s272 + $0x30] sm:$0xff]
      %v306 = vld [vmem:[%s272 + $0x38] sm:$0xff]
      %v307 = vld [vmem:[%s272 + $0x40] sm:$0xff]
      %v308 = vld [vmem:[%s272 + $0x48] sm:$0xff]
      %v309 = vld [vmem:[%s272 + $0x50] sm:$0xff]
      %v310 = vld [vmem:[%s272 + $0x58] sm:$0xff]
      %v311 = vld [vmem:[%s0] sm:$0xff]
      %v312 = vld [vmem:[%s0 + $0x8] sm:$0xff]
      %v313 = vld [vmem:[%s0 + $0x10] sm:$0xff]
      %v314 = vld [vmem:[%s0 + $0x18] sm:$0xff]
      %v315 = vld [vmem:[%s0 + $0x20] sm:$0xff]
      %v316 = vld [vmem:[%s0 + $0x28] sm:$0xff]
      %v317 = vld [vmem:[%s0 + $0x30] sm:$0xff]
      %v318 = vld [vmem:[%s0 + $0x38] sm:$0xff]
      %v319 = vld [vmem:[%s0 + $0x40] sm:$0xff]
      %v320 = vld [vmem:[%s0 + $0x48] sm:$0xff]
      %v321 = vld [vmem:[%s0 + $0x50] sm:$0xff]
      %v322 = vld [vmem:[%s0 + $0x58] sm:$0xff]
      %v323 = vld [vmem:[%s0 + $0x60] sm:$0xff]
      %v324 = vld [vmem:[%s0 + $0x68] sm:$0xff]
      %v325 = vld [vmem:[%s0 + $0x70] sm:$0xff]
      %v326 = vld [vmem:[%s0 + $0x78] sm:$0xff]
      %v327 = vld [vmem:[%s0 + $0x80] sm:$0xff]
      %v328 = vld [vmem:[%s0 + $0x88] sm:$0xff]
      %v329 = vld [vmem:[%s0 + $0x90] sm:$0xff]
      %v330 = vld [vmem:[%s0 + $0x98] sm:$0xff]
      %v331 = vld [vmem:[%s0 + $0xa0] sm:$0xff]
      %v332 = vld [vmem:[%s0 + $0xa8] sm:$0xff]
      %v333 = vld [vmem:[%s0 + $0xb0] sm:$0xff]
      %v334 = vld [vmem:[%s0 + $0xb8] sm:$0xff]
      %v335 = vld [vmem:[%s0 + $0xc0] sm:$0xff]
      %v336 = vld [vmem:[%s0 + $0xc8] sm:$0xff]
      %v337 = vld [vmem:[%s0 + $0xd0] sm:$0xff]
      %v338 = vld [vmem:[%s0 + $0xd8] sm:$0xff]
      %v339 = vld [vmem:[%s0 + $0xe0] sm:$0xff]
      %v340 = vld [vmem:[%s0 + $0xe8] sm:$0xff]
      %v341 = vld [vmem:[%s0 + $0xf0] sm:$0xff]
      %v342 = vld [vmem:[%s0 + $0xf8] sm:$0xff]
      %v343 = vld [vmem:[%s0 + $0x100] sm:$0xff]
      %v344 = vld [vmem:[%s0 + $0x108] sm:$0xff]
      %v345 = vld [vmem:[%s0 + $0x110] sm:$0xff]
      %v346 = vld [vmem:[%s0 + $0x118] sm:$0xff]
      %v347 = vld [vmem:[%s0 + $0x120] sm:$0xff]
      %v348 = vld [vmem:[%s0 + $0x128] sm:$0xff]
      %v349 = vld [vmem:[%s0 + $0x130] sm:$0xff]
      %v350 = vld [vmem:[%s0 + $0x138] sm:$0xff]
      %v351 = vld [vmem:[%s0 + $0x140] sm:$0xff]
      %v352 = vld [vmem:[%s0 + $0x148] sm:$0xff]
      %v353 = vld [vmem:[%s0 + $0x150] sm:$0xff]
      %v354 = vld [vmem:[%s0 + $0x158] sm:$0xff]
      %v355 = vld [vmem:[%s0 + $0x160] sm:$0xff]
      %v356 = vld [vmem:[%s0 + $0x168] sm:$0xff]
      %v357 = vld [vmem:[%s0 + $0x170] sm:$0xff]
      %v358 = vld [vmem:[%s0 + $0x178] sm:$0xff]
      %v359 = vld [vmem:[%s0 + $0x180] sm:$0xff]
      %v360 = vld [vmem:[%s0 + $0x188] sm:$0xff]
      %v361 = vld [vmem:[%s0 + $0x190] sm:$0xff]
      %v362 = vld [vmem:[%s0 + $0x198] sm:$0xff]
      %v363 = vld [vmem:[%s0 + $0x1a0] sm:$0xff]
      %v364 = vld [vmem:[%s0 + $0x1a8] sm:$0xff]
      %v365 = vld [vmem:[%s0 + $0x1b0] sm:$0xff]
      %v366 = vld [vmem:[%s0 + $0x1b8] sm:$0xff]
      %v367 = vld [vmem:[%s0 + $0x1c0] sm:$0xff]
      %v368 = vld [vmem:[%s0 + $0x1c8] sm:$0xff]
      %v369 = vld [vmem:[%s0 + $0x1d0] sm:$0xff]
      %v370 = vld [vmem:[%s0 + $0x1d8] sm:$0xff]
      %v371 = vld [vmem:[%s0 + $0x1e0] sm:$0xff]
      %v372 = vld [vmem:[%s0 + $0x1e8] sm:$0xff]
      %v373 = vld [vmem:[%s0 + $0x1f0] sm:$0xff]
      %v374 = vld [vmem:[%s0 + $0x1f8] sm:$0xff]
      %v375 = vld [vmem:[%s0 + $0x200] sm:$0xff]
      %v376 = vld [vmem:[%s0 + $0x208] sm:$0xff]
      %v377 = vld [vmem:[%s0 + $0x210] sm:$0xff]
      %v378 = vld [vmem:[%s0 + $0x218] sm:$0xff]
      %v379 = vld [vmem:[%s0 + $0x220] sm:$0xff]
      %v380 = vld [vmem:[%s0 + $0x228] sm:$0xff]
      %v381 = vld [vmem:[%s0 + $0x230] sm:$0xff]
      %v382 = vld [vmem:[%s0 + $0x238] sm:$0xff]
      %v383 = vld [vmem:[%s0 + $0x240] sm:$0xff]
      %v384 = vld [vmem:[%s0 + $0x248] sm:$0xff]
      %v385 = vld [vmem:[%s0 + $0x250] sm:$0xff]
      %v386 = vld [vmem:[%s0 + $0x258] sm:$0xff]
      %v387 = vld [vmem:[%s0 + $0x260] sm:$0xff]
      %v388 = vld [vmem:[%s0 + $0x268] sm:$0xff]
      %v389 = vld [vmem:[%s0 + $0x270] sm:$0xff]
      %v390 = vld [vmem:[%s0 + $0x278] sm:$0xff]
      %v391 = vld [vmem:[%s0 + $0x280] sm:$0xff]
      %v392 = vld [vmem:[%s0 + $0x288] sm:$0xff]
      %v393 = vld [vmem:[%s0 + $0x290] sm:$0xff]
      %v394 = vld [vmem:[%s0 + $0x298] sm:$0xff]
      %v395 = vld [vmem:[%s0 + $0x2a0] sm:$0xff]
      %v396 = vld [vmem:[%s0 + $0x2a8] sm:$0xff]
      %v397 = vld [vmem:[%s0 + $0x2b0] sm:$0xff]
      %v398 = vld [vmem:[%s0 + $0x2b8] sm:$0xff]
      %v399 = vld [vmem:[%s0 + $0x2c0] sm:$0xff]
      %v400 = vld [vmem:[%s0 + $0x2c8] sm:$0xff]
      %v401 = vld [vmem:[%s0 + $0x2d0] sm:$0xff]
      %v402 = vld [vmem:[%s0 + $0x2d8] sm:$0xff]
      %v403 = vld [vmem:[%s0 + $0x2e0] sm:$0xff]
      %v404 = vld [vmem:[%s0 + $0x2e8] sm:$0xff]
      %v405 = vld [vmem:[%s0 + $0x2f0] sm:$0xff]
      %v406 = vld [vmem:[%s0 + $0x2f8] sm:$0xff]
      %v407 = vld [vmem:[%s0 + $0x300] sm:$0xff]
      %v408 = vld [vmem:[%s0 + $0x308] sm:$0xff]
      %v409 = vld [vmem:[%s0 + $0x310] sm:$0xff]
      %v410 = vld [vmem:[%s0 + $0x318] sm:$0xff]
      %v411 = vld [vmem:[%s0 + $0x320] sm:$0xff]
      %v412 = vld [vmem:[%s0 + $0x328] sm:$0xff]
      %v413 = vld [vmem:[%s0 + $0x330] sm:$0xff]
      %v414 = vld [vmem:[%s0 + $0x338] sm:$0xff]
      %v415 = vld [vmem:[%s0 + $0x340] sm:$0xff]
      %v416 = vld [vmem:[%s0 + $0x348] sm:$0xff]
      %v417 = vld [vmem:[%s0 + $0x350] sm:$0xff]
      %v418 = vld [vmem:[%s0 + $0x358] sm:$0xff]
      %v419 = vld [vmem:[%s0 + $0x360] sm:$0xff]
      %v420 = vld [vmem:[%s0 + $0x368] sm:$0xff]
      %v421 = vld [vmem:[%s0 + $0x370] sm:$0xff]
      %v422 = vld [vmem:[%s0 + $0x378] sm:$0xff]
      %v423 = vld [vmem:[%s0 + $0x380] sm:$0xff]
      %v424 = vld [vmem:[%s0 + $0x388] sm:$0xff]
      %v425 = vld [vmem:[%s0 + $0x390] sm:$0xff]
      %v426 = vld [vmem:[%s0 + $0x398] sm:$0xff]
      %v427 = vld [vmem:[%s0 + $0x3a0] sm:$0xff]
      %v428 = vld [vmem:[%s0 + $0x3a8] sm:$0xff]
      %v429 = vld [vmem:[%s0 + $0x3b0] sm:$0xff]
      %v430 = vld [vmem:[%s0 + $0x3b8] sm:$0xff]
      %v431 = vld [vmem:[%s0 + $0x3c0] sm:$0xff]
      %v432 = vld [vmem:[%s0 + $0x3c8] sm:$0xff]
      %v433 = vld [vmem:[%s0 + $0x3d0] sm:$0xff]
      %v434 = vld [vmem:[%s0 + $0x3d8] sm:$0xff]
      %v435 = vld [vmem:[%s0 + $0x3e0] sm:$0xff]
      %v436 = vld [vmem:[%s0 + $0x3e8] sm:$0xff]
      %v437 = vld [vmem:[%s0 + $0x3f0] sm:$0xff]
      %v438 = vld [vmem:[%s0 + $0x3f8] sm:$0xff]
      %v439 = vld [vmem:[%s0 + $0x400] sm:$0xff]
      %v440 = vld [vmem:[%s0 + $0x408] sm:$0xff]
      %v441 = vld [vmem:[%s0 + $0x410] sm:$0xff]
      %v442 = vld [vmem:[%s0 + $0x418] sm:$0xff]
      %v443 = vld [vmem:[%s0 + $0x420] sm:$0xff]
      %v444 = vld [vmem:[%s0 + $0x428] sm:$0xff]
      %v445 = vld [vmem:[%s0 + $0x430] sm:$0xff]
      %v446 = vld [vmem:[%s0 + $0x438] sm:$0xff]
      %v447 = vld [vmem:[%s0 + $0x440] sm:$0xff]
      %v448 = vld [vmem:[%s0 + $0x448] sm:$0xff]
      %v449 = vld [vmem:[%s0 + $0x450] sm:$0xff]
      %v450 = vld [vmem:[%s0 + $0x458] sm:$0xff]
      %v451 = vld [vmem:[%s0 + $0x460] sm:$0xff]
      %v452 = vld [vmem:[%s0 + $0x468] sm:$0xff]
      %v453 = vld [vmem:[%s0 + $0x470] sm:$0xff]
      %v454 = vld [vmem:[%s0 + $0x478] sm:$0xff]
      %v455 = vld [vmem:[%s278] sm:$0xff]
      %v456 = vld [vmem:[%s278 + $0x8] sm:$0xff]
      %v457 = vld [vmem:[%s278 + $0x10] sm:$0xff]
      %v458 = vld [vmem:[%s278 + $0x18] sm:$0xff]
      %460 = vset.pattern.permute.xlu0 0
      %461 = vperm.xlu0 %460, %v455
      %v462 = vpop.permute.xlu0 %461
      %465 = vset.pattern.permute.xlu0 0
      %466 = vperm.xlu0 %465, %v456
      %v467 = vpop.permute.xlu0 %466
      %470 = vset.pattern.permute.xlu0 0
      %471 = vperm.xlu0 %470, %v457
      %v472 = vpop.permute.xlu0 %471
      %475 = vset.pattern.permute.xlu0 0
      %476 = vperm.xlu0 %475, %v458
      %v477 = vpop.permute.xlu0 %476
      %vm479 = vcmask 261120
      %v481 = vsel %vm479, %v301, 0
      %v484 = vsel %vm479, %v304, 0
      %v487 = vsel %vm479, %v307, 0
      %v490 = vsel %vm479, %v310, 0
      %492 = vmatpush.msra.mxu0 %v371
      %493 = vmatpush.msra.mxu0 %v367
      %494 = vmatpush.msra.mxu0 %v363
      %495 = vmatpush.msra.mxu0 %v359
      %496 = vmatpush.msra.mxu0 %v355
      %497 = vmatpush.msra.mxu0 %v351
      %498 = vmatpush.msra.mxu0 %v347
      %499 = vmatpush.msra.mxu0 %v343
      %500 = vmatpush.msra.mxu0 %v339
      %501 = vmatpush.msra.mxu0 %v335
      %502 = vmatpush.msra.mxu0 %v331
      %503 = vmatpush.msra.mxu0 %v327
      %504 = vmatpush.msra.mxu0 %v323
      %505 = vmatpush.msra.mxu0 %v319
      %506 = vmatpush.msra.mxu0 %v315
      %507 = vmatpush.msra.mxu0 %v311
      %508 = vmatmul.f32.gmra.mxu0 %v299
      %v509 = vpop.f32.mrf.mxu0
      %v510 = vadd.f32 %v462, %v509
      %511 = vmatmul.f32.gmra.mxu0 %v302
      %v512 = vpop.f32.mrf.mxu0
      %v513 = vadd.f32 %v467, %v512
      %514 = vmatmul.f32.gmra.mxu0 %v305
      %v515 = vpop.f32.mrf.mxu0
      %v516 = vadd.f32 %v472, %v515
      %517 = vmatmul.f32.gmra.mxu0 %v308
      %v518 = vpop.f32.mrf.mxu0
      %v519 = vadd.f32 %v477, %v518
      %520 = vdwg.mxu0
      %521 = vmatpush.msra.mxu0 %v435
      %522 = vmatpush.msra.mxu0 %v431
      %523 = vmatpush.msra.mxu0 %v427
      %524 = vmatpush.msra.mxu0 %v423
      %525 = vmatpush.msra.mxu0 %v419
      %526 = vmatpush.msra.mxu0 %v415
      %527 = vmatpush.msra.mxu0 %v411
      %528 = vmatpush.msra.mxu0 %v407
      %529 = vmatpush.msra.mxu0 %v403
      %530 = vmatpush.msra.mxu0 %v399
      %531 = vmatpush.msra.mxu0 %v395
      %532 = vmatpush.msra.mxu0 %v391
      %533 = vmatpush.msra.mxu0 %v387
      %534 = vmatpush.msra.mxu0 %v383
      %535 = vmatpush.msra.mxu0 %v379
      %536 = vmatpush.msra.mxu0 %v375
      %537 = vmatmul.f32.gmra.mxu0 %v300
      %v538 = vpop.f32.mrf.mxu0
      %v539 = vadd.f32 %v510, %v538
      %540 = vmatmul.f32.gmra.mxu0 %v303
      %v541 = vpop.f32.mrf.mxu0
      %v542 = vadd.f32 %v513, %v541
      %543 = vmatmul.f32.gmra.mxu0 %v306
      %v544 = vpop.f32.mrf.mxu0
      %v545 = vadd.f32 %v516, %v544
      %546 = vmatmul.f32.gmra.mxu0 %v309
      %v547 = vpop.f32.mrf.mxu0
      %v548 = vadd.f32 %v519, %v547
      %549 = vdwg.mxu0
      %550 = vmatpush.msra.mxu0 0.0
      %551 = vmatpush.msra.mxu0 0.0
      %552 = vmatpush.msra.mxu0 0.0
      %553 = vmatpush.msra.mxu0 0.0
      %554 = vmatpush.msra.mxu0 0.0
      %555 = vmatpush.msra.mxu0 0.0
      %556 = vmatpush.msra.mxu0 0.0
      %557 = vmatpush.msra.mxu0 0.0
      %558 = vmatpush.msra.mxu0 0.0
      %559 = vmatpush.msra.mxu0 0.0
      %560 = vmatpush.msra.mxu0 0.0
      %561 = vmatpush.msra.mxu0 0.0
      %562 = vmatpush.msra.mxu0 %v451
      %563 = vmatpush.msra.mxu0 %v447
      %564 = vmatpush.msra.mxu0 %v443
      %565 = vmatpush.msra.mxu0 %v439
      %566 = vmatmul.f32.gmra.mxu0 %v481
      %v567 = vpop.f32.mrf.mxu0
      %v568 = vadd.f32 %v539, %v567
      %569 = vmatmul.f32.gmra.mxu0 %v484
      %v570 = vpop.f32.mrf.mxu0
      %v571 = vadd.f32 %v542, %v570
      %572 = vmatmul.f32.gmra.mxu0 %v487
      %v573 = vpop.f32.mrf.mxu0
      %v574 = vadd.f32 %v545, %v573
      %575 = vmatmul.f32.gmra.mxu0 %v490
      %v576 = vpop.f32.mrf.mxu0
      %v577 = vadd.f32 %v548, %v576
      %578 = vdwg.mxu0
      %579 = vmatpush.msra.mxu0 %v372
      %580 = vmatpush.msra.mxu0 %v368
      %581 = vmatpush.msra.mxu0 %v364
      %582 = vmatpush.msra.mxu0 %v360
      %583 = vmatpush.msra.mxu0 %v356
      %584 = vmatpush.msra.mxu0 %v352
      %585 = vmatpush.msra.mxu0 %v348
      %586 = vmatpush.msra.mxu0 %v344
      %587 = vmatpush.msra.mxu0 %v340
      %588 = vmatpush.msra.mxu0 %v336
      %589 = vmatpush.msra.mxu0 %v332
      %590 = vmatpush.msra.mxu0 %v328
      %591 = vmatpush.msra.mxu0 %v324
      %592 = vmatpush.msra.mxu0 %v320
      %593 = vmatpush.msra.mxu0 %v316
      %594 = vmatpush.msra.mxu0 %v312
      %595 = vmatmul.f32.gmra.mxu0 %v299
      %v596 = vpop.f32.mrf.mxu0
      %v597 = vadd.f32 %v462, %v596
      %598 = vmatmul.f32.gmra.mxu0 %v302
      %v599 = vpop.f32.mrf.mxu0
      %v600 = vadd.f32 %v467, %v599
      %601 = vmatmul.f32.gmra.mxu0 %v305
      %v602 = vpop.f32.mrf.mxu0
      %v603 = vadd.f32 %v472, %v602
      %604 = vmatmul.f32.gmra.mxu0 %v308
      %v605 = vpop.f32.mrf.mxu0
      %v606 = vadd.f32 %v477, %v605
      %607 = vdwg.mxu0
      %608 = vmatpush.msra.mxu0 %v436
      %609 = vmatpush.msra.mxu0 %v432
      %610 = vmatpush.msra.mxu0 %v428
      %611 = vmatpush.msra.mxu0 %v424
      %612 = vmatpush.msra.mxu0 %v420
      %613 = vmatpush.msra.mxu0 %v416
      %614 = vmatpush.msra.mxu0 %v412
      %615 = vmatpush.msra.mxu0 %v408
      %616 = vmatpush.msra.mxu0 %v404
      %617 = vmatpush.msra.mxu0 %v400
      %618 = vmatpush.msra.mxu0 %v396
      %619 = vmatpush.msra.mxu0 %v392
      %620 = vmatpush.msra.mxu0 %v388
      %621 = vmatpush.msra.mxu0 %v384
      %622 = vmatpush.msra.mxu0 %v380
      %623 = vmatpush.msra.mxu0 %v376
      %624 = vmatmul.f32.gmra.mxu0 %v300
      %v625 = vpop.f32.mrf.mxu0
      %v626 = vadd.f32 %v597, %v625
      %627 = vmatmul.f32.gmra.mxu0 %v303
      %v628 = vpop.f32.mrf.mxu0
      %v629 = vadd.f32 %v600, %v628
      %630 = vmatmul.f32.gmra.mxu0 %v306
      %v631 = vpop.f32.mrf.mxu0
      %v632 = vadd.f32 %v603, %v631
      %633 = vmatmul.f32.gmra.mxu0 %v309
      %v634 = vpop.f32.mrf.mxu0
      %v635 = vadd.f32 %v606, %v634
      %636 = vdwg.mxu0
      %637 = vmatpush.msra.mxu0 0.0
      %638 = vmatpush.msra.mxu0 0.0
      %639 = vmatpush.msra.mxu0 0.0
      %640 = vmatpush.msra.mxu0 0.0
      %641 = vmatpush.msra.mxu0 0.0
      %642 = vmatpush.msra.mxu0 0.0
      %643 = vmatpush.msra.mxu0 0.0
      %644 = vmatpush.msra.mxu0 0.0
      %645 = vmatpush.msra.mxu0 0.0
      %646 = vmatpush.msra.mxu0 0.0
      %647 = vmatpush.msra.mxu0 0.0
      %648 = vmatpush.msra.mxu0 0.0
      %649 = vmatpush.msra.mxu0 %v452
      %650 = vmatpush.msra.mxu0 %v448
      %651 = vmatpush.msra.mxu0 %v444
      %652 = vmatpush.msra.mxu0 %v440
      %653 = vmatmul.f32.gmra.mxu0 %v481
      %v654 = vpop.f32.mrf.mxu0
      %v655 = vadd.f32 %v626, %v654
      %656 = vmatmul.f32.gmra.mxu0 %v484
      %v657 = vpop.f32.mrf.mxu0
      %v658 = vadd.f32 %v629, %v657
      %659 = vmatmul.f32.gmra.mxu0 %v487
      %v660 = vpop.f32.mrf.mxu0
      %v661 = vadd.f32 %v632, %v660
      %662 = vmatmul.f32.gmra.mxu0 %v490
      %v663 = vpop.f32.mrf.mxu0
      %v664 = vadd.f32 %v635, %v663
      %665 = vdwg.mxu0
      %666 = vmatpush.msra.mxu0 %v373
      %667 = vmatpush.msra.mxu0 %v369
      %668 = vmatpush.msra.mxu0 %v365
      %669 = vmatpush.msra.mxu0 %v361
      %670 = vmatpush.msra.mxu0 %v357
      %671 = vmatpush.msra.mxu0 %v353
      %672 = vmatpush.msra.mxu0 %v349
      %673 = vmatpush.msra.mxu0 %v345
      %674 = vmatpush.msra.mxu0 %v341
      %675 = vmatpush.msra.mxu0 %v337
      %676 = vmatpush.msra.mxu0 %v333
      %677 = vmatpush.msra.mxu0 %v329
      %678 = vmatpush.msra.mxu0 %v325
      %679 = vmatpush.msra.mxu0 %v321
      %680 = vmatpush.msra.mxu0 %v317
      %681 = vmatpush.msra.mxu0 %v313
      %682 = vmatmul.f32.gmra.mxu0 %v299
      %v683 = vpop.f32.mrf.mxu0
      %v684 = vadd.f32 %v462, %v683
      %685 = vmatmul.f32.gmra.mxu0 %v302
      %v686 = vpop.f32.mrf.mxu0
      %v687 = vadd.f32 %v467, %v686
      %688 = vmatmul.f32.gmra.mxu0 %v305
      %v689 = vpop.f32.mrf.mxu0
      %v690 = vadd.f32 %v472, %v689
      %691 = vmatmul.f32.gmra.mxu0 %v308
      %v692 = vpop.f32.mrf.mxu0
      %v693 = vadd.f32 %v477, %v692
      %694 = vdwg.mxu0
      %695 = vmatpush.msra.mxu0 %v437
      %696 = vmatpush.msra.mxu0 %v433
      %697 = vmatpush.msra.mxu0 %v429
      %698 = vmatpush.msra.mxu0 %v425
      %699 = vmatpush.msra.mxu0 %v421
      %700 = vmatpush.msra.mxu0 %v417
      %701 = vmatpush.msra.mxu0 %v413
      %702 = vmatpush.msra.mxu0 %v409
      %703 = vmatpush.msra.mxu0 %v405
      %704 = vmatpush.msra.mxu0 %v401
      %705 = vmatpush.msra.mxu0 %v397
      %706 = vmatpush.msra.mxu0 %v393
      %707 = vmatpush.msra.mxu0 %v389
      %708 = vmatpush.msra.mxu0 %v385
      %709 = vmatpush.msra.mxu0 %v381
      %710 = vmatpush.msra.mxu0 %v377
      %711 = vmatmul.f32.gmra.mxu0 %v300
      %v712 = vpop.f32.mrf.mxu0
      %v713 = vadd.f32 %v684, %v712
      %714 = vmatmul.f32.gmra.mxu0 %v303
      %v715 = vpop.f32.mrf.mxu0
      %v716 = vadd.f32 %v687, %v715
      %717 = vmatmul.f32.gmra.mxu0 %v306
      %v718 = vpop.f32.mrf.mxu0
      %v719 = vadd.f32 %v690, %v718
      %720 = vmatmul.f32.gmra.mxu0 %v309
      %v721 = vpop.f32.mrf.mxu0
      %v722 = vadd.f32 %v693, %v721
      %723 = vdwg.mxu0
      %724 = vmatpush.msra.mxu0 0.0
      %725 = vmatpush.msra.mxu0 0.0
      %726 = vmatpush.msra.mxu0 0.0
      %727 = vmatpush.msra.mxu0 0.0
      %728 = vmatpush.msra.mxu0 0.0
      %729 = vmatpush.msra.mxu0 0.0
      %730 = vmatpush.msra.mxu0 0.0
      %731 = vmatpush.msra.mxu0 0.0
      %732 = vmatpush.msra.mxu0 0.0
      %733 = vmatpush.msra.mxu0 0.0
      %734 = vmatpush.msra.mxu0 0.0
      %735 = vmatpush.msra.mxu0 0.0
      %736 = vmatpush.msra.mxu0 %v453
      %737 = vmatpush.msra.mxu0 %v449
      %738 = vmatpush.msra.mxu0 %v445
      %739 = vmatpush.msra.mxu0 %v441
      %740 = vmatmul.f32.gmra.mxu0 %v481
      %v741 = vpop.f32.mrf.mxu0
      %v742 = vadd.f32 %v713, %v741
      %743 = vmatmul.f32.gmra.mxu0 %v484
      %v744 = vpop.f32.mrf.mxu0
      %v745 = vadd.f32 %v716, %v744
      %746 = vmatmul.f32.gmra.mxu0 %v487
      %v747 = vpop.f32.mrf.mxu0
      %v748 = vadd.f32 %v719, %v747
      %749 = vmatmul.f32.gmra.mxu0 %v490
      %v750 = vpop.f32.mrf.mxu0
      %v751 = vadd.f32 %v722, %v750
      %752 = vdwg.mxu0
      %753 = vmatpush.msra.mxu0 %v374
      %754 = vmatpush.msra.mxu0 %v370
      %755 = vmatpush.msra.mxu0 %v366
      %756 = vmatpush.msra.mxu0 %v362
      %757 = vmatpush.msra.mxu0 %v358
      %758 = vmatpush.msra.mxu0 %v354
      %759 = vmatpush.msra.mxu0 %v350
      %760 = vmatpush.msra.mxu0 %v346
      %761 = vmatpush.msra.mxu0 %v342
      %762 = vmatpush.msra.mxu0 %v338
      %763 = vmatpush.msra.mxu0 %v334
      %764 = vmatpush.msra.mxu0 %v330
      %765 = vmatpush.msra.mxu0 %v326
      %766 = vmatpush.msra.mxu0 %v322
      %767 = vmatpush.msra.mxu0 %v318
      %768 = vmatpush.msra.mxu0 %v314
      %769 = vmatmul.f32.gmra.mxu0 %v299
      %v770 = vpop.f32.mrf.mxu0
      %v771 = vadd.f32 %v462, %v770
      %772 = vmatmul.f32.gmra.mxu0 %v302
      %v773 = vpop.f32.mrf.mxu0
      %v774 = vadd.f32 %v467, %v773
      %775 = vmatmul.f32.gmra.mxu0 %v305
      %v776 = vpop.f32.mrf.mxu0
      %v777 = vadd.f32 %v472, %v776
      %778 = vmatmul.f32.gmra.mxu0 %v308
      %v779 = vpop.f32.mrf.mxu0
      %v780 = vadd.f32 %v477, %v779
      %781 = vdwg.mxu0
      %782 = vmatpush.msra.mxu0 %v438
      %783 = vmatpush.msra.mxu0 %v434
      %784 = vmatpush.msra.mxu0 %v430
      %785 = vmatpush.msra.mxu0 %v426
      %786 = vmatpush.msra.mxu0 %v422
      %787 = vmatpush.msra.mxu0 %v418
      %788 = vmatpush.msra.mxu0 %v414
      %789 = vmatpush.msra.mxu0 %v410
      %790 = vmatpush.msra.mxu0 %v406
      %791 = vmatpush.msra.mxu0 %v402
      %792 = vmatpush.msra.mxu0 %v398
      %793 = vmatpush.msra.mxu0 %v394
      %794 = vmatpush.msra.mxu0 %v390
      %795 = vmatpush.msra.mxu0 %v386
      %796 = vmatpush.msra.mxu0 %v382
      %797 = vmatpush.msra.mxu0 %v378
      %798 = vmatmul.f32.gmra.mxu0 %v300
      %v799 = vpop.f32.mrf.mxu0
      %v800 = vadd.f32 %v771, %v799
      %801 = vmatmul.f32.gmra.mxu0 %v303
      %v802 = vpop.f32.mrf.mxu0
      %v803 = vadd.f32 %v774, %v802
      %804 = vmatmul.f32.gmra.mxu0 %v306
      %v805 = vpop.f32.mrf.mxu0
      %v806 = vadd.f32 %v777, %v805
      %807 = vmatmul.f32.gmra.mxu0 %v309
      %v808 = vpop.f32.mrf.mxu0
      %v809 = vadd.f32 %v780, %v808
      %810 = vdwg.mxu0
      %811 = vmatpush.msra.mxu0 0.0
      %812 = vmatpush.msra.mxu0 0.0
      %813 = vmatpush.msra.mxu0 0.0
      %814 = vmatpush.msra.mxu0 0.0
      %815 = vmatpush.msra.mxu0 0.0
      %816 = vmatpush.msra.mxu0 0.0
      %817 = vmatpush.msra.mxu0 0.0
      %818 = vmatpush.msra.mxu0 0.0
      %819 = vmatpush.msra.mxu0 0.0
      %820 = vmatpush.msra.mxu0 0.0
      %821 = vmatpush.msra.mxu0 0.0
      %822 = vmatpush.msra.mxu0 0.0
      %823 = vmatpush.msra.mxu0 %v454
      %824 = vmatpush.msra.mxu0 %v450
      %825 = vmatpush.msra.mxu0 %v446
      %826 = vmatpush.msra.mxu0 %v442
      %827 = vmatmul.f32.gmra.mxu0 %v481
      %v828 = vpop.f32.mrf.mxu0
      %v829 = vadd.f32 %v800, %v828
      %830 = vmatmul.f32.gmra.mxu0 %v484
      %v831 = vpop.f32.mrf.mxu0
      %v832 = vadd.f32 %v803, %v831
      %833 = vmatmul.f32.gmra.mxu0 %v487
      %v834 = vpop.f32.mrf.mxu0
      %v835 = vadd.f32 %v806, %v834
      %836 = vmatmul.f32.gmra.mxu0 %v490
      %v837 = vpop.f32.mrf.mxu0
      %v838 = vadd.f32 %v809, %v837
      %839 = vdwg.mxu0
      %v840 = vadd.f32 %v568, %v655
      %v841 = vadd.f32 %v840, %v742
      %v842 = vadd.f32 %v841, %v829
      %843 = vadd.xlane.f32.xlu0 %v842
      %v844 = vpop.xlane.xlu0 %843
      %v845 = vadd.f32 %v571, %v658
      %v846 = vadd.f32 %v845, %v745
      %v847 = vadd.f32 %v846, %v832
      %848 = vadd.xlane.f32.xlu0 %v847
      %v849 = vpop.xlane.xlu0 %848
      %v850 = vadd.f32 %v574, %v661
      %v851 = vadd.f32 %v850, %v748
      %v852 = vadd.f32 %v851, %v835
      %853 = vadd.xlane.f32.xlu0 %v852
      %v854 = vpop.xlane.xlu0 %853
      %v855 = vadd.f32 %v577, %v664
      %v856 = vadd.f32 %v855, %v751
      %v857 = vadd.f32 %v856, %v838
      %858 = vadd.xlane.f32.xlu0 %v857
      %v859 = vpop.xlane.xlu0 %858
      %v860 = vrcp.pop 512.0
      %v861 = vmul.f32 512.0, %v860
      %v862 = vsub.f32 1.0, %v861
      %v863 = vmul.f32 %v860, %v862
      %v864 = vadd.f32 %v860, %v863
      %vm865 = vweird.f32 %v860
      %v866 = vsel %vm865, %v860, %v864
      %v867 = vmul.f32 %v844, %v866
      %v868 = vmul.f32 %v849, %v866
      %v869 = vmul.f32 %v854, %v866
      %v870 = vmul.f32 %v859, %v866
      %v871 = vsub.f32 %v568, %v867
      %v872 = vsub.f32 %v655, %v867
      %v873 = vsub.f32 %v742, %v867
      %v874 = vsub.f32 %v829, %v867
      %v875 = vsub.f32 %v571, %v868
      %v876 = vsub.f32 %v658, %v868
      %v877 = vsub.f32 %v745, %v868
      %v878 = vsub.f32 %v832, %v868
      %v879 = vsub.f32 %v574, %v869
      %v880 = vsub.f32 %v661, %v869
      %v881 = vsub.f32 %v748, %v869
      %v882 = vsub.f32 %v835, %v869
      %v883 = vsub.f32 %v577, %v870
      %v884 = vsub.f32 %v664, %v870
      %v885 = vsub.f32 %v751, %v870
      %v886 = vsub.f32 %v838, %v870
      %v887 = vmul.f32 %v871, %v871
      %v888 = vmul.f32 %v872, %v872
      %v889 = vmul.f32 %v873, %v873
      %v890 = vmul.f32 %v874, %v874
      %v891 = vmul.f32 %v875, %v875
      %v892 = vmul.f32 %v876, %v876
      %v893 = vmul.f32 %v877, %v877
      %v894 = vmul.f32 %v878, %v878
      %v895 = vmul.f32 %v879, %v879
      %v896 = vmul.f32 %v880, %v880
      %v897 = vmul.f32 %v881, %v881
      %v898 = vmul.f32 %v882, %v882
      %v899 = vmul.f32 %v883, %v883
      %v900 = vmul.f32 %v884, %v884
      %v901 = vmul.f32 %v885, %v885
      %v902 = vmul.f32 %v886, %v886
      %v903 = vadd.f32 %v887, %v888
      %v904 = vadd.f32 %v903, %v889
      %v905 = vadd.f32 %v904, %v890
      %906 = vadd.xlane.f32.xlu0 %v905
      %v907 = vpop.xlane.xlu0 %906
      %v908 = vadd.f32 %v891, %v892
      %v909 = vadd.f32 %v908, %v893
      %v910 = vadd.f32 %v909, %v894
      %911 = vadd.xlane.f32.xlu0 %v910
      %v912 = vpop.xlane.xlu0 %911
      %v913 = vadd.f32 %v895, %v896
      %v914 = vadd.f32 %v913, %v897
      %v915 = vadd.f32 %v914, %v898
      %916 = vadd.xlane.f32.xlu0 %v915
      %v917 = vpop.xlane.xlu0 %916
      %v918 = vadd.f32 %v899, %v900
      %v919 = vadd.f32 %v918, %v901
      %v920 = vadd.f32 %v919, %v902
      %921 = vadd.xlane.f32.xlu0 %v920
      %v922 = vpop.xlane.xlu0 %921
      %v923 = vmul.f32 %v907, %v866
      %v924 = vmul.f32 %v912, %v866
      %v925 = vmul.f32 %v917, %v866
      %v926 = vmul.f32 %v922, %v866
      %v927 = vadd.f32 %v923, 1e-05
      %v928 = vadd.f32 %v924, 1e-05
      %v929 = vadd.f32 %v925, 1e-05
      %v930 = vadd.f32 %v926, 1e-05
      %v931 = vrsqrt.pop %v927
      %v932 = vmul.f32 %v931, %v927
      %v933 = vmul.f32 %v932, %v931
      %v934 = vmul.f32 0.5, %v933
      %v935 = vsub.f32 1.5, %v934
      %v936 = vmul.f32 %v931, %v935
      %vm937 = vweird.f32 %v927
      %vm938 = vweird.f32 %v931
      %vm939 = vmor %vm937, %vm938
      %v940 = vsel %vm939, %v931, %v936
      %v941 = vrsqrt.pop %v928
      %v942 = vmul.f32 %v941, %v928
      %v943 = vmul.f32 %v942, %v941
      %v944 = vmul.f32 0.5, %v943
      %v945 = vsub.f32 1.5, %v944
      %v946 = vmul.f32 %v941, %v945
      %vm947 = vweird.f32 %v928
      %vm948 = vweird.f32 %v941
      %vm949 = vmor %vm947, %vm948
      %v950 = vsel %vm949, %v941, %v946
      %v951 = vrsqrt.pop %v929
      %v952 = vmul.f32 %v951, %v929
      %v953 = vmul.f32 %v952, %v951
      %v954 = vmul.f32 0.5, %v953
      %v955 = vsub.f32 1.5, %v954
      %v956 = vmul.f32 %v951, %v955
      %vm957 = vweird.f32 %v929
      %vm958 = vweird.f32 %v951
      %vm959 = vmor %vm957, %vm958
      %v960 = vsel %vm959, %v951, %v956
      %v961 = vrsqrt.pop %v930
      %v962 = vmul.f32 %v961, %v930
      %v963 = vmul.f32 %v962, %v961
      %v964 = vmul.f32 0.5, %v963
      %v965 = vsub.f32 1.5, %v964
      %v966 = vmul.f32 %v961, %v965
      %vm967 = vweird.f32 %v930
      %vm968 = vweird.f32 %v961
      %vm969 = vmor %vm967, %vm968
      %v970 = vsel %vm969, %v961, %v966
      %v971 = vmul.f32 %v871, %v940
      %v972 = vmul.f32 %v872, %v940
      %v973 = vmul.f32 %v873, %v940
      %v974 = vmul.f32 %v874, %v940
      %v975 = vmul.f32 %v875, %v950
      %v976 = vmul.f32 %v876, %v950
      %v977 = vmul.f32 %v877, %v950
      %v978 = vmul.f32 %v878, %v950
      %v979 = vmul.f32 %v879, %v960
      %v980 = vmul.f32 %v880, %v960
      %v981 = vmul.f32 %v881, %v960
      %v982 = vmul.f32 %v882, %v960
      %v983 = vmul.f32 %v883, %v970
      %v984 = vmul.f32 %v884, %v970
      %v985 = vmul.f32 %v885, %v970
      %v986 = vmul.f32 %v886, %v970
      %v987 = vld [vmem:[%s284] sm:$0xff]
      %v988 = vld [vmem:[%s284 + $0x8] sm:$0xff]
      %v989 = vld [vmem:[%s284 + $0x10] sm:$0xff]
      %v990 = vld [vmem:[%s284 + $0x18] sm:$0xff]
      %992 = vset.pattern.permute.xlu0 0
      %993 = vperm.xlu0 %992, %v987
      %v994 = vpop.permute.xlu0 %993
      %997 = vset.pattern.permute.xlu0 0
      %998 = vperm.xlu0 %997, %v988
      %v999 = vpop.permute.xlu0 %998
      %1002 = vset.pattern.permute.xlu0 0
      %1003 = vperm.xlu0 %1002, %v989
      %v1004 = vpop.permute.xlu0 %1003
      %1007 = vset.pattern.permute.xlu0 0
      %1008 = vperm.xlu0 %1007, %v990
      %v1009 = vpop.permute.xlu0 %1008
      %v1011 = vmul.f32 %v971, %v994
      %v1012 = vmul.f32 %v972, %v994
      %v1013 = vmul.f32 %v973, %v994
      %v1014 = vmul.f32 %v974, %v994
      %v1015 = vmul.f32 %v975, %v999
      %v1016 = vmul.f32 %v976, %v999
      %v1017 = vmul.f32 %v977, %v999
      %v1018 = vmul.f32 %v978, %v999
      %v1019 = vmul.f32 %v979, %v1004
      %v1020 = vmul.f32 %v980, %v1004
      %v1021 = vmul.f32 %v981, %v1004
      %v1022 = vmul.f32 %v982, %v1004
      %v1023 = vmul.f32 %v983, %v1009
      %v1024 = vmul.f32 %v984, %v1009
      %v1025 = vmul.f32 %v985, %v1009
      %v1026 = vmul.f32 %v986, %v1009
      %v1027 = vld [vmem:[%s290] sm:$0xff]
      %v1028 = vld [vmem:[%s290 + $0x8] sm:$0xff]
      %v1029 = vld [vmem:[%s290 + $0x10] sm:$0xff]
      %v1030 = vld [vmem:[%s290 + $0x18] sm:$0xff]
      %1032 = vset.pattern.permute.xlu0 0
      %1033 = vperm.xlu0 %1032, %v1027
      %v1034 = vpop.permute.xlu0 %1033
      %1037 = vset.pattern.permute.xlu0 0
      %1038 = vperm.xlu0 %1037, %v1028
      %v1039 = vpop.permute.xlu0 %1038
      %1042 = vset.pattern.permute.xlu0 0
      %1043 = vperm.xlu0 %1042, %v1029
      %v1044 = vpop.permute.xlu0 %1043
      %1047 = vset.pattern.permute.xlu0 0
      %1048 = vperm.xlu0 %1047, %v1030
      %v1049 = vpop.permute.xlu0 %1048
      %v1051 = vadd.f32 %v1011, %v1034
      %v1052 = vadd.f32 %v1012, %v1034
      %v1053 = vadd.f32 %v1013, %v1034
      %v1054 = vadd.f32 %v1014, %v1034
      %v1055 = vadd.f32 %v1015, %v1039
      %v1056 = vadd.f32 %v1016, %v1039
      %v1057 = vadd.f32 %v1017, %v1039
      %v1058 = vadd.f32 %v1018, %v1039
      %v1059 = vadd.f32 %v1019, %v1044
      %v1060 = vadd.f32 %v1020, %v1044
      %v1061 = vadd.f32 %v1021, %v1044
      %v1062 = vadd.f32 %v1022, %v1044
      %v1063 = vadd.f32 %v1023, %v1049
      %v1064 = vadd.f32 %v1024, %v1049
      %v1065 = vadd.f32 %v1025, %v1049
      %v1066 = vadd.f32 %v1026, %v1049
      %v1067 = vmax.f32 %v1051, 0.0
      %v1068 = vmax.f32 %v1052, 0.0
      %v1069 = vmax.f32 %v1053, 0.0
      %v1070 = vmax.f32 %v1054, 0.0
      %v1071 = vmax.f32 %v1055, 0.0
      %v1072 = vmax.f32 %v1056, 0.0
      %v1073 = vmax.f32 %v1057, 0.0
      %v1074 = vmax.f32 %v1058, 0.0
      %v1075 = vmax.f32 %v1059, 0.0
      %v1076 = vmax.f32 %v1060, 0.0
      %v1077 = vmax.f32 %v1061, 0.0
      %v1078 = vmax.f32 %v1062, 0.0
      %v1079 = vmax.f32 %v1063, 0.0
      %v1080 = vmax.f32 %v1064, 0.0
      %v1081 = vmax.f32 %v1065, 0.0
      %v1082 = vmax.f32 %v1066, 0.0
      %1083 = vst [vmem:[%s297] sm:$0xff] %v1067
      %1084 = vst [vmem:[%s297 + $0x8] sm:$0xff] %v1068
      %1085 = vst [vmem:[%s297 + $0x10] sm:$0xff] %v1069
      %1086 = vst [vmem:[%s297 + $0x18] sm:$0xff] %v1070
      %1087 = vst [vmem:[%s297 + $0x20] sm:$0xff] %v1071
      %1088 = vst [vmem:[%s297 + $0x28] sm:$0xff] %v1072
      %1089 = vst [vmem:[%s297 + $0x30] sm:$0xff] %v1073
      %1090 = vst [vmem:[%s297 + $0x38] sm:$0xff] %v1074
      %1091 = vst [vmem:[%s297 + $0x40] sm:$0xff] %v1075
      %1092 = vst [vmem:[%s297 + $0x48] sm:$0xff] %v1076
      %1093 = vst [vmem:[%s297 + $0x50] sm:$0xff] %v1077
      %1094 = vst [vmem:[%s297 + $0x58] sm:$0xff] %v1078
      %1095 = vst [vmem:[%s297 + $0x60] sm:$0xff] %v1079
      %1096 = vst [vmem:[%s297 + $0x68] sm:$0xff] %v1080
      %1097 = vst [vmem:[%s297 + $0x70] sm:$0xff] %v1081
      %1098 = vst [vmem:[%s297 + $0x78] sm:$0xff] %v1082
      %s1099 = smul.u32 4, %s16
      %p1100 = scmp.lt.s32.totalorder %s1099, 7
      %s1101 = scalar_select %p1100, %s1099, 7
      %s1102 = smul.addr %s1101, 4
      %s1103 = smul.addr %s1102, 8
      %s1104 = scalar_lea.vmem %s5, %s1103
      // Predicated region
      $region41: #{forward.7} parent=39 // pred_check
        %p1105 = pneg %p159
      $region42: #{forward.7} parent=39 // pred_check_branch
        %1107 = sbr.rel (%p1105) target = $region44
      $region43: #{forward.7} parent=39 // pred_region
        %s1108 = smul.u32 4, %s16
      $region44: #{forward.7} parent=39 // pred_fallthru
        _
    $region40: #{forward.7} parent=5 // pred_fallthru
      _
    %p1109 = scmp.le.s32.totalorder 2, %s11
    // Predicated region
    $region45: #{forward.7} parent=5 // pred_check
      %p1110 = pneg %p1109
    $region46: #{forward.7} parent=5 // pred_check_branch
      %1112 = sbr.rel (%p1110) target = $region48
    $region47: #{forward.7} parent=5 // pred_region
      %s1113 = ssub.s32 %s11, 2
      // Predicated region
      $region49: #{forward.7} parent=47 // pred_check
        %p1114 = pneg %p165
      $region50: #{forward.7} parent=47 // pred_check_branch
        %1116 = sbr.rel (%p1114) target = $region52
      $region51: #{forward.7} parent=47 // pred_region
        %s1117 = smul.u32 4, %s17
        %p1118 = scmp.lt.s32.totalorder %s1117, 7
        %s1119 = scalar_select %p1118, %s1117, 7
        %s1120 = smul.addr %s1119, 4
        %s1121 = smul.addr %s1120, 8
        %s1122 = scalar_lea.vmem %s5, %s1121
      $region52: #{forward.7} parent=47 // pred_fallthru
        _
    $region48: #{forward.7} parent=5 // pred_fallthru
      _
  $region6: #{forward.7} parent=0 // loop_footer
    %s15 = sadd.s32 1, %s11
  $region7: #{forward.7} parent=0 // loop_footer_branch
    %10 = sbr.rel target = $region3
  $region8: #{forward.7} parent=0 // loop_exit
    _

// kernel: forward.8
$region0: #{forward.8}
  #allocation0 [shape = 'u32[]', space=smem, size = 0x4, offset = 0x4, fixed_abs, tag = 'smem constant byte address 0x4 - core index']
  #allocation1 [shape = 'u32[72,128]{1,0:T(1,128)}', space=vmem, size = 0x9000, scoped, tag = 'internal scratch']
  %s0 = inlined_call_operand.vmem [shape: f32[576,128], index: 0, kind: input, shape index: {}]
  %s1 = inlined_call_operand.vmem [shape: f32[64,576], index: 1, kind: input, shape index: {}]
  %s2 = inlined_call_operand.vmem [shape: f32[64,1], index: 2, kind: input, shape index: {}, may-alias: {2,4}]
  %s3 = inlined_call_operand.vmem [shape: f32[64,1], index: 3, kind: input, shape index: {}]
  %s4 = inlined_call_operand.vmem [shape: f32[64,1], index: 4, kind: input, shape index: {}, may-alias: {2,4}]
  %s5 = inlined_call_operand.vmem [shape: f32[64,128], index: 5, kind: output, shape index: {}]
  %s6 = sld [smem:[#allocation0]]
  $region53: #{forward.8} parent=0
    _
  %s8 = ssub.s32 1, %s6
  %s9 = scalar_select 0, %s8, %s6
  loop: start=0, step=1, limit=4
  $region2: #{forward.8} parent=0 // loop_pre_header
    _
  $region3: #{forward.8} parent=0 // loop_header
    %s11 = sphi 0, %s15
    %p12 = scmp.ge.s32.totalorder %s11, 4
    %s19 = sphi 0, %s19
    %s21 = sphi 0, %s19
    %s22 = sphi 0, %s21
    %s36 = sphi 0, %s22
    %s42 = sphi 0, %s44
    %s45 = sphi 0, %s42
    %s46 = sphi 0, %s45
    %s62 = sphi 0, %s46
    %s68 = sphi 0, %s70
    %s71 = sphi 0, %s68
    %s72 = sphi 0, %s71
    %s88 = sphi 0, %s72
    %s94 = sphi 0, %s96
    %s97 = sphi 0, %s94
    %s98 = sphi 0, %s97
    %s114 = sphi 0, %s98
    %s120 = sphi 0, %s122
    %s123 = sphi 0, %s120
    %s124 = sphi 0, %s123
    %s140 = sphi 0, %s124
    %s146 = sphi 0, %s148
    %s149 = sphi 0, %s146
    %s150 = sphi 0, %s149
    %s166 = sphi 0, %s150
  $region4: #{forward.8} parent=0 // loop_header_branch
    %14 = sbr.rel (%p12) target = $region8
  $region5: #{forward.8} parent=0 // loop_body
    %s16 = ssub.s32 %s11, 1
    %s17 = ssub.s32 %s11, 2
    %s18 = sadd.s32 %s11, 1
    %s20 = sadd.s32 %s19, 1
    %p23 = scmp.eq.s32.totalorder %s11, 1
    %p24 = scmp.ne.s32.totalorder %s19, %s21
    %p25 = scmp.eq.s32.totalorder %s11, 0
    %p26 = por %p24, %p25
    %p27 = scmp.ne.s32.totalorder %s19, %s21
    %p28 = scmp.eq.s32.totalorder %s16, 1
    %p29 = por %p27, %p28
    %p30 = scmp.ne.s32.totalorder %s21, %s22
    %p31 = scmp.eq.s32.totalorder %s16, 0
    %p32 = por %p30, %p31
    %p33 = scmp.ne.s32.totalorder %s21, %s22
    %p34 = scmp.eq.s32.totalorder %s17, 1
    %p35 = por %p33, %p34
    %p37 = scmp.ne.s32.totalorder %s22, %s36
    %p38 = scmp.eq.s32.totalorder %s17, 0
    %p39 = por %p37, %p38
    %s40 = ssub.s32 %s11, %s18
    %p41 = scmp.eq.s32.totalorder %s40, 0
    %s43 = sadd.s32 %s42, 1
    %s44 = scalar_select %p41, %s42, %s43
    %p47 = pneg %p41
    %p48 = scmp.eq.s32.totalorder %s11, 1
    %p49 = por %p47, %p48
    %p50 = scmp.ne.s32.totalorder %s42, %s45
    %p51 = scmp.eq.s32.totalorder %s11, 0
    %p52 = por %p50, %p51
    %p53 = scmp.ne.s32.totalorder %s42, %s45
    %p54 = scmp.eq.s32.totalorder %s16, 1
    %p55 = por %p53, %p54
    %p56 = scmp.ne.s32.totalorder %s45, %s46
    %p57 = scmp.eq.s32.totalorder %s16, 0
    %p58 = por %p56, %p57
    %p59 = scmp.ne.s32.totalorder %s45, %s46
    %p60 = scmp.eq.s32.totalorder %s17, 1
    %p61 = por %p59, %p60
    %p63 = scmp.ne.s32.totalorder %s46, %s62
    %p64 = scmp.eq.s32.totalorder %s17, 0
    %p65 = por %p63, %p64
    %s66 = ssub.s32 %s11, %s18
    %p67 = scmp.eq.s32.totalorder %s66, 0
    %s69 = sadd.s32 %s68, 1
    %s70 = scalar_select %p67, %s68, %s69
    %p73 = pneg %p67
    %p74 = scmp.eq.s32.totalorder %s11, 1
    %p75 = por %p73, %p74
    %p76 = scmp.ne.s32.totalorder %s68, %s71
    %p77 = scmp.eq.s32.totalorder %s11, 0
    %p78 = por %p76, %p77
    %p79 = scmp.ne.s32.totalorder %s68, %s71
    %p80 = scmp.eq.s32.totalorder %s16, 1
    %p81 = por %p79, %p80
    %p82 = scmp.ne.s32.totalorder %s71, %s72
    %p83 = scmp.eq.s32.totalorder %s16, 0
    %p84 = por %p82, %p83
    %p85 = scmp.ne.s32.totalorder %s71, %s72
    %p86 = scmp.eq.s32.totalorder %s17, 1
    %p87 = por %p85, %p86
    %p89 = scmp.ne.s32.totalorder %s72, %s88
    %p90 = scmp.eq.s32.totalorder %s17, 0
    %p91 = por %p89, %p90
    %s92 = ssub.s32 %s11, %s18
    %p93 = scmp.eq.s32.totalorder %s92, 0
    %s95 = sadd.s32 %s94, 1
    %s96 = scalar_select %p93, %s94, %s95
    %p99 = pneg %p93
    %p100 = scmp.eq.s32.totalorder %s11, 1
    %p101 = por %p99, %p100
    %p102 = scmp.ne.s32.totalorder %s94, %s97
    %p103 = scmp.eq.s32.totalorder %s11, 0
    %p104 = por %p102, %p103
    %p105 = scmp.ne.s32.totalorder %s94, %s97
    %p106 = scmp.eq.s32.totalorder %s16, 1
    %p107 = por %p105, %p106
    %p108 = scmp.ne.s32.totalorder %s97, %s98
    %p109 = scmp.eq.s32.totalorder %s16, 0
    %p110 = por %p108, %p109
    %p111 = scmp.ne.s32.totalorder %s97, %s98
    %p112 = scmp.eq.s32.totalorder %s17, 1
    %p113 = por %p111, %p112
    %p115 = scmp.ne.s32.totalorder %s98, %s114
    %p116 = scmp.eq.s32.totalorder %s17, 0
    %p117 = por %p115, %p116
    %s118 = ssub.s32 %s11, %s18
    %p119 = scmp.eq.s32.totalorder %s118, 0
    %s121 = sadd.s32 %s120, 1
    %s122 = scalar_select %p119, %s120, %s121
    %p125 = pneg %p119
    %p126 = scmp.eq.s32.totalorder %s11, 1
    %p127 = por %p125, %p126
    %p128 = scmp.ne.s32.totalorder %s120, %s123
    %p129 = scmp.eq.s32.totalorder %s11, 0
    %p130 = por %p128, %p129
    %p131 = scmp.ne.s32.totalorder %s120, %s123
    %p132 = scmp.eq.s32.totalorder %s16, 1
    %p133 = por %p131, %p132
    %p134 = scmp.ne.s32.totalorder %s123, %s124
    %p135 = scmp.eq.s32.totalorder %s16, 0
    %p136 = por %p134, %p135
    %p137 = scmp.ne.s32.totalorder %s123, %s124
    %p138 = scmp.eq.s32.totalorder %s17, 1
    %p139 = por %p137, %p138
    %p141 = scmp.ne.s32.totalorder %s124, %s140
    %p142 = scmp.eq.s32.totalorder %s17, 0
    %p143 = por %p141, %p142
    %s144 = ssub.s32 %s11, %s18
    %p145 = scmp.eq.s32.totalorder %s144, 0
    %s147 = sadd.s32 %s146, 1
    %s148 = scalar_select %p145, %s146, %s147
    %p151 = pneg %p145
    %p152 = scmp.eq.s32.totalorder %s11, 1
    %p153 = por %p151, %p152
    %p154 = scmp.ne.s32.totalorder %s146, %s149
    %p155 = scmp.eq.s32.totalorder %s11, 0
    %p156 = por %p154, %p155
    %p157 = scmp.ne.s32.totalorder %s146, %s149
    %p158 = scmp.eq.s32.totalorder %s16, 1
    %p159 = por %p157, %p158
    %p160 = scmp.ne.s32.totalorder %s149, %s150
    %p161 = scmp.eq.s32.totalorder %s16, 0
    %p162 = por %p160, %p161
    %p163 = scmp.ne.s32.totalorder %s149, %s150
    %p164 = scmp.eq.s32.totalorder %s17, 1
    %p165 = por %p163, %p164
    %p167 = scmp.ne.s32.totalorder %s150, %s166
    %p168 = scmp.eq.s32.totalorder %s17, 0
    %p169 = por %p167, %p168
    %p170 = scmp.le.s32.totalorder 1, %s11
    %p171 = scmp.lt.s32.totalorder %s11, 3
    %p172 = pnand %p170, %p171
    %p173 = pneg %p172
    // Predicated region
    $region9: #{forward.8} parent=5 // pred_check
      _
    $region10: #{forward.8} parent=5 // pred_check_branch
      %175 = sbr.rel (%p172) target = $region12
    $region11: #{forward.8} parent=5 // pred_region
      %s176 = ssub.s32 %s11, 1
      // Predicated region
      $region13: #{forward.8} parent=11 // pred_check
        %p177 = pneg %p32
      $region14: #{forward.8} parent=11 // pred_check_branch
        %179 = sbr.rel (%p177) target = $region16
      $region15: #{forward.8} parent=11 // pred_region
        _
      $region16: #{forward.8} parent=11 // pred_fallthru
        _
    $region12: #{forward.8} parent=5 // pred_fallthru
      _
    %p180 = scmp.lt.s32.totalorder %s11, 2
    // Predicated region
    $region17: #{forward.8} parent=5 // pred_check
      %p181 = pneg %p180
    $region18: #{forward.8} parent=5 // pred_check_branch
      %183 = sbr.rel (%p181) target = $region20
    $region19: #{forward.8} parent=5 // pred_region
      // Predicated region
      $region21: #{forward.8} parent=19 // pred_check
        %p184 = pneg %p52
      $region22: #{forward.8} parent=19 // pred_check_branch
        %186 = sbr.rel (%p184) target = $region24
      $region23: #{forward.8} parent=19 // pred_region
        %s187 = smul.u32 4, %s11
        %p188 = scmp.lt.s32.totalorder %s187, 7
        %s189 = scalar_select %p188, %s187, 7
        %s190 = smul.addr %s189, 5
        %s191 = smul.addr %s190, 8
        %s192 = scalar_lea.vmem %s1, %s191
        %s193 = smul.u32 4, %s11
      $region24: #{forward.8} parent=19 // pred_fallthru
        _
      // Predicated region
      $region25: #{forward.8} parent=19 // pred_check
        %p194 = pneg %p78
      $region26: #{forward.8} parent=19 // pred_check_branch
        %196 = sbr.rel (%p194) target = $region28
      $region27: #{forward.8} parent=19 // pred_region
        %s197 = smul.u32 4, %s11
        %p198 = scmp.lt.s32.totalorder %s197, 7
        %s199 = scalar_select %p198, %s197, 7
        %s200 = smul.addr %s199, 8
        %s201 = scalar_lea.vmem %s2, %s200
        %s202 = smul.u32 4, %s11
      $region28: #{forward.8} parent=19 // pred_fallthru
        _
      // Predicated region
      $region29: #{forward.8} parent=19 // pred_check
        %p203 = pneg %p104
      $region30: #{forward.8} parent=19 // pred_check_branch
        %205 = sbr.rel (%p203) target = $region32
      $region31: #{forward.8} parent=19 // pred_region
        %s206 = smul.u32 4, %s11
        %p207 = scmp.lt.s32.totalorder %s206, 7
        %s208 = scalar_select %p207, %s206, 7
        %s209 = smul.addr %s208, 8
        %s210 = scalar_lea.vmem %s3, %s209
        %s211 = smul.u32 4, %s11
      $region32: #{forward.8} parent=19 // pred_fallthru
        _
      // Predicated region
      $region33: #{forward.8} parent=19 // pred_check
        %p212 = pneg %p130
      $region34: #{forward.8} parent=19 // pred_check_branch
        %214 = sbr.rel (%p212) target = $region36
      $region35: #{forward.8} parent=19 // pred_region
        %s215 = smul.u32 4, %s11
        %p216 = scmp.lt.s32.totalorder %s215, 7
        %s217 = scalar_select %p216, %s215, 7
        %s218 = smul.addr %s217, 8
        %s219 = scalar_lea.vmem %s4, %s218
        %s220 = smul.u32 4, %s11
      $region36: #{forward.8} parent=19 // pred_fallthru
        _
    $region20: #{forward.8} parent=5 // pred_fallthru
      _
    %p221 = scmp.le.s32.totalorder 1, %s11
    %p222 = scmp.lt.s32.totalorder %s11, 3
    %p223 = pnand %p221, %p222
    %p224 = pneg %p223
    // Predicated region
    $region37: #{forward.8} parent=5 // pred_check
      _
    $region38: #{forward.8} parent=5 // pred_check_branch
      %226 = sbr.rel (%p223) target = $region40
    $region39: #{forward.8} parent=5 // pred_region
      %s227 = ssub.s32 %s11, 1
      %p228 = pneg %p32
      %p229 = pneg %p29
      %s230 = smul.u32 4, %s16
      %p231 = scmp.lt.s32.totalorder %s230, 7
      %s232 = scalar_select %p231, %s230, 7
      %s233 = smul.addr %s232, 5
      %s234 = smul.addr %s233, 8
      %s235 = scalar_lea.vmem %s1, %s234
      %p236 = pneg %p58
      %p237 = pneg %p55
      %s238 = smul.u32 4, %s16
      %p239 = scmp.lt.s32.totalorder %s238, 7
      %s240 = scalar_select %p239, %s238, 7
      %s241 = smul.addr %s240, 8
      %s242 = scalar_lea.vmem %s2, %s241
      %p243 = pneg %p84
      %p244 = pneg %p81
      %s245 = smul.u32 4, %s16
      %p246 = scmp.lt.s32.totalorder %s245, 7
      %s247 = scalar_select %p246, %s245, 7
      %s248 = smul.addr %s247, 8
      %s249 = scalar_lea.vmem %s3, %s248
      %p250 = pneg %p110
      %p251 = pneg %p107
      %s252 = smul.u32 4, %s16
      %p253 = scmp.lt.s32.totalorder %s252, 7
      %s254 = scalar_select %p253, %s252, 7
      %s255 = smul.addr %s254, 8
      %s256 = scalar_lea.vmem %s4, %s255
      %p257 = pneg %p136
      %p258 = pneg %p133
      %p259 = pneg %p162
      %p260 = pneg %p159
      %s261 = smul.u32 4, %s16
      %p262 = scmp.lt.s32.totalorder %s261, 7
      %s263 = scalar_select %p262, %s261, 7
      %s264 = smul.addr %s263, 8
      %s265 = scalar_lea.vmem %s5, %s264
      %s266 = smul.u32 4, %s16
      %p267 = scmp.lt.s32.totalorder %s266, 7
      %s268 = scalar_select %p267, %s266, 7
      %s269 = smul.addr %s268, 5
      %s270 = smul.addr %s269, 8
      %s271 = scalar_lea.vmem %s1, %s270
      %s272 = smul.u32 4, %s16
      %s273 = smul.u32 4, %s16
      %p274 = scmp.lt.s32.totalorder %s273, 7
      %s275 = scalar_select %p274, %s273, 7
      %s276 = smul.addr %s275, 8
      %s277 = scalar_lea.vmem %s2, %s276
      %s278 = smul.u32 4, %s16
      %s279 = smul.u32 4, %s16
      %p280 = scmp.lt.s32.totalorder %s279, 7
      %s281 = scalar_select %p280, %s279, 7
      %s282 = smul.addr %s281, 8
      %s283 = scalar_lea.vmem %s3, %s282
      %s284 = smul.u32 4, %s16
      %s285 = smul.u32 4, %s16
      %p286 = scmp.lt.s32.totalorder %s285, 7
      %s287 = scalar_select %p286, %s285, 7
      %s288 = smul.addr %s287, 8
      %s289 = scalar_lea.vmem %s4, %s288
      %s290 = smul.u32 4, %s16
      %s291 = smul.u32 4, %s16
      %p292 = scmp.lt.s32.totalorder %s291, 7
      %s293 = scalar_select %p292, %s291, 7
      %s294 = smul.addr %s293, 8
      %s295 = scalar_lea.vmem %s5, %s294
      %s296 = smul.u32 4, %s16
      %v297 = vld [vmem:[%s271] sm:$0xff]
      %v298 = vld [vmem:[%s271 + $0x8] sm:$0xff]
      %v299 = vld [vmem:[%s271 + $0x10] sm:$0xff]
      %v300 = vld [vmem:[%s271 + $0x18] sm:$0xff]
      %v301 = vld [vmem:[%s271 + $0x20] sm:$0xff]
      %v302 = vld [vmem:[%s271 + $0x28] sm:$0xff]
      %v303 = vld [vmem:[%s271 + $0x30] sm:$0xff]
      %v304 = vld [vmem:[%s271 + $0x38] sm:$0xff]
      %v305 = vld [vmem:[%s271 + $0x40] sm:$0xff]
      %v306 = vld [vmem:[%s271 + $0x48] sm:$0xff]
      %v307 = vld [vmem:[%s271 + $0x50] sm:$0xff]
      %v308 = vld [vmem:[%s271 + $0x58] sm:$0xff]
      %v309 = vld [vmem:[%s271 + $0x60] sm:$0xff]
      %v310 = vld [vmem:[%s271 + $0x68] sm:$0xff]
      %v311 = vld [vmem:[%s271 + $0x70] sm:$0xff]
      %v312 = vld [vmem:[%s271 + $0x78] sm:$0xff]
      %v313 = vld [vmem:[%s271 + $0x80] sm:$0xff]
      %v314 = vld [vmem:[%s271 + $0x88] sm:$0xff]
      %v315 = vld [vmem:[%s271 + $0x90] sm:$0xff]
      %v316 = vld [vmem:[%s271 + $0x98] sm:$0xff]
      %v317 = vld [vmem:[%s0] sm:$0xff]
      %v318 = vld [vmem:[%s0 + $0x8] sm:$0xff]
      %v319 = vld [vmem:[%s0 + $0x10] sm:$0xff]
      %v320 = vld [vmem:[%s0 + $0x18] sm:$0xff]
      %v321 = vld [vmem:[%s0 + $0x20] sm:$0xff]
      %v322 = vld [vmem:[%s0 + $0x28] sm:$0xff]
      %v323 = vld [vmem:[%s0 + $0x30] sm:$0xff]
      %v324 = vld [vmem:[%s0 + $0x38] sm:$0xff]
      %v325 = vld [vmem:[%s0 + $0x40] sm:$0xff]
      %v326 = vld [vmem:[%s0 + $0x48] sm:$0xff]
      %v327 = vld [vmem:[%s0 + $0x50] sm:$0xff]
      %v328 = vld [vmem:[%s0 + $0x58] sm:$0xff]
      %v329 = vld [vmem:[%s0 + $0x60] sm:$0xff]
      %v330 = vld [vmem:[%s0 + $0x68] sm:$0xff]
      %v331 = vld [vmem:[%s0 + $0x70] sm:$0xff]
      %v332 = vld [vmem:[%s0 + $0x78] sm:$0xff]
      %v333 = vld [vmem:[%s0 + $0x80] sm:$0xff]
      %v334 = vld [vmem:[%s0 + $0x88] sm:$0xff]
      %v335 = vld [vmem:[%s0 + $0x90] sm:$0xff]
      %v336 = vld [vmem:[%s0 + $0x98] sm:$0xff]
      %v337 = vld [vmem:[%s0 + $0xa0] sm:$0xff]
      %v338 = vld [vmem:[%s0 + $0xa8] sm:$0xff]
      %v339 = vld [vmem:[%s0 + $0xb0] sm:$0xff]
      %v340 = vld [vmem:[%s0 + $0xb8] sm:$0xff]
      %v341 = vld [vmem:[%s0 + $0xc0] sm:$0xff]
      %v342 = vld [vmem:[%s0 + $0xc8] sm:$0xff]
      %v343 = vld [vmem:[%s0 + $0xd0] sm:$0xff]
      %v344 = vld [vmem:[%s0 + $0xd8] sm:$0xff]
      %v345 = vld [vmem:[%s0 + $0xe0] sm:$0xff]
      %v346 = vld [vmem:[%s0 + $0xe8] sm:$0xff]
      %v347 = vld [vmem:[%s0 + $0xf0] sm:$0xff]
      %v348 = vld [vmem:[%s0 + $0xf8] sm:$0xff]
      %v349 = vld [vmem:[%s0 + $0x100] sm:$0xff]
      %v350 = vld [vmem:[%s0 + $0x108] sm:$0xff]
      %v351 = vld [vmem:[%s0 + $0x110] sm:$0xff]
      %v352 = vld [vmem:[%s0 + $0x118] sm:$0xff]
      %v353 = vld [vmem:[%s0 + $0x120] sm:$0xff]
      %v354 = vld [vmem:[%s0 + $0x128] sm:$0xff]
      %v355 = vld [vmem:[%s0 + $0x130] sm:$0xff]
      %v356 = vld [vmem:[%s0 + $0x138] sm:$0xff]
      %v357 = vld [vmem:[%s0 + $0x140] sm:$0xff]
      %v358 = vld [vmem:[%s0 + $0x148] sm:$0xff]
      %v359 = vld [vmem:[%s0 + $0x150] sm:$0xff]
      %v360 = vld [vmem:[%s0 + $0x158] sm:$0xff]
      %v361 = vld [vmem:[%s0 + $0x160] sm:$0xff]
      %v362 = vld [vmem:[%s0 + $0x168] sm:$0xff]
      %v363 = vld [vmem:[%s0 + $0x170] sm:$0xff]
      %v364 = vld [vmem:[%s0 + $0x178] sm:$0xff]
      %v365 = vld [vmem:[%s0 + $0x180] sm:$0xff]
      %v366 = vld [vmem:[%s0 + $0x188] sm:$0xff]
      %v367 = vld [vmem:[%s0 + $0x190] sm:$0xff]
      %v368 = vld [vmem:[%s0 + $0x198] sm:$0xff]
      %v369 = vld [vmem:[%s0 + $0x1a0] sm:$0xff]
      %v370 = vld [vmem:[%s0 + $0x1a8] sm:$0xff]
      %v371 = vld [vmem:[%s0 + $0x1b0] sm:$0xff]
      %v372 = vld [vmem:[%s0 + $0x1b8] sm:$0xff]
      %v373 = vld [vmem:[%s0 + $0x1c0] sm:$0xff]
      %v374 = vld [vmem:[%s0 + $0x1c8] sm:$0xff]
      %v375 = vld [vmem:[%s0 + $0x1d0] sm:$0xff]
      %v376 = vld [vmem:[%s0 + $0x1d8] sm:$0xff]
      %v377 = vld [vmem:[%s0 + $0x1e0] sm:$0xff]
      %v378 = vld [vmem:[%s0 + $0x1e8] sm:$0xff]
      %v379 = vld [vmem:[%s0 + $0x1f0] sm:$0xff]
      %v380 = vld [vmem:[%s0 + $0x1f8] sm:$0xff]
      %v381 = vld [vmem:[%s0 + $0x200] sm:$0xff]
      %v382 = vld [vmem:[%s0 + $0x208] sm:$0xff]
      %v383 = vld [vmem:[%s0 + $0x210] sm:$0xff]
      %v384 = vld [vmem:[%s0 + $0x218] sm:$0xff]
      %v385 = vld [vmem:[%s0 + $0x220] sm:$0xff]
      %v386 = vld [vmem:[%s0 + $0x228] sm:$0xff]
      %v387 = vld [vmem:[%s0 + $0x230] sm:$0xff]
      %v388 = vld [vmem:[%s0 + $0x238] sm:$0xff]
      %v389 = vld [vmem:[%s277] sm:$0xff]
      %v390 = vld [vmem:[%s277 + $0x8] sm:$0xff]
      %v391 = vld [vmem:[%s277 + $0x10] sm:$0xff]
      %v392 = vld [vmem:[%s277 + $0x18] sm:$0xff]
      %394 = vset.pattern.permute.xlu0 0
      %395 = vperm.xlu0 %394, %v389
      %v396 = vpop.permute.xlu0 %395
      %399 = vset.pattern.permute.xlu0 0
      %400 = vperm.xlu0 %399, %v390
      %v401 = vpop.permute.xlu0 %400
      %404 = vset.pattern.permute.xlu0 0
      %405 = vperm.xlu0 %404, %v391
      %v406 = vpop.permute.xlu0 %405
      %409 = vset.pattern.permute.xlu0 0
      %410 = vperm.xlu0 %409, %v392
      %v411 = vpop.permute.xlu0 %410
      %vm413 = vcmask 523264
      %v415 = vsel %vm413, %v301, 0
      %v418 = vsel %vm413, %v306, 0
      %v421 = vsel %vm413, %v311, 0
      %v424 = vsel %vm413, %v316, 0
      %426 = vmatpush.msra.mxu0 %v332
      %427 = vmatpush.msra.mxu0 %v331
      %428 = vmatpush.msra.mxu0 %v330
      %429 = vmatpush.msra.mxu0 %v329
      %430 = vmatpush.msra.mxu0 %v328
      %431 = vmatpush.msra.mxu0 %v327
      %432 = vmatpush.msra.mxu0 %v326
      %433 = vmatpush.msra.mxu0 %v325
      %434 = vmatpush.msra.mxu0 %v324
      %435 = vmatpush.msra.mxu0 %v323
      %436 = vmatpush.msra.mxu0 %v322
      %437 = vmatpush.msra.mxu0 %v321
      %438 = vmatpush.msra.mxu0 %v320
      %439 = vmatpush.msra.mxu0 %v319
      %440 = vmatpush.msra.mxu0 %v318
      %441 = vmatpush.msra.mxu0 %v317
      %442 = vmatmul.f32.gmra.mxu0 %v297
      %v443 = vpop.f32.mrf.mxu0
      %v444 = vadd.f32 %v396, %v443
      %445 = vmatmul.f32.gmra.mxu0 %v302
      %v446 = vpop.f32.mrf.mxu0
      %v447 = vadd.f32 %v401, %v446
      %448 = vmatmul.f32.gmra.mxu0 %v307
      %v449 = vpop.f32.mrf.mxu0
      %v450 = vadd.f32 %v406, %v449
      %451 = vmatmul.f32.gmra.mxu0 %v312
      %v452 = vpop.f32.mrf.mxu0
      %v453 = vadd.f32 %v411, %v452
      %454 = vdwg.mxu0
      %455 = vmatpush.msra.mxu0 %v348
      %456 = vmatpush.msra.mxu0 %v347
      %457 = vmatpush.msra.mxu0 %v346
      %458 = vmatpush.msra.mxu0 %v345
      %459 = vmatpush.msra.mxu0 %v344
      %460 = vmatpush.msra.mxu0 %v343
      %461 = vmatpush.msra.mxu0 %v342
      %462 = vmatpush.msra.mxu0 %v341
      %463 = vmatpush.msra.mxu0 %v340
      %464 = vmatpush.msra.mxu0 %v339
      %465 = vmatpush.msra.mxu0 %v338
      %466 = vmatpush.msra.mxu0 %v337
      %467 = vmatpush.msra.mxu0 %v336
      %468 = vmatpush.msra.mxu0 %v335
      %469 = vmatpush.msra.mxu0 %v334
      %470 = vmatpush.msra.mxu0 %v333
      %471 = vmatmul.f32.gmra.mxu0 %v298
      %v472 = vpop.f32.mrf.mxu0
      %v473 = vadd.f32 %v444, %v472
      %474 = vmatmul.f32.gmra.mxu0 %v303
      %v475 = vpop.f32.mrf.mxu0
      %v476 = vadd.f32 %v447, %v475
      %477 = vmatmul.f32.gmra.mxu0 %v308
      %v478 = vpop.f32.mrf.mxu0
      %v479 = vadd.f32 %v450, %v478
      %480 = vmatmul.f32.gmra.mxu0 %v313
      %v481 = vpop.f32.mrf.mxu0
      %v482 = vadd.f32 %v453, %v481
      %483 = vdwg.mxu0
      %484 = vmatpush.msra.mxu0 %v364
      %485 = vmatpush.msra.mxu0 %v363
      %486 = vmatpush.msra.mxu0 %v362
      %487 = vmatpush.msra.mxu0 %v361
      %488 = vmatpush.msra.mxu0 %v360
      %489 = vmatpush.msra.mxu0 %v359
      %490 = vmatpush.msra.mxu0 %v358
      %491 = vmatpush.msra.mxu0 %v357
      %492 = vmatpush.msra.mxu0 %v356
      %493 = vmatpush.msra.mxu0 %v355
      %494 = vmatpush.msra.mxu0 %v354
      %495 = vmatpush.msra.mxu0 %v353
      %496 = vmatpush.msra.mxu0 %v352
      %497 = vmatpush.msra.mxu0 %v351
      %498 = vmatpush.msra.mxu0 %v350
      %499 = vmatpush.msra.mxu0 %v349
      %500 = vmatmul.f32.gmra.mxu0 %v299
      %v501 = vpop.f32.mrf.mxu0
      %v502 = vadd.f32 %v473, %v501
      %503 = vmatmul.f32.gmra.mxu0 %v304
      %v504 = vpop.f32.mrf.mxu0
      %v505 = vadd.f32 %v476, %v504
      %506 = vmatmul.f32.gmra.mxu0 %v309
      %v507 = vpop.f32.mrf.mxu0
      %v508 = vadd.f32 %v479, %v507
      %509 = vmatmul.f32.gmra.mxu0 %v314
      %v510 = vpop.f32.mrf.mxu0
      %v511 = vadd.f32 %v482, %v510
      %512 = vdwg.mxu0
      %513 = vmatpush.msra.mxu0 %v380
      %514 = vmatpush.msra.mxu0 %v379
      %515 = vmatpush.msra.mxu0 %v378
      %516 = vmatpush.msra.mxu0 %v377
      %517 = vmatpush.msra.mxu0 %v376
      %518 = vmatpush.msra.mxu0 %v375
      %519 = vmatpush.msra.mxu0 %v374
      %520 = vmatpush.msra.mxu0 %v373
      %521 = vmatpush.msra.mxu0 %v372
      %522 = vmatpush.msra.mxu0 %v371
      %523 = vmatpush.msra.mxu0 %v370
      %524 = vmatpush.msra.mxu0 %v369
      %525 = vmatpush.msra.mxu0 %v368
      %526 = vmatpush.msra.mxu0 %v367
      %527 = vmatpush.msra.mxu0 %v366
      %528 = vmatpush.msra.mxu0 %v365
      %529 = vmatmul.f32.gmra.mxu0 %v300
      %v530 = vpop.f32.mrf.mxu0
      %v531 = vadd.f32 %v502, %v530
      %532 = vmatmul.f32.gmra.mxu0 %v305
      %v533 = vpop.f32.mrf.mxu0
      %v534 = vadd.f32 %v505, %v533
      %535 = vmatmul.f32.gmra.mxu0 %v310
      %v536 = vpop.f32.mrf.mxu0
      %v537 = vadd.f32 %v508, %v536
      %538 = vmatmul.f32.gmra.mxu0 %v315
      %v539 = vpop.f32.mrf.mxu0
      %v540 = vadd.f32 %v511, %v539
      %541 = vdwg.mxu0
      %542 = vmatpush.msra.mxu0 0.0
      %543 = vmatpush.msra.mxu0 0.0
      %544 = vmatpush.msra.mxu0 0.0
      %545 = vmatpush.msra.mxu0 0.0
      %546 = vmatpush.msra.mxu0 0.0
      %547 = vmatpush.msra.mxu0 0.0
      %548 = vmatpush.msra.mxu0 0.0
      %549 = vmatpush.msra.mxu0 0.0
      %550 = vmatpush.msra.mxu0 %v388
      %551 = vmatpush.msra.mxu0 %v387
      %552 = vmatpush.msra.mxu0 %v386
      %553 = vmatpush.msra.mxu0 %v385
      %554 = vmatpush.msra.mxu0 %v384
      %555 = vmatpush.msra.mxu0 %v383
      %556 = vmatpush.msra.mxu0 %v382
      %557 = vmatpush.msra.mxu0 %v381
      %558 = vmatmul.f32.gmra.mxu0 %v415
      %v559 = vpop.f32.mrf.mxu0
      %v560 = vadd.f32 %v531, %v559
      %561 = vmatmul.f32.gmra.mxu0 %v418
      %v562 = vpop.f32.mrf.mxu0
      %v563 = vadd.f32 %v534, %v562
      %564 = vmatmul.f32.gmra.mxu0 %v421
      %v565 = vpop.f32.mrf.mxu0
      %v566 = vadd.f32 %v537, %v565
      %567 = vmatmul.f32.gmra.mxu0 %v424
      %v568 = vpop.f32.mrf.mxu0
      %v569 = vadd.f32 %v540, %v568
      %570 = vdwg.mxu0
      %571 = vadd.xlane.f32.xlu0 %v560
      %v572 = vpop.xlane.xlu0 %571
      %573 = vadd.xlane.f32.xlu0 %v563
      %v574 = vpop.xlane.xlu0 %573
      %575 = vadd.xlane.f32.xlu0 %v566
      %v576 = vpop.xlane.xlu0 %575
      %577 = vadd.xlane.f32.xlu0 %v569
      %v578 = vpop.xlane.xlu0 %577
      %v579 = vrcp.pop 128.0
      %v580 = vmul.f32 128.0, %v579
      %v581 = vsub.f32 1.0, %v580
      %v582 = vmul.f32 %v579, %v581
      %v583 = vadd.f32 %v579, %v582
      %vm584 = vweird.f32 %v579
      %v585 = vsel %vm584, %v579, %v583
      %v586 = vmul.f32 %v572, %v585
      %v587 = vmul.f32 %v574, %v585
      %v588 = vmul.f32 %v576, %v585
      %v589 = vmul.f32 %v578, %v585
      %v590 = vsub.f32 %v560, %v586
      %v591 = vsub.f32 %v563, %v587
      %v592 = vsub.f32 %v566, %v588
      %v593 = vsub.f32 %v569, %v589
      %v594 = vmul.f32 %v590, %v590
      %v595 = vmul.f32 %v591, %v591
      %v596 = vmul.f32 %v592, %v592
      %v597 = vmul.f32 %v593, %v593
      %598 = vadd.xlane.f32.xlu0 %v594
      %v599 = vpop.xlane.xlu0 %598
      %600 = vadd.xlane.f32.xlu0 %v595
      %v601 = vpop.xlane.xlu0 %600
      %602 = vadd.xlane.f32.xlu0 %v596
      %v603 = vpop.xlane.xlu0 %602
      %604 = vadd.xlane.f32.xlu0 %v597
      %v605 = vpop.xlane.xlu0 %604
      %v606 = vmul.f32 %v599, %v585
      %v607 = vmul.f32 %v601, %v585
      %v608 = vmul.f32 %v603, %v585
      %v609 = vmul.f32 %v605, %v585
      %v610 = vadd.f32 %v606, 1e-05
      %v611 = vadd.f32 %v607, 1e-05
      %v612 = vadd.f32 %v608, 1e-05
      %v613 = vadd.f32 %v609, 1e-05
      %v614 = vrsqrt.pop %v610
      %v615 = vmul.f32 %v614, %v610
      %v616 = vmul.f32 %v615, %v614
      %v617 = vmul.f32 0.5, %v616
      %v618 = vsub.f32 1.5, %v617
      %v619 = vmul.f32 %v614, %v618
      %vm620 = vweird.f32 %v610
      %vm621 = vweird.f32 %v614
      %vm622 = vmor %vm620, %vm621
      %v623 = vsel %vm622, %v614, %v619
      %v624 = vrsqrt.pop %v611
      %v625 = vmul.f32 %v624, %v611
      %v626 = vmul.f32 %v625, %v624
      %v627 = vmul.f32 0.5, %v626
      %v628 = vsub.f32 1.5, %v627
      %v629 = vmul.f32 %v624, %v628
      %vm630 = vweird.f32 %v611
      %vm631 = vweird.f32 %v624
      %vm632 = vmor %vm630, %vm631
      %v633 = vsel %vm632, %v624, %v629
      %v634 = vrsqrt.pop %v612
      %v635 = vmul.f32 %v634, %v612
      %v636 = vmul.f32 %v635, %v634
      %v637 = vmul.f32 0.5, %v636
      %v638 = vsub.f32 1.5, %v637
      %v639 = vmul.f32 %v634, %v638
      %vm640 = vweird.f32 %v612
      %vm641 = vweird.f32 %v634
      %vm642 = vmor %vm640, %vm641
      %v643 = vsel %vm642, %v634, %v639
      %v644 = vrsqrt.pop %v613
      %v645 = vmul.f32 %v644, %v613
      %v646 = vmul.f32 %v645, %v644
      %v647 = vmul.f32 0.5, %v646
      %v648 = vsub.f32 1.5, %v647
      %v649 = vmul.f32 %v644, %v648
      %vm650 = vweird.f32 %v613
      %vm651 = vweird.f32 %v644
      %vm652 = vmor %vm650, %vm651
      %v653 = vsel %vm652, %v644, %v649
      %v654 = vmul.f32 %v590, %v623
      %v655 = vmul.f32 %v591, %v633
      %v656 = vmul.f32 %v592, %v643
      %v657 = vmul.f32 %v593, %v653
      %v658 = vld [vmem:[%s283] sm:$0xff]
      %v659 = vld [vmem:[%s283 + $0x8] sm:$0xff]
      %v660 = vld [vmem:[%s283 + $0x10] sm:$0xff]
      %v661 = vld [vmem:[%s283 + $0x18] sm:$0xff]
      %663 = vset.pattern.permute.xlu0 0
      %664 = vperm.xlu0 %663, %v658
      %v665 = vpop.permute.xlu0 %664
      %668 = vset.pattern.permute.xlu0 0
      %669 = vperm.xlu0 %668, %v659
      %v670 = vpop.permute.xlu0 %669
      %673 = vset.pattern.permute.xlu0 0
      %674 = vperm.xlu0 %673, %v660
      %v675 = vpop.permute.xlu0 %674
      %678 = vset.pattern.permute.xlu0 0
      %679 = vperm.xlu0 %678, %v661
      %v680 = vpop.permute.xlu0 %679
      %v682 = vmul.f32 %v654, %v665
      %v683 = vmul.f32 %v655, %v670
      %v684 = vmul.f32 %v656, %v675
      %v685 = vmul.f32 %v657, %v680
      %v686 = vld [vmem:[%s289] sm:$0xff]
      %v687 = vld [vmem:[%s289 + $0x8] sm:$0xff]
      %v688 = vld [vmem:[%s289 + $0x10] sm:$0xff]
      %v689 = vld [vmem:[%s289 + $0x18] sm:$0xff]
      %691 = vset.pattern.permute.xlu0 0
      %692 = vperm.xlu0 %691, %v686
      %v693 = vpop.permute.xlu0 %692
      %696 = vset.pattern.permute.xlu0 0
      %697 = vperm.xlu0 %696, %v687
      %v698 = vpop.permute.xlu0 %697
      %701 = vset.pattern.permute.xlu0 0
      %702 = vperm.xlu0 %701, %v688
      %v703 = vpop.permute.xlu0 %702
      %706 = vset.pattern.permute.xlu0 0
      %707 = vperm.xlu0 %706, %v689
      %v708 = vpop.permute.xlu0 %707
      %v710 = vadd.f32 %v682, %v693
      %v711 = vadd.f32 %v683, %v698
      %v712 = vadd.f32 %v684, %v703
      %v713 = vadd.f32 %v685, %v708
      %v714 = vmax.f32 %v710, 0.0
      %v715 = vmax.f32 %v711, 0.0
      %v716 = vmax.f32 %v712, 0.0
      %v717 = vmax.f32 %v713, 0.0
      %718 = vst [vmem:[%s295] sm:$0xff] %v714
      %719 = vst [vmem:[%s295 + $0x8] sm:$0xff] %v715
      %720 = vst [vmem:[%s295 + $0x10] sm:$0xff] %v716
      %721 = vst [vmem:[%s295 + $0x18] sm:$0xff] %v717
      %s722 = smul.u32 4, %s16
      %p723 = scmp.lt.s32.totalorder %s722, 7
      %s724 = scalar_select %p723, %s722, 7
      %s725 = smul.addr %s724, 8
      %s726 = scalar_lea.vmem %s5, %s725
      // Predicated region
      $region41: #{forward.8} parent=39 // pred_check
        %p727 = pneg %p159
      $region42: #{forward.8} parent=39 // pred_check_branch
        %729 = sbr.rel (%p727) target = $region44
      $region43: #{forward.8} parent=39 // pred_region
        %s730 = smul.u32 4, %s16
      $region44: #{forward.8} parent=39 // pred_fallthru
        _
    $region40: #{forward.8} parent=5 // pred_fallthru
      _
    %p731 = scmp.le.s32.totalorder 2, %s11
    // Predicated region
    $region45: #{forward.8} parent=5 // pred_check
      %p732 = pneg %p731
    $region46: #{forward.8} parent=5 // pred_check_branch
      %734 = sbr.rel (%p732) target = $region48
    $region47: #{forward.8} parent=5 // pred_region
      %s735 = ssub.s32 %s11, 2
      // Predicated region
      $region49: #{forward.8} parent=47 // pred_check
        %p736 = pneg %p165
      $region50: #{forward.8} parent=47 // pred_check_branch
        %738 = sbr.rel (%p736) target = $region52
      $region51: #{forward.8} parent=47 // pred_region
        %s739 = smul.u32 4, %s17
        %p740 = scmp.lt.s32.totalorder %s739, 7
        %s741 = scalar_select %p740, %s739, 7
        %s742 = smul.addr %s741, 8
        %s743 = scalar_lea.vmem %s5, %s742
      $region52: #{forward.8} parent=47 // pred_fallthru
        _
    $region48: #{forward.8} parent=5 // pred_fallthru
      _
  $region6: #{forward.8} parent=0 // loop_footer
    %s15 = sadd.s32 1, %s11
  $region7: #{forward.8} parent=0 // loop_footer_branch
    %10 = sbr.rel target = $region3
  $region8: #{forward.8} parent=0 // loop_exit
    _

// kernel: forward.9
$region0: #{forward.9}
  #allocation0 [shape = 'u32[]', space=smem, size = 0x4, offset = 0x4, fixed_abs, tag = 'smem constant byte address 0x4 - core index']
  #allocation1 [shape = 'u32[72,128]{1,0:T(1,128)}', space=vmem, size = 0x9000, scoped, tag = 'internal scratch']
  %s0 = inlined_call_operand.vmem [shape: f32[8,1024], index: 0, kind: input, shape index: {}]
  %s1 = inlined_call_operand.vmem [shape: f32[1024,256], index: 1, kind: input, shape index: {}]
  %s2 = inlined_call_operand.vmem [shape: f32[1,256], index: 2, kind: input, shape index: {}, may-alias: {2,4,6,12}]
  %s3 = inlined_call_operand.vmem [shape: f32[1,256], index: 3, kind: input, shape index: {}, may-alias: {3,11}]
  %s4 = inlined_call_operand.vmem [shape: f32[1,256], index: 4, kind: input, shape index: {}, may-alias: {2,4,6,12}]
  %s5 = inlined_call_operand.vmem [shape: f32[256,256], index: 5, kind: input, shape index: {}]
  %s6 = inlined_call_operand.vmem [shape: f32[1,256], index: 6, kind: input, shape index: {}, may-alias: {2,4,6,12}]
  %s7 = inlined_call_operand.vmem [shape: f32[256,768], index: 7, kind: input, shape index: {}]
  %s8 = inlined_call_operand.vmem [shape: f32[1,768], index: 8, kind: input, shape index: {}, may-alias: {8,10}]
  %s9 = inlined_call_operand.vmem [shape: f32[256,768], index: 9, kind: input, shape index: {}]
  %s10 = inlined_call_operand.vmem [shape: f32[1,768], index: 10, kind: input, shape index: {}, may-alias: {8,10}]
  %s11 = inlined_call_operand.vmem [shape: f32[1,256], index: 11, kind: input, shape index: {}, may-alias: {3,11}]
  %s12 = inlined_call_operand.vmem [shape: f32[1,256], index: 12, kind: input, shape index: {}, may-alias: {2,4,6,12}]
  %s13 = inlined_call_operand.vmem [shape: f32[256,6], index: 13, kind: input, shape index: {}]
  %s14 = inlined_call_operand.vmem [shape: f32[1,6], index: 14, kind: input, shape index: {}]
  %s15 = inlined_call_operand.hbm [shape: f32[2,6], index: 15, kind: output, shape index: {0}]
  %s16 = inlined_call_operand.hbm [shape: f32[2,256], index: 16, kind: output, shape index: {1}]
  %17 = xla_tuple %s15, %s16
  %s18 = sld [smem:[#allocation0]]
  $region78: #{forward.9} parent=0
    _
  %s20 = ssub.s32 1, %s18
  %s21 = scalar_select 0, %s20, %s18
  $region1: #{forward.9} parent=0
    #allocation2 [shape = 'u8[1024]{0}', space=vmem, size = 0x400, scoped, tag = 'output window, operand 0, single buffered']
    #allocation3 [shape = 's32[1]{0}', space=sflag, size = 0x4, scoped, tag = 'scoped memory for forward.9']
    #allocation4 [shape = 'u8[2048]{0}', space=vmem, size = 0x800, scoped, tag = 'output window, operand 1, single buffered']
    #allocation5 [shape = 's32[1]{0}', space=sflag, size = 0x4, scoped, tag = 'scoped memory for forward.9']
    %22 = vsyncpa [#allocation3], 0
    %23 = vsyncpa [#allocation5], 0
    // Predicated region
    $region2: #{forward.9} parent=1 // pred_check
      _
    $region3: #{forward.9} parent=1 // pred_check_branch
      %25 = sbr.rel (0) target = $region5
    $region4: #{forward.9} parent=1 // pred_region
      _
    $region5: #{forward.9} parent=1 // pred_fallthru
      _
    // Predicated region
    $region6: #{forward.9} parent=1 // pred_check
      _
    $region7: #{forward.9} parent=1 // pred_check_branch
      %27 = sbr.rel (0) target = $region9
    $region8: #{forward.9} parent=1 // pred_region
      _
    $region9: #{forward.9} parent=1 // pred_fallthru
      _
    // Predicated region
    $region10: #{forward.9} parent=1 // pred_check
      _
    $region11: #{forward.9} parent=1 // pred_check_branch
      %29 = sbr.rel (0) target = $region13
    $region12: #{forward.9} parent=1 // pred_region
      _
    $region13: #{forward.9} parent=1 // pred_fallthru
      _
    // Predicated region
    $region14: #{forward.9} parent=1 // pred_check
      _
    $region15: #{forward.9} parent=1 // pred_check_branch
      %31 = sbr.rel (0) target = $region17
    $region16: #{forward.9} parent=1 // pred_region
      _
    $region17: #{forward.9} parent=1 // pred_fallthru
      _
    // Predicated region
    $region18: #{forward.9} parent=1 // pred_check
      _
    $region19: #{forward.9} parent=1 // pred_check_branch
      %33 = sbr.rel (0) target = $region21
    $region20: #{forward.9} parent=1 // pred_region
      _
    $region21: #{forward.9} parent=1 // pred_fallthru
      _
    // Predicated region
    $region22: #{forward.9} parent=1 // pred_check
      _
    $region23: #{forward.9} parent=1 // pred_check_branch
      %35 = sbr.rel (0) target = $region25
    $region24: #{forward.9} parent=1 // pred_region
      _
    $region25: #{forward.9} parent=1 // pred_fallthru
      _
    // Predicated region
    $region26: #{forward.9} parent=1 // pred_check
      _
    $region27: #{forward.9} parent=1 // pred_check_branch
      %37 = sbr.rel (0) target = $region29
    $region28: #{forward.9} parent=1 // pred_region
      _
    $region29: #{forward.9} parent=1 // pred_fallthru
      _
    // Predicated region
    $region30: #{forward.9} parent=1 // pred_check
      _
    $region31: #{forward.9} parent=1 // pred_check_branch
      %39 = sbr.rel (0) target = $region33
    $region32: #{forward.9} parent=1 // pred_region
      _
    $region33: #{forward.9} parent=1 // pred_fallthru
      _
    // Predicated region
    $region34: #{forward.9} parent=1 // pred_check
      _
    $region35: #{forward.9} parent=1 // pred_check_branch
      %41 = sbr.rel (0) target = $region37
    $region36: #{forward.9} parent=1 // pred_region
      _
    $region37: #{forward.9} parent=1 // pred_fallthru
      _
    // Predicated region
    $region38: #{forward.9} parent=1 // pred_check
      _
    $region39: #{forward.9} parent=1 // pred_check_branch
      %43 = sbr.rel (0) target = $region41
    $region40: #{forward.9} parent=1 // pred_region
      _
    $region41: #{forward.9} parent=1 // pred_fallthru
      _
    // Predicated region
    $region42: #{forward.9} parent=1 // pred_check
      _
    $region43: #{forward.9} parent=1 // pred_check_branch
      %45 = sbr.rel (0) target = $region45
    $region44: #{forward.9} parent=1 // pred_region
      _
    $region45: #{forward.9} parent=1 // pred_fallthru
      _
    // Predicated region
    $region46: #{forward.9} parent=1 // pred_check
      _
    $region47: #{forward.9} parent=1 // pred_check_branch
      %47 = sbr.rel (0) target = $region49
    $region48: #{forward.9} parent=1 // pred_region
      _
    $region49: #{forward.9} parent=1 // pred_fallthru
      _
    // Predicated region
    $region50: #{forward.9} parent=1 // pred_check
      _
    $region51: #{forward.9} parent=1 // pred_check_branch
      %49 = sbr.rel (0) target = $region53
    $region52: #{forward.9} parent=1 // pred_region
      _
    $region53: #{forward.9} parent=1 // pred_fallthru
      _
    // Predicated region
    $region54: #{forward.9} parent=1 // pred_check
      _
    $region55: #{forward.9} parent=1 // pred_check_branch
      %51 = sbr.rel (0) target = $region57
    $region56: #{forward.9} parent=1 // pred_region
      _
    $region57: #{forward.9} parent=1 // pred_fallthru
      _
    // Predicated region
    $region58: #{forward.9} parent=1 // pred_check
      _
    $region59: #{forward.9} parent=1 // pred_check_branch
      %53 = sbr.rel (0) target = $region61
    $region60: #{forward.9} parent=1 // pred_region
      _
    $region61: #{forward.9} parent=1 // pred_fallthru
      _
    %v54 = vld [vmem:[%s0] sm:$0xff]
    %v55 = vld [vmem:[%s0 + $0x8] sm:$0xff]
    %v56 = vld [vmem:[%s0 + $0x10] sm:$0xff]
    %v57 = vld [vmem:[%s0 + $0x18] sm:$0xff]
    %v58 = vld [vmem:[%s0 + $0x20] sm:$0xff]
    %v59 = vld [vmem:[%s0 + $0x28] sm:$0xff]
    %v60 = vld [vmem:[%s0 + $0x30] sm:$0xff]
    %v61 = vld [vmem:[%s0 + $0x38] sm:$0xff]
    %v62 = vld [vmem:[%s1] sm:$0xff]
    %v63 = vld [vmem:[%s1 + $0x8] sm:$0xff]
    %v64 = vld [vmem:[%s1 + $0x10] sm:$0xff]
    %v65 = vld [vmem:[%s1 + $0x18] sm:$0xff]
    %v66 = vld [vmem:[%s1 + $0x20] sm:$0xff]
    %v67 = vld [vmem:[%s1 + $0x28] sm:$0xff]
    %v68 = vld [vmem:[%s1 + $0x30] sm:$0xff]
    %v69 = vld [vmem:[%s1 + $0x38] sm:$0xff]
    %v70 = vld [vmem:[%s1 + $0x40] sm:$0xff]
    %v71 = vld [vmem:[%s1 + $0x48] sm:$0xff]
    %v72 = vld [vmem:[%s1 + $0x50] sm:$0xff]
    %v73 = vld [vmem:[%s1 + $0x58] sm:$0xff]
    %v74 = vld [vmem:[%s1 + $0x60] sm:$0xff]
    %v75 = vld [vmem:[%s1 + $0x68] sm:$0xff]
    %v76 = vld [vmem:[%s1 + $0x70] sm:$0xff]
    %v77 = vld [vmem:[%s1 + $0x78] sm:$0xff]
    %v78 = vld [vmem:[%s1 + $0x80] sm:$0xff]
    %v79 = vld [vmem:[%s1 + $0x88] sm:$0xff]
    %v80 = vld [vmem:[%s1 + $0x90] sm:$0xff]
    %v81 = vld [vmem:[%s1 + $0x98] sm:$0xff]
    %v82 = vld [vmem:[%s1 + $0xa0] sm:$0xff]
    %v83 = vld [vmem:[%s1 + $0xa8] sm:$0xff]
    %v84 = vld [vmem:[%s1 + $0xb0] sm:$0xff]
    %v85 = vld [vmem:[%s1 + $0xb8] sm:$0xff]
    %v86 = vld [vmem:[%s1 + $0xc0] sm:$0xff]
    %v87 = vld [vmem:[%s1 + $0xc8] sm:$0xff]
    %v88 = vld [vmem:[%s1 + $0xd0] sm:$0xff]
    %v89 = vld [vmem:[%s1 + $0xd8] sm:$0xff]
    %v90 = vld [vmem:[%s1 + $0xe0] sm:$0xff]
    %v91 = vld [vmem:[%s1 + $0xe8] sm:$0xff]
    %v92 = vld [vmem:[%s1 + $0xf0] sm:$0xff]
    %v93 = vld [vmem:[%s1 + $0xf8] sm:$0xff]
    %v94 = vld [vmem:[%s1 + $0x100] sm:$0xff]
    %v95 = vld [vmem:[%s1 + $0x108] sm:$0xff]
    %v96 = vld [vmem:[%s1 + $0x110] sm:$0xff]
    %v97 = vld [vmem:[%s1 + $0x118] sm:$0xff]
    %v98 = vld [vmem:[%s1 + $0x120] sm:$0xff]
    %v99 = vld [vmem:[%s1 + $0x128] sm:$0xff]
    %v100 = vld [vmem:[%s1 + $0x130] sm:$0xff]
    %v101 = vld [vmem:[%s1 + $0x138] sm:$0xff]
    %v102 = vld [vmem:[%s1 + $0x140] sm:$0xff]
    %v103 = vld [vmem:[%s1 + $0x148] sm:$0xff]
    %v104 = vld [vmem:[%s1 + $0x150] sm:$0xff]
    %v105 = vld [vmem:[%s1 + $0x158] sm:$0xff]
    %v106 = vld [vmem:[%s1 + $0x160] sm:$0xff]
    %v107 = vld [vmem:[%s1 + $0x168] sm:$0xff]
    %v108 = vld [vmem:[%s1 + $0x170] sm:$0xff]
    %v109 = vld [vmem:[%s1 + $0x178] sm:$0xff]
    %v110 = vld [vmem:[%s1 + $0x180] sm:$0xff]
    %v111 = vld [vmem:[%s1 + $0x188] sm:$0xff]
    %v112 = vld [vmem:[%s1 + $0x190] sm:$0xff]
    %v113 = vld [vmem:[%s1 + $0x198] sm:$0xff]
    %v114 = vld [vmem:[%s1 + $0x1a0] sm:$0xff]
    %v115 = vld [vmem:[%s1 + $0x1a8] sm:$0xff]
    %v116 = vld [vmem:[%s1 + $0x1b0] sm:$0xff]
    %v117 = vld [vmem:[%s1 + $0x1b8] sm:$0xff]
    %v118 = vld [vmem:[%s1 + $0x1c0] sm:$0xff]
    %v119 = vld [vmem:[%s1 + $0x1c8] sm:$0xff]
    %v120 = vld [vmem:[%s1 + $0x1d0] sm:$0xff]
    %v121 = vld [vmem:[%s1 + $0x1d8] sm:$0xff]
    %v122 = vld [vmem:[%s1 + $0x1e0] sm:$0xff]
    %v123 = vld [vmem:[%s1 + $0x1e8] sm:$0xff]
    %v124 = vld [vmem:[%s1 + $0x1f0] sm:$0xff]
    %v125 = vld [vmem:[%s1 + $0x1f8] sm:$0xff]
    %v126 = vld [vmem:[%s1 + $0x200] sm:$0xff]
    %v127 = vld [vmem:[%s1 + $0x208] sm:$0xff]
    %v128 = vld [vmem:[%s1 + $0x210] sm:$0xff]
    %v129 = vld [vmem:[%s1 + $0x218] sm:$0xff]
    %v130 = vld [vmem:[%s1 + $0x220] sm:$0xff]
    %v131 = vld [vmem:[%s1 + $0x228] sm:$0xff]
    %v132 = vld [vmem:[%s1 + $0x230] sm:$0xff]
    %v133 = vld [vmem:[%s1 + $0x238] sm:$0xff]
    %v134 = vld [vmem:[%s1 + $0x240] sm:$0xff]
    %v135 = vld [vmem:[%s1 + $0x248] sm:$0xff]
    %v136 = vld [vmem:[%s1 + $0x250] sm:$0xff]
    %v137 = vld [vmem:[%s1 + $0x258] sm:$0xff]
    %v138 = vld [vmem:[%s1 + $0x260] sm:$0xff]
    %v139 = vld [vmem:[%s1 + $0x268] sm:$0xff]
    %v140 = vld [vmem:[%s1 + $0x270] sm:$0xff]
    %v141 = vld [vmem:[%s1 + $0x278] sm:$0xff]
    %v142 = vld [vmem:[%s1 + $0x280] sm:$0xff]
    %v143 = vld [vmem:[%s1 + $0x288] sm:$0xff]
    %v144 = vld [vmem:[%s1 + $0x290] sm:$0xff]
    %v145 = vld [vmem:[%s1 + $0x298] sm:$0xff]
    %v146 = vld [vmem:[%s1 + $0x2a0] sm:$0xff]
    %v147 = vld [vmem:[%s1 + $0x2a8] sm:$0xff]
    %v148 = vld [vmem:[%s1 + $0x2b0] sm:$0xff]
    %v149 = vld [vmem:[%s1 + $0x2b8] sm:$0xff]
    %v150 = vld [vmem:[%s1 + $0x2c0] sm:$0xff]
    %v151 = vld [vmem:[%s1 + $0x2c8] sm:$0xff]
    %v152 = vld [vmem:[%s1 + $0x2d0] sm:$0xff]
    %v153 = vld [vmem:[%s1 + $0x2d8] sm:$0xff]
    %v154 = vld [vmem:[%s1 + $0x2e0] sm:$0xff]
    %v155 = vld [vmem:[%s1 + $0x2e8] sm:$0xff]
    %v156 = vld [vmem:[%s1 + $0x2f0] sm:$0xff]
    %v157 = vld [vmem:[%s1 + $0x2f8] sm:$0xff]
    %v158 = vld [vmem:[%s1 + $0x300] sm:$0xff]
    %v159 = vld [vmem:[%s1 + $0x308] sm:$0xff]
    %v160 = vld [vmem:[%s1 + $0x310] sm:$0xff]
    %v161 = vld [vmem:[%s1 + $0x318] sm:$0xff]
    %v162 = vld [vmem:[%s1 + $0x320] sm:$0xff]
    %v163 = vld [vmem:[%s1 + $0x328] sm:$0xff]
    %v164 = vld [vmem:[%s1 + $0x330] sm:$0xff]
    %v165 = vld [vmem:[%s1 + $0x338] sm:$0xff]
    %v166 = vld [vmem:[%s1 + $0x340] sm:$0xff]
    %v167 = vld [vmem:[%s1 + $0x348] sm:$0xff]
    %v168 = vld [vmem:[%s1 + $0x350] sm:$0xff]
    %v169 = vld [vmem:[%s1 + $0x358] sm:$0xff]
    %v170 = vld [vmem:[%s1 + $0x360] sm:$0xff]
    %v171 = vld [vmem:[%s1 + $0x368] sm:$0xff]
    %v172 = vld [vmem:[%s1 + $0x370] sm:$0xff]
    %v173 = vld [vmem:[%s1 + $0x378] sm:$0xff]
    %v174 = vld [vmem:[%s1 + $0x380] sm:$0xff]
    %v175 = vld [vmem:[%s1 + $0x388] sm:$0xff]
    %v176 = vld [vmem:[%s1 + $0x390] sm:$0xff]
    %v177 = vld [vmem:[%s1 + $0x398] sm:$0xff]
    %v178 = vld [vmem:[%s1 + $0x3a0] sm:$0xff]
    %v179 = vld [vmem:[%s1 + $0x3a8] sm:$0xff]
    %v180 = vld [vmem:[%s1 + $0x3b0] sm:$0xff]
    %v181 = vld [vmem:[%s1 + $0x3b8] sm:$0xff]
    %v182 = vld [vmem:[%s1 + $0x3c0] sm:$0xff]
    %v183 = vld [vmem:[%s1 + $0x3c8] sm:$0xff]
    %v184 = vld [vmem:[%s1 + $0x3d0] sm:$0xff]
    %v185 = vld [vmem:[%s1 + $0x3d8] sm:$0xff]
    %v186 = vld [vmem:[%s1 + $0x3e0] sm:$0xff]
    %v187 = vld [vmem:[%s1 + $0x3e8] sm:$0xff]
    %v188 = vld [vmem:[%s1 + $0x3f0] sm:$0xff]
    %v189 = vld [vmem:[%s1 + $0x3f8] sm:$0xff]
    %v190 = vld [vmem:[%s1 + $0x400] sm:$0xff]
    %v191 = vld [vmem:[%s1 + $0x408] sm:$0xff]
    %v192 = vld [vmem:[%s1 + $0x410] sm:$0xff]
    %v193 = vld [vmem:[%s1 + $0x418] sm:$0xff]
    %v194 = vld [vmem:[%s1 + $0x420] sm:$0xff]
    %v195 = vld [vmem:[%s1 + $0x428] sm:$0xff]
    %v196 = vld [vmem:[%s1 + $0x430] sm:$0xff]
    %v197 = vld [vmem:[%s1 + $0x438] sm:$0xff]
    %v198 = vld [vmem:[%s1 + $0x440] sm:$0xff]
    %v199 = vld [vmem:[%s1 + $0x448] sm:$0xff]
    %v200 = vld [vmem:[%s1 + $0x450] sm:$0xff]
    %v201 = vld [vmem:[%s1 + $0x458] sm:$0xff]
    %v202 = vld [vmem:[%s1 + $0x460] sm:$0xff]
    %v203 = vld [vmem:[%s1 + $0x468] sm:$0xff]
    %v204 = vld [vmem:[%s1 + $0x470] sm:$0xff]
    %v205 = vld [vmem:[%s1 + $0x478] sm:$0xff]
    %v206 = vld [vmem:[%s1 + $0x480] sm:$0xff]
    %v207 = vld [vmem:[%s1 + $0x488] sm:$0xff]
    %v208 = vld [vmem:[%s1 + $0x490] sm:$0xff]
    %v209 = vld [vmem:[%s1 + $0x498] sm:$0xff]
    %v210 = vld [vmem:[%s1 + $0x4a0] sm:$0xff]
    %v211 = vld [vmem:[%s1 + $0x4a8] sm:$0xff]
    %v212 = vld [vmem:[%s1 + $0x4b0] sm:$0xff]
    %v213 = vld [vmem:[%s1 + $0x4b8] sm:$0xff]
    %v214 = vld [vmem:[%s1 + $0x4c0] sm:$0xff]
    %v215 = vld [vmem:[%s1 + $0x4c8] sm:$0xff]
    %v216 = vld [vmem:[%s1 + $0x4d0] sm:$0xff]
    %v217 = vld [vmem:[%s1 + $0x4d8] sm:$0xff]
    %v218 = vld [vmem:[%s1 + $0x4e0] sm:$0xff]
    %v219 = vld [vmem:[%s1 + $0x4e8] sm:$0xff]
    %v220 = vld [vmem:[%s1 + $0x4f0] sm:$0xff]
    %v221 = vld [vmem:[%s1 + $0x4f8] sm:$0xff]
    %v222 = vld [vmem:[%s1 + $0x500] sm:$0xff]
    %v223 = vld [vmem:[%s1 + $0x508] sm:$0xff]
    %v224 = vld [vmem:[%s1 + $0x510] sm:$0xff]
    %v225 = vld [vmem:[%s1 + $0x518] sm:$0xff]
    %v226 = vld [vmem:[%s1 + $0x520] sm:$0xff]
    %v227 = vld [vmem:[%s1 + $0x528] sm:$0xff]
    %v228 = vld [vmem:[%s1 + $0x530] sm:$0xff]
    %v229 = vld [vmem:[%s1 + $0x538] sm:$0xff]
    %v230 = vld [vmem:[%s1 + $0x540] sm:$0xff]
    %v231 = vld [vmem:[%s1 + $0x548] sm:$0xff]
    %v232 = vld [vmem:[%s1 + $0x550] sm:$0xff]
    %v233 = vld [vmem:[%s1 + $0x558] sm:$0xff]
    %v234 = vld [vmem:[%s1 + $0x560] sm:$0xff]
    %v235 = vld [vmem:[%s1 + $0x568] sm:$0xff]
    %v236 = vld [vmem:[%s1 + $0x570] sm:$0xff]
    %v237 = vld [vmem:[%s1 + $0x578] sm:$0xff]
    %v238 = vld [vmem:[%s1 + $0x580] sm:$0xff]
    %v239 = vld [vmem:[%s1 + $0x588] sm:$0xff]
    %v240 = vld [vmem:[%s1 + $0x590] sm:$0xff]
    %v241 = vld [vmem:[%s1 + $0x598] sm:$0xff]
    %v242 = vld [vmem:[%s1 + $0x5a0] sm:$0xff]
    %v243 = vld [vmem:[%s1 + $0x5a8] sm:$0xff]
    %v244 = vld [vmem:[%s1 + $0x5b0] sm:$0xff]
    %v245 = vld [vmem:[%s1 + $0x5b8] sm:$0xff]
    %v246 = vld [vmem:[%s1 + $0x5c0] sm:$0xff]
    %v247 = vld [vmem:[%s1 + $0x5c8] sm:$0xff]
    %v248 = vld [vmem:[%s1 + $0x5d0] sm:$0xff]
    %v249 = vld [vmem:[%s1 + $0x5d8] sm:$0xff]
    %v250 = vld [vmem:[%s1 + $0x5e0] sm:$0xff]
    %v251 = vld [vmem:[%s1 + $0x5e8] sm:$0xff]
    %v252 = vld [vmem:[%s1 + $0x5f0] sm:$0xff]
    %v253 = vld [vmem:[%s1 + $0x5f8] sm:$0xff]
    %v254 = vld [vmem:[%s1 + $0x600] sm:$0xff]
    %v255 = vld [vmem:[%s1 + $0x608] sm:$0xff]
    %v256 = vld [vmem:[%s1 + $0x610] sm:$0xff]
    %v257 = vld [vmem:[%s1 + $0x618] sm:$0xff]
    %v258 = vld [vmem:[%s1 + $0x620] sm:$0xff]
    %v259 = vld [vmem:[%s1 + $0x628] sm:$0xff]
    %v260 = vld [vmem:[%s1 + $0x630] sm:$0xff]
    %v261 = vld [vmem:[%s1 + $0x638] sm:$0xff]
    %v262 = vld [vmem:[%s1 + $0x640] sm:$0xff]
    %v263 = vld [vmem:[%s1 + $0x648] sm:$0xff]
    %v264 = vld [vmem:[%s1 + $0x650] sm:$0xff]
    %v265 = vld [vmem:[%s1 + $0x658] sm:$0xff]
    %v266 = vld [vmem:[%s1 + $0x660] sm:$0xff]
    %v267 = vld [vmem:[%s1 + $0x668] sm:$0xff]
    %v268 = vld [vmem:[%s1 + $0x670] sm:$0xff]
    %v269 = vld [vmem:[%s1 + $0x678] sm:$0xff]
    %v270 = vld [vmem:[%s1 + $0x680] sm:$0xff]
    %v271 = vld [vmem:[%s1 + $0x688] sm:$0xff]
    %v272 = vld [vmem:[%s1 + $0x690] sm:$0xff]
    %v273 = vld [vmem:[%s1 + $0x698] sm:$0xff]
    %v274 = vld [vmem:[%s1 + $0x6a0] sm:$0xff]
    %v275 = vld [vmem:[%s1 + $0x6a8] sm:$0xff]
    %v276 = vld [vmem:[%s1 + $0x6b0] sm:$0xff]
    %v277 = vld [vmem:[%s1 + $0x6b8] sm:$0xff]
    %v278 = vld [vmem:[%s1 + $0x6c0] sm:$0xff]
    %v279 = vld [vmem:[%s1 + $0x6c8] sm:$0xff]
    %v280 = vld [vmem:[%s1 + $0x6d0] sm:$0xff]
    %v281 = vld [vmem:[%s1 + $0x6d8] sm:$0xff]
    %v282 = vld [vmem:[%s1 + $0x6e0] sm:$0xff]
    %v283 = vld [vmem:[%s1 + $0x6e8] sm:$0xff]
    %v284 = vld [vmem:[%s1 + $0x6f0] sm:$0xff]
    %v285 = vld [vmem:[%s1 + $0x6f8] sm:$0xff]
    %v286 = vld [vmem:[%s1 + $0x700] sm:$0xff]
    %v287 = vld [vmem:[%s1 + $0x708] sm:$0xff]
    %v288 = vld [vmem:[%s1 + $0x710] sm:$0xff]
    %v289 = vld [vmem:[%s1 + $0x718] sm:$0xff]
    %v290 = vld [vmem:[%s1 + $0x720] sm:$0xff]
    %v291 = vld [vmem:[%s1 + $0x728] sm:$0xff]
    %v292 = vld [vmem:[%s1 + $0x730] sm:$0xff]
    %v293 = vld [vmem:[%s1 + $0x738] sm:$0xff]
    %v294 = vld [vmem:[%s1 + $0x740] sm:$0xff]
    %v295 = vld [vmem:[%s1 + $0x748] sm:$0xff]
    %v296 = vld [vmem:[%s1 + $0x750] sm:$0xff]
    %v297 = vld [vmem:[%s1 + $0x758] sm:$0xff]
    %v298 = vld [vmem:[%s1 + $0x760] sm:$0xff]
    %v299 = vld [vmem:[%s1 + $0x768] sm:$0xff]
    %v300 = vld [vmem:[%s1 + $0x770] sm:$0xff]
    %v301 = vld [vmem:[%s1 + $0x778] sm:$0xff]
    %v302 = vld [vmem:[%s1 + $0x780] sm:$0xff]
    %v303 = vld [vmem:[%s1 + $0x788] sm:$0xff]
    %v304 = vld [vmem:[%s1 + $0x790] sm:$0xff]
    %v305 = vld [vmem:[%s1 + $0x798] sm:$0xff]
    %v306 = vld [vmem:[%s1 + $0x7a0] sm:$0xff]
    %v307 = vld [vmem:[%s1 + $0x7a8] sm:$0xff]
    %v308 = vld [vmem:[%s1 + $0x7b0] sm:$0xff]
    %v309 = vld [vmem:[%s1 + $0x7b8] sm:$0xff]
    %v310 = vld [vmem:[%s1 + $0x7c0] sm:$0xff]
    %v311 = vld [vmem:[%s1 + $0x7c8] sm:$0xff]
    %v312 = vld [vmem:[%s1 + $0x7d0] sm:$0xff]
    %v313 = vld [vmem:[%s1 + $0x7d8] sm:$0xff]
    %v314 = vld [vmem:[%s1 + $0x7e0] sm:$0xff]
    %v315 = vld [vmem:[%s1 + $0x7e8] sm:$0xff]
    %v316 = vld [vmem:[%s1 + $0x7f0] sm:$0xff]
    %v317 = vld [vmem:[%s1 + $0x7f8] sm:$0xff]
    %v318 = vld [vmem:[%s2] sm:$0x3]
    %v320 = vperm.slane %v318, 0
    %v321 = vperm.slane %v318, 1
    %324 = vmatpush.msra.mxu0 %v92
    %325 = vmatpush.msra.mxu0 %v90
    %326 = vmatpush.msra.mxu0 %v88
    %327 = vmatpush.msra.mxu0 %v86
    %328 = vmatpush.msra.mxu0 %v84
    %329 = vmatpush.msra.mxu0 %v82
    %330 = vmatpush.msra.mxu0 %v80
    %331 = vmatpush.msra.mxu0 %v78
    %332 = vmatpush.msra.mxu0 %v76
    %333 = vmatpush.msra.mxu0 %v74
    %334 = vmatpush.msra.mxu0 %v72
    %335 = vmatpush.msra.mxu0 %v70
    %336 = vmatpush.msra.mxu0 %v68
    %337 = vmatpush.msra.mxu0 %v66
    %338 = vmatpush.msra.mxu0 %v64
    %339 = vmatpush.msra.mxu0 %v62
    %340 = vmatmul.f32.gmra.mxu0 %v54
    %v341 = vpop.f32.mrf.mxu0
    %v342 = vadd.f32 %v320, %v341
    %343 = vdwg.mxu0
    %344 = vmatpush.msra.mxu0 %v124
    %345 = vmatpush.msra.mxu0 %v122
    %346 = vmatpush.msra.mxu0 %v120
    %347 = vmatpush.msra.mxu0 %v118
    %348 = vmatpush.msra.mxu0 %v116
    %349 = vmatpush.msra.mxu0 %v114
    %350 = vmatpush.msra.mxu0 %v112
    %351 = vmatpush.msra.mxu0 %v110
    %352 = vmatpush.msra.mxu0 %v108
    %353 = vmatpush.msra.mxu0 %v106
    %354 = vmatpush.msra.mxu0 %v104
    %355 = vmatpush.msra.mxu0 %v102
    %356 = vmatpush.msra.mxu0 %v100
    %357 = vmatpush.msra.mxu0 %v98
    %358 = vmatpush.msra.mxu0 %v96
    %359 = vmatpush.msra.mxu0 %v94
    %360 = vmatmul.f32.gmra.mxu0 %v55
    %v361 = vpop.f32.mrf.mxu0
    %v362 = vadd.f32 %v342, %v361
    %363 = vdwg.mxu0
    %364 = vmatpush.msra.mxu0 %v156
    %365 = vmatpush.msra.mxu0 %v154
    %366 = vmatpush.msra.mxu0 %v152
    %367 = vmatpush.msra.mxu0 %v150
    %368 = vmatpush.msra.mxu0 %v148
    %369 = vmatpush.msra.mxu0 %v146
    %370 = vmatpush.msra.mxu0 %v144
    %371 = vmatpush.msra.mxu0 %v142
    %372 = vmatpush.msra.mxu0 %v140
    %373 = vmatpush.msra.mxu0 %v138
    %374 = vmatpush.msra.mxu0 %v136
    %375 = vmatpush.msra.mxu0 %v134
    %376 = vmatpush.msra.mxu0 %v132
    %377 = vmatpush.msra.mxu0 %v130
    %378 = vmatpush.msra.mxu0 %v128
    %379 = vmatpush.msra.mxu0 %v126
    %380 = vmatmul.f32.gmra.mxu0 %v56
    %v381 = vpop.f32.mrf.mxu0
    %v382 = vadd.f32 %v362, %v381
    %383 = vdwg.mxu0
    %384 = vmatpush.msra.mxu0 %v188
    %385 = vmatpush.msra.mxu0 %v186
    %386 = vmatpush.msra.mxu0 %v184
    %387 = vmatpush.msra.mxu0 %v182
    %388 = vmatpush.msra.mxu0 %v180
    %389 = vmatpush.msra.mxu0 %v178
    %390 = vmatpush.msra.mxu0 %v176
    %391 = vmatpush.msra.mxu0 %v174
    %392 = vmatpush.msra.mxu0 %v172
    %393 = vmatpush.msra.mxu0 %v170
    %394 = vmatpush.msra.mxu0 %v168
    %395 = vmatpush.msra.mxu0 %v166
    %396 = vmatpush.msra.mxu0 %v164
    %397 = vmatpush.msra.mxu0 %v162
    %398 = vmatpush.msra.mxu0 %v160
    %399 = vmatpush.msra.mxu0 %v158
    %400 = vmatmul.f32.gmra.mxu0 %v57
    %v401 = vpop.f32.mrf.mxu0
    %v402 = vadd.f32 %v382, %v401
    %403 = vdwg.mxu0
    %404 = vmatpush.msra.mxu0 %v220
    %405 = vmatpush.msra.mxu0 %v218
    %406 = vmatpush.msra.mxu0 %v216
    %407 = vmatpush.msra.mxu0 %v214
    %408 = vmatpush.msra.mxu0 %v212
    %409 = vmatpush.msra.mxu0 %v210
    %410 = vmatpush.msra.mxu0 %v208
    %411 = vmatpush.msra.mxu0 %v206
    %412 = vmatpush.msra.mxu0 %v204
    %413 = vmatpush.msra.mxu0 %v202
    %414 = vmatpush.msra.mxu0 %v200
    %415 = vmatpush.msra.mxu0 %v198
    %416 = vmatpush.msra.mxu0 %v196
    %417 = vmatpush.msra.mxu0 %v194
    %418 = vmatpush.msra.mxu0 %v192
    %419 = vmatpush.msra.mxu0 %v190
    %420 = vmatmul.f32.gmra.mxu0 %v58
    %v421 = vpop.f32.mrf.mxu0
    %v422 = vadd.f32 %v402, %v421
    %423 = vdwg.mxu0
    %424 = vmatpush.msra.mxu0 %v252
    %425 = vmatpush.msra.mxu0 %v250
    %426 = vmatpush.msra.mxu0 %v248
    %427 = vmatpush.msra.mxu0 %v246
    %428 = vmatpush.msra.mxu0 %v244
    %429 = vmatpush.msra.mxu0 %v242
    %430 = vmatpush.msra.mxu0 %v240
    %431 = vmatpush.msra.mxu0 %v238
    %432 = vmatpush.msra.mxu0 %v236
    %433 = vmatpush.msra.mxu0 %v234
    %434 = vmatpush.msra.mxu0 %v232
    %435 = vmatpush.msra.mxu0 %v230
    %436 = vmatpush.msra.mxu0 %v228
    %437 = vmatpush.msra.mxu0 %v226
    %438 = vmatpush.msra.mxu0 %v224
    %439 = vmatpush.msra.mxu0 %v222
    %440 = vmatmul.f32.gmra.mxu0 %v59
    %v441 = vpop.f32.mrf.mxu0
    %v442 = vadd.f32 %v422, %v441
    %443 = vdwg.mxu0
    %444 = vmatpush.msra.mxu0 %v284
    %445 = vmatpush.msra.mxu0 %v282
    %446 = vmatpush.msra.mxu0 %v280
    %447 = vmatpush.msra.mxu0 %v278
    %448 = vmatpush.msra.mxu0 %v276
    %449 = vmatpush.msra.mxu0 %v274
    %450 = vmatpush.msra.mxu0 %v272
    %451 = vmatpush.msra.mxu0 %v270
    %452 = vmatpush.msra.mxu0 %v268
    %453 = vmatpush.msra.mxu0 %v266
    %454 = vmatpush.msra.mxu0 %v264
    %455 = vmatpush.msra.mxu0 %v262
    %456 = vmatpush.msra.mxu0 %v260
    %457 = vmatpush.msra.mxu0 %v258
    %458 = vmatpush.msra.mxu0 %v256
    %459 = vmatpush.msra.mxu0 %v254
    %460 = vmatmul.f32.gmra.mxu0 %v60
    %v461 = vpop.f32.mrf.mxu0
    %v462 = vadd.f32 %v442, %v461
    %463 = vdwg.mxu0
    %464 = vmatpush.msra.mxu0 %v316
    %465 = vmatpush.msra.mxu0 %v314
    %466 = vmatpush.msra.mxu0 %v312
    %467 = vmatpush.msra.mxu0 %v310
    %468 = vmatpush.msra.mxu0 %v308
    %469 = vmatpush.msra.mxu0 %v306
    %470 = vmatpush.msra.mxu0 %v304
    %471 = vmatpush.msra.mxu0 %v302
    %472 = vmatpush.msra.mxu0 %v300
    %473 = vmatpush.msra.mxu0 %v298
    %474 = vmatpush.msra.mxu0 %v296
    %475 = vmatpush.msra.mxu0 %v294
    %476 = vmatpush.msra.mxu0 %v292
    %477 = vmatpush.msra.mxu0 %v290
    %478 = vmatpush.msra.mxu0 %v288
    %479 = vmatpush.msra.mxu0 %v286
    %480 = vmatmul.f32.gmra.mxu0 %v61
    %v481 = vpop.f32.mrf.mxu0
    %v482 = vadd.f32 %v462, %v481
    %483 = vdwg.mxu0
    %484 = vmatpush.msra.mxu0 %v93
    %485 = vmatpush.msra.mxu0 %v91
    %486 = vmatpush.msra.mxu0 %v89
    %487 = vmatpush.msra.mxu0 %v87
    %488 = vmatpush.msra.mxu0 %v85
    %489 = vmatpush.msra.mxu0 %v83
    %490 = vmatpush.msra.mxu0 %v81
    %491 = vmatpush.msra.mxu0 %v79
    %492 = vmatpush.msra.mxu0 %v77
    %493 = vmatpush.msra.mxu0 %v75
    %494 = vmatpush.msra.mxu0 %v73
    %495 = vmatpush.msra.mxu0 %v71
    %496 = vmatpush.msra.mxu0 %v69
    %497 = vmatpush.msra.mxu0 %v67
    %498 = vmatpush.msra.mxu0 %v65
    %499 = vmatpush.msra.mxu0 %v63
    %500 = vmatmul.f32.gmra.mxu0 %v54
    %v501 = vpop.f32.mrf.mxu0
    %v502 = vadd.f32 %v321, %v501
    %503 = vdwg.mxu0
    %504 = vmatpush.msra.mxu0 %v125
    %505 = vmatpush.msra.mxu0 %v123
    %506 = vmatpush.msra.mxu0 %v121
    %507 = vmatpush.msra.mxu0 %v119
    %508 = vmatpush.msra.mxu0 %v117
    %509 = vmatpush.msra.mxu0 %v115
    %510 = vmatpush.msra.mxu0 %v113
    %511 = vmatpush.msra.mxu0 %v111
    %512 = vmatpush.msra.mxu0 %v109
    %513 = vmatpush.msra.mxu0 %v107
    %514 = vmatpush.msra.mxu0 %v105
    %515 = vmatpush.msra.mxu0 %v103
    %516 = vmatpush.msra.mxu0 %v101
    %517 = vmatpush.msra.mxu0 %v99
    %518 = vmatpush.msra.mxu0 %v97
    %519 = vmatpush.msra.mxu0 %v95
    %520 = vmatmul.f32.gmra.mxu0 %v55
    %v521 = vpop.f32.mrf.mxu0
    %v522 = vadd.f32 %v502, %v521
    %523 = vdwg.mxu0
    %524 = vmatpush.msra.mxu0 %v157
    %525 = vmatpush.msra.mxu0 %v155
    %526 = vmatpush.msra.mxu0 %v153
    %527 = vmatpush.msra.mxu0 %v151
    %528 = vmatpush.msra.mxu0 %v149
    %529 = vmatpush.msra.mxu0 %v147
    %530 = vmatpush.msra.mxu0 %v145
    %531 = vmatpush.msra.mxu0 %v143
    %532 = vmatpush.msra.mxu0 %v141
    %533 = vmatpush.msra.mxu0 %v139
    %534 = vmatpush.msra.mxu0 %v137
    %535 = vmatpush.msra.mxu0 %v135
    %536 = vmatpush.msra.mxu0 %v133
    %537 = vmatpush.msra.mxu0 %v131
    %538 = vmatpush.msra.mxu0 %v129
    %539 = vmatpush.msra.mxu0 %v127
    %540 = vmatmul.f32.gmra.mxu0 %v56
    %v541 = vpop.f32.mrf.mxu0
    %v542 = vadd.f32 %v522, %v541
    %543 = vdwg.mxu0
    %544 = vmatpush.msra.mxu0 %v189
    %545 = vmatpush.msra.mxu0 %v187
    %546 = vmatpush.msra.mxu0 %v185
    %547 = vmatpush.msra.mxu0 %v183
    %548 = vmatpush.msra.mxu0 %v181
    %549 = vmatpush.msra.mxu0 %v179
    %550 = vmatpush.msra.mxu0 %v177
    %551 = vmatpush.msra.mxu0 %v175
    %552 = vmatpush.msra.mxu0 %v173
    %553 = vmatpush.msra.mxu0 %v171
    %554 = vmatpush.msra.mxu0 %v169
    %555 = vmatpush.msra.mxu0 %v167
    %556 = vmatpush.msra.mxu0 %v165
    %557 = vmatpush.msra.mxu0 %v163
    %558 = vmatpush.msra.mxu0 %v161
    %559 = vmatpush.msra.mxu0 %v159
    %560 = vmatmul.f32.gmra.mxu0 %v57
    %v561 = vpop.f32.mrf.mxu0
    %v562 = vadd.f32 %v542, %v561
    %563 = vdwg.mxu0
    %564 = vmatpush.msra.mxu0 %v221
    %565 = vmatpush.msra.mxu0 %v219
    %566 = vmatpush.msra.mxu0 %v217
    %567 = vmatpush.msra.mxu0 %v215
    %568 = vmatpush.msra.mxu0 %v213
    %569 = vmatpush.msra.mxu0 %v211
    %570 = vmatpush.msra.mxu0 %v209
    %571 = vmatpush.msra.mxu0 %v207
    %572 = vmatpush.msra.mxu0 %v205
    %573 = vmatpush.msra.mxu0 %v203
    %574 = vmatpush.msra.mxu0 %v201
    %575 = vmatpush.msra.mxu0 %v199
    %576 = vmatpush.msra.mxu0 %v197
    %577 = vmatpush.msra.mxu0 %v195
    %578 = vmatpush.msra.mxu0 %v193
    %579 = vmatpush.msra.mxu0 %v191
    %580 = vmatmul.f32.gmra.mxu0 %v58
    %v581 = vpop.f32.mrf.mxu0
    %v582 = vadd.f32 %v562, %v581
    %583 = vdwg.mxu0
    %584 = vmatpush.msra.mxu0 %v253
    %585 = vmatpush.msra.mxu0 %v251
    %586 = vmatpush.msra.mxu0 %v249
    %587 = vmatpush.msra.mxu0 %v247
    %588 = vmatpush.msra.mxu0 %v245
    %589 = vmatpush.msra.mxu0 %v243
    %590 = vmatpush.msra.mxu0 %v241
    %591 = vmatpush.msra.mxu0 %v239
    %592 = vmatpush.msra.mxu0 %v237
    %593 = vmatpush.msra.mxu0 %v235
    %594 = vmatpush.msra.mxu0 %v233
    %595 = vmatpush.msra.mxu0 %v231
    %596 = vmatpush.msra.mxu0 %v229
    %597 = vmatpush.msra.mxu0 %v227
    %598 = vmatpush.msra.mxu0 %v225
    %599 = vmatpush.msra.mxu0 %v223
    %600 = vmatmul.f32.gmra.mxu0 %v59
    %v601 = vpop.f32.mrf.mxu0
    %v602 = vadd.f32 %v582, %v601
    %603 = vdwg.mxu0
    %604 = vmatpush.msra.mxu0 %v285
    %605 = vmatpush.msra.mxu0 %v283
    %606 = vmatpush.msra.mxu0 %v281
    %607 = vmatpush.msra.mxu0 %v279
    %608 = vmatpush.msra.mxu0 %v277
    %609 = vmatpush.msra.mxu0 %v275
    %610 = vmatpush.msra.mxu0 %v273
    %611 = vmatpush.msra.mxu0 %v271
    %612 = vmatpush.msra.mxu0 %v269
    %613 = vmatpush.msra.mxu0 %v267
    %614 = vmatpush.msra.mxu0 %v265
    %615 = vmatpush.msra.mxu0 %v263
    %616 = vmatpush.msra.mxu0 %v261
    %617 = vmatpush.msra.mxu0 %v259
    %618 = vmatpush.msra.mxu0 %v257
    %619 = vmatpush.msra.mxu0 %v255
    %620 = vmatmul.f32.gmra.mxu0 %v60
    %v621 = vpop.f32.mrf.mxu0
    %v622 = vadd.f32 %v602, %v621
    %623 = vdwg.mxu0
    %624 = vmatpush.msra.mxu0 %v317
    %625 = vmatpush.msra.mxu0 %v315
    %626 = vmatpush.msra.mxu0 %v313
    %627 = vmatpush.msra.mxu0 %v311
    %628 = vmatpush.msra.mxu0 %v309
    %629 = vmatpush.msra.mxu0 %v307
    %630 = vmatpush.msra.mxu0 %v305
    %631 = vmatpush.msra.mxu0 %v303
    %632 = vmatpush.msra.mxu0 %v301
    %633 = vmatpush.msra.mxu0 %v299
    %634 = vmatpush.msra.mxu0 %v297
    %635 = vmatpush.msra.mxu0 %v295
    %636 = vmatpush.msra.mxu0 %v293
    %637 = vmatpush.msra.mxu0 %v291
    %638 = vmatpush.msra.mxu0 %v289
    %639 = vmatpush.msra.mxu0 %v287
    %640 = vmatmul.f32.gmra.mxu0 %v61
    %v641 = vpop.f32.mrf.mxu0
    %v642 = vadd.f32 %v622, %v641
    %643 = vdwg.mxu0
    %v644 = vrot.slane %v482, 4
    %v645 = vadd.f32 %v482, %v644
    %v646 = vrot.slane %v645, 2
    %v647 = vadd.f32 %v645, %v646
    %v648 = vrot.slane %v647, 1
    %v649 = vadd.f32 %v647, %v648
    %v650 = vrot.slane %v642, 4
    %v651 = vadd.f32 %v642, %v650
    %v652 = vrot.slane %v651, 2
    %v653 = vadd.f32 %v651, %v652
    %v654 = vrot.slane %v653, 1
    %v655 = vadd.f32 %v653, %v654
    %v656 = vrcp.pop 8.0
    %v657 = vmul.f32 8.0, %v656
    %v658 = vsub.f32 1.0, %v657
    %v659 = vmul.f32 %v656, %v658
    %v660 = vadd.f32 %v656, %v659
    %vm661 = vweird.f32 %v656
    %v662 = vsel %vm661, %v656, %v660
    %v663 = vmul.f32 %v649, %v662
    %v664 = vmul.f32 %v655, %v662
    %v665 = vsub.f32 %v482, %v663
    %v666 = vsub.f32 %v642, %v664
    %v667 = vmul.f32 %v665, %v665
    %v668 = vmul.f32 %v666, %v666
    %v669 = vrot.slane %v667, 4
    %v670 = vadd.f32 %v667, %v669
    %v671 = vrot.slane %v670, 2
    %v672 = vadd.f32 %v670, %v671
    %v673 = vrot.slane %v672, 1
    %v674 = vadd.f32 %v672, %v673
    %v675 = vrot.slane %v668, 4
    %v676 = vadd.f32 %v668, %v675
    %v677 = vrot.slane %v676, 2
    %v678 = vadd.f32 %v676, %v677
    %v679 = vrot.slane %v678, 1
    %v680 = vadd.f32 %v678, %v679
    %v681 = vmul.f32 %v674, %v662
    %v682 = vmul.f32 %v680, %v662
    %v683 = vadd.f32 %v681, 1e-05
    %v684 = vadd.f32 %v682, 1e-05
    %v685 = vrsqrt.pop %v683
    %v686 = vmul.f32 %v685, %v683
    %v687 = vmul.f32 %v686, %v685
    %v688 = vmul.f32 0.5, %v687
    %v689 = vsub.f32 1.5, %v688
    %v690 = vmul.f32 %v685, %v689
    %vm691 = vweird.f32 %v683
    %vm692 = vweird.f32 %v685
    %vm693 = vmor %vm691, %vm692
    %v694 = vsel %vm693, %v685, %v690
    %v695 = vrsqrt.pop %v684
    %v696 = vmul.f32 %v695, %v684
    %v697 = vmul.f32 %v696, %v695
    %v698 = vmul.f32 0.5, %v697
    %v699 = vsub.f32 1.5, %v698
    %v700 = vmul.f32 %v695, %v699
    %vm701 = vweird.f32 %v684
    %vm702 = vweird.f32 %v695
    %vm703 = vmor %vm701, %vm702
    %v704 = vsel %vm703, %v695, %v700
    %v705 = vmul.f32 %v665, %v694
    %v706 = vmul.f32 %v666, %v704
    %v707 = vld [vmem:[%s3] sm:$0x3]
    %v709 = vperm.slane %v707, 0
    %v710 = vperm.slane %v707, 1
    %v713 = vmul.f32 %v705, %v709
    %v714 = vmul.f32 %v706, %v710
    %v715 = vld [vmem:[%s4] sm:$0x3]
    %v717 = vperm.slane %v715, 0
    %v718 = vperm.slane %v715, 1
    %v721 = vadd.f32 %v713, %v717
    %v722 = vadd.f32 %v714, %v718
    %v723 = vmax.f32 %v721, 0.0
    %v724 = vmax.f32 %v722, 0.0
    %v725 = vld [vmem:[%s5] sm:$0xff]
    %v726 = vld [vmem:[%s5 + $0x8] sm:$0xff]
    %v727 = vld [vmem:[%s5 + $0x10] sm:$0xff]
    %v728 = vld [vmem:[%s5 + $0x18] sm:$0xff]
    %v729 = vld [vmem:[%s5 + $0x20] sm:$0xff]
    %v730 = vld [vmem:[%s5 + $0x28] sm:$0xff]
    %v731 = vld [vmem:[%s5 + $0x30] sm:$0xff]
    %v732 = vld [vmem:[%s5 + $0x38] sm:$0xff]
    %v733 = vld [vmem:[%s5 + $0x40] sm:$0xff]
    %v734 = vld [vmem:[%s5 + $0x48] sm:$0xff]
    %v735 = vld [vmem:[%s5 + $0x50] sm:$0xff]
    %v736 = vld [vmem:[%s5 + $0x58] sm:$0xff]
    %v737 = vld [vmem:[%s5 + $0x60] sm:$0xff]
    %v738 = vld [vmem:[%s5 + $0x68] sm:$0xff]
    %v739 = vld [vmem:[%s5 + $0x70] sm:$0xff]
    %v740 = vld [vmem:[%s5 + $0x78] sm:$0xff]
    %v741 = vld [vmem:[%s5 + $0x80] sm:$0xff]
    %v742 = vld [vmem:[%s5 + $0x88] sm:$0xff]
    %v743 = vld [vmem:[%s5 + $0x90] sm:$0xff]
    %v744 = vld [vmem:[%s5 + $0x98] sm:$0xff]
    %v745 = vld [vmem:[%s5 + $0xa0] sm:$0xff]
    %v746 = vld [vmem:[%s5 + $0xa8] sm:$0xff]
    %v747 = vld [vmem:[%s5 + $0xb0] sm:$0xff]
    %v748 = vld [vmem:[%s5 + $0xb8] sm:$0xff]
    %v749 = vld [vmem:[%s5 + $0xc0] sm:$0xff]
    %v750 = vld [vmem:[%s5 + $0xc8] sm:$0xff]
    %v751 = vld [vmem:[%s5 + $0xd0] sm:$0xff]
    %v752 = vld [vmem:[%s5 + $0xd8] sm:$0xff]
    %v753 = vld [vmem:[%s5 + $0xe0] sm:$0xff]
    %v754 = vld [vmem:[%s5 + $0xe8] sm:$0xff]
    %v755 = vld [vmem:[%s5 + $0xf0] sm:$0xff]
    %v756 = vld [vmem:[%s5 + $0xf8] sm:$0xff]
    %v757 = vld [vmem:[%s5 + $0x100] sm:$0xff]
    %v758 = vld [vmem:[%s5 + $0x108] sm:$0xff]
    %v759 = vld [vmem:[%s5 + $0x110] sm:$0xff]
    %v760 = vld [vmem:[%s5 + $0x118] sm:$0xff]
    %v761 = vld [vmem:[%s5 + $0x120] sm:$0xff]
    %v762 = vld [vmem:[%s5 + $0x128] sm:$0xff]
    %v763 = vld [vmem:[%s5 + $0x130] sm:$0xff]
    %v764 = vld [vmem:[%s5 + $0x138] sm:$0xff]
    %v765 = vld [vmem:[%s5 + $0x140] sm:$0xff]
    %v766 = vld [vmem:[%s5 + $0x148] sm:$0xff]
    %v767 = vld [vmem:[%s5 + $0x150] sm:$0xff]
    %v768 = vld [vmem:[%s5 + $0x158] sm:$0xff]
    %v769 = vld [vmem:[%s5 + $0x160] sm:$0xff]
    %v770 = vld [vmem:[%s5 + $0x168] sm:$0xff]
    %v771 = vld [vmem:[%s5 + $0x170] sm:$0xff]
    %v772 = vld [vmem:[%s5 + $0x178] sm:$0xff]
    %v773 = vld [vmem:[%s5 + $0x180] sm:$0xff]
    %v774 = vld [vmem:[%s5 + $0x188] sm:$0xff]
    %v775 = vld [vmem:[%s5 + $0x190] sm:$0xff]
    %v776 = vld [vmem:[%s5 + $0x198] sm:$0xff]
    %v777 = vld [vmem:[%s5 + $0x1a0] sm:$0xff]
    %v778 = vld [vmem:[%s5 + $0x1a8] sm:$0xff]
    %v779 = vld [vmem:[%s5 + $0x1b0] sm:$0xff]
    %v780 = vld [vmem:[%s5 + $0x1b8] sm:$0xff]
    %v781 = vld [vmem:[%s5 + $0x1c0] sm:$0xff]
    %v782 = vld [vmem:[%s5 + $0x1c8] sm:$0xff]
    %v783 = vld [vmem:[%s5 + $0x1d0] sm:$0xff]
    %v784 = vld [vmem:[%s5 + $0x1d8] sm:$0xff]
    %v785 = vld [vmem:[%s5 + $0x1e0] sm:$0xff]
    %v786 = vld [vmem:[%s5 + $0x1e8] sm:$0xff]
    %v787 = vld [vmem:[%s5 + $0x1f0] sm:$0xff]
    %v788 = vld [vmem:[%s5 + $0x1f8] sm:$0xff]
    %v789 = vld [vmem:[%s6] sm:$0x3]
    %v791 = vperm.slane %v789, 0
    %v792 = vperm.slane %v789, 1
    %795 = vmatpush.msra.mxu0 %v755
    %796 = vmatpush.msra.mxu0 %v753
    %797 = vmatpush.msra.mxu0 %v751
    %798 = vmatpush.msra.mxu0 %v749
    %799 = vmatpush.msra.mxu0 %v747
    %800 = vmatpush.msra.mxu0 %v745
    %801 = vmatpush.msra.mxu0 %v743
    %802 = vmatpush.msra.mxu0 %v741
    %803 = vmatpush.msra.mxu0 %v739
    %804 = vmatpush.msra.mxu0 %v737
    %805 = vmatpush.msra.mxu0 %v735
    %806 = vmatpush.msra.mxu0 %v733
    %807 = vmatpush.msra.mxu0 %v731
    %808 = vmatpush.msra.mxu0 %v729
    %809 = vmatpush.msra.mxu0 %v727
    %810 = vmatpush.msra.mxu0 %v725
    %811 = vmatmul.f32.gmra.mxu0 %v723
    %v812 = vpop.f32.mrf.mxu0
    %v813 = vadd.f32 %v791, %v812
    %814 = vdwg.mxu0
    %815 = vmatpush.msra.mxu0 %v787
    %816 = vmatpush.msra.mxu0 %v785
    %817 = vmatpush.msra.mxu0 %v783
    %818 = vmatpush.msra.mxu0 %v781
    %819 = vmatpush.msra.mxu0 %v779
    %820 = vmatpush.msra.mxu0 %v777
    %821 = vmatpush.msra.mxu0 %v775
    %822 = vmatpush.msra.mxu0 %v773
    %823 = vmatpush.msra.mxu0 %v771
    %824 = vmatpush.msra.mxu0 %v769
    %825 = vmatpush.msra.mxu0 %v767
    %826 = vmatpush.msra.mxu0 %v765
    %827 = vmatpush.msra.mxu0 %v763
    %828 = vmatpush.msra.mxu0 %v761
    %829 = vmatpush.msra.mxu0 %v759
    %830 = vmatpush.msra.mxu0 %v757
    %831 = vmatmul.f32.gmra.mxu0 %v724
    %v832 = vpop.f32.mrf.mxu0
    %v833 = vadd.f32 %v813, %v832
    %834 = vdwg.mxu0
    %835 = vmatpush.msra.mxu0 %v756
    %836 = vmatpush.msra.mxu0 %v754
    %837 = vmatpush.msra.mxu0 %v752
    %838 = vmatpush.msra.mxu0 %v750
    %839 = vmatpush.msra.mxu0 %v748
    %840 = vmatpush.msra.mxu0 %v746
    %841 = vmatpush.msra.mxu0 %v744
    %842 = vmatpush.msra.mxu0 %v742
    %843 = vmatpush.msra.mxu0 %v740
    %844 = vmatpush.msra.mxu0 %v738
    %845 = vmatpush.msra.mxu0 %v736
    %846 = vmatpush.msra.mxu0 %v734
    %847 = vmatpush.msra.mxu0 %v732
    %848 = vmatpush.msra.mxu0 %v730
    %849 = vmatpush.msra.mxu0 %v728
    %850 = vmatpush.msra.mxu0 %v726
    %851 = vmatmul.f32.gmra.mxu0 %v723
    %v852 = vpop.f32.mrf.mxu0
    %v853 = vadd.f32 %v792, %v852
    %854 = vdwg.mxu0
    %855 = vmatpush.msra.mxu0 %v788
    %856 = vmatpush.msra.mxu0 %v786
    %857 = vmatpush.msra.mxu0 %v784
    %858 = vmatpush.msra.mxu0 %v782
    %859 = vmatpush.msra.mxu0 %v780
    %860 = vmatpush.msra.mxu0 %v778
    %861 = vmatpush.msra.mxu0 %v776
    %862 = vmatpush.msra.mxu0 %v774
    %863 = vmatpush.msra.mxu0 %v772
    %864 = vmatpush.msra.mxu0 %v770
    %865 = vmatpush.msra.mxu0 %v768
    %866 = vmatpush.msra.mxu0 %v766
    %867 = vmatpush.msra.mxu0 %v764
    %868 = vmatpush.msra.mxu0 %v762
    %869 = vmatpush.msra.mxu0 %v760
    %870 = vmatpush.msra.mxu0 %v758
    %871 = vmatmul.f32.gmra.mxu0 %v724
    %v872 = vpop.f32.mrf.mxu0
    %v873 = vadd.f32 %v853, %v872
    %874 = vdwg.mxu0
    %v875 = vld [vmem:[%s7] sm:$0xff]
    %v876 = vld [vmem:[%s7 + $0x8] sm:$0xff]
    %v877 = vld [vmem:[%s7 + $0x10] sm:$0xff]
    %v878 = vld [vmem:[%s7 + $0x18] sm:$0xff]
    %v879 = vld [vmem:[%s7 + $0x20] sm:$0xff]
    %v880 = vld [vmem:[%s7 + $0x28] sm:$0xff]
    %v881 = vld [vmem:[%s7 + $0x30] sm:$0xff]
    %v882 = vld [vmem:[%s7 + $0x38] sm:$0xff]
    %v883 = vld [vmem:[%s7 + $0x40] sm:$0xff]
    %v884 = vld [vmem:[%s7 + $0x48] sm:$0xff]
    %v885 = vld [vmem:[%s7 + $0x50] sm:$0xff]
    %v886 = vld [vmem:[%s7 + $0x58] sm:$0xff]
    %v887 = vld [vmem:[%s7 + $0x60] sm:$0xff]
    %v888 = vld [vmem:[%s7 + $0x68] sm:$0xff]
    %v889 = vld [vmem:[%s7 + $0x70] sm:$0xff]
    %v890 = vld [vmem:[%s7 + $0x78] sm:$0xff]
    %v891 = vld [vmem:[%s7 + $0x80] sm:$0xff]
    %v892 = vld [vmem:[%s7 + $0x88] sm:$0xff]
    %v893 = vld [vmem:[%s7 + $0x90] sm:$0xff]
    %v894 = vld [vmem:[%s7 + $0x98] sm:$0xff]
    %v895 = vld [vmem:[%s7 + $0xa0] sm:$0xff]
    %v896 = vld [vmem:[%s7 + $0xa8] sm:$0xff]
    %v897 = vld [vmem:[%s7 + $0xb0] sm:$0xff]
    %v898 = vld [vmem:[%s7 + $0xb8] sm:$0xff]
    %v899 = vld [vmem:[%s7 + $0xc0] sm:$0xff]
    %v900 = vld [vmem:[%s7 + $0xc8] sm:$0xff]
    %v901 = vld [vmem:[%s7 + $0xd0] sm:$0xff]
    %v902 = vld [vmem:[%s7 + $0xd8] sm:$0xff]
    %v903 = vld [vmem:[%s7 + $0xe0] sm:$0xff]
    %v904 = vld [vmem:[%s7 + $0xe8] sm:$0xff]
    %v905 = vld [vmem:[%s7 + $0xf0] sm:$0xff]
    %v906 = vld [vmem:[%s7 + $0xf8] sm:$0xff]
    %v907 = vld [vmem:[%s7 + $0x100] sm:$0xff]
    %v908 = vld [vmem:[%s7 + $0x108] sm:$0xff]
    %v909 = vld [vmem:[%s7 + $0x110] sm:$0xff]
    %v910 = vld [vmem:[%s7 + $0x118] sm:$0xff]
    %v911 = vld [vmem:[%s7 + $0x120] sm:$0xff]
    %v912 = vld [vmem:[%s7 + $0x128] sm:$0xff]
    %v913 = vld [vmem:[%s7 + $0x130] sm:$0xff]
    %v914 = vld [vmem:[%s7 + $0x138] sm:$0xff]
    %v915 = vld [vmem:[%s7 + $0x140] sm:$0xff]
    %v916 = vld [vmem:[%s7 + $0x148] sm:$0xff]
    %v917 = vld [vmem:[%s7 + $0x150] sm:$0xff]
    %v918 = vld [vmem:[%s7 + $0x158] sm:$0xff]
    %v919 = vld [vmem:[%s7 + $0x160] sm:$0xff]
    %v920 = vld [vmem:[%s7 + $0x168] sm:$0xff]
    %v921 = vld [vmem:[%s7 + $0x170] sm:$0xff]
    %v922 = vld [vmem:[%s7 + $0x178] sm:$0xff]
    %v923 = vld [vmem:[%s7 + $0x180] sm:$0xff]
    %v924 = vld [vmem:[%s7 + $0x188] sm:$0xff]
    %v925 = vld [vmem:[%s7 + $0x190] sm:$0xff]
    %v926 = vld [vmem:[%s7 + $0x198] sm:$0xff]
    %v927 = vld [vmem:[%s7 + $0x1a0] sm:$0xff]
    %v928 = vld [vmem:[%s7 + $0x1a8] sm:$0xff]
    %v929 = vld [vmem:[%s7 + $0x1b0] sm:$0xff]
    %v930 = vld [vmem:[%s7 + $0x1b8] sm:$0xff]
    %v931 = vld [vmem:[%s7 + $0x1c0] sm:$0xff]
    %v932 = vld [vmem:[%s7 + $0x1c8] sm:$0xff]
    %v933 = vld [vmem:[%s7 + $0x1d0] sm:$0xff]
    %v934 = vld [vmem:[%s7 + $0x1d8] sm:$0xff]
    %v935 = vld [vmem:[%s7 + $0x1e0] sm:$0xff]
    %v936 = vld [vmem:[%s7 + $0x1e8] sm:$0xff]
    %v937 = vld [vmem:[%s7 + $0x1f0] sm:$0xff]
    %v938 = vld [vmem:[%s7 + $0x1f8] sm:$0xff]
    %v939 = vld [vmem:[%s7 + $0x200] sm:$0xff]
    %v940 = vld [vmem:[%s7 + $0x208] sm:$0xff]
    %v941 = vld [vmem:[%s7 + $0x210] sm:$0xff]
    %v942 = vld [vmem:[%s7 + $0x218] sm:$0xff]
    %v943 = vld [vmem:[%s7 + $0x220] sm:$0xff]
    %v944 = vld [vmem:[%s7 + $0x228] sm:$0xff]
    %v945 = vld [vmem:[%s7 + $0x230] sm:$0xff]
    %v946 = vld [vmem:[%s7 + $0x238] sm:$0xff]
    %v947 = vld [vmem:[%s7 + $0x240] sm:$0xff]
    %v948 = vld [vmem:[%s7 + $0x248] sm:$0xff]
    %v949 = vld [vmem:[%s7 + $0x250] sm:$0xff]
    %v950 = vld [vmem:[%s7 + $0x258] sm:$0xff]
    %v951 = vld [vmem:[%s7 + $0x260] sm:$0xff]
    %v952 = vld [vmem:[%s7 + $0x268] sm:$0xff]
    %v953 = vld [vmem:[%s7 + $0x270] sm:$0xff]
    %v954 = vld [vmem:[%s7 + $0x278] sm:$0xff]
    %v955 = vld [vmem:[%s7 + $0x280] sm:$0xff]
    %v956 = vld [vmem:[%s7 + $0x288] sm:$0xff]
    %v957 = vld [vmem:[%s7 + $0x290] sm:$0xff]
    %v958 = vld [vmem:[%s7 + $0x298] sm:$0xff]
    %v959 = vld [vmem:[%s7 + $0x2a0] sm:$0xff]
    %v960 = vld [vmem:[%s7 + $0x2a8] sm:$0xff]
    %v961 = vld [vmem:[%s7 + $0x2b0] sm:$0xff]
    %v962 = vld [vmem:[%s7 + $0x2b8] sm:$0xff]
    %v963 = vld [vmem:[%s7 + $0x2c0] sm:$0xff]
    %v964 = vld [vmem:[%s7 + $0x2c8] sm:$0xff]
    %v965 = vld [vmem:[%s7 + $0x2d0] sm:$0xff]
    %v966 = vld [vmem:[%s7 + $0x2d8] sm:$0xff]
    %v967 = vld [vmem:[%s7 + $0x2e0] sm:$0xff]
    %v968 = vld [vmem:[%s7 + $0x2e8] sm:$0xff]
    %v969 = vld [vmem:[%s7 + $0x2f0] sm:$0xff]
    %v970 = vld [vmem:[%s7 + $0x2f8] sm:$0xff]
    %v971 = vld [vmem:[%s7 + $0x300] sm:$0xff]
    %v972 = vld [vmem:[%s7 + $0x308] sm:$0xff]
    %v973 = vld [vmem:[%s7 + $0x310] sm:$0xff]
    %v974 = vld [vmem:[%s7 + $0x318] sm:$0xff]
    %v975 = vld [vmem:[%s7 + $0x320] sm:$0xff]
    %v976 = vld [vmem:[%s7 + $0x328] sm:$0xff]
    %v977 = vld [vmem:[%s7 + $0x330] sm:$0xff]
    %v978 = vld [vmem:[%s7 + $0x338] sm:$0xff]
    %v979 = vld [vmem:[%s7 + $0x340] sm:$0xff]
    %v980 = vld [vmem:[%s7 + $0x348] sm:$0xff]
    %v981 = vld [vmem:[%s7 + $0x350] sm:$0xff]
    %v982 = vld [vmem:[%s7 + $0x358] sm:$0xff]
    %v983 = vld [vmem:[%s7 + $0x360] sm:$0xff]
    %v984 = vld [vmem:[%s7 + $0x368] sm:$0xff]
    %v985 = vld [vmem:[%s7 + $0x370] sm:$0xff]
    %v986 = vld [vmem:[%s7 + $0x378] sm:$0xff]
    %v987 = vld [vmem:[%s7 + $0x380] sm:$0xff]
    %v988 = vld [vmem:[%s7 + $0x388] sm:$0xff]
    %v989 = vld [vmem:[%s7 + $0x390] sm:$0xff]
    %v990 = vld [vmem:[%s7 + $0x398] sm:$0xff]
    %v991 = vld [vmem:[%s7 + $0x3a0] sm:$0xff]
    %v992 = vld [vmem:[%s7 + $0x3a8] sm:$0xff]
    %v993 = vld [vmem:[%s7 + $0x3b0] sm:$0xff]
    %v994 = vld [vmem:[%s7 + $0x3b8] sm:$0xff]
    %v995 = vld [vmem:[%s7 + $0x3c0] sm:$0xff]
    %v996 = vld [vmem:[%s7 + $0x3c8] sm:$0xff]
    %v997 = vld [vmem:[%s7 + $0x3d0] sm:$0xff]
    %v998 = vld [vmem:[%s7 + $0x3d8] sm:$0xff]
    %v999 = vld [vmem:[%s7 + $0x3e0] sm:$0xff]
    %v1000 = vld [vmem:[%s7 + $0x3e8] sm:$0xff]
    %v1001 = vld [vmem:[%s7 + $0x3f0] sm:$0xff]
    %v1002 = vld [vmem:[%s7 + $0x3f8] sm:$0xff]
    %v1003 = vld [vmem:[%s7 + $0x400] sm:$0xff]
    %v1004 = vld [vmem:[%s7 + $0x408] sm:$0xff]
    %v1005 = vld [vmem:[%s7 + $0x410] sm:$0xff]
    %v1006 = vld [vmem:[%s7 + $0x418] sm:$0xff]
    %v1007 = vld [vmem:[%s7 + $0x420] sm:$0xff]
    %v1008 = vld [vmem:[%s7 + $0x428] sm:$0xff]
    %v1009 = vld [vmem:[%s7 + $0x430] sm:$0xff]
    %v1010 = vld [vmem:[%s7 + $0x438] sm:$0xff]
    %v1011 = vld [vmem:[%s7 + $0x440] sm:$0xff]
    %v1012 = vld [vmem:[%s7 + $0x448] sm:$0xff]
    %v1013 = vld [vmem:[%s7 + $0x450] sm:$0xff]
    %v1014 = vld [vmem:[%s7 + $0x458] sm:$0xff]
    %v1015 = vld [vmem:[%s7 + $0x460] sm:$0xff]
    %v1016 = vld [vmem:[%s7 + $0x468] sm:$0xff]
    %v1017 = vld [vmem:[%s7 + $0x470] sm:$0xff]
    %v1018 = vld [vmem:[%s7 + $0x478] sm:$0xff]
    %v1019 = vld [vmem:[%s7 + $0x480] sm:$0xff]
    %v1020 = vld [vmem:[%s7 + $0x488] sm:$0xff]
    %v1021 = vld [vmem:[%s7 + $0x490] sm:$0xff]
    %v1022 = vld [vmem:[%s7 + $0x498] sm:$0xff]
    %v1023 = vld [vmem:[%s7 + $0x4a0] sm:$0xff]
    %v1024 = vld [vmem:[%s7 + $0x4a8] sm:$0xff]
    %v1025 = vld [vmem:[%s7 + $0x4b0] sm:$0xff]
    %v1026 = vld [vmem:[%s7 + $0x4b8] sm:$0xff]
    %v1027 = vld [vmem:[%s7 + $0x4c0] sm:$0xff]
    %v1028 = vld [vmem:[%s7 + $0x4c8] sm:$0xff]
    %v1029 = vld [vmem:[%s7 + $0x4d0] sm:$0xff]
    %v1030 = vld [vmem:[%s7 + $0x4d8] sm:$0xff]
    %v1031 = vld [vmem:[%s7 + $0x4e0] sm:$0xff]
    %v1032 = vld [vmem:[%s7 + $0x4e8] sm:$0xff]
    %v1033 = vld [vmem:[%s7 + $0x4f0] sm:$0xff]
    %v1034 = vld [vmem:[%s7 + $0x4f8] sm:$0xff]
    %v1035 = vld [vmem:[%s7 + $0x500] sm:$0xff]
    %v1036 = vld [vmem:[%s7 + $0x508] sm:$0xff]
    %v1037 = vld [vmem:[%s7 + $0x510] sm:$0xff]
    %v1038 = vld [vmem:[%s7 + $0x518] sm:$0xff]
    %v1039 = vld [vmem:[%s7 + $0x520] sm:$0xff]
    %v1040 = vld [vmem:[%s7 + $0x528] sm:$0xff]
    %v1041 = vld [vmem:[%s7 + $0x530] sm:$0xff]
    %v1042 = vld [vmem:[%s7 + $0x538] sm:$0xff]
    %v1043 = vld [vmem:[%s7 + $0x540] sm:$0xff]
    %v1044 = vld [vmem:[%s7 + $0x548] sm:$0xff]
    %v1045 = vld [vmem:[%s7 + $0x550] sm:$0xff]
    %v1046 = vld [vmem:[%s7 + $0x558] sm:$0xff]
    %v1047 = vld [vmem:[%s7 + $0x560] sm:$0xff]
    %v1048 = vld [vmem:[%s7 + $0x568] sm:$0xff]
    %v1049 = vld [vmem:[%s7 + $0x570] sm:$0xff]
    %v1050 = vld [vmem:[%s7 + $0x578] sm:$0xff]
    %v1051 = vld [vmem:[%s7 + $0x580] sm:$0xff]
    %v1052 = vld [vmem:[%s7 + $0x588] sm:$0xff]
    %v1053 = vld [vmem:[%s7 + $0x590] sm:$0xff]
    %v1054 = vld [vmem:[%s7 + $0x598] sm:$0xff]
    %v1055 = vld [vmem:[%s7 + $0x5a0] sm:$0xff]
    %v1056 = vld [vmem:[%s7 + $0x5a8] sm:$0xff]
    %v1057 = vld [vmem:[%s7 + $0x5b0] sm:$0xff]
    %v1058 = vld [vmem:[%s7 + $0x5b8] sm:$0xff]
    %v1059 = vld [vmem:[%s7 + $0x5c0] sm:$0xff]
    %v1060 = vld [vmem:[%s7 + $0x5c8] sm:$0xff]
    %v1061 = vld [vmem:[%s7 + $0x5d0] sm:$0xff]
    %v1062 = vld [vmem:[%s7 + $0x5d8] sm:$0xff]
    %v1063 = vld [vmem:[%s7 + $0x5e0] sm:$0xff]
    %v1064 = vld [vmem:[%s7 + $0x5e8] sm:$0xff]
    %v1065 = vld [vmem:[%s7 + $0x5f0] sm:$0xff]
    %v1066 = vld [vmem:[%s7 + $0x5f8] sm:$0xff]
    %v1067 = vld [vmem:[%s8] sm:$0x3f]
    %v1069 = vperm.slane %v1067, 0
    %v1070 = vperm.slane %v1067, 1
    %v1071 = vperm.slane %v1067, 2
    %v1072 = vperm.slane %v1067, 3
    %v1073 = vperm.slane %v1067, 4
    %v1074 = vperm.slane %v1067, 5
    %1081 = vmatpush.msra.mxu0 %v965
    %1082 = vmatpush.msra.mxu0 %v959
    %1083 = vmatpush.msra.mxu0 %v953
    %1084 = vmatpush.msra.mxu0 %v947
    %1085 = vmatpush.msra.mxu0 %v941
    %1086 = vmatpush.msra.mxu0 %v935
    %1087 = vmatpush.msra.mxu0 %v929
    %1088 = vmatpush.msra.mxu0 %v923
    %1089 = vmatpush.msra.mxu0 %v917
    %1090 = vmatpush.msra.mxu0 %v911
    %1091 = vmatpush.msra.mxu0 %v905
    %1092 = vmatpush.msra.mxu0 %v899
    %1093 = vmatpush.msra.mxu0 %v893
    %1094 = vmatpush.msra.mxu0 %v887
    %1095 = vmatpush.msra.mxu0 %v881
    %1096 = vmatpush.msra.mxu0 %v875
    %1097 = vmatmul.f32.gmra.mxu0 %v833
    %v1098 = vpop.f32.mrf.mxu0
    %v1099 = vadd.f32 %v1069, %v1098
    %1100 = vdwg.mxu0
    %1101 = vmatpush.msra.mxu0 %v1061
    %1102 = vmatpush.msra.mxu0 %v1055
    %1103 = vmatpush.msra.mxu0 %v1049
    %1104 = vmatpush.msra.mxu0 %v1043
    %1105 = vmatpush.msra.mxu0 %v1037
    %1106 = vmatpush.msra.mxu0 %v1031
    %1107 = vmatpush.msra.mxu0 %v1025
    %1108 = vmatpush.msra.mxu0 %v1019
    %1109 = vmatpush.msra.mxu0 %v1013
    %1110 = vmatpush.msra.mxu0 %v1007
    %1111 = vmatpush.msra.mxu0 %v1001
    %1112 = vmatpush.msra.mxu0 %v995
    %1113 = vmatpush.msra.mxu0 %v989
    %1114 = vmatpush.msra.mxu0 %v983
    %1115 = vmatpush.msra.mxu0 %v977
    %1116 = vmatpush.msra.mxu0 %v971
    %1117 = vmatmul.f32.gmra.mxu0 %v873
    %v1118 = vpop.f32.mrf.mxu0
    %v1119 = vadd.f32 %v1099, %v1118
    %1120 = vdwg.mxu0
    %1121 = vmatpush.msra.mxu0 %v966
    %1122 = vmatpush.msra.mxu0 %v960
    %1123 = vmatpush.msra.mxu0 %v954
    %1124 = vmatpush.msra.mxu0 %v948
    %1125 = vmatpush.msra.mxu0 %v942
    %1126 = vmatpush.msra.mxu0 %v936
    %1127 = vmatpush.msra.mxu0 %v930
    %1128 = vmatpush.msra.mxu0 %v924
    %1129 = vmatpush.msra.mxu0 %v918
    %1130 = vmatpush.msra.mxu0 %v912
    %1131 = vmatpush.msra.mxu0 %v906
    %1132 = vmatpush.msra.mxu0 %v900
    %1133 = vmatpush.msra.mxu0 %v894
    %1134 = vmatpush.msra.mxu0 %v888
    %1135 = vmatpush.msra.mxu0 %v882
    %1136 = vmatpush.msra.mxu0 %v876
    %1137 = vmatmul.f32.gmra.mxu0 %v833
    %v1138 = vpop.f32.mrf.mxu0
    %v1139 = vadd.f32 %v1070, %v1138
    %1140 = vdwg.mxu0
    %1141 = vmatpush.msra.mxu0 %v1062
    %1142 = vmatpush.msra.mxu0 %v1056
    %1143 = vmatpush.msra.mxu0 %v1050
    %1144 = vmatpush.msra.mxu0 %v1044
    %1145 = vmatpush.msra.mxu0 %v1038
    %1146 = vmatpush.msra.mxu0 %v1032
    %1147 = vmatpush.msra.mxu0 %v1026
    %1148 = vmatpush.msra.mxu0 %v1020
    %1149 = vmatpush.msra.mxu0 %v1014
    %1150 = vmatpush.msra.mxu0 %v1008
    %1151 = vmatpush.msra.mxu0 %v1002
    %1152 = vmatpush.msra.mxu0 %v996
    %1153 = vmatpush.msra.mxu0 %v990
    %1154 = vmatpush.msra.mxu0 %v984
    %1155 = vmatpush.msra.mxu0 %v978
    %1156 = vmatpush.msra.mxu0 %v972
    %1157 = vmatmul.f32.gmra.mxu0 %v873
    %v1158 = vpop.f32.mrf.mxu0
    %v1159 = vadd.f32 %v1139, %v1158
    %1160 = vdwg.mxu0
    %1161 = vmatpush.msra.mxu0 %v967
    %1162 = vmatpush.msra.mxu0 %v961
    %1163 = vmatpush.msra.mxu0 %v955
    %1164 = vmatpush.msra.mxu0 %v949
    %1165 = vmatpush.msra.mxu0 %v943
    %1166 = vmatpush.msra.mxu0 %v937
    %1167 = vmatpush.msra.mxu0 %v931
    %1168 = vmatpush.msra.mxu0 %v925
    %1169 = vmatpush.msra.mxu0 %v919
    %1170 = vmatpush.msra.mxu0 %v913
    %1171 = vmatpush.msra.mxu0 %v907
    %1172 = vmatpush.msra.mxu0 %v901
    %1173 = vmatpush.msra.mxu0 %v895
    %1174 = vmatpush.msra.mxu0 %v889
    %1175 = vmatpush.msra.mxu0 %v883
    %1176 = vmatpush.msra.mxu0 %v877
    %1177 = vmatmul.f32.gmra.mxu0 %v833
    %v1178 = vpop.f32.mrf.mxu0
    %v1179 = vadd.f32 %v1071, %v1178
    %1180 = vdwg.mxu0
    %1181 = vmatpush.msra.mxu0 %v1063
    %1182 = vmatpush.msra.mxu0 %v1057
    %1183 = vmatpush.msra.mxu0 %v1051
    %1184 = vmatpush.msra.mxu0 %v1045
    %1185 = vmatpush.msra.mxu0 %v1039
    %1186 = vmatpush.msra.mxu0 %v1033
    %1187 = vmatpush.msra.mxu0 %v1027
    %1188 = vmatpush.msra.mxu0 %v1021
    %1189 = vmatpush.msra.mxu0 %v1015
    %1190 = vmatpush.msra.mxu0 %v1009
    %1191 = vmatpush.msra.mxu0 %v1003
    %1192 = vmatpush.msra.mxu0 %v997
    %1193 = vmatpush.msra.mxu0 %v991
    %1194 = vmatpush.msra.mxu0 %v985
    %1195 = vmatpush.msra.mxu0 %v979
    %1196 = vmatpush.msra.mxu0 %v973
    %1197 = vmatmul.f32.gmra.mxu0 %v873
    %v1198 = vpop.f32.mrf.mxu0
    %v1199 = vadd.f32 %v1179, %v1198
    %1200 = vdwg.mxu0
    %1201 = vmatpush.msra.mxu0 %v968
    %1202 = vmatpush.msra.mxu0 %v962
    %1203 = vmatpush.msra.mxu0 %v956
    %1204 = vmatpush.msra.mxu0 %v950
    %1205 = vmatpush.msra.mxu0 %v944
    %1206 = vmatpush.msra.mxu0 %v938
    %1207 = vmatpush.msra.mxu0 %v932
    %1208 = vmatpush.msra.mxu0 %v926
    %1209 = vmatpush.msra.mxu0 %v920
    %1210 = vmatpush.msra.mxu0 %v914
    %1211 = vmatpush.msra.mxu0 %v908
    %1212 = vmatpush.msra.mxu0 %v902
    %1213 = vmatpush.msra.mxu0 %v896
    %1214 = vmatpush.msra.mxu0 %v890
    %1215 = vmatpush.msra.mxu0 %v884
    %1216 = vmatpush.msra.mxu0 %v878
    %1217 = vmatmul.f32.gmra.mxu0 %v833
    %v1218 = vpop.f32.mrf.mxu0
    %v1219 = vadd.f32 %v1072, %v1218
    %1220 = vdwg.mxu0
    %1221 = vmatpush.msra.mxu0 %v1064
    %1222 = vmatpush.msra.mxu0 %v1058
    %1223 = vmatpush.msra.mxu0 %v1052
    %1224 = vmatpush.msra.mxu0 %v1046
    %1225 = vmatpush.msra.mxu0 %v1040
    %1226 = vmatpush.msra.mxu0 %v1034
    %1227 = vmatpush.msra.mxu0 %v1028
    %1228 = vmatpush.msra.mxu0 %v1022
    %1229 = vmatpush.msra.mxu0 %v1016
    %1230 = vmatpush.msra.mxu0 %v1010
    %1231 = vmatpush.msra.mxu0 %v1004
    %1232 = vmatpush.msra.mxu0 %v998
    %1233 = vmatpush.msra.mxu0 %v992
    %1234 = vmatpush.msra.mxu0 %v986
    %1235 = vmatpush.msra.mxu0 %v980
    %1236 = vmatpush.msra.mxu0 %v974
    %1237 = vmatmul.f32.gmra.mxu0 %v873
    %v1238 = vpop.f32.mrf.mxu0
    %v1239 = vadd.f32 %v1219, %v1238
    %1240 = vdwg.mxu0
    %1241 = vmatpush.msra.mxu0 %v969
    %1242 = vmatpush.msra.mxu0 %v963
    %1243 = vmatpush.msra.mxu0 %v957
    %1244 = vmatpush.msra.mxu0 %v951
    %1245 = vmatpush.msra.mxu0 %v945
    %1246 = vmatpush.msra.mxu0 %v939
    %1247 = vmatpush.msra.mxu0 %v933
    %1248 = vmatpush.msra.mxu0 %v927
    %1249 = vmatpush.msra.mxu0 %v921
    %1250 = vmatpush.msra.mxu0 %v915
    %1251 = vmatpush.msra.mxu0 %v909
    %1252 = vmatpush.msra.mxu0 %v903
    %1253 = vmatpush.msra.mxu0 %v897
    %1254 = vmatpush.msra.mxu0 %v891
    %1255 = vmatpush.msra.mxu0 %v885
    %1256 = vmatpush.msra.mxu0 %v879
    %1257 = vmatmul.f32.gmra.mxu0 %v833
    %v1258 = vpop.f32.mrf.mxu0
    %v1259 = vadd.f32 %v1073, %v1258
    %1260 = vdwg.mxu0
    %1261 = vmatpush.msra.mxu0 %v1065
    %1262 = vmatpush.msra.mxu0 %v1059
    %1263 = vmatpush.msra.mxu0 %v1053
    %1264 = vmatpush.msra.mxu0 %v1047
    %1265 = vmatpush.msra.mxu0 %v1041
    %1266 = vmatpush.msra.mxu0 %v1035
    %1267 = vmatpush.msra.mxu0 %v1029
    %1268 = vmatpush.msra.mxu0 %v1023
    %1269 = vmatpush.msra.mxu0 %v1017
    %1270 = vmatpush.msra.mxu0 %v1011
    %1271 = vmatpush.msra.mxu0 %v1005
    %1272 = vmatpush.msra.mxu0 %v999
    %1273 = vmatpush.msra.mxu0 %v993
    %1274 = vmatpush.msra.mxu0 %v987
    %1275 = vmatpush.msra.mxu0 %v981
    %1276 = vmatpush.msra.mxu0 %v975
    %1277 = vmatmul.f32.gmra.mxu0 %v873
    %v1278 = vpop.f32.mrf.mxu0
    %v1279 = vadd.f32 %v1259, %v1278
    %1280 = vdwg.mxu0
    %1281 = vmatpush.msra.mxu0 %v970
    %1282 = vmatpush.msra.mxu0 %v964
    %1283 = vmatpush.msra.mxu0 %v958
    %1284 = vmatpush.msra.mxu0 %v952
    %1285 = vmatpush.msra.mxu0 %v946
    %1286 = vmatpush.msra.mxu0 %v940
    %1287 = vmatpush.msra.mxu0 %v934
    %1288 = vmatpush.msra.mxu0 %v928
    %1289 = vmatpush.msra.mxu0 %v922
    %1290 = vmatpush.msra.mxu0 %v916
    %1291 = vmatpush.msra.mxu0 %v910
    %1292 = vmatpush.msra.mxu0 %v904
    %1293 = vmatpush.msra.mxu0 %v898
    %1294 = vmatpush.msra.mxu0 %v892
    %1295 = vmatpush.msra.mxu0 %v886
    %1296 = vmatpush.msra.mxu0 %v880
    %1297 = vmatmul.f32.gmra.mxu0 %v833
    %v1298 = vpop.f32.mrf.mxu0
    %v1299 = vadd.f32 %v1074, %v1298
    %1300 = vdwg.mxu0
    %1301 = vmatpush.msra.mxu0 %v1066
    %1302 = vmatpush.msra.mxu0 %v1060
    %1303 = vmatpush.msra.mxu0 %v1054
    %1304 = vmatpush.msra.mxu0 %v1048
    %1305 = vmatpush.msra.mxu0 %v1042
    %1306 = vmatpush.msra.mxu0 %v1036
    %1307 = vmatpush.msra.mxu0 %v1030
    %1308 = vmatpush.msra.mxu0 %v1024
    %1309 = vmatpush.msra.mxu0 %v1018
    %1310 = vmatpush.msra.mxu0 %v1012
    %1311 = vmatpush.msra.mxu0 %v1006
    %1312 = vmatpush.msra.mxu0 %v1000
    %1313 = vmatpush.msra.mxu0 %v994
    %1314 = vmatpush.msra.mxu0 %v988
    %1315 = vmatpush.msra.mxu0 %v982
    %1316 = vmatpush.msra.mxu0 %v976
    %1317 = vmatmul.f32.gmra.mxu0 %v873
    %v1318 = vpop.f32.mrf.mxu0
    %v1319 = vadd.f32 %v1299, %v1318
    %1320 = vdwg.mxu0
    %v1321 = vld [vmem:[%s9] sm:$0xff]
    %v1322 = vld [vmem:[%s9 + $0x8] sm:$0xff]
    %v1323 = vld [vmem:[%s9 + $0x10] sm:$0xff]
    %v1324 = vld [vmem:[%s9 + $0x18] sm:$0xff]
    %v1325 = vld [vmem:[%s9 + $0x20] sm:$0xff]
    %v1326 = vld [vmem:[%s9 + $0x28] sm:$0xff]
    %v1327 = vld [vmem:[%s9 + $0x30] sm:$0xff]
    %v1328 = vld [vmem:[%s9 + $0x38] sm:$0xff]
    %v1329 = vld [vmem:[%s9 + $0x40] sm:$0xff]
    %v1330 = vld [vmem:[%s9 + $0x48] sm:$0xff]
    %v1331 = vld [vmem:[%s9 + $0x50] sm:$0xff]
    %v1332 = vld [vmem:[%s9 + $0x58] sm:$0xff]
    %v1333 = vld [vmem:[%s9 + $0x60] sm:$0xff]
    %v1334 = vld [vmem:[%s9 + $0x68] sm:$0xff]
    %v1335 = vld [vmem:[%s9 + $0x70] sm:$0xff]
    %v1336 = vld [vmem:[%s9 + $0x78] sm:$0xff]
    %v1337 = vld [vmem:[%s9 + $0x80] sm:$0xff]
    %v1338 = vld [vmem:[%s9 + $0x88] sm:$0xff]
    %v1339 = vld [vmem:[%s9 + $0x90] sm:$0xff]
    %v1340 = vld [vmem:[%s9 + $0x98] sm:$0xff]
    %v1341 = vld [vmem:[%s9 + $0xa0] sm:$0xff]
    %v1342 = vld [vmem:[%s9 + $0xa8] sm:$0xff]
    %v1343 = vld [vmem:[%s9 + $0xb0] sm:$0xff]
    %v1344 = vld [vmem:[%s9 + $0xb8] sm:$0xff]
    %v1345 = vld [vmem:[%s9 + $0xc0] sm:$0xff]
    %v1346 = vld [vmem:[%s9 + $0xc8] sm:$0xff]
    %v1347 = vld [vmem:[%s9 + $0xd0] sm:$0xff]
    %v1348 = vld [vmem:[%s9 + $0xd8] sm:$0xff]
    %v1349 = vld [vmem:[%s9 + $0xe0] sm:$0xff]
    %v1350 = vld [vmem:[%s9 + $0xe8] sm:$0xff]
    %v1351 = vld [vmem:[%s9 + $0xf0] sm:$0xff]
    %v1352 = vld [vmem:[%s9 + $0xf8] sm:$0xff]
    %v1353 = vld [vmem:[%s9 + $0x100] sm:$0xff]
    %v1354 = vld [vmem:[%s9 + $0x108] sm:$0xff]
    %v1355 = vld [vmem:[%s9 + $0x110] sm:$0xff]
    %v1356 = vld [vmem:[%s9 + $0x118] sm:$0xff]
    %v1357 = vld [vmem:[%s9 + $0x120] sm:$0xff]
    %v1358 = vld [vmem:[%s9 + $0x128] sm:$0xff]
    %v1359 = vld [vmem:[%s9 + $0x130] sm:$0xff]
    %v1360 = vld [vmem:[%s9 + $0x138] sm:$0xff]
    %v1361 = vld [vmem:[%s9 + $0x140] sm:$0xff]
    %v1362 = vld [vmem:[%s9 + $0x148] sm:$0xff]
    %v1363 = vld [vmem:[%s9 + $0x150] sm:$0xff]
    %v1364 = vld [vmem:[%s9 + $0x158] sm:$0xff]
    %v1365 = vld [vmem:[%s9 + $0x160] sm:$0xff]
    %v1366 = vld [vmem:[%s9 + $0x168] sm:$0xff]
    %v1367 = vld [vmem:[%s9 + $0x170] sm:$0xff]
    %v1368 = vld [vmem:[%s9 + $0x178] sm:$0xff]
    %v1369 = vld [vmem:[%s9 + $0x180] sm:$0xff]
    %v1370 = vld [vmem:[%s9 + $0x188] sm:$0xff]
    %v1371 = vld [vmem:[%s9 + $0x190] sm:$0xff]
    %v1372 = vld [vmem:[%s9 + $0x198] sm:$0xff]
    %v1373 = vld [vmem:[%s9 + $0x1a0] sm:$0xff]
    %v1374 = vld [vmem:[%s9 + $0x1a8] sm:$0xff]
    %v1375 = vld [vmem:[%s9 + $0x1b0] sm:$0xff]
    %v1376 = vld [vmem:[%s9 + $0x1b8] sm:$0xff]
    %v1377 = vld [vmem:[%s9 + $0x1c0] sm:$0xff]
    %v1378 = vld [vmem:[%s9 + $0x1c8] sm:$0xff]
    %v1379 = vld [vmem:[%s9 + $0x1d0] sm:$0xff]
    %v1380 = vld [vmem:[%s9 + $0x1d8] sm:$0xff]
    %v1381 = vld [vmem:[%s9 + $0x1e0] sm:$0xff]
    %v1382 = vld [vmem:[%s9 + $0x1e8] sm:$0xff]
    %v1383 = vld [vmem:[%s9 + $0x1f0] sm:$0xff]
    %v1384 = vld [vmem:[%s9 + $0x1f8] sm:$0xff]
    %v1385 = vld [vmem:[%s9 + $0x200] sm:$0xff]
    %v1386 = vld [vmem:[%s9 + $0x208] sm:$0xff]
    %v1387 = vld [vmem:[%s9 + $0x210] sm:$0xff]
    %v1388 = vld [vmem:[%s9 + $0x218] sm:$0xff]
    %v1389 = vld [vmem:[%s9 + $0x220] sm:$0xff]
    %v1390 = vld [vmem:[%s9 + $0x228] sm:$0xff]
    %v1391 = vld [vmem:[%s9 + $0x230] sm:$0xff]
    %v1392 = vld [vmem:[%s9 + $0x238] sm:$0xff]
    %v1393 = vld [vmem:[%s9 + $0x240] sm:$0xff]
    %v1394 = vld [vmem:[%s9 + $0x248] sm:$0xff]
    %v1395 = vld [vmem:[%s9 + $0x250] sm:$0xff]
    %v1396 = vld [vmem:[%s9 + $0x258] sm:$0xff]
    %v1397 = vld [vmem:[%s9 + $0x260] sm:$0xff]
    %v1398 = vld [vmem:[%s9 + $0x268] sm:$0xff]
    %v1399 = vld [vmem:[%s9 + $0x270] sm:$0xff]
    %v1400 = vld [vmem:[%s9 + $0x278] sm:$0xff]
    %v1401 = vld [vmem:[%s9 + $0x280] sm:$0xff]
    %v1402 = vld [vmem:[%s9 + $0x288] sm:$0xff]
    %v1403 = vld [vmem:[%s9 + $0x290] sm:$0xff]
    %v1404 = vld [vmem:[%s9 + $0x298] sm:$0xff]
    %v1405 = vld [vmem:[%s9 + $0x2a0] sm:$0xff]
    %v1406 = vld [vmem:[%s9 + $0x2a8] sm:$0xff]
    %v1407 = vld [vmem:[%s9 + $0x2b0] sm:$0xff]
    %v1408 = vld [vmem:[%s9 + $0x2b8] sm:$0xff]
    %v1409 = vld [vmem:[%s9 + $0x2c0] sm:$0xff]
    %v1410 = vld [vmem:[%s9 + $0x2c8] sm:$0xff]
    %v1411 = vld [vmem:[%s9 + $0x2d0] sm:$0xff]
    %v1412 = vld [vmem:[%s9 + $0x2d8] sm:$0xff]
    %v1413 = vld [vmem:[%s9 + $0x2e0] sm:$0xff]
    %v1414 = vld [vmem:[%s9 + $0x2e8] sm:$0xff]
    %v1415 = vld [vmem:[%s9 + $0x2f0] sm:$0xff]
    %v1416 = vld [vmem:[%s9 + $0x2f8] sm:$0xff]
    %v1417 = vld [vmem:[%s9 + $0x300] sm:$0xff]
    %v1418 = vld [vmem:[%s9 + $0x308] sm:$0xff]
    %v1419 = vld [vmem:[%s9 + $0x310] sm:$0xff]
    %v1420 = vld [vmem:[%s9 + $0x318] sm:$0xff]
    %v1421 = vld [vmem:[%s9 + $0x320] sm:$0xff]
    %v1422 = vld [vmem:[%s9 + $0x328] sm:$0xff]
    %v1423 = vld [vmem:[%s9 + $0x330] sm:$0xff]
    %v1424 = vld [vmem:[%s9 + $0x338] sm:$0xff]
    %v1425 = vld [vmem:[%s9 + $0x340] sm:$0xff]
    %v1426 = vld [vmem:[%s9 + $0x348] sm:$0xff]
    %v1427 = vld [vmem:[%s9 + $0x350] sm:$0xff]
    %v1428 = vld [vmem:[%s9 + $0x358] sm:$0xff]
    %v1429 = vld [vmem:[%s9 + $0x360] sm:$0xff]
    %v1430 = vld [vmem:[%s9 + $0x368] sm:$0xff]
    %v1431 = vld [vmem:[%s9 + $0x370] sm:$0xff]
    %v1432 = vld [vmem:[%s9 + $0x378] sm:$0xff]
    %v1433 = vld [vmem:[%s9 + $0x380] sm:$0xff]
    %v1434 = vld [vmem:[%s9 + $0x388] sm:$0xff]
    %v1435 = vld [vmem:[%s9 + $0x390] sm:$0xff]
    %v1436 = vld [vmem:[%s9 + $0x398] sm:$0xff]
    %v1437 = vld [vmem:[%s9 + $0x3a0] sm:$0xff]
    %v1438 = vld [vmem:[%s9 + $0x3a8] sm:$0xff]
    %v1439 = vld [vmem:[%s9 + $0x3b0] sm:$0xff]
    %v1440 = vld [vmem:[%s9 + $0x3b8] sm:$0xff]
    %v1441 = vld [vmem:[%s9 + $0x3c0] sm:$0xff]
    %v1442 = vld [vmem:[%s9 + $0x3c8] sm:$0xff]
    %v1443 = vld [vmem:[%s9 + $0x3d0] sm:$0xff]
    %v1444 = vld [vmem:[%s9 + $0x3d8] sm:$0xff]
    %v1445 = vld [vmem:[%s9 + $0x3e0] sm:$0xff]
    %v1446 = vld [vmem:[%s9 + $0x3e8] sm:$0xff]
    %v1447 = vld [vmem:[%s9 + $0x3f0] sm:$0xff]
    %v1448 = vld [vmem:[%s9 + $0x3f8] sm:$0xff]
    %v1449 = vld [vmem:[%s9 + $0x400] sm:$0xff]
    %v1450 = vld [vmem:[%s9 + $0x408] sm:$0xff]
    %v1451 = vld [vmem:[%s9 + $0x410] sm:$0xff]
    %v1452 = vld [vmem:[%s9 + $0x418] sm:$0xff]
    %v1453 = vld [vmem:[%s9 + $0x420] sm:$0xff]
    %v1454 = vld [vmem:[%s9 + $0x428] sm:$0xff]
    %v1455 = vld [vmem:[%s9 + $0x430] sm:$0xff]
    %v1456 = vld [vmem:[%s9 + $0x438] sm:$0xff]
    %v1457 = vld [vmem:[%s9 + $0x440] sm:$0xff]
    %v1458 = vld [vmem:[%s9 + $0x448] sm:$0xff]
    %v1459 = vld [vmem:[%s9 + $0x450] sm:$0xff]
    %v1460 = vld [vmem:[%s9 + $0x458] sm:$0xff]
    %v1461 = vld [vmem:[%s9 + $0x460] sm:$0xff]
    %v1462 = vld [vmem:[%s9 + $0x468] sm:$0xff]
    %v1463 = vld [vmem:[%s9 + $0x470] sm:$0xff]
    %v1464 = vld [vmem:[%s9 + $0x478] sm:$0xff]
    %v1465 = vld [vmem:[%s9 + $0x480] sm:$0xff]
    %v1466 = vld [vmem:[%s9 + $0x488] sm:$0xff]
    %v1467 = vld [vmem:[%s9 + $0x490] sm:$0xff]
    %v1468 = vld [vmem:[%s9 + $0x498] sm:$0xff]
    %v1469 = vld [vmem:[%s9 + $0x4a0] sm:$0xff]
    %v1470 = vld [vmem:[%s9 + $0x4a8] sm:$0xff]
    %v1471 = vld [vmem:[%s9 + $0x4b0] sm:$0xff]
    %v1472 = vld [vmem:[%s9 + $0x4b8] sm:$0xff]
    %v1473 = vld [vmem:[%s9 + $0x4c0] sm:$0xff]
    %v1474 = vld [vmem:[%s9 + $0x4c8] sm:$0xff]
    %v1475 = vld [vmem:[%s9 + $0x4d0] sm:$0xff]
    %v1476 = vld [vmem:[%s9 + $0x4d8] sm:$0xff]
    %v1477 = vld [vmem:[%s9 + $0x4e0] sm:$0xff]
    %v1478 = vld [vmem:[%s9 + $0x4e8] sm:$0xff]
    %v1479 = vld [vmem:[%s9 + $0x4f0] sm:$0xff]
    %v1480 = vld [vmem:[%s9 + $0x4f8] sm:$0xff]
    %v1481 = vld [vmem:[%s9 + $0x500] sm:$0xff]
    %v1482 = vld [vmem:[%s9 + $0x508] sm:$0xff]
    %v1483 = vld [vmem:[%s9 + $0x510] sm:$0xff]
    %v1484 = vld [vmem:[%s9 + $0x518] sm:$0xff]
    %v1485 = vld [vmem:[%s9 + $0x520] sm:$0xff]
    %v1486 = vld [vmem:[%s9 + $0x528] sm:$0xff]
    %v1487 = vld [vmem:[%s9 + $0x530] sm:$0xff]
    %v1488 = vld [vmem:[%s9 + $0x538] sm:$0xff]
    %v1489 = vld [vmem:[%s9 + $0x540] sm:$0xff]
    %v1490 = vld [vmem:[%s9 + $0x548] sm:$0xff]
    %v1491 = vld [vmem:[%s9 + $0x550] sm:$0xff]
    %v1492 = vld [vmem:[%s9 + $0x558] sm:$0xff]
    %v1493 = vld [vmem:[%s9 + $0x560] sm:$0xff]
    %v1494 = vld [vmem:[%s9 + $0x568] sm:$0xff]
    %v1495 = vld [vmem:[%s9 + $0x570] sm:$0xff]
    %v1496 = vld [vmem:[%s9 + $0x578] sm:$0xff]
    %v1497 = vld [vmem:[%s9 + $0x580] sm:$0xff]
    %v1498 = vld [vmem:[%s9 + $0x588] sm:$0xff]
    %v1499 = vld [vmem:[%s9 + $0x590] sm:$0xff]
    %v1500 = vld [vmem:[%s9 + $0x598] sm:$0xff]
    %v1501 = vld [vmem:[%s9 + $0x5a0] sm:$0xff]
    %v1502 = vld [vmem:[%s9 + $0x5a8] sm:$0xff]
    %v1503 = vld [vmem:[%s9 + $0x5b0] sm:$0xff]
    %v1504 = vld [vmem:[%s9 + $0x5b8] sm:$0xff]
    %v1505 = vld [vmem:[%s9 + $0x5c0] sm:$0xff]
    %v1506 = vld [vmem:[%s9 + $0x5c8] sm:$0xff]
    %v1507 = vld [vmem:[%s9 + $0x5d0] sm:$0xff]
    %v1508 = vld [vmem:[%s9 + $0x5d8] sm:$0xff]
    %v1509 = vld [vmem:[%s9 + $0x5e0] sm:$0xff]
    %v1510 = vld [vmem:[%s9 + $0x5e8] sm:$0xff]
    %v1511 = vld [vmem:[%s9 + $0x5f0] sm:$0xff]
    %v1512 = vld [vmem:[%s9 + $0x5f8] sm:$0xff]
    %v1513 = vld [vmem:[%s10] sm:$0x3f]
    %v1515 = vperm.slane %v1513, 0
    %v1516 = vperm.slane %v1513, 1
    %v1517 = vperm.slane %v1513, 2
    %v1518 = vperm.slane %v1513, 3
    %v1519 = vperm.slane %v1513, 4
    %v1520 = vperm.slane %v1513, 5
    %1527 = vmatpush.msra.mxu0 %v1411
    %1528 = vmatpush.msra.mxu0 %v1405
    %1529 = vmatpush.msra.mxu0 %v1399
    %1530 = vmatpush.msra.mxu0 %v1393
    %1531 = vmatpush.msra.mxu0 %v1387
    %1532 = vmatpush.msra.mxu0 %v1381
    %1533 = vmatpush.msra.mxu0 %v1375
    %1534 = vmatpush.msra.mxu0 %v1369
    %1535 = vmatpush.msra.mxu0 %v1363
    %1536 = vmatpush.msra.mxu0 %v1357
    %1537 = vmatpush.msra.mxu0 %v1351
    %1538 = vmatpush.msra.mxu0 %v1345
    %1539 = vmatpush.msra.mxu0 %v1339
    %1540 = vmatpush.msra.mxu0 %v1333
    %1541 = vmatpush.msra.mxu0 %v1327
    %1542 = vmatpush.msra.mxu0 %v1321
    %1543 = vmatmul.f32.gmra.mxu0 0.0
    %v1544 = vpop.f32.mrf.mxu0
    %v1545 = vadd.f32 %v1515, %v1544
    %1546 = vdwg.mxu0
    %1547 = vmatpush.msra.mxu0 %v1507
    %1548 = vmatpush.msra.mxu0 %v1501
    %1549 = vmatpush.msra.mxu0 %v1495
    %1550 = vmatpush.msra.mxu0 %v1489
    %1551 = vmatpush.msra.mxu0 %v1483
    %1552 = vmatpush.msra.mxu0 %v1477
    %1553 = vmatpush.msra.mxu0 %v1471
    %1554 = vmatpush.msra.mxu0 %v1465
    %1555 = vmatpush.msra.mxu0 %v1459
    %1556 = vmatpush.msra.mxu0 %v1453
    %1557 = vmatpush.msra.mxu0 %v1447
    %1558 = vmatpush.msra.mxu0 %v1441
    %1559 = vmatpush.msra.mxu0 %v1435
    %1560 = vmatpush.msra.mxu0 %v1429
    %1561 = vmatpush.msra.mxu0 %v1423
    %1562 = vmatpush.msra.mxu0 %v1417
    %1563 = vmatmul.f32.gmra.mxu0 0.0
    %v1564 = vpop.f32.mrf.mxu0
    %v1565 = vadd.f32 %v1545, %v1564
    %1566 = vdwg.mxu0
    %1567 = vmatpush.msra.mxu0 %v1412
    %1568 = vmatpush.msra.mxu0 %v1406
    %1569 = vmatpush.msra.mxu0 %v1400
    %1570 = vmatpush.msra.mxu0 %v1394
    %1571 = vmatpush.msra.mxu0 %v1388
    %1572 = vmatpush.msra.mxu0 %v1382
    %1573 = vmatpush.msra.mxu0 %v1376
    %1574 = vmatpush.msra.mxu0 %v1370
    %1575 = vmatpush.msra.mxu0 %v1364
    %1576 = vmatpush.msra.mxu0 %v1358
    %1577 = vmatpush.msra.mxu0 %v1352
    %1578 = vmatpush.msra.mxu0 %v1346
    %1579 = vmatpush.msra.mxu0 %v1340
    %1580 = vmatpush.msra.mxu0 %v1334
    %1581 = vmatpush.msra.mxu0 %v1328
    %1582 = vmatpush.msra.mxu0 %v1322
    %1583 = vmatmul.f32.gmra.mxu0 0.0
    %v1584 = vpop.f32.mrf.mxu0
    %v1585 = vadd.f32 %v1516, %v1584
    %1586 = vdwg.mxu0
    %1587 = vmatpush.msra.mxu0 %v1508
    %1588 = vmatpush.msra.mxu0 %v1502
    %1589 = vmatpush.msra.mxu0 %v1496
    %1590 = vmatpush.msra.mxu0 %v1490
    %1591 = vmatpush.msra.mxu0 %v1484
    %1592 = vmatpush.msra.mxu0 %v1478
    %1593 = vmatpush.msra.mxu0 %v1472
    %1594 = vmatpush.msra.mxu0 %v1466
    %1595 = vmatpush.msra.mxu0 %v1460
    %1596 = vmatpush.msra.mxu0 %v1454
    %1597 = vmatpush.msra.mxu0 %v1448
    %1598 = vmatpush.msra.mxu0 %v1442
    %1599 = vmatpush.msra.mxu0 %v1436
    %1600 = vmatpush.msra.mxu0 %v1430
    %1601 = vmatpush.msra.mxu0 %v1424
    %1602 = vmatpush.msra.mxu0 %v1418
    %1603 = vmatmul.f32.gmra.mxu0 0.0
    %v1604 = vpop.f32.mrf.mxu0
    %v1605 = vadd.f32 %v1585, %v1604
    %1606 = vdwg.mxu0
    %1607 = vmatpush.msra.mxu0 %v1413
    %1608 = vmatpush.msra.mxu0 %v1407
    %1609 = vmatpush.msra.mxu0 %v1401
    %1610 = vmatpush.msra.mxu0 %v1395
    %1611 = vmatpush.msra.mxu0 %v1389
    %1612 = vmatpush.msra.mxu0 %v1383
    %1613 = vmatpush.msra.mxu0 %v1377
    %1614 = vmatpush.msra.mxu0 %v1371
    %1615 = vmatpush.msra.mxu0 %v1365
    %1616 = vmatpush.msra.mxu0 %v1359
    %1617 = vmatpush.msra.mxu0 %v1353
    %1618 = vmatpush.msra.mxu0 %v1347
    %1619 = vmatpush.msra.mxu0 %v1341
    %1620 = vmatpush.msra.mxu0 %v1335
    %1621 = vmatpush.msra.mxu0 %v1329
    %1622 = vmatpush.msra.mxu0 %v1323
    %1623 = vmatmul.f32.gmra.mxu0 0.0
    %v1624 = vpop.f32.mrf.mxu0
    %v1625 = vadd.f32 %v1517, %v1624
    %1626 = vdwg.mxu0
    %1627 = vmatpush.msra.mxu0 %v1509
    %1628 = vmatpush.msra.mxu0 %v1503
    %1629 = vmatpush.msra.mxu0 %v1497
    %1630 = vmatpush.msra.mxu0 %v1491
    %1631 = vmatpush.msra.mxu0 %v1485
    %1632 = vmatpush.msra.mxu0 %v1479
    %1633 = vmatpush.msra.mxu0 %v1473
    %1634 = vmatpush.msra.mxu0 %v1467
    %1635 = vmatpush.msra.mxu0 %v1461
    %1636 = vmatpush.msra.mxu0 %v1455
    %1637 = vmatpush.msra.mxu0 %v1449
    %1638 = vmatpush.msra.mxu0 %v1443
    %1639 = vmatpush.msra.mxu0 %v1437
    %1640 = vmatpush.msra.mxu0 %v1431
    %1641 = vmatpush.msra.mxu0 %v1425
    %1642 = vmatpush.msra.mxu0 %v1419
    %1643 = vmatmul.f32.gmra.mxu0 0.0
    %v1644 = vpop.f32.mrf.mxu0
    %v1645 = vadd.f32 %v1625, %v1644
    %1646 = vdwg.mxu0
    %1647 = vmatpush.msra.mxu0 %v1414
    %1648 = vmatpush.msra.mxu0 %v1408
    %1649 = vmatpush.msra.mxu0 %v1402
    %1650 = vmatpush.msra.mxu0 %v1396
    %1651 = vmatpush.msra.mxu0 %v1390
    %1652 = vmatpush.msra.mxu0 %v1384
    %1653 = vmatpush.msra.mxu0 %v1378
    %1654 = vmatpush.msra.mxu0 %v1372
    %1655 = vmatpush.msra.mxu0 %v1366
    %1656 = vmatpush.msra.mxu0 %v1360
    %1657 = vmatpush.msra.mxu0 %v1354
    %1658 = vmatpush.msra.mxu0 %v1348
    %1659 = vmatpush.msra.mxu0 %v1342
    %1660 = vmatpush.msra.mxu0 %v1336
    %1661 = vmatpush.msra.mxu0 %v1330
    %1662 = vmatpush.msra.mxu0 %v1324
    %1663 = vmatmul.f32.gmra.mxu0 0.0
    %v1664 = vpop.f32.mrf.mxu0
    %v1665 = vadd.f32 %v1518, %v1664
    %1666 = vdwg.mxu0
    %1667 = vmatpush.msra.mxu0 %v1510
    %1668 = vmatpush.msra.mxu0 %v1504
    %1669 = vmatpush.msra.mxu0 %v1498
    %1670 = vmatpush.msra.mxu0 %v1492
    %1671 = vmatpush.msra.mxu0 %v1486
    %1672 = vmatpush.msra.mxu0 %v1480
    %1673 = vmatpush.msra.mxu0 %v1474
    %1674 = vmatpush.msra.mxu0 %v1468
    %1675 = vmatpush.msra.mxu0 %v1462
    %1676 = vmatpush.msra.mxu0 %v1456
    %1677 = vmatpush.msra.mxu0 %v1450
    %1678 = vmatpush.msra.mxu0 %v1444
    %1679 = vmatpush.msra.mxu0 %v1438
    %1680 = vmatpush.msra.mxu0 %v1432
    %1681 = vmatpush.msra.mxu0 %v1426
    %1682 = vmatpush.msra.mxu0 %v1420
    %1683 = vmatmul.f32.gmra.mxu0 0.0
    %v1684 = vpop.f32.mrf.mxu0
    %v1685 = vadd.f32 %v1665, %v1684
    %1686 = vdwg.mxu0
    %1687 = vmatpush.msra.mxu0 %v1415
    %1688 = vmatpush.msra.mxu0 %v1409
    %1689 = vmatpush.msra.mxu0 %v1403
    %1690 = vmatpush.msra.mxu0 %v1397
    %1691 = vmatpush.msra.mxu0 %v1391
    %1692 = vmatpush.msra.mxu0 %v1385
    %1693 = vmatpush.msra.mxu0 %v1379
    %1694 = vmatpush.msra.mxu0 %v1373
    %1695 = vmatpush.msra.mxu0 %v1367
    %1696 = vmatpush.msra.mxu0 %v1361
    %1697 = vmatpush.msra.mxu0 %v1355
    %1698 = vmatpush.msra.mxu0 %v1349
    %1699 = vmatpush.msra.mxu0 %v1343
    %1700 = vmatpush.msra.mxu0 %v1337
    %1701 = vmatpush.msra.mxu0 %v1331
    %1702 = vmatpush.msra.mxu0 %v1325
    %1703 = vmatmul.f32.gmra.mxu0 0.0
    %v1704 = vpop.f32.mrf.mxu0
    %v1705 = vadd.f32 %v1519, %v1704
    %1706 = vdwg.mxu0
    %1707 = vmatpush.msra.mxu0 %v1511
    %1708 = vmatpush.msra.mxu0 %v1505
    %1709 = vmatpush.msra.mxu0 %v1499
    %1710 = vmatpush.msra.mxu0 %v1493
    %1711 = vmatpush.msra.mxu0 %v1487
    %1712 = vmatpush.msra.mxu0 %v1481
    %1713 = vmatpush.msra.mxu0 %v1475
    %1714 = vmatpush.msra.mxu0 %v1469
    %1715 = vmatpush.msra.mxu0 %v1463
    %1716 = vmatpush.msra.mxu0 %v1457
    %1717 = vmatpush.msra.mxu0 %v1451
    %1718 = vmatpush.msra.mxu0 %v1445
    %1719 = vmatpush.msra.mxu0 %v1439
    %1720 = vmatpush.msra.mxu0 %v1433
    %1721 = vmatpush.msra.mxu0 %v1427
    %1722 = vmatpush.msra.mxu0 %v1421
    %1723 = vmatmul.f32.gmra.mxu0 0.0
    %v1724 = vpop.f32.mrf.mxu0
    %v1725 = vadd.f32 %v1705, %v1724
    %1726 = vdwg.mxu0
    %1727 = vmatpush.msra.mxu0 %v1416
    %1728 = vmatpush.msra.mxu0 %v1410
    %1729 = vmatpush.msra.mxu0 %v1404
    %1730 = vmatpush.msra.mxu0 %v1398
    %1731 = vmatpush.msra.mxu0 %v1392
    %1732 = vmatpush.msra.mxu0 %v1386
    %1733 = vmatpush.msra.mxu0 %v1380
    %1734 = vmatpush.msra.mxu0 %v1374
    %1735 = vmatpush.msra.mxu0 %v1368
    %1736 = vmatpush.msra.mxu0 %v1362
    %1737 = vmatpush.msra.mxu0 %v1356
    %1738 = vmatpush.msra.mxu0 %v1350
    %1739 = vmatpush.msra.mxu0 %v1344
    %1740 = vmatpush.msra.mxu0 %v1338
    %1741 = vmatpush.msra.mxu0 %v1332
    %1742 = vmatpush.msra.mxu0 %v1326
    %1743 = vmatmul.f32.gmra.mxu0 0.0
    %v1744 = vpop.f32.mrf.mxu0
    %v1745 = vadd.f32 %v1520, %v1744
    %1746 = vdwg.mxu0
    %1747 = vmatpush.msra.mxu0 %v1512
    %1748 = vmatpush.msra.mxu0 %v1506
    %1749 = vmatpush.msra.mxu0 %v1500
    %1750 = vmatpush.msra.mxu0 %v1494
    %1751 = vmatpush.msra.mxu0 %v1488
    %1752 = vmatpush.msra.mxu0 %v1482
    %1753 = vmatpush.msra.mxu0 %v1476
    %1754 = vmatpush.msra.mxu0 %v1470
    %1755 = vmatpush.msra.mxu0 %v1464
    %1756 = vmatpush.msra.mxu0 %v1458
    %1757 = vmatpush.msra.mxu0 %v1452
    %1758 = vmatpush.msra.mxu0 %v1446
    %1759 = vmatpush.msra.mxu0 %v1440
    %1760 = vmatpush.msra.mxu0 %v1434
    %1761 = vmatpush.msra.mxu0 %v1428
    %1762 = vmatpush.msra.mxu0 %v1422
    %1763 = vmatmul.f32.gmra.mxu0 0.0
    %v1764 = vpop.f32.mrf.mxu0
    %v1765 = vadd.f32 %v1745, %v1764
    %1766 = vdwg.mxu0
    %v1767 = vadd.f32 %v1119, %v1565
    %v1768 = vadd.f32 %v1159, %v1605
    %v1769 = vxor.u32 %v1767, 2147483648
    %v1770 = vxor.u32 %v1768, 2147483648
    %v1771 = vmul.f32 %v1769, 1.442695
    %v1772 = vpow.pop %v1771
    %v1773 = vmul.f32 %v1770, 1.442695
    %v1774 = vpow.pop %v1773
    %v1775 = vadd.f32 %v1772, 1.0
    %v1776 = vadd.f32 %v1774, 1.0
    %v1777 = vrcp.pop %v1775
    %v1778 = vmul.f32 %v1775, %v1777
    %v1779 = vsub.f32 1.0, %v1778
    %v1780 = vmul.f32 %v1777, %v1779
    %v1781 = vadd.f32 %v1777, %v1780
    %vm1782 = vweird.f32 %v1775
    %vm1783 = vweird.f32 %v1777
    %vm1784 = vmor %vm1782, %vm1783
    %v1785 = vsel %vm1784, %v1777, %v1781
    %v1786 = vand.u32 2147483647, %v1775
    %vm1787 = vcmp.eq.f32.partialorder %v1786, 8.507059e+37
    %v1788 = vand.u32 %v1775, 2147483648
    %v1789 = vor.u32 1.1754944e-38, %v1788
    %v1790 = vsel %vm1787, %v1789, %v1785
    %v1791 = vmul.f32 1.0, %v1790
    %v1792 = vrcp.pop %v1776
    %v1793 = vmul.f32 %v1776, %v1792
    %v1794 = vsub.f32 1.0, %v1793
    %v1795 = vmul.f32 %v1792, %v1794
    %v1796 = vadd.f32 %v1792, %v1795
    %vm1797 = vweird.f32 %v1776
    %vm1798 = vweird.f32 %v1792
    %vm1799 = vmor %vm1797, %vm1798
    %v1800 = vsel %vm1799, %v1792, %v1796
    %v1801 = vand.u32 2147483647, %v1776
    %vm1802 = vcmp.eq.f32.partialorder %v1801, 8.507059e+37
    %v1803 = vand.u32 %v1776, 2147483648
    %v1804 = vor.u32 1.1754944e-38, %v1803
    %v1805 = vsel %vm1802, %v1804, %v1800
    %v1806 = vmul.f32 1.0, %v1805
    %v1807 = vadd.f32 %v1199, %v1645
    %v1808 = vadd.f32 %v1239, %v1685
    %v1809 = vxor.u32 %v1807, 2147483648
    %v1810 = vxor.u32 %v1808, 2147483648
    %v1811 = vmul.f32 %v1809, 1.442695
    %v1812 = vpow.pop %v1811
    %v1813 = vmul.f32 %v1810, 1.442695
    %v1814 = vpow.pop %v1813
    %v1815 = vadd.f32 %v1812, 1.0
    %v1816 = vadd.f32 %v1814, 1.0
    %v1817 = vrcp.pop %v1815
    %v1818 = vmul.f32 %v1815, %v1817
    %v1819 = vsub.f32 1.0, %v1818
    %v1820 = vmul.f32 %v1817, %v1819
    %v1821 = vadd.f32 %v1817, %v1820
    %vm1822 = vweird.f32 %v1815
    %vm1823 = vweird.f32 %v1817
    %vm1824 = vmor %vm1822, %vm1823
    %v1825 = vsel %vm1824, %v1817, %v1821
    %v1826 = vand.u32 2147483647, %v1815
    %vm1827 = vcmp.eq.f32.partialorder %v1826, 8.507059e+37
    %v1828 = vand.u32 %v1815, 2147483648
    %v1829 = vor.u32 1.1754944e-38, %v1828
    %v1830 = vsel %vm1827, %v1829, %v1825
    %v1831 = vmul.f32 1.0, %v1830
    %v1832 = vrcp.pop %v1816
    %v1833 = vmul.f32 %v1816, %v1832
    %v1834 = vsub.f32 1.0, %v1833
    %v1835 = vmul.f32 %v1832, %v1834
    %v1836 = vadd.f32 %v1832, %v1835
    %vm1837 = vweird.f32 %v1816
    %vm1838 = vweird.f32 %v1832
    %vm1839 = vmor %vm1837, %vm1838
    %v1840 = vsel %vm1839, %v1832, %v1836
    %v1841 = vand.u32 2147483647, %v1816
    %vm1842 = vcmp.eq.f32.partialorder %v1841, 8.507059e+37
    %v1843 = vand.u32 %v1816, 2147483648
    %v1844 = vor.u32 1.1754944e-38, %v1843
    %v1845 = vsel %vm1842, %v1844, %v1840
    %v1846 = vmul.f32 1.0, %v1845
    %v1847 = vmul.f32 %v1791, %v1725
    %v1848 = vmul.f32 %v1806, %v1765
    %v1849 = vadd.f32 %v1279, %v1847
    %v1850 = vadd.f32 %v1319, %v1848
    %v1851 = vtanh.pop %v1849
    %v1852 = vtanh.pop %v1850
    %v1853 = vsub.f32 1.0, %v1831
    %v1854 = vsub.f32 1.0, %v1846
    %v1855 = vmul.f32 %v1853, %v1851
    %v1856 = vmul.f32 %v1854, %v1852
    %v1857 = vmul.f32 %v1831, 0.0
    %v1858 = vmul.f32 %v1846, 0.0
    %v1859 = vadd.f32 %v1855, %v1857
    %v1860 = vadd.f32 %v1856, %v1858
    %1861 = vmatpush.msra.mxu0 %v1411
    %1862 = vmatpush.msra.mxu0 %v1405
    %1863 = vmatpush.msra.mxu0 %v1399
    %1864 = vmatpush.msra.mxu0 %v1393
    %1865 = vmatpush.msra.mxu0 %v1387
    %1866 = vmatpush.msra.mxu0 %v1381
    %1867 = vmatpush.msra.mxu0 %v1375
    %1868 = vmatpush.msra.mxu0 %v1369
    %1869 = vmatpush.msra.mxu0 %v1363
    %1870 = vmatpush.msra.mxu0 %v1357
    %1871 = vmatpush.msra.mxu0 %v1351
    %1872 = vmatpush.msra.mxu0 %v1345
    %1873 = vmatpush.msra.mxu0 %v1339
    %1874 = vmatpush.msra.mxu0 %v1333
    %1875 = vmatpush.msra.mxu0 %v1327
    %1876 = vmatpush.msra.mxu0 %v1321
    %1877 = vmatmul.f32.gmra.mxu0 %v1859
    %v1878 = vpop.f32.mrf.mxu0
    %v1879 = vadd.f32 %v1515, %v1878
    %1880 = vdwg.mxu0
    %1881 = vmatpush.msra.mxu0 %v1507
    %1882 = vmatpush.msra.mxu0 %v1501
    %1883 = vmatpush.msra.mxu0 %v1495
    %1884 = vmatpush.msra.mxu0 %v1489
    %1885 = vmatpush.msra.mxu0 %v1483
    %1886 = vmatpush.msra.mxu0 %v1477
    %1887 = vmatpush.msra.mxu0 %v1471
    %1888 = vmatpush.msra.mxu0 %v1465
    %1889 = vmatpush.msra.mxu0 %v1459
    %1890 = vmatpush.msra.mxu0 %v1453
    %1891 = vmatpush.msra.mxu0 %v1447
    %1892 = vmatpush.msra.mxu0 %v1441
    %1893 = vmatpush.msra.mxu0 %v1435
    %1894 = vmatpush.msra.mxu0 %v1429
    %1895 = vmatpush.msra.mxu0 %v1423
    %1896 = vmatpush.msra.mxu0 %v1417
    %1897 = vmatmul.f32.gmra.mxu0 %v1860
    %v1898 = vpop.f32.mrf.mxu0
    %v1899 = vadd.f32 %v1879, %v1898
    %1900 = vdwg.mxu0
    %1901 = vmatpush.msra.mxu0 %v1412
    %1902 = vmatpush.msra.mxu0 %v1406
    %1903 = vmatpush.msra.mxu0 %v1400
    %1904 = vmatpush.msra.mxu0 %v1394
    %1905 = vmatpush.msra.mxu0 %v1388
    %1906 = vmatpush.msra.mxu0 %v1382
    %1907 = vmatpush.msra.mxu0 %v1376
    %1908 = vmatpush.msra.mxu0 %v1370
    %1909 = vmatpush.msra.mxu0 %v1364
    %1910 = vmatpush.msra.mxu0 %v1358
    %1911 = vmatpush.msra.mxu0 %v1352
    %1912 = vmatpush.msra.mxu0 %v1346
    %1913 = vmatpush.msra.mxu0 %v1340
    %1914 = vmatpush.msra.mxu0 %v1334
    %1915 = vmatpush.msra.mxu0 %v1328
    %1916 = vmatpush.msra.mxu0 %v1322
    %1917 = vmatmul.f32.gmra.mxu0 %v1859
    %v1918 = vpop.f32.mrf.mxu0
    %v1919 = vadd.f32 %v1516, %v1918
    %1920 = vdwg.mxu0
    %1921 = vmatpush.msra.mxu0 %v1508
    %1922 = vmatpush.msra.mxu0 %v1502
    %1923 = vmatpush.msra.mxu0 %v1496
    %1924 = vmatpush.msra.mxu0 %v1490
    %1925 = vmatpush.msra.mxu0 %v1484
    %1926 = vmatpush.msra.mxu0 %v1478
    %1927 = vmatpush.msra.mxu0 %v1472
    %1928 = vmatpush.msra.mxu0 %v1466
    %1929 = vmatpush.msra.mxu0 %v1460
    %1930 = vmatpush.msra.mxu0 %v1454
    %1931 = vmatpush.msra.mxu0 %v1448
    %1932 = vmatpush.msra.mxu0 %v1442
    %1933 = vmatpush.msra.mxu0 %v1436
    %1934 = vmatpush.msra.mxu0 %v1430
    %1935 = vmatpush.msra.mxu0 %v1424
    %1936 = vmatpush.msra.mxu0 %v1418
    %1937 = vmatmul.f32.gmra.mxu0 %v1860
    %v1938 = vpop.f32.mrf.mxu0
    %v1939 = vadd.f32 %v1919, %v1938
    %1940 = vdwg.mxu0
    %1941 = vmatpush.msra.mxu0 %v1413
    %1942 = vmatpush.msra.mxu0 %v1407
    %1943 = vmatpush.msra.mxu0 %v1401
    %1944 = vmatpush.msra.mxu0 %v1395
    %1945 = vmatpush.msra.mxu0 %v1389
    %1946 = vmatpush.msra.mxu0 %v1383
    %1947 = vmatpush.msra.mxu0 %v1377
    %1948 = vmatpush.msra.mxu0 %v1371
    %1949 = vmatpush.msra.mxu0 %v1365
    %1950 = vmatpush.msra.mxu0 %v1359
    %1951 = vmatpush.msra.mxu0 %v1353
    %1952 = vmatpush.msra.mxu0 %v1347
    %1953 = vmatpush.msra.mxu0 %v1341
    %1954 = vmatpush.msra.mxu0 %v1335
    %1955 = vmatpush.msra.mxu0 %v1329
    %1956 = vmatpush.msra.mxu0 %v1323
    %1957 = vmatmul.f32.gmra.mxu0 %v1859
    %v1958 = vpop.f32.mrf.mxu0
    %v1959 = vadd.f32 %v1517, %v1958
    %1960 = vdwg.mxu0
    %1961 = vmatpush.msra.mxu0 %v1509
    %1962 = vmatpush.msra.mxu0 %v1503
    %1963 = vmatpush.msra.mxu0 %v1497
    %1964 = vmatpush.msra.mxu0 %v1491
    %1965 = vmatpush.msra.mxu0 %v1485
    %1966 = vmatpush.msra.mxu0 %v1479
    %1967 = vmatpush.msra.mxu0 %v1473
    %1968 = vmatpush.msra.mxu0 %v1467
    %1969 = vmatpush.msra.mxu0 %v1461
    %1970 = vmatpush.msra.mxu0 %v1455
    %1971 = vmatpush.msra.mxu0 %v1449
    %1972 = vmatpush.msra.mxu0 %v1443
    %1973 = vmatpush.msra.mxu0 %v1437
    %1974 = vmatpush.msra.mxu0 %v1431
    %1975 = vmatpush.msra.mxu0 %v1425
    %1976 = vmatpush.msra.mxu0 %v1419
    %1977 = vmatmul.f32.gmra.mxu0 %v1860
    %v1978 = vpop.f32.mrf.mxu0
    %v1979 = vadd.f32 %v1959, %v1978
    %1980 = vdwg.mxu0
    %1981 = vmatpush.msra.mxu0 %v1414
    %1982 = vmatpush.msra.mxu0 %v1408
    %1983 = vmatpush.msra.mxu0 %v1402
    %1984 = vmatpush.msra.mxu0 %v1396
    %1985 = vmatpush.msra.mxu0 %v1390
    %1986 = vmatpush.msra.mxu0 %v1384
    %1987 = vmatpush.msra.mxu0 %v1378
    %1988 = vmatpush.msra.mxu0 %v1372
    %1989 = vmatpush.msra.mxu0 %v1366
    %1990 = vmatpush.msra.mxu0 %v1360
    %1991 = vmatpush.msra.mxu0 %v1354
    %1992 = vmatpush.msra.mxu0 %v1348
    %1993 = vmatpush.msra.mxu0 %v1342
    %1994 = vmatpush.msra.mxu0 %v1336
    %1995 = vmatpush.msra.mxu0 %v1330
    %1996 = vmatpush.msra.mxu0 %v1324
    %1997 = vmatmul.f32.gmra.mxu0 %v1859
    %v1998 = vpop.f32.mrf.mxu0
    %v1999 = vadd.f32 %v1518, %v1998
    %2000 = vdwg.mxu0
    %2001 = vmatpush.msra.mxu0 %v1510
    %2002 = vmatpush.msra.mxu0 %v1504
    %2003 = vmatpush.msra.mxu0 %v1498
    %2004 = vmatpush.msra.mxu0 %v1492
    %2005 = vmatpush.msra.mxu0 %v1486
    %2006 = vmatpush.msra.mxu0 %v1480
    %2007 = vmatpush.msra.mxu0 %v1474
    %2008 = vmatpush.msra.mxu0 %v1468
    %2009 = vmatpush.msra.mxu0 %v1462
    %2010 = vmatpush.msra.mxu0 %v1456
    %2011 = vmatpush.msra.mxu0 %v1450
    %2012 = vmatpush.msra.mxu0 %v1444
    %2013 = vmatpush.msra.mxu0 %v1438
    %2014 = vmatpush.msra.mxu0 %v1432
    %2015 = vmatpush.msra.mxu0 %v1426
    %2016 = vmatpush.msra.mxu0 %v1420
    %2017 = vmatmul.f32.gmra.mxu0 %v1860
    %v2018 = vpop.f32.mrf.mxu0
    %v2019 = vadd.f32 %v1999, %v2018
    %2020 = vdwg.mxu0
    %2021 = vmatpush.msra.mxu0 %v1415
    %2022 = vmatpush.msra.mxu0 %v1409
    %2023 = vmatpush.msra.mxu0 %v1403
    %2024 = vmatpush.msra.mxu0 %v1397
    %2025 = vmatpush.msra.mxu0 %v1391
    %2026 = vmatpush.msra.mxu0 %v1385
    %2027 = vmatpush.msra.mxu0 %v1379
    %2028 = vmatpush.msra.mxu0 %v1373
    %2029 = vmatpush.msra.mxu0 %v1367
    %2030 = vmatpush.msra.mxu0 %v1361
    %2031 = vmatpush.msra.mxu0 %v1355
    %2032 = vmatpush.msra.mxu0 %v1349
    %2033 = vmatpush.msra.mxu0 %v1343
    %2034 = vmatpush.msra.mxu0 %v1337
    %2035 = vmatpush.msra.mxu0 %v1331
    %2036 = vmatpush.msra.mxu0 %v1325
    %2037 = vmatmul.f32.gmra.mxu0 %v1859
    %v2038 = vpop.f32.mrf.mxu0
    %v2039 = vadd.f32 %v1519, %v2038
    %2040 = vdwg.mxu0
    %2041 = vmatpush.msra.mxu0 %v1511
    %2042 = vmatpush.msra.mxu0 %v1505
    %2043 = vmatpush.msra.mxu0 %v1499
    %2044 = vmatpush.msra.mxu0 %v1493
    %2045 = vmatpush.msra.mxu0 %v1487
    %2046 = vmatpush.msra.mxu0 %v1481
    %2047 = vmatpush.msra.mxu0 %v1475
    %2048 = vmatpush.msra.mxu0 %v1469
    %2049 = vmatpush.msra.mxu0 %v1463
    %2050 = vmatpush.msra.mxu0 %v1457
    %2051 = vmatpush.msra.mxu0 %v1451
    %2052 = vmatpush.msra.mxu0 %v1445
    %2053 = vmatpush.msra.mxu0 %v1439
    %2054 = vmatpush.msra.mxu0 %v1433
    %2055 = vmatpush.msra.mxu0 %v1427
    %2056 = vmatpush.msra.mxu0 %v1421
    %2057 = vmatmul.f32.gmra.mxu0 %v1860
    %v2058 = vpop.f32.mrf.mxu0
    %v2059 = vadd.f32 %v2039, %v2058
    %2060 = vdwg.mxu0
    %2061 = vmatpush.msra.mxu0 %v1416
    %2062 = vmatpush.msra.mxu0 %v1410
    %2063 = vmatpush.msra.mxu0 %v1404
    %2064 = vmatpush.msra.mxu0 %v1398
    %2065 = vmatpush.msra.mxu0 %v1392
    %2066 = vmatpush.msra.mxu0 %v1386
    %2067 = vmatpush.msra.mxu0 %v1380
    %2068 = vmatpush.msra.mxu0 %v1374
    %2069 = vmatpush.msra.mxu0 %v1368
    %2070 = vmatpush.msra.mxu0 %v1362
    %2071 = vmatpush.msra.mxu0 %v1356
    %2072 = vmatpush.msra.mxu0 %v1350
    %2073 = vmatpush.msra.mxu0 %v1344
    %2074 = vmatpush.msra.mxu0 %v1338
    %2075 = vmatpush.msra.mxu0 %v1332
    %2076 = vmatpush.msra.mxu0 %v1326
    %2077 = vmatmul.f32.gmra.mxu0 %v1859
    %v2078 = vpop.f32.mrf.mxu0
    %v2079 = vadd.f32 %v1520, %v2078
    %2080 = vdwg.mxu0
    %2081 = vmatpush.msra.mxu0 %v1512
    %2082 = vmatpush.msra.mxu0 %v1506
    %2083 = vmatpush.msra.mxu0 %v1500
    %2084 = vmatpush.msra.mxu0 %v1494
    %2085 = vmatpush.msra.mxu0 %v1488
    %2086 = vmatpush.msra.mxu0 %v1482
    %2087 = vmatpush.msra.mxu0 %v1476
    %2088 = vmatpush.msra.mxu0 %v1470
    %2089 = vmatpush.msra.mxu0 %v1464
    %2090 = vmatpush.msra.mxu0 %v1458
    %2091 = vmatpush.msra.mxu0 %v1452
    %2092 = vmatpush.msra.mxu0 %v1446
    %2093 = vmatpush.msra.mxu0 %v1440
    %2094 = vmatpush.msra.mxu0 %v1434
    %2095 = vmatpush.msra.mxu0 %v1428
    %2096 = vmatpush.msra.mxu0 %v1422
    %2097 = vmatmul.f32.gmra.mxu0 %v1860
    %v2098 = vpop.f32.mrf.mxu0
    %v2099 = vadd.f32 %v2079, %v2098
    %2100 = vdwg.mxu0
    %v2103 = vrot.slane %v1899, 6
    %v2104 = vrot.slane %v1939, 6
    %v2107 = vadd.f32 %v1119, %v2103
    %v2108 = vadd.f32 %v1159, %v2104
    %v2109 = vxor.u32 %v2107, 2147483648
    %v2110 = vxor.u32 %v2108, 2147483648
    %v2111 = vmul.f32 %v2109, 1.442695
    %v2112 = vpow.pop %v2111
    %v2113 = vmul.f32 %v2110, 1.442695
    %v2114 = vpow.pop %v2113
    %v2115 = vadd.f32 %v2112, 1.0
    %v2116 = vadd.f32 %v2114, 1.0
    %v2117 = vrcp.pop %v2115
    %v2118 = vmul.f32 %v2115, %v2117
    %v2119 = vsub.f32 1.0, %v2118
    %v2120 = vmul.f32 %v2117, %v2119
    %v2121 = vadd.f32 %v2117, %v2120
    %vm2122 = vweird.f32 %v2115
    %vm2123 = vweird.f32 %v2117
    %vm2124 = vmor %vm2122, %vm2123
    %v2125 = vsel %vm2124, %v2117, %v2121
    %v2126 = vand.u32 2147483647, %v2115
    %vm2127 = vcmp.eq.f32.partialorder %v2126, 8.507059e+37
    %v2128 = vand.u32 %v2115, 2147483648
    %v2129 = vor.u32 1.1754944e-38, %v2128
    %v2130 = vsel %vm2127, %v2129, %v2125
    %v2131 = vmul.f32 1.0, %v2130
    %v2132 = vrcp.pop %v2116
    %v2133 = vmul.f32 %v2116, %v2132
    %v2134 = vsub.f32 1.0, %v2133
    %v2135 = vmul.f32 %v2132, %v2134
    %v2136 = vadd.f32 %v2132, %v2135
    %vm2137 = vweird.f32 %v2116
    %vm2138 = vweird.f32 %v2132
    %vm2139 = vmor %vm2137, %vm2138
    %v2140 = vsel %vm2139, %v2132, %v2136
    %v2141 = vand.u32 2147483647, %v2116
    %vm2142 = vcmp.eq.f32.partialorder %v2141, 8.507059e+37
    %v2143 = vand.u32 %v2116, 2147483648
    %v2144 = vor.u32 1.1754944e-38, %v2143
    %v2145 = vsel %vm2142, %v2144, %v2140
    %v2146 = vmul.f32 1.0, %v2145
    %v2149 = vrot.slane %v1979, 6
    %v2150 = vrot.slane %v2019, 6
    %v2153 = vadd.f32 %v1199, %v2149
    %v2154 = vadd.f32 %v1239, %v2150
    %v2155 = vxor.u32 %v2153, 2147483648
    %v2156 = vxor.u32 %v2154, 2147483648
    %v2157 = vmul.f32 %v2155, 1.442695
    %v2158 = vpow.pop %v2157
    %v2159 = vmul.f32 %v2156, 1.442695
    %v2160 = vpow.pop %v2159
    %v2161 = vadd.f32 %v2158, 1.0
    %v2162 = vadd.f32 %v2160, 1.0
    %v2163 = vrcp.pop %v2161
    %v2164 = vmul.f32 %v2161, %v2163
    %v2165 = vsub.f32 1.0, %v2164
    %v2166 = vmul.f32 %v2163, %v2165
    %v2167 = vadd.f32 %v2163, %v2166
    %vm2168 = vweird.f32 %v2161
    %vm2169 = vweird.f32 %v2163
    %vm2170 = vmor %vm2168, %vm2169
    %v2171 = vsel %vm2170, %v2163, %v2167
    %v2172 = vand.u32 2147483647, %v2161
    %vm2173 = vcmp.eq.f32.partialorder %v2172, 8.507059e+37
    %v2174 = vand.u32 %v2161, 2147483648
    %v2175 = vor.u32 1.1754944e-38, %v2174
    %v2176 = vsel %vm2173, %v2175, %v2171
    %v2177 = vmul.f32 1.0, %v2176
    %v2178 = vrcp.pop %v2162
    %v2179 = vmul.f32 %v2162, %v2178
    %v2180 = vsub.f32 1.0, %v2179
    %v2181 = vmul.f32 %v2178, %v2180
    %v2182 = vadd.f32 %v2178, %v2181
    %vm2183 = vweird.f32 %v2162
    %vm2184 = vweird.f32 %v2178
    %vm2185 = vmor %vm2183, %vm2184
    %v2186 = vsel %vm2185, %v2178, %v2182
    %v2187 = vand.u32 2147483647, %v2162
    %vm2188 = vcmp.eq.f32.partialorder %v2187, 8.507059e+37
    %v2189 = vand.u32 %v2162, 2147483648
    %v2190 = vor.u32 1.1754944e-38, %v2189
    %v2191 = vsel %vm2188, %v2190, %v2186
    %v2192 = vmul.f32 1.0, %v2191
    %v2195 = vrot.slane %v2059, 6
    %v2196 = vrot.slane %v2099, 6
    %v2199 = vmul.f32 %v2131, %v2195
    %v2200 = vmul.f32 %v2146, %v2196
    %v2201 = vadd.f32 %v1279, %v2199
    %v2202 = vadd.f32 %v1319, %v2200
    %v2203 = vtanh.pop %v2201
    %v2204 = vtanh.pop %v2202
    %v2205 = vsub.f32 1.0, %v2177
    %v2206 = vsub.f32 1.0, %v2192
    %v2207 = vmul.f32 %v2205, %v2203
    %v2208 = vmul.f32 %v2206, %v2204
    %v2211 = vrot.slane %v1859, 6
    %v2212 = vrot.slane %v1860, 6
    %v2215 = vmul.f32 %v2177, %v2211
    %v2216 = vmul.f32 %v2192, %v2212
    %v2217 = vadd.f32 %v2207, %v2215
    %v2218 = vadd.f32 %v2208, %v2216
    %v2221 = vrot.slane %v2217, 2
    %v2222 = vrot.slane %v2218, 2
    %2225 = vmatpush.msra.mxu0 %v1411
    %2226 = vmatpush.msra.mxu0 %v1405
    %2227 = vmatpush.msra.mxu0 %v1399
    %2228 = vmatpush.msra.mxu0 %v1393
    %2229 = vmatpush.msra.mxu0 %v1387
    %2230 = vmatpush.msra.mxu0 %v1381
    %2231 = vmatpush.msra.mxu0 %v1375
    %2232 = vmatpush.msra.mxu0 %v1369
    %2233 = vmatpush.msra.mxu0 %v1363
    %2234 = vmatpush.msra.mxu0 %v1357
    %2235 = vmatpush.msra.mxu0 %v1351
    %2236 = vmatpush.msra.mxu0 %v1345
    %2237 = vmatpush.msra.mxu0 %v1339
    %2238 = vmatpush.msra.mxu0 %v1333
    %2239 = vmatpush.msra.mxu0 %v1327
    %2240 = vmatpush.msra.mxu0 %v1321
    %2241 = vmatmul.f32.gmra.mxu0 %v2221
    %v2242 = vpop.f32.mrf.mxu0
    %v2243 = vadd.f32 %v1515, %v2242
    %2244 = vdwg.mxu0
    %2245 = vmatpush.msra.mxu0 %v1507
    %2246 = vmatpush.msra.mxu0 %v1501
    %2247 = vmatpush.msra.mxu0 %v1495
    %2248 = vmatpush.msra.mxu0 %v1489
    %2249 = vmatpush.msra.mxu0 %v1483
    %2250 = vmatpush.msra.mxu0 %v1477
    %2251 = vmatpush.msra.mxu0 %v1471
    %2252 = vmatpush.msra.mxu0 %v1465
    %2253 = vmatpush.msra.mxu0 %v1459
    %2254 = vmatpush.msra.mxu0 %v1453
    %2255 = vmatpush.msra.mxu0 %v1447
    %2256 = vmatpush.msra.mxu0 %v1441
    %2257 = vmatpush.msra.mxu0 %v1435
    %2258 = vmatpush.msra.mxu0 %v1429
    %2259 = vmatpush.msra.mxu0 %v1423
    %2260 = vmatpush.msra.mxu0 %v1417
    %2261 = vmatmul.f32.gmra.mxu0 %v2222
    %v2262 = vpop.f32.mrf.mxu0
    %v2263 = vadd.f32 %v2243, %v2262
    %2264 = vdwg.mxu0
    %2265 = vmatpush.msra.mxu0 %v1412
    %2266 = vmatpush.msra.mxu0 %v1406
    %2267 = vmatpush.msra.mxu0 %v1400
    %2268 = vmatpush.msra.mxu0 %v1394
    %2269 = vmatpush.msra.mxu0 %v1388
    %2270 = vmatpush.msra.mxu0 %v1382
    %2271 = vmatpush.msra.mxu0 %v1376
    %2272 = vmatpush.msra.mxu0 %v1370
    %2273 = vmatpush.msra.mxu0 %v1364
    %2274 = vmatpush.msra.mxu0 %v1358
    %2275 = vmatpush.msra.mxu0 %v1352
    %2276 = vmatpush.msra.mxu0 %v1346
    %2277 = vmatpush.msra.mxu0 %v1340
    %2278 = vmatpush.msra.mxu0 %v1334
    %2279 = vmatpush.msra.mxu0 %v1328
    %2280 = vmatpush.msra.mxu0 %v1322
    %2281 = vmatmul.f32.gmra.mxu0 %v2221
    %v2282 = vpop.f32.mrf.mxu0
    %v2283 = vadd.f32 %v1516, %v2282
    %2284 = vdwg.mxu0
    %2285 = vmatpush.msra.mxu0 %v1508
    %2286 = vmatpush.msra.mxu0 %v1502
    %2287 = vmatpush.msra.mxu0 %v1496
    %2288 = vmatpush.msra.mxu0 %v1490
    %2289 = vmatpush.msra.mxu0 %v1484
    %2290 = vmatpush.msra.mxu0 %v1478
    %2291 = vmatpush.msra.mxu0 %v1472
    %2292 = vmatpush.msra.mxu0 %v1466
    %2293 = vmatpush.msra.mxu0 %v1460
    %2294 = vmatpush.msra.mxu0 %v1454
    %2295 = vmatpush.msra.mxu0 %v1448
    %2296 = vmatpush.msra.mxu0 %v1442
    %2297 = vmatpush.msra.mxu0 %v1436
    %2298 = vmatpush.msra.mxu0 %v1430
    %2299 = vmatpush.msra.mxu0 %v1424
    %2300 = vmatpush.msra.mxu0 %v1418
    %2301 = vmatmul.f32.gmra.mxu0 %v2222
    %v2302 = vpop.f32.mrf.mxu0
    %v2303 = vadd.f32 %v2283, %v2302
    %2304 = vdwg.mxu0
    %2305 = vmatpush.msra.mxu0 %v1413
    %2306 = vmatpush.msra.mxu0 %v1407
    %2307 = vmatpush.msra.mxu0 %v1401
    %2308 = vmatpush.msra.mxu0 %v1395
    %2309 = vmatpush.msra.mxu0 %v1389
    %2310 = vmatpush.msra.mxu0 %v1383
    %2311 = vmatpush.msra.mxu0 %v1377
    %2312 = vmatpush.msra.mxu0 %v1371
    %2313 = vmatpush.msra.mxu0 %v1365
    %2314 = vmatpush.msra.mxu0 %v1359
    %2315 = vmatpush.msra.mxu0 %v1353
    %2316 = vmatpush.msra.mxu0 %v1347
    %2317 = vmatpush.msra.mxu0 %v1341
    %2318 = vmatpush.msra.mxu0 %v1335
    %2319 = vmatpush.msra.mxu0 %v1329
    %2320 = vmatpush.msra.mxu0 %v1323
    %2321 = vmatmul.f32.gmra.mxu0 %v2221
    %v2322 = vpop.f32.mrf.mxu0
    %v2323 = vadd.f32 %v1517, %v2322
    %2324 = vdwg.mxu0
    %2325 = vmatpush.msra.mxu0 %v1509
    %2326 = vmatpush.msra.mxu0 %v1503
    %2327 = vmatpush.msra.mxu0 %v1497
    %2328 = vmatpush.msra.mxu0 %v1491
    %2329 = vmatpush.msra.mxu0 %v1485
    %2330 = vmatpush.msra.mxu0 %v1479
    %2331 = vmatpush.msra.mxu0 %v1473
    %2332 = vmatpush.msra.mxu0 %v1467
    %2333 = vmatpush.msra.mxu0 %v1461
    %2334 = vmatpush.msra.mxu0 %v1455
    %2335 = vmatpush.msra.mxu0 %v1449
    %2336 = vmatpush.msra.mxu0 %v1443
    %2337 = vmatpush.msra.mxu0 %v1437
    %2338 = vmatpush.msra.mxu0 %v1431
    %2339 = vmatpush.msra.mxu0 %v1425
    %2340 = vmatpush.msra.mxu0 %v1419
    %2341 = vmatmul.f32.gmra.mxu0 %v2222
    %v2342 = vpop.f32.mrf.mxu0
    %v2343 = vadd.f32 %v2323, %v2342
    %2344 = vdwg.mxu0
    %2345 = vmatpush.msra.mxu0 %v1414
    %2346 = vmatpush.msra.mxu0 %v1408
    %2347 = vmatpush.msra.mxu0 %v1402
    %2348 = vmatpush.msra.mxu0 %v1396
    %2349 = vmatpush.msra.mxu0 %v1390
    %2350 = vmatpush.msra.mxu0 %v1384
    %2351 = vmatpush.msra.mxu0 %v1378
    %2352 = vmatpush.msra.mxu0 %v1372
    %2353 = vmatpush.msra.mxu0 %v1366
    %2354 = vmatpush.msra.mxu0 %v1360
    %2355 = vmatpush.msra.mxu0 %v1354
    %2356 = vmatpush.msra.mxu0 %v1348
    %2357 = vmatpush.msra.mxu0 %v1342
    %2358 = vmatpush.msra.mxu0 %v1336
    %2359 = vmatpush.msra.mxu0 %v1330
    %2360 = vmatpush.msra.mxu0 %v1324
    %2361 = vmatmul.f32.gmra.mxu0 %v2221
    %v2362 = vpop.f32.mrf.mxu0
    %v2363 = vadd.f32 %v1518, %v2362
    %2364 = vdwg.mxu0
    %2365 = vmatpush.msra.mxu0 %v1510
    %2366 = vmatpush.msra.mxu0 %v1504
    %2367 = vmatpush.msra.mxu0 %v1498
    %2368 = vmatpush.msra.mxu0 %v1492
    %2369 = vmatpush.msra.mxu0 %v1486
    %2370 = vmatpush.msra.mxu0 %v1480
    %2371 = vmatpush.msra.mxu0 %v1474
    %2372 = vmatpush.msra.mxu0 %v1468
    %2373 = vmatpush.msra.mxu0 %v1462
    %2374 = vmatpush.msra.mxu0 %v1456
    %2375 = vmatpush.msra.mxu0 %v1450
    %2376 = vmatpush.msra.mxu0 %v1444
    %2377 = vmatpush.msra.mxu0 %v1438
    %2378 = vmatpush.msra.mxu0 %v1432
    %2379 = vmatpush.msra.mxu0 %v1426
    %2380 = vmatpush.msra.mxu0 %v1420
    %2381 = vmatmul.f32.gmra.mxu0 %v2222
    %v2382 = vpop.f32.mrf.mxu0
    %v2383 = vadd.f32 %v2363, %v2382
    %2384 = vdwg.mxu0
    %2385 = vmatpush.msra.mxu0 %v1415
    %2386 = vmatpush.msra.mxu0 %v1409
    %2387 = vmatpush.msra.mxu0 %v1403
    %2388 = vmatpush.msra.mxu0 %v1397
    %2389 = vmatpush.msra.mxu0 %v1391
    %2390 = vmatpush.msra.mxu0 %v1385
    %2391 = vmatpush.msra.mxu0 %v1379
    %2392 = vmatpush.msra.mxu0 %v1373
    %2393 = vmatpush.msra.mxu0 %v1367
    %2394 = vmatpush.msra.mxu0 %v1361
    %2395 = vmatpush.msra.mxu0 %v1355
    %2396 = vmatpush.msra.mxu0 %v1349
    %2397 = vmatpush.msra.mxu0 %v1343
    %2398 = vmatpush.msra.mxu0 %v1337
    %2399 = vmatpush.msra.mxu0 %v1331
    %2400 = vmatpush.msra.mxu0 %v1325
    %2401 = vmatmul.f32.gmra.mxu0 %v2221
    %v2402 = vpop.f32.mrf.mxu0
    %v2403 = vadd.f32 %v1519, %v2402
    %2404 = vdwg.mxu0
    %2405 = vmatpush.msra.mxu0 %v1511
    %2406 = vmatpush.msra.mxu0 %v1505
    %2407 = vmatpush.msra.mxu0 %v1499
    %2408 = vmatpush.msra.mxu0 %v1493
    %2409 = vmatpush.msra.mxu0 %v1487
    %2410 = vmatpush.msra.mxu0 %v1481
    %2411 = vmatpush.msra.mxu0 %v1475
    %2412 = vmatpush.msra.mxu0 %v1469
    %2413 = vmatpush.msra.mxu0 %v1463
    %2414 = vmatpush.msra.mxu0 %v1457
    %2415 = vmatpush.msra.mxu0 %v1451
    %2416 = vmatpush.msra.mxu0 %v1445
    %2417 = vmatpush.msra.mxu0 %v1439
    %2418 = vmatpush.msra.mxu0 %v1433
    %2419 = vmatpush.msra.mxu0 %v1427
    %2420 = vmatpush.msra.mxu0 %v1421
    %2421 = vmatmul.f32.gmra.mxu0 %v2222
    %v2422 = vpop.f32.mrf.mxu0
    %v2423 = vadd.f32 %v2403, %v2422
    %2424 = vdwg.mxu0
    %2425 = vmatpush.msra.mxu0 %v1416
    %2426 = vmatpush.msra.mxu0 %v1410
    %2427 = vmatpush.msra.mxu0 %v1404
    %2428 = vmatpush.msra.mxu0 %v1398
    %2429 = vmatpush.msra.mxu0 %v1392
    %2430 = vmatpush.msra.mxu0 %v1386
    %2431 = vmatpush.msra.mxu0 %v1380
    %2432 = vmatpush.msra.mxu0 %v1374
    %2433 = vmatpush.msra.mxu0 %v1368
    %2434 = vmatpush.msra.mxu0 %v1362
    %2435 = vmatpush.msra.mxu0 %v1356
    %2436 = vmatpush.msra.mxu0 %v1350
    %2437 = vmatpush.msra.mxu0 %v1344
    %2438 = vmatpush.msra.mxu0 %v1338
    %2439 = vmatpush.msra.mxu0 %v1332
    %2440 = vmatpush.msra.mxu0 %v1326
    %2441 = vmatmul.f32.gmra.mxu0 %v2221
    %v2442 = vpop.f32.mrf.mxu0
    %v2443 = vadd.f32 %v1520, %v2442
    %2444 = vdwg.mxu0
    %2445 = vmatpush.msra.mxu0 %v1512
    %2446 = vmatpush.msra.mxu0 %v1506
    %2447 = vmatpush.msra.mxu0 %v1500
    %2448 = vmatpush.msra.mxu0 %v1494
    %2449 = vmatpush.msra.mxu0 %v1488
    %2450 = vmatpush.msra.mxu0 %v1482
    %2451 = vmatpush.msra.mxu0 %v1476
    %2452 = vmatpush.msra.mxu0 %v1470
    %2453 = vmatpush.msra.mxu0 %v1464
    %2454 = vmatpush.msra.mxu0 %v1458
    %2455 = vmatpush.msra.mxu0 %v1452
    %2456 = vmatpush.msra.mxu0 %v1446
    %2457 = vmatpush.msra.mxu0 %v1440
    %2458 = vmatpush.msra.mxu0 %v1434
    %2459 = vmatpush.msra.mxu0 %v1428
    %2460 = vmatpush.msra.mxu0 %v1422
    %2461 = vmatmul.f32.gmra.mxu0 %v2222
    %v2462 = vpop.f32.mrf.mxu0
    %v2463 = vadd.f32 %v2443, %v2462
    %2464 = vdwg.mxu0
    %v2467 = vrot.slane %v2263, 4
    %v2468 = vrot.slane %v2303, 4
    %v2471 = vadd.f32 %v1119, %v2467
    %v2472 = vadd.f32 %v1159, %v2468
    %v2473 = vxor.u32 %v2471, 2147483648
    %v2474 = vxor.u32 %v2472, 2147483648
    %v2475 = vmul.f32 %v2473, 1.442695
    %v2476 = vpow.pop %v2475
    %v2477 = vmul.f32 %v2474, 1.442695
    %v2478 = vpow.pop %v2477
    %v2479 = vadd.f32 %v2476, 1.0
    %v2480 = vadd.f32 %v2478, 1.0
    %v2481 = vrcp.pop %v2479
    %v2482 = vmul.f32 %v2479, %v2481
    %v2483 = vsub.f32 1.0, %v2482
    %v2484 = vmul.f32 %v2481, %v2483
    %v2485 = vadd.f32 %v2481, %v2484
    %vm2486 = vweird.f32 %v2479
    %vm2487 = vweird.f32 %v2481
    %vm2488 = vmor %vm2486, %vm2487
    %v2489 = vsel %vm2488, %v2481, %v2485
    %v2490 = vand.u32 2147483647, %v2479
    %vm2491 = vcmp.eq.f32.partialorder %v2490, 8.507059e+37
    %v2492 = vand.u32 %v2479, 2147483648
    %v2493 = vor.u32 1.1754944e-38, %v2492
    %v2494 = vsel %vm2491, %v2493, %v2489
    %v2495 = vmul.f32 1.0, %v2494
    %v2496 = vrcp.pop %v2480
    %v2497 = vmul.f32 %v2480, %v2496
    %v2498 = vsub.f32 1.0, %v2497
    %v2499 = vmul.f32 %v2496, %v2498
    %v2500 = vadd.f32 %v2496, %v2499
    %vm2501 = vweird.f32 %v2480
    %vm2502 = vweird.f32 %v2496
    %vm2503 = vmor %vm2501, %vm2502
    %v2504 = vsel %vm2503, %v2496, %v2500
    %v2505 = vand.u32 2147483647, %v2480
    %vm2506 = vcmp.eq.f32.partialorder %v2505, 8.507059e+37
    %v2507 = vand.u32 %v2480, 2147483648
    %v2508 = vor.u32 1.1754944e-38, %v2507
    %v2509 = vsel %vm2506, %v2508, %v2504
    %v2510 = vmul.f32 1.0, %v2509
    %v2513 = vrot.slane %v2343, 4
    %v2514 = vrot.slane %v2383, 4
    %v2517 = vadd.f32 %v1199, %v2513
    %v2518 = vadd.f32 %v1239, %v2514
    %v2519 = vxor.u32 %v2517, 2147483648
    %v2520 = vxor.u32 %v2518, 2147483648
    %v2521 = vmul.f32 %v2519, 1.442695
    %v2522 = vpow.pop %v2521
    %v2523 = vmul.f32 %v2520, 1.442695
    %v2524 = vpow.pop %v2523
    %v2525 = vadd.f32 %v2522, 1.0
    %v2526 = vadd.f32 %v2524, 1.0
    %v2527 = vrcp.pop %v2525
    %v2528 = vmul.f32 %v2525, %v2527
    %v2529 = vsub.f32 1.0, %v2528
    %v2530 = vmul.f32 %v2527, %v2529
    %v2531 = vadd.f32 %v2527, %v2530
    %vm2532 = vweird.f32 %v2525
    %vm2533 = vweird.f32 %v2527
    %vm2534 = vmor %vm2532, %vm2533
    %v2535 = vsel %vm2534, %v2527, %v2531
    %v2536 = vand.u32 2147483647, %v2525
    %vm2537 = vcmp.eq.f32.partialorder %v2536, 8.507059e+37
    %v2538 = vand.u32 %v2525, 2147483648
    %v2539 = vor.u32 1.1754944e-38, %v2538
    %v2540 = vsel %vm2537, %v2539, %v2535
    %v2541 = vmul.f32 1.0, %v2540
    %v2542 = vrcp.pop %v2526
    %v2543 = vmul.f32 %v2526, %v2542
    %v2544 = vsub.f32 1.0, %v2543
    %v2545 = vmul.f32 %v2542, %v2544
    %v2546 = vadd.f32 %v2542, %v2545
    %vm2547 = vweird.f32 %v2526
    %vm2548 = vweird.f32 %v2542
    %vm2549 = vmor %vm2547, %vm2548
    %v2550 = vsel %vm2549, %v2542, %v2546
    %v2551 = vand.u32 2147483647, %v2526
    %vm2552 = vcmp.eq.f32.partialorder %v2551, 8.507059e+37
    %v2553 = vand.u32 %v2526, 2147483648
    %v2554 = vor.u32 1.1754944e-38, %v2553
    %v2555 = vsel %vm2552, %v2554, %v2550
    %v2556 = vmul.f32 1.0, %v2555
    %v2559 = vrot.slane %v2423, 4
    %v2560 = vrot.slane %v2463, 4
    %v2563 = vmul.f32 %v2495, %v2559
    %v2564 = vmul.f32 %v2510, %v2560
    %v2565 = vadd.f32 %v1279, %v2563
    %v2566 = vadd.f32 %v1319, %v2564
    %v2567 = vtanh.pop %v2565
    %v2568 = vtanh.pop %v2566
    %v2569 = vsub.f32 1.0, %v2541
    %v2570 = vsub.f32 1.0, %v2556
    %v2571 = vmul.f32 %v2569, %v2567
    %v2572 = vmul.f32 %v2570, %v2568
    %v2573 = vrot.slane %v2217, 6
    %v2574 = vrot.slane %v2218, 6
    %v2577 = vmul.f32 %v2541, %v2573
    %v2578 = vmul.f32 %v2556, %v2574
    %v2579 = vadd.f32 %v2571, %v2577
    %v2580 = vadd.f32 %v2572, %v2578
    %v2583 = vrot.slane %v2579, 4
    %v2584 = vrot.slane %v2580, 4
    %2587 = vmatpush.msra.mxu0 %v1411
    %2588 = vmatpush.msra.mxu0 %v1405
    %2589 = vmatpush.msra.mxu0 %v1399
    %2590 = vmatpush.msra.mxu0 %v1393
    %2591 = vmatpush.msra.mxu0 %v1387
    %2592 = vmatpush.msra.mxu0 %v1381
    %2593 = vmatpush.msra.mxu0 %v1375
    %2594 = vmatpush.msra.mxu0 %v1369
    %2595 = vmatpush.msra.mxu0 %v1363
    %2596 = vmatpush.msra.mxu0 %v1357
    %2597 = vmatpush.msra.mxu0 %v1351
    %2598 = vmatpush.msra.mxu0 %v1345
    %2599 = vmatpush.msra.mxu0 %v1339
    %2600 = vmatpush.msra.mxu0 %v1333
    %2601 = vmatpush.msra.mxu0 %v1327
    %2602 = vmatpush.msra.mxu0 %v1321
    %2603 = vmatmul.f32.gmra.mxu0 %v2583
    %v2604 = vpop.f32.mrf.mxu0
    %v2605 = vadd.f32 %v1515, %v2604
    %2606 = vdwg.mxu0
    %2607 = vmatpush.msra.mxu0 %v1507
    %2608 = vmatpush.msra.mxu0 %v1501
    %2609 = vmatpush.msra.mxu0 %v1495
    %2610 = vmatpush.msra.mxu0 %v1489
    %2611 = vmatpush.msra.mxu0 %v1483
    %2612 = vmatpush.msra.mxu0 %v1477
    %2613 = vmatpush.msra.mxu0 %v1471
    %2614 = vmatpush.msra.mxu0 %v1465
    %2615 = vmatpush.msra.mxu0 %v1459
    %2616 = vmatpush.msra.mxu0 %v1453
    %2617 = vmatpush.msra.mxu0 %v1447
    %2618 = vmatpush.msra.mxu0 %v1441
    %2619 = vmatpush.msra.mxu0 %v1435
    %2620 = vmatpush.msra.mxu0 %v1429
    %2621 = vmatpush.msra.mxu0 %v1423
    %2622 = vmatpush.msra.mxu0 %v1417
    %2623 = vmatmul.f32.gmra.mxu0 %v2584
    %v2624 = vpop.f32.mrf.mxu0
    %v2625 = vadd.f32 %v2605, %v2624
    %2626 = vdwg.mxu0
    %2627 = vmatpush.msra.mxu0 %v1412
    %2628 = vmatpush.msra.mxu0 %v1406
    %2629 = vmatpush.msra.mxu0 %v1400
    %2630 = vmatpush.msra.mxu0 %v1394
    %2631 = vmatpush.msra.mxu0 %v1388
    %2632 = vmatpush.msra.mxu0 %v1382
    %2633 = vmatpush.msra.mxu0 %v1376
    %2634 = vmatpush.msra.mxu0 %v1370
    %2635 = vmatpush.msra.mxu0 %v1364
    %2636 = vmatpush.msra.mxu0 %v1358
    %2637 = vmatpush.msra.mxu0 %v1352
    %2638 = vmatpush.msra.mxu0 %v1346
    %2639 = vmatpush.msra.mxu0 %v1340
    %2640 = vmatpush.msra.mxu0 %v1334
    %2641 = vmatpush.msra.mxu0 %v1328
    %2642 = vmatpush.msra.mxu0 %v1322
    %2643 = vmatmul.f32.gmra.mxu0 %v2583
    %v2644 = vpop.f32.mrf.mxu0
    %v2645 = vadd.f32 %v1516, %v2644
    %2646 = vdwg.mxu0
    %2647 = vmatpush.msra.mxu0 %v1508
    %2648 = vmatpush.msra.mxu0 %v1502
    %2649 = vmatpush.msra.mxu0 %v1496
    %2650 = vmatpush.msra.mxu0 %v1490
    %2651 = vmatpush.msra.mxu0 %v1484
    %2652 = vmatpush.msra.mxu0 %v1478
    %2653 = vmatpush.msra.mxu0 %v1472
    %2654 = vmatpush.msra.mxu0 %v1466
    %2655 = vmatpush.msra.mxu0 %v1460
    %2656 = vmatpush.msra.mxu0 %v1454
    %2657 = vmatpush.msra.mxu0 %v1448
    %2658 = vmatpush.msra.mxu0 %v1442
    %2659 = vmatpush.msra.mxu0 %v1436
    %2660 = vmatpush.msra.mxu0 %v1430
    %2661 = vmatpush.msra.mxu0 %v1424
    %2662 = vmatpush.msra.mxu0 %v1418
    %2663 = vmatmul.f32.gmra.mxu0 %v2584
    %v2664 = vpop.f32.mrf.mxu0
    %v2665 = vadd.f32 %v2645, %v2664
    %2666 = vdwg.mxu0
    %2667 = vmatpush.msra.mxu0 %v1413
    %2668 = vmatpush.msra.mxu0 %v1407
    %2669 = vmatpush.msra.mxu0 %v1401
    %2670 = vmatpush.msra.mxu0 %v1395
    %2671 = vmatpush.msra.mxu0 %v1389
    %2672 = vmatpush.msra.mxu0 %v1383
    %2673 = vmatpush.msra.mxu0 %v1377
    %2674 = vmatpush.msra.mxu0 %v1371
    %2675 = vmatpush.msra.mxu0 %v1365
    %2676 = vmatpush.msra.mxu0 %v1359
    %2677 = vmatpush.msra.mxu0 %v1353
    %2678 = vmatpush.msra.mxu0 %v1347
    %2679 = vmatpush.msra.mxu0 %v1341
    %2680 = vmatpush.msra.mxu0 %v1335
    %2681 = vmatpush.msra.mxu0 %v1329
    %2682 = vmatpush.msra.mxu0 %v1323
    %2683 = vmatmul.f32.gmra.mxu0 %v2583
    %v2684 = vpop.f32.mrf.mxu0
    %v2685 = vadd.f32 %v1517, %v2684
    %2686 = vdwg.mxu0
    %2687 = vmatpush.msra.mxu0 %v1509
    %2688 = vmatpush.msra.mxu0 %v1503
    %2689 = vmatpush.msra.mxu0 %v1497
    %2690 = vmatpush.msra.mxu0 %v1491
    %2691 = vmatpush.msra.mxu0 %v1485
    %2692 = vmatpush.msra.mxu0 %v1479
    %2693 = vmatpush.msra.mxu0 %v1473
    %2694 = vmatpush.msra.mxu0 %v1467
    %2695 = vmatpush.msra.mxu0 %v1461
    %2696 = vmatpush.msra.mxu0 %v1455
    %2697 = vmatpush.msra.mxu0 %v1449
    %2698 = vmatpush.msra.mxu0 %v1443
    %2699 = vmatpush.msra.mxu0 %v1437
    %2700 = vmatpush.msra.mxu0 %v1431
    %2701 = vmatpush.msra.mxu0 %v1425
    %2702 = vmatpush.msra.mxu0 %v1419
    %2703 = vmatmul.f32.gmra.mxu0 %v2584
    %v2704 = vpop.f32.mrf.mxu0
    %v2705 = vadd.f32 %v2685, %v2704
    %2706 = vdwg.mxu0
    %2707 = vmatpush.msra.mxu0 %v1414
    %2708 = vmatpush.msra.mxu0 %v1408
    %2709 = vmatpush.msra.mxu0 %v1402
    %2710 = vmatpush.msra.mxu0 %v1396
    %2711 = vmatpush.msra.mxu0 %v1390
    %2712 = vmatpush.msra.mxu0 %v1384
    %2713 = vmatpush.msra.mxu0 %v1378
    %2714 = vmatpush.msra.mxu0 %v1372
    %2715 = vmatpush.msra.mxu0 %v1366
    %2716 = vmatpush.msra.mxu0 %v1360
    %2717 = vmatpush.msra.mxu0 %v1354
    %2718 = vmatpush.msra.mxu0 %v1348
    %2719 = vmatpush.msra.mxu0 %v1342
    %2720 = vmatpush.msra.mxu0 %v1336
    %2721 = vmatpush.msra.mxu0 %v1330
    %2722 = vmatpush.msra.mxu0 %v1324
    %2723 = vmatmul.f32.gmra.mxu0 %v2583
    %v2724 = vpop.f32.mrf.mxu0
    %v2725 = vadd.f32 %v1518, %v2724
    %2726 = vdwg.mxu0
    %2727 = vmatpush.msra.mxu0 %v1510
    %2728 = vmatpush.msra.mxu0 %v1504
    %2729 = vmatpush.msra.mxu0 %v1498
    %2730 = vmatpush.msra.mxu0 %v1492
    %2731 = vmatpush.msra.mxu0 %v1486
    %2732 = vmatpush.msra.mxu0 %v1480
    %2733 = vmatpush.msra.mxu0 %v1474
    %2734 = vmatpush.msra.mxu0 %v1468
    %2735 = vmatpush.msra.mxu0 %v1462
    %2736 = vmatpush.msra.mxu0 %v1456
    %2737 = vmatpush.msra.mxu0 %v1450
    %2738 = vmatpush.msra.mxu0 %v1444
    %2739 = vmatpush.msra.mxu0 %v1438
    %2740 = vmatpush.msra.mxu0 %v1432
    %2741 = vmatpush.msra.mxu0 %v1426
    %2742 = vmatpush.msra.mxu0 %v1420
    %2743 = vmatmul.f32.gmra.mxu0 %v2584
    %v2744 = vpop.f32.mrf.mxu0
    %v2745 = vadd.f32 %v2725, %v2744
    %2746 = vdwg.mxu0
    %2747 = vmatpush.msra.mxu0 %v1415
    %2748 = vmatpush.msra.mxu0 %v1409
    %2749 = vmatpush.msra.mxu0 %v1403
    %2750 = vmatpush.msra.mxu0 %v1397
    %2751 = vmatpush.msra.mxu0 %v1391
    %2752 = vmatpush.msra.mxu0 %v1385
    %2753 = vmatpush.msra.mxu0 %v1379
    %2754 = vmatpush.msra.mxu0 %v1373
    %2755 = vmatpush.msra.mxu0 %v1367
    %2756 = vmatpush.msra.mxu0 %v1361
    %2757 = vmatpush.msra.mxu0 %v1355
    %2758 = vmatpush.msra.mxu0 %v1349
    %2759 = vmatpush.msra.mxu0 %v1343
    %2760 = vmatpush.msra.mxu0 %v1337
    %2761 = vmatpush.msra.mxu0 %v1331
    %2762 = vmatpush.msra.mxu0 %v1325
    %2763 = vmatmul.f32.gmra.mxu0 %v2583
    %v2764 = vpop.f32.mrf.mxu0
    %v2765 = vadd.f32 %v1519, %v2764
    %2766 = vdwg.mxu0
    %2767 = vmatpush.msra.mxu0 %v1511
    %2768 = vmatpush.msra.mxu0 %v1505
    %2769 = vmatpush.msra.mxu0 %v1499
    %2770 = vmatpush.msra.mxu0 %v1493
    %2771 = vmatpush.msra.mxu0 %v1487
    %2772 = vmatpush.msra.mxu0 %v1481
    %2773 = vmatpush.msra.mxu0 %v1475
    %2774 = vmatpush.msra.mxu0 %v1469
    %2775 = vmatpush.msra.mxu0 %v1463
    %2776 = vmatpush.msra.mxu0 %v1457
    %2777 = vmatpush.msra.mxu0 %v1451
    %2778 = vmatpush.msra.mxu0 %v1445
    %2779 = vmatpush.msra.mxu0 %v1439
    %2780 = vmatpush.msra.mxu0 %v1433
    %2781 = vmatpush.msra.mxu0 %v1427
    %2782 = vmatpush.msra.mxu0 %v1421
    %2783 = vmatmul.f32.gmra.mxu0 %v2584
    %v2784 = vpop.f32.mrf.mxu0
    %v2785 = vadd.f32 %v2765, %v2784
    %2786 = vdwg.mxu0
    %2787 = vmatpush.msra.mxu0 %v1416
    %2788 = vmatpush.msra.mxu0 %v1410
    %2789 = vmatpush.msra.mxu0 %v1404
    %2790 = vmatpush.msra.mxu0 %v1398
    %2791 = vmatpush.msra.mxu0 %v1392
    %2792 = vmatpush.msra.mxu0 %v1386
    %2793 = vmatpush.msra.mxu0 %v1380
    %2794 = vmatpush.msra.mxu0 %v1374
    %2795 = vmatpush.msra.mxu0 %v1368
    %2796 = vmatpush.msra.mxu0 %v1362
    %2797 = vmatpush.msra.mxu0 %v1356
    %2798 = vmatpush.msra.mxu0 %v1350
    %2799 = vmatpush.msra.mxu0 %v1344
    %2800 = vmatpush.msra.mxu0 %v1338
    %2801 = vmatpush.msra.mxu0 %v1332
    %2802 = vmatpush.msra.mxu0 %v1326
    %2803 = vmatmul.f32.gmra.mxu0 %v2583
    %v2804 = vpop.f32.mrf.mxu0
    %v2805 = vadd.f32 %v1520, %v2804
    %2806 = vdwg.mxu0
    %2807 = vmatpush.msra.mxu0 %v1512
    %2808 = vmatpush.msra.mxu0 %v1506
    %2809 = vmatpush.msra.mxu0 %v1500
    %2810 = vmatpush.msra.mxu0 %v1494
    %2811 = vmatpush.msra.mxu0 %v1488
    %2812 = vmatpush.msra.mxu0 %v1482
    %2813 = vmatpush.msra.mxu0 %v1476
    %2814 = vmatpush.msra.mxu0 %v1470
    %2815 = vmatpush.msra.mxu0 %v1464
    %2816 = vmatpush.msra.mxu0 %v1458
    %2817 = vmatpush.msra.mxu0 %v1452
    %2818 = vmatpush.msra.mxu0 %v1446
    %2819 = vmatpush.msra.mxu0 %v1440
    %2820 = vmatpush.msra.mxu0 %v1434
    %2821 = vmatpush.msra.mxu0 %v1428
    %2822 = vmatpush.msra.mxu0 %v1422
    %2823 = vmatmul.f32.gmra.mxu0 %v2584
    %v2824 = vpop.f32.mrf.mxu0
    %v2825 = vadd.f32 %v2805, %v2824
    %2826 = vdwg.mxu0
    %v2829 = vrot.slane %v2625, 2
    %v2830 = vrot.slane %v2665, 2
    %v2833 = vadd.f32 %v1119, %v2829
    %v2834 = vadd.f32 %v1159, %v2830
    %v2835 = vxor.u32 %v2833, 2147483648
    %v2836 = vxor.u32 %v2834, 2147483648
    %v2837 = vmul.f32 %v2835, 1.442695
    %v2838 = vpow.pop %v2837
    %v2839 = vmul.f32 %v2836, 1.442695
    %v2840 = vpow.pop %v2839
    %v2841 = vadd.f32 %v2838, 1.0
    %v2842 = vadd.f32 %v2840, 1.0
    %v2843 = vrcp.pop %v2841
    %v2844 = vmul.f32 %v2841, %v2843
    %v2845 = vsub.f32 1.0, %v2844
    %v2846 = vmul.f32 %v2843, %v2845
    %v2847 = vadd.f32 %v2843, %v2846
    %vm2848 = vweird.f32 %v2841
    %vm2849 = vweird.f32 %v2843
    %vm2850 = vmor %vm2848, %vm2849
    %v2851 = vsel %vm2850, %v2843, %v2847
    %v2852 = vand.u32 2147483647, %v2841
    %vm2853 = vcmp.eq.f32.partialorder %v2852, 8.507059e+37
    %v2854 = vand.u32 %v2841, 2147483648
    %v2855 = vor.u32 1.1754944e-38, %v2854
    %v2856 = vsel %vm2853, %v2855, %v2851
    %v2857 = vmul.f32 1.0, %v2856
    %v2858 = vrcp.pop %v2842
    %v2859 = vmul.f32 %v2842, %v2858
    %v2860 = vsub.f32 1.0, %v2859
    %v2861 = vmul.f32 %v2858, %v2860
    %v2862 = vadd.f32 %v2858, %v2861
    %vm2863 = vweird.f32 %v2842
    %vm2864 = vweird.f32 %v2858
    %vm2865 = vmor %vm2863, %vm2864
    %v2866 = vsel %vm2865, %v2858, %v2862
    %v2867 = vand.u32 2147483647, %v2842
    %vm2868 = vcmp.eq.f32.partialorder %v2867, 8.507059e+37
    %v2869 = vand.u32 %v2842, 2147483648
    %v2870 = vor.u32 1.1754944e-38, %v2869
    %v2871 = vsel %vm2868, %v2870, %v2866
    %v2872 = vmul.f32 1.0, %v2871
    %v2875 = vrot.slane %v2705, 2
    %v2876 = vrot.slane %v2745, 2
    %v2879 = vadd.f32 %v1199, %v2875
    %v2880 = vadd.f32 %v1239, %v2876
    %v2881 = vxor.u32 %v2879, 2147483648
    %v2882 = vxor.u32 %v2880, 2147483648
    %v2883 = vmul.f32 %v2881, 1.442695
    %v2884 = vpow.pop %v2883
    %v2885 = vmul.f32 %v2882, 1.442695
    %v2886 = vpow.pop %v2885
    %v2887 = vadd.f32 %v2884, 1.0
    %v2888 = vadd.f32 %v2886, 1.0
    %v2889 = vrcp.pop %v2887
    %v2890 = vmul.f32 %v2887, %v2889
    %v2891 = vsub.f32 1.0, %v2890
    %v2892 = vmul.f32 %v2889, %v2891
    %v2893 = vadd.f32 %v2889, %v2892
    %vm2894 = vweird.f32 %v2887
    %vm2895 = vweird.f32 %v2889
    %vm2896 = vmor %vm2894, %vm2895
    %v2897 = vsel %vm2896, %v2889, %v2893
    %v2898 = vand.u32 2147483647, %v2887
    %vm2899 = vcmp.eq.f32.partialorder %v2898, 8.507059e+37
    %v2900 = vand.u32 %v2887, 2147483648
    %v2901 = vor.u32 1.1754944e-38, %v2900
    %v2902 = vsel %vm2899, %v2901, %v2897
    %v2903 = vmul.f32 1.0, %v2902
    %v2904 = vrcp.pop %v2888
    %v2905 = vmul.f32 %v2888, %v2904
    %v2906 = vsub.f32 1.0, %v2905
    %v2907 = vmul.f32 %v2904, %v2906
    %v2908 = vadd.f32 %v2904, %v2907
    %vm2909 = vweird.f32 %v2888
    %vm2910 = vweird.f32 %v2904
    %vm2911 = vmor %vm2909, %vm2910
    %v2912 = vsel %vm2911, %v2904, %v2908
    %v2913 = vand.u32 2147483647, %v2888
    %vm2914 = vcmp.eq.f32.partialorder %v2913, 8.507059e+37
    %v2915 = vand.u32 %v2888, 2147483648
    %v2916 = vor.u32 1.1754944e-38, %v2915
    %v2917 = vsel %vm2914, %v2916, %v2912
    %v2918 = vmul.f32 1.0, %v2917
    %v2921 = vrot.slane %v2785, 2
    %v2922 = vrot.slane %v2825, 2
    %v2925 = vmul.f32 %v2857, %v2921
    %v2926 = vmul.f32 %v2872, %v2922
    %v2927 = vadd.f32 %v1279, %v2925
    %v2928 = vadd.f32 %v1319, %v2926
    %v2929 = vtanh.pop %v2927
    %v2930 = vtanh.pop %v2928
    %v2931 = vsub.f32 1.0, %v2903
    %v2932 = vsub.f32 1.0, %v2918
    %v2933 = vmul.f32 %v2931, %v2929
    %v2934 = vmul.f32 %v2932, %v2930
    %v2935 = vrot.slane %v2579, 6
    %v2936 = vrot.slane %v2580, 6
    %v2939 = vmul.f32 %v2903, %v2935
    %v2940 = vmul.f32 %v2918, %v2936
    %v2941 = vadd.f32 %v2933, %v2939
    %v2942 = vadd.f32 %v2934, %v2940
    %2945 = vst.sshfl [vmem:[#allocation1] sm:$0xff pattern:$0x73625140] %v2941
    %2946 = vst.sshfl [vmem:[#allocation1 + $0x8] sm:$0xff pattern:$0x73625140] %v2942
    %s2947 = scalar_lea.vmem [#allocation1], 3
    %v2948 = vld [vmem:[%s2947] ss:$4 sm:$0xff]
    %2950 = vst [vmem:[#allocation4] sm:$0xf] %v2948
    %v2951 = vrot.slane %v2941, 6
    %v2952 = vrot.slane %v2942, 6
    %vm2955 = vcmask 1041408
    %v2956 = vsel %vm2955, %v2951, 0.0
    %v2957 = vrot.slane %v2956, 4
    %v2958 = vadd.f32 %v2956, %v2957
    %v2959 = vrot.slane %v2958, 2
    %v2960 = vadd.f32 %v2958, %v2959
    %v2961 = vrot.slane %v2960, 1
    %v2962 = vadd.f32 %v2960, %v2961
    %v2963 = vsel %vm2955, %v2952, 0.0
    %v2964 = vrot.slane %v2963, 4
    %v2965 = vadd.f32 %v2963, %v2964
    %v2966 = vrot.slane %v2965, 2
    %v2967 = vadd.f32 %v2965, %v2966
    %v2968 = vrot.slane %v2967, 1
    %v2969 = vadd.f32 %v2967, %v2968
    %v2970 = vrcp.pop 2.0
    %v2971 = vmul.f32 2.0, %v2970
    %v2972 = vsub.f32 1.0, %v2971
    %v2973 = vmul.f32 %v2970, %v2972
    %v2974 = vadd.f32 %v2970, %v2973
    %vm2975 = vweird.f32 %v2970
    %v2976 = vsel %vm2975, %v2970, %v2974
    %v2977 = vmul.f32 %v2962, %v2976
    %v2978 = vmul.f32 %v2969, %v2976
    %v2979 = vsub.f32 %v2941, %v2977
    %v2980 = vsub.f32 %v2942, %v2978
    %v2981 = vmul.f32 %v2979, %v2979
    %v2982 = vmul.f32 %v2980, %v2980
    %v2985 = vrot.slane %v2981, 6
    %v2986 = vrot.slane %v2982, 6
    %v2989 = vsel %vm2955, %v2985, 0.0
    %v2990 = vrot.slane %v2989, 4
    %v2991 = vadd.f32 %v2989, %v2990
    %v2992 = vrot.slane %v2991, 2
    %v2993 = vadd.f32 %v2991, %v2992
    %v2994 = vrot.slane %v2993, 1
    %v2995 = vadd.f32 %v2993, %v2994
    %v2996 = vsel %vm2955, %v2986, 0.0
    %v2997 = vrot.slane %v2996, 4
    %v2998 = vadd.f32 %v2996, %v2997
    %v2999 = vrot.slane %v2998, 2
    %v3000 = vadd.f32 %v2998, %v2999
    %v3001 = vrot.slane %v3000, 1
    %v3002 = vadd.f32 %v3000, %v3001
    %v3003 = vmul.f32 %v2995, %v2976
    %v3004 = vmul.f32 %v3002, %v2976
    %v3005 = vadd.f32 %v3003, 1e-05
    %v3006 = vadd.f32 %v3004, 1e-05
    %v3007 = vrsqrt.pop %v3005
    %v3008 = vmul.f32 %v3007, %v3005
    %v3009 = vmul.f32 %v3008, %v3007
    %v3010 = vmul.f32 0.5, %v3009
    %v3011 = vsub.f32 1.5, %v3010
    %v3012 = vmul.f32 %v3007, %v3011
    %vm3013 = vweird.f32 %v3005
    %vm3014 = vweird.f32 %v3007
    %vm3015 = vmor %vm3013, %vm3014
    %v3016 = vsel %vm3015, %v3007, %v3012
    %v3017 = vrsqrt.pop %v3006
    %v3018 = vmul.f32 %v3017, %v3006
    %v3019 = vmul.f32 %v3018, %v3017
    %v3020 = vmul.f32 0.5, %v3019
    %v3021 = vsub.f32 1.5, %v3020
    %v3022 = vmul.f32 %v3017, %v3021
    %vm3023 = vweird.f32 %v3006
    %vm3024 = vweird.f32 %v3017
    %vm3025 = vmor %vm3023, %vm3024
    %v3026 = vsel %vm3025, %v3017, %v3022
    %v3027 = vmul.f32 %v2979, %v3016
    %v3028 = vmul.f32 %v2980, %v3026
    %v3029 = vld [vmem:[%s11] sm:$0x3]
    %v3031 = vperm.slane %v3029, 0
    %v3032 = vperm.slane %v3029, 1
    %v3035 = vmul.f32 %v3027, %v3031
    %v3036 = vmul.f32 %v3028, %v3032
    %v3037 = vld [vmem:[%s12] sm:$0x3]
    %v3039 = vperm.slane %v3037, 0
    %v3040 = vperm.slane %v3037, 1
    %v3043 = vadd.f32 %v3035, %v3039
    %v3044 = vadd.f32 %v3036, %v3040
    %v3045 = vld [vmem:[%s13] sm:$0xff]
    %v3046 = vld [vmem:[%s13 + $0x8] sm:$0xff]
    %v3047 = vld [vmem:[%s13 + $0x10] sm:$0xff]
    %v3048 = vld [vmem:[%s13 + $0x18] sm:$0xff]
    %v3049 = vld [vmem:[%s13 + $0x20] sm:$0xff]
    %v3050 = vld [vmem:[%s13 + $0x28] sm:$0xff]
    %v3051 = vld [vmem:[%s13 + $0x30] sm:$0xff]
    %v3052 = vld [vmem:[%s13 + $0x38] sm:$0xff]
    %v3053 = vld [vmem:[%s13 + $0x40] sm:$0xff]
    %v3054 = vld [vmem:[%s13 + $0x48] sm:$0xff]
    %v3055 = vld [vmem:[%s13 + $0x50] sm:$0xff]
    %v3056 = vld [vmem:[%s13 + $0x58] sm:$0xff]
    %v3057 = vld [vmem:[%s13 + $0x60] sm:$0xff]
    %v3058 = vld [vmem:[%s13 + $0x68] sm:$0xff]
    %v3059 = vld [vmem:[%s13 + $0x70] sm:$0xff]
    %v3060 = vld [vmem:[%s13 + $0x78] sm:$0xff]
    %v3061 = vld [vmem:[%s13 + $0x80] sm:$0xff]
    %v3062 = vld [vmem:[%s13 + $0x88] sm:$0xff]
    %v3063 = vld [vmem:[%s13 + $0x90] sm:$0xff]
    %v3064 = vld [vmem:[%s13 + $0x98] sm:$0xff]
    %v3065 = vld [vmem:[%s13 + $0xa0] sm:$0xff]
    %v3066 = vld [vmem:[%s13 + $0xa8] sm:$0xff]
    %v3067 = vld [vmem:[%s13 + $0xb0] sm:$0xff]
    %v3068 = vld [vmem:[%s13 + $0xb8] sm:$0xff]
    %v3069 = vld [vmem:[%s13 + $0xc0] sm:$0xff]
    %v3070 = vld [vmem:[%s13 + $0xc8] sm:$0xff]
    %v3071 = vld [vmem:[%s13 + $0xd0] sm:$0xff]
    %v3072 = vld [vmem:[%s13 + $0xd8] sm:$0xff]
    %v3073 = vld [vmem:[%s13 + $0xe0] sm:$0xff]
    %v3074 = vld [vmem:[%s13 + $0xe8] sm:$0xff]
    %v3075 = vld [vmem:[%s13 + $0xf0] sm:$0xff]
    %v3076 = vld [vmem:[%s13 + $0xf8] sm:$0xff]
    %v3077 = vld [vmem:[%s14] sm:$0x1]
    %v3079 = vperm.slane %v3077, 0
    %v3083 = vrot.slane %v3043, 6
    %v3084 = vrot.slane %v3044, 6
    %3087 = vmatpush.msra.mxu0 %v3060
    %3088 = vmatpush.msra.mxu0 %v3059
    %3089 = vmatpush.msra.mxu0 %v3058
    %3090 = vmatpush.msra.mxu0 %v3057
    %3091 = vmatpush.msra.mxu0 %v3056
    %3092 = vmatpush.msra.mxu0 %v3055
    %3093 = vmatpush.msra.mxu0 %v3054
    %3094 = vmatpush.msra.mxu0 %v3053
    %3095 = vmatpush.msra.mxu0 %v3052
    %3096 = vmatpush.msra.mxu0 %v3051
    %3097 = vmatpush.msra.mxu0 %v3050
    %3098 = vmatpush.msra.mxu0 %v3049
    %3099 = vmatpush.msra.mxu0 %v3048
    %3100 = vmatpush.msra.mxu0 %v3047
    %3101 = vmatpush.msra.mxu0 %v3046
    %3102 = vmatpush.msra.mxu0 %v3045
    %3103 = vmatmul.f32.gmra.mxu0 %v3083
    %v3104 = vpop.f32.mrf.mxu0
    %v3105 = vadd.f32 %v3079, %v3104
    %3106 = vdwg.mxu0
    %3107 = vmatpush.msra.mxu0 %v3076
    %3108 = vmatpush.msra.mxu0 %v3075
    %3109 = vmatpush.msra.mxu0 %v3074
    %3110 = vmatpush.msra.mxu0 %v3073
    %3111 = vmatpush.msra.mxu0 %v3072
    %3112 = vmatpush.msra.mxu0 %v3071
    %3113 = vmatpush.msra.mxu0 %v3070
    %3114 = vmatpush.msra.mxu0 %v3069
    %3115 = vmatpush.msra.mxu0 %v3068
    %3116 = vmatpush.msra.mxu0 %v3067
    %3117 = vmatpush.msra.mxu0 %v3066
    %3118 = vmatpush.msra.mxu0 %v3065
    %3119 = vmatpush.msra.mxu0 %v3064
    %3120 = vmatpush.msra.mxu0 %v3063
    %3121 = vmatpush.msra.mxu0 %v3062
    %3122 = vmatpush.msra.mxu0 %v3061
    %3123 = vmatmul.f32.gmra.mxu0 %v3084
    %v3124 = vpop.f32.mrf.mxu0
    %v3125 = vadd.f32 %v3105, %v3124
    %3126 = vdwg.mxu0
    %vm3127 = vcmask 41984
    %3128 = vst.msk [vmem:[#allocation2] sm:$0x3] %vm3127, %v3125
    // Predicated region
    $region62: #{forward.9} parent=1 // pred_check
      _
    $region63: #{forward.9} parent=1 // pred_check_branch
      %3130 = sbr.rel (0) target = $region65
    $region64: #{forward.9} parent=1 // pred_region
      %3132 = vsyncadd [#allocation3], 0
      %s3134 = sshll.u32 [#allocation2], 4
      %s3135 = int_to_ptr.vmem [resolvable:$true] %s3134
      %s3136 = sshll.u32 %s15, 4
      %s3137 = int_to_ptr.hbm [resolvable:$true] %s3136
      %3139 = dma.vmem_to_hbm [thread:$0]  %s3135, 32, %s3137, [#allocation3]
    $region65: #{forward.9} parent=1 // pred_fallthru
      _
    // Predicated region
    $region66: #{forward.9} parent=1 // pred_check
      _
    $region67: #{forward.9} parent=1 // pred_check_branch
      %3141 = sbr.rel (0) target = $region69
    $region68: #{forward.9} parent=1 // pred_region
      %3143 = vsyncadd [#allocation5], 0
      %s3145 = sshll.u32 [#allocation4], 4
      %s3146 = int_to_ptr.vmem [resolvable:$true] %s3145
      %s3147 = sshll.u32 %s16, 4
      %s3148 = int_to_ptr.hbm [resolvable:$true] %s3147
      %3150 = dma.vmem_to_hbm [thread:$0]  %s3146, 64, %s3148, [#allocation5]
    $region69: #{forward.9} parent=1 // pred_fallthru
      _
    // Predicated region
    $region70: #{forward.9} parent=1 // pred_check
      _
    $region71: #{forward.9} parent=1 // pred_check_branch
      %3152 = sbr.rel (0) target = $region73
    $region72: #{forward.9} parent=1 // pred_region
      %3154 = dma.done [#allocation3], 32
    $region73: #{forward.9} parent=1 // pred_fallthru
      _
    // Predicated region
    $region74: #{forward.9} parent=1 // pred_check
      _
    $region75: #{forward.9} parent=1 // pred_check_branch
      %3156 = sbr.rel (0) target = $region77
    $region76: #{forward.9} parent=1 // pred_region
      %3158 = dma.done [#allocation5], 64
    $region77: #{forward.9} parent=1 // pred_fallthru
      _
    %3159 = vsyncpa [#allocation3], 1
    %3160 = vsyncpa [#allocation5], 1

</llo_original>
